<compile_context>
chip_gen: v5e
topology: v5e:2x2
jax: 0.10.0
libtpu: 0.0.40
codegen_flags: <defaults>
</compile_context>

<pallas_src>
import math

import jax
import jax.numpy as jnp
from jax.experimental import pallas as pl
from jax.experimental.pallas import tpu as pltpu

N_FILT = 3        # "N" in the PyTorch module
CLASSES = 65
CHANNELS = 1024


# -----------------------------------------------------------------------------------
# Fused kernel: {spatial avg-pool + TSF temporal pooling} as ONE matmul, then the
# 1x1x1-conv logits.   grid = (B // bblk,), "parallel".
# -----------------------------------------------------------------------------------
def _build_kernel(bblk, time, hw):
    inv_hw = 1.0 / float(hw)

    def kernel(lhs_ref, vid_ref, w_ref, b_ref, se_ref, cls_ref):
        # lhs_ref : (bblk, T+2N, THW) bf16   [ 0/1 spatial-pool rows ; hw-replicated TSF rows ]
        # vid_ref : (bblk, THW, C)    bf16   pre-transposed video
        # w_ref   : (C, classes)      bf16   1x1x1 conv weight (transposed, MXU-oriented)
        # b_ref   : (1, classes)      f32    conv bias
        # se_ref  : (bblk, 2N, C)     f32    TSF responses, lane-dense over C
        # cls_ref : (bblk, T, classes) f32   per-frame logits
        w = w_ref[...]
        b = b_ref[...]
        for bb in range(bblk):                                   # static unroll; bblk small
            # one MXU pass over the video tile: pooled frames + both TSF banks together
            fused = jax.lax.dot_general(
                lhs_ref[bb], vid_ref[bb], (((1,), (0,)), ((), ())),
                preferred_element_type=jnp.float32)              # (T+2N, C) f32
            fused = fused * inv_hw                               # exact 1/49 scale, in f32
            se_ref[bb] = fused[time:]                            # (2N, C)
            # per-frame 1x1x1 conv logits: (T, C) x (C, classes), canonical orientation
            cls_ref[bb] = jax.lax.dot_general(
                fused[:time].astype(jnp.bfloat16), w,
                (((1,), (0,)), ((), ())),
                preferred_element_type=jnp.float32) + b          # (T, classes)

    return kernel


# -----------------------------------------------------------------------------------
# TSF Cauchy filters (tiny scalar math, plain JAX glue)
# -----------------------------------------------------------------------------------
def tsf_filters(tsf_p, lengths, time):
    c = jnp.tanh(tsf_p["center"])[None, :]                 # (1, N)
    d = jnp.tanh(tsf_p["delta"])[None, :]
    g = jnp.tanh(tsf_p["gamma"])[None, :]
    L = lengths.astype(jnp.float32)[:, None]               # (B, 1)
    centers = (L - 1.0) * (c + 1.0) / 2.0                  # (B, N)
    deltas = L * (1.0 - jnp.abs(d))                        # (B, N)
    gammas = jnp.exp(1.5 - 2.0 * jnp.abs(g))               # (B, N)
    a = centers + deltas * 0.0                             # stride offsets are zeros (as in public TSF)
    t = jnp.arange(time, dtype=jnp.float32)[None, None, :]
    f = (t - a[:, :, None]) / gammas[:, :, None]
    f = 1.0 / (jnp.pi * gammas[:, :, None] * (f * f + 1.0))
    f = f / (jnp.sum(f, axis=2, keepdims=True) + 1e-6)
    return f                                               # (B, N, T)


def init_params(key, classes=CLASSES, channels=CHANNELS, n=N_FILT):
    ks = jax.random.split(key, 11)
    stdv = 1.0 / math.sqrt(classes)          # sup_mat.size(1) == classes
    sim_sd = 1.0 / math.sqrt(6.0)
    xav = math.sqrt(6.0 / (channels + classes))            # xavier_uniform for 1x1x1 conv
    return dict(
        cls_wts=jax.random.uniform(ks[0], (classes,), jnp.float32, -1.0, 1.0),
        sup_mat=jax.random.uniform(ks[1], (1, classes, channels * n), jnp.float32, -stdv, stdv),
        sim_wts_1=jax.random.uniform(ks[2], (2, 6), jnp.float32, -sim_sd, sim_sd),
        sim_wts_2=jax.random.uniform(ks[3], (2, 6), jnp.float32, -sim_sd, sim_sd),
        pf_weight=jax.random.uniform(ks[4], (classes, channels, 1, 1, 1), jnp.float32, -xav, xav),
        pf_bias=jnp.zeros((classes,), jnp.float32),
        tsf1=dict(center=0.5 * jax.random.normal(ks[5], (n,), jnp.float32),
                  delta=0.01 * jax.random.normal(ks[6], (n,), jnp.float32),
                  gamma=1e-4 * jax.random.normal(ks[7], (n,), jnp.float32)),
        tsf2=dict(center=0.5 * jax.random.normal(ks[8], (n,), jnp.float32),
                  delta=0.01 * jax.random.normal(ks[9], (n,), jnp.float32),
                  gamma=1e-4 * jax.random.normal(ks[10], (n,), jnp.float32)),
    )


# -----------------------------------------------------------------------------------
# Forward pass (mirrors SuperEvent.forward)
# -----------------------------------------------------------------------------------
def super_event_forward(params, video, lengths, *, bblk=1):
    B, C, T, H, W = video.shape
    assert H == 7 and W == 7, "AvgPool3d([1,7,7], stride 1) path implemented for 7x7 maps"
    # TODO(synk): spatial sizes other than 7x7 (pool output > 1x1) not implemented.
    assert B % bblk == 0, "bblk must divide the batch"
    classes = params["sup_mat"].shape[1]
    n = N_FILT
    hw = H * W
    thw = T * hw

    # Dropout(0.7) -> identity at inference.  Video enters pre-transposed (THW, C) bf16 so
    # all in-kernel contractions are canonical and lane-dense over C.
    vid_t = jnp.transpose(video, (0, 2, 3, 4, 1)).reshape(B, thw, C).astype(jnp.bfloat16)

    # Fused LHS: T spatial-pool rows (exact 0/1 in bf16) + 2N hw-replicated TSF rows.
    # The 1/49 spatial-mean scale is NOT baked in here; it is applied in f32 in the kernel.
    f1 = tsf_filters(params["tsf1"], lengths, T)                      # (B, N, T)
    f2 = tsf_filters(params["tsf2"], lengths, T)                      # (B, N, T)
    f_all = jnp.concatenate([f1, f2], axis=1)                         # (B, 2N, T)
    frep = jnp.repeat(f_all, hw, axis=2)                              # (B, 2N, THW)
    pool_rows = jnp.kron(jnp.eye(T, dtype=jnp.float32),
                         jnp.ones((1, hw), jnp.float32))              # (T, THW), 0/1
    lhs = jnp.concatenate(
        [jnp.broadcast_to(pool_rows[None], (B, T, thw)), frep],
        axis=1).astype(jnp.bfloat16)                                  # (B, T+2N, THW)

    # 1x1x1 conv weight, MXU-oriented (C, classes) bf16; bias stays f32.
    w2d = jnp.transpose(params["pf_weight"].reshape(classes, C)).astype(jnp.bfloat16)
    bias2d = params["pf_bias"].reshape(1, classes)

    kernel = _build_kernel(bblk, T, hw)
    se_bnc, cls_btk = pl.pallas_call(
        kernel,
        out_shape=(jax.ShapeDtypeStruct((B, 2 * n, C), jnp.float32),
                   jax.ShapeDtypeStruct((B, T, classes), jnp.float32)),
        grid_spec=pltpu.PrefetchScalarGridSpec(
            num_scalar_prefetch=0,
            grid=(B // bblk,),
            in_specs=[
                pl.BlockSpec((bblk, T + 2 * n, thw), lambda i: (i, 0, 0)),
                pl.BlockSpec((bblk, thw, C), lambda i: (i, 0, 0)),
                pl.BlockSpec((C, classes), lambda i: (0, 0)),
                pl.BlockSpec((1, classes), lambda i: (0, 0)),
            ],
            out_specs=[
                pl.BlockSpec((bblk, 2 * n, C), lambda i: (i, 0, 0)),
                pl.BlockSpec((bblk, T, classes), lambda i: (i, 0, 0)),
            ],
        ),
        compiler_params=pltpu.CompilerParams(
            dimension_semantics=("parallel",)),
    )(lhs, vid_t, w2d, bias2d)
    # TODO(synk): for B == 1 on v7x add a second "parallel" grid axis splitting C across the
    #             two TensorCores (partial cls/head summed in the glue); for long clips add a
    #             T-reduction axis or set vmem_limit_bytes so v7x's 64 MiB VMEM still fits.
    # TODO(synk): mark the grid-invariant w/bias specs pipeline_mode=pl.Buffered(1) if VMEM
    #             headroom ever matters (it does not at these sizes).

    # --- super-event head (tiny; done in XLA so the ~1.8 MiB sup_mat never enters the kernel)
    sig = jax.nn.sigmoid(params["cls_wts"])                           # (classes,)
    sup3 = params["sup_mat"][0].reshape(classes, C, n)                # sup[k, c*N+i] -> [k,c,i]
    head1 = jnp.einsum("kci,bic->bk", sup3, se_bnc[:, :n, :])         # (B, classes)
    head2 = jnp.einsum("kci,bic->bk", sup3, se_bnc[:, n:, :])
    head = sig[None, :] * head1 + (1.0 - sig)[None, :] * head2        # (B, classes)

    # --- sim_wts bmm: one shared (6,6) matmul each (identical for every (b,c)) ------------
    se_bc6 = jnp.transpose(se_bnc, (0, 2, 1)).reshape(B * C, 2 * n)
    m1 = jnp.tile(params["sim_wts_1"], (1, 3)).reshape(2 * n, 2 * n)
    m2 = jnp.tile(params["sim_wts_2"], (1, 3)).reshape(2 * n, 2 * n)
    super_event_out_1 = (se_bc6 @ m1).reshape(B, -1)
    super_event_out_2 = (se_bc6 @ m2).reshape(B, -1)

    # super_event.unsqueeze(2,3,4) + per_frame(avg_pool(inp[0]))
    cls_bkt = jnp.transpose(cls_btk, (0, 2, 1))                       # (B, classes, T)
    out = head[:, :, None, None, None] + cls_bkt[:, :, :, None, None]
    return out, super_event_out_1, super_event_out_2


# -----------------------------------------------------------------------------------
# Pure-JAX reference (sanity check)
# -----------------------------------------------------------------------------------
def super_event_reference(params, video, lengths):
    B, C, T, H, W = video.shape
    n = N_FILT
    classes = params["sup_mat"].shape[1]
    f1 = tsf_filters(params["tsf1"], lengths, T)
    f2 = tsf_filters(params["tsf2"], lengths, T)
    pooled = video.reshape(B, C, T, H * W).mean(-1)          # (B, C, T)
    se1 = jnp.einsum("bct,bnt->bcn", pooled, f1).reshape(B, C * n)
    se2 = jnp.einsum("bct,bnt->bcn", pooled, f2).reshape(B, C * n)
    stack = jnp.stack([se1, se2], axis=1)                    # (B, 2, C*N)
    sig = jax.nn.sigmoid(params["cls_wts"])
    cls_wts = jnp.stack([sig, 1.0 - sig], axis=1)            # (classes, 2)
    comb = jnp.einsum("kj,bjd->bkd", cls_wts, stack)         # (B, classes, C*N)
    super_event = jnp.sum(params["sup_mat"] * comb, axis=2)  # (B, classes)
    w2d = params["pf_weight"].reshape(classes, C)
    cls = jnp.einsum("kc,bct->bkt", w2d, pooled) + params["pf_bias"][None, :, None]
    out = super_event[:, :, None, None, None] + cls[:, :, :, None, None]
    se_cat = jnp.concatenate([se1.reshape(B, C, n), se2.reshape(B, C, n)], -1).reshape(B * C, 1, 2 * n)
    w1 = jnp.tile(params["sim_wts_1"], (B * C, 1, 3)).reshape(B * C, 6, 6)
    w2 = jnp.tile(params["sim_wts_2"], (B * C, 1, 3)).reshape(B * C, 6, 6)
    return out, jnp.matmul(se_cat, w1).reshape(B, -1), jnp.matmul(se_cat, w2).reshape(B, -1)


if __name__ == "__main__":
    key = jax.random.PRNGKey(0)
    pkey, vkey = jax.random.split(key)
    params = init_params(pkey)

    B, C, T, H, W = 2, CHANNELS, 8, 7, 7
    video = jax.random.normal(vkey, (B, C, T, H, W), jnp.float32)
    lengths = jnp.array([8.0, 6.0], jnp.float32)

    fwd = jax.jit(super_event_forward)
    out, o1, o2 = fwd(params, video, lengths)
    jax.block_until_ready((out, o1, o2))

    ref_out, ref_o1, ref_o2 = jax.jit(super_event_reference)(params, video, lengths)
    assert out.shape == (B, CLASSES, T, 1, 1)
    assert o1.shape == (B, C * 6) and o2.shape == (B, C * 6)
    assert jnp.allclose(out, ref_out, atol=2e-2, rtol=2e-2)
    assert jnp.allclose(o1, ref_o1, atol=2e-2, rtol=2e-2)
    assert jnp.allclose(o2, ref_o2, atol=2e-2, rtol=2e-2)

    print("KERNEL_OK")
</pallas_src>

<mosaic_0001>
module attributes {stable_mosaic.version = 11 : i64} {
  func.func @kernel(%arg0: i32, %arg1: memref<1x14x392xbf16, #tpu.memory_space<vmem>>, %arg2: memref<1x392x1024xbf16, #tpu.memory_space<vmem>>, %arg3: memref<1024x65xbf16, #tpu.memory_space<vmem>>, %arg4: memref<1x65xf32, #tpu.memory_space<vmem>>, %arg5: memref<1x6x1024xf32, #tpu.memory_space<vmem>>, %arg6: memref<1x8x65xf32, #tpu.memory_space<vmem>>) attributes {dimension_semantics = [#tpu.dimension_semantics<parallel>], iteration_bounds = array<i64: 2>, scalar_prefetch = 0 : i64, scratch_operands = 0 : i64, tpu.core_type = #tpu.core_type<tc>, window_params = [{transform_indices = @transform_0, window_bounds = array<i64: 1, 14, 392>}, {transform_indices = @transform_1, window_bounds = array<i64: 1, 392, 1024>}, {pipeline_mode = #tpu.pipeline_mode<synchronous>, transform_indices = @transform_2, window_bounds = array<i64: 1024, 65>}, {pipeline_mode = #tpu.pipeline_mode<synchronous>, transform_indices = @transform_3, window_bounds = array<i64: 1, 65>}, {transform_indices = @transform_4, window_bounds = array<i64: 1, 6, 1024>}, {transform_indices = @transform_5, window_bounds = array<i64: 1, 8, 65>}]} {
    %c0 = arith.constant 0 : index
    %c0_0 = arith.constant 0 : index
    %0 = vector.load %arg3[%c0, %c0_0] : memref<1024x65xbf16, #tpu.memory_space<vmem>>, vector<1024x65xbf16>
    %c0_1 = arith.constant 0 : index
    %c0_2 = arith.constant 0 : index
    %1 = vector.load %arg4[%c0_1, %c0_2] : memref<1x65xf32, #tpu.memory_space<vmem>>, vector<1x65xf32>
    %c0_3 = arith.constant 0 : index
    %c0_4 = arith.constant 0 : index
    %c0_5 = arith.constant 0 : index
    %2 = vector.load %arg1[%c0_3, %c0_4, %c0_5] : memref<1x14x392xbf16, #tpu.memory_space<vmem>>, vector<1x14x392xbf16>
    %3 = vector.shape_cast %2 : vector<1x14x392xbf16> to vector<14x392xbf16>
    %c0_6 = arith.constant 0 : index
    %c0_7 = arith.constant 0 : index
    %c0_8 = arith.constant 0 : index
    %4 = vector.load %arg2[%c0_6, %c0_7, %c0_8] : memref<1x392x1024xbf16, #tpu.memory_space<vmem>>, vector<1x392x1024xbf16>
    %5 = vector.shape_cast %4 : vector<1x392x1024xbf16> to vector<392x1024xbf16>
    %cst = arith.constant dense<0.000000e+00> : vector<14x1024xf32>
    %6 = tpu.matmul %3, %5, %cst {dimension_numbers = #tpu.dot_dimension_numbers<[1], [0], [0], [1], [0, 0, 1, 1], [], []>} : vector<14x392xbf16>, vector<392x1024xbf16>, vector<14x1024xf32> -> vector<14x1024xf32>
    %cst_9 = arith.constant 0.0204081628 : f32
    %7 = vector.broadcast %cst_9 : f32 to vector<14x1024xf32>
    %8 = arith.mulf %6, %7 : vector<14x1024xf32>
    %9 = vector.extract_strided_slice %8 {offsets = [8, 0], sizes = [6, 1024], strides = [1, 1]} : vector<14x1024xf32> to vector<6x1024xf32>
    %c0_10 = arith.constant 0 : index
    %c0_11 = arith.constant 0 : index
    %c0_12 = arith.constant 0 : index
    %10 = vector.load %arg5[%c0_10, %c0_11, %c0_12] : memref<1x6x1024xf32, #tpu.memory_space<vmem>>, vector<1x6x1024xf32>
    %11 = vector.shape_cast %10 : vector<1x6x1024xf32> to vector<6x1024xf32>
    %12 = vector.shape_cast %9 : vector<6x1024xf32> to vector<1x6x1024xf32>
    tpu.vector_store %arg5[%c0_10, %c0_11, %c0_12], %12 {strides = array<i32>} : memref<1x6x1024xf32, #tpu.memory_space<vmem>>, vector<1x6x1024xf32>,
    %13 = vector.extract_strided_slice %8 {offsets = [0, 0], sizes = [8, 1024], strides = [1, 1]} : vector<14x1024xf32> to vector<8x1024xf32>
    %14 = arith.truncf %13 : vector<8x1024xf32> to vector<8x1024xbf16>
    %cst_13 = arith.constant dense<0.000000e+00> : vector<8x65xf32>
    %15 = tpu.matmul %14, %0, %cst_13 {dimension_numbers = #tpu.dot_dimension_numbers<[1], [0], [0], [1], [0, 0, 1, 1], [], []>} : vector<8x1024xbf16>, vector<1024x65xbf16>, vector<8x65xf32> -> vector<8x65xf32>
    %16 = vector.broadcast %1 : vector<1x65xf32> to vector<8x65xf32>
    %17 = arith.addf %15, %16 : vector<8x65xf32>
    %c0_14 = arith.constant 0 : index
    %c0_15 = arith.constant 0 : index
    %c0_16 = arith.constant 0 : index
    %18 = vector.load %arg6[%c0_14, %c0_15, %c0_16] : memref<1x8x65xf32, #tpu.memory_space<vmem>>, vector<1x8x65xf32>
    %19 = vector.shape_cast %18 : vector<1x8x65xf32> to vector<8x65xf32>
    %20 = vector.shape_cast %17 : vector<8x65xf32> to vector<1x8x65xf32>
    tpu.vector_store %arg6[%c0_14, %c0_15, %c0_16], %20 {strides = array<i32>} : memref<1x8x65xf32, #tpu.memory_space<vmem>>, vector<1x8x65xf32>,
    return
  }
  func.func @transform_0(%arg0: i32) -> (i32, i32, i32) {
    %c0_i32 = arith.constant 0 : i32
    %c0_i32_0 = arith.constant 0 : i32
    %c0_i32_1 = arith.constant 0 : i32
    return %arg0, %c0_i32, %c0_i32_0 : i32, i32, i32
  }
  func.func @transform_1(%arg0: i32) -> (i32, i32, i32) {
    %c0_i32 = arith.constant 0 : i32
    %c0_i32_0 = arith.constant 0 : i32
    %c0_i32_1 = arith.constant 0 : i32
    return %arg0, %c0_i32, %c0_i32_0 : i32, i32, i32
  }
  func.func @transform_2(%arg0: i32) -> (i32, i32) {
    %c0_i32 = arith.constant 0 : i32
    %c0_i32_0 = arith.constant 0 : i32
    %c0_i32_1 = arith.constant 0 : i32
    return %c0_i32, %c0_i32_0 : i32, i32
  }
  func.func @transform_3(%arg0: i32) -> (i32, i32) {
    %c0_i32 = arith.constant 0 : i32
    %c0_i32_0 = arith.constant 0 : i32
    %c0_i32_1 = arith.constant 0 : i32
    return %c0_i32, %c0_i32_0 : i32, i32
  }
  func.func @transform_4(%arg0: i32) -> (i32, i32, i32) {
    %c0_i32 = arith.constant 0 : i32
    %c0_i32_0 = arith.constant 0 : i32
    %c0_i32_1 = arith.constant 0 : i32
    return %arg0, %c0_i32, %c0_i32_0 : i32, i32, i32
  }
  func.func @transform_5(%arg0: i32) -> (i32, i32, i32) {
    %c0_i32 = arith.constant 0 : i32
    %c0_i32_0 = arith.constant 0 : i32
    %c0_i32_1 = arith.constant 0 : i32
    return %arg0, %c0_i32, %c0_i32_0 : i32, i32, i32
  }
}

</mosaic_0001>

<llo_original>
// kernel: super_event_forward.1
$region0: #{super_event_forward.1}
  #allocation0 [shape = 'u32[]', space=smem, size = 0x4, offset = 0x4, fixed_abs, tag = 'smem constant byte address 0x4 - core index']
  #allocation1 [shape = 'u32[72,128]{1,0:T(1,128)}', space=vmem, size = 0x9000, scoped, tag = 'internal scratch']
  %s0 = inlined_call_operand.vmem [shape: bf16[2,14,392], index: 0, kind: input, shape index: {}]
  %s1 = inlined_call_operand.vmem [shape: bf16[2,392,1024], index: 1, kind: input, shape index: {}]
  %s2 = inlined_call_operand.vmem [shape: bf16[1024,65], index: 2, kind: input, shape index: {}]
  %s3 = inlined_call_operand.vmem [shape: f32[1,65], index: 3, kind: input, shape index: {}]
  %s4 = inlined_call_operand.vmem [shape: f32[2,6,1024], index: 4, kind: output, shape index: {0}]
  %s5 = inlined_call_operand.vmem [shape: f32[2,8,65], index: 5, kind: output, shape index: {1}]
  %6 = xla_tuple %s4, %s5
  %s7 = sld [smem:[#allocation0]]
  $region57: #{super_event_forward.1} parent=0
    _
  %s9 = ssub.s32 1, %s7
  %s10 = scalar_select 0, %s9, %s7
  loop: start=0, step=1, limit=4
  $region2: #{super_event_forward.1} parent=0 // loop_pre_header
    _
  $region3: #{super_event_forward.1} parent=0 // loop_header
    %s12 = sphi 0, %s16
    %p13 = scmp.ge.s32.totalorder %s12, 4
    %s22 = sphi 0, %s24
    %s25 = sphi 0, %s22
    %s26 = sphi 0, %s25
    %s42 = sphi 0, %s26
    %s48 = sphi 0, %s50
    %s51 = sphi 0, %s48
    %s52 = sphi 0, %s51
    %s68 = sphi 0, %s52
    %s72 = sphi 0, %s72
    %s74 = sphi 0, %s72
    %s75 = sphi 0, %s74
    %s89 = sphi 0, %s75
    %s93 = sphi 0, %s93
    %s95 = sphi 0, %s93
    %s96 = sphi 0, %s95
    %s110 = sphi 0, %s96
    %s116 = sphi 0, %s118
    %s119 = sphi 0, %s116
    %s120 = sphi 0, %s119
    %s136 = sphi 0, %s120
    %s142 = sphi 0, %s144
    %s145 = sphi 0, %s142
    %s146 = sphi 0, %s145
    %s162 = sphi 0, %s146
  $region4: #{super_event_forward.1} parent=0 // loop_header_branch
    %15 = sbr.rel (%p13) target = $region8
  $region5: #{super_event_forward.1} parent=0 // loop_body
    %s17 = ssub.s32 %s12, 1
    %s18 = ssub.s32 %s12, 2
    %s19 = sadd.s32 %s12, 1
    %s20 = ssub.s32 %s12, %s19
    %p21 = scmp.eq.s32.totalorder %s20, 0
    %s23 = sadd.s32 %s22, 1
    %s24 = scalar_select %p21, %s22, %s23
    %p27 = pneg %p21
    %p28 = scmp.eq.s32.totalorder %s12, 1
    %p29 = por %p27, %p28
    %p30 = scmp.ne.s32.totalorder %s22, %s25
    %p31 = scmp.eq.s32.totalorder %s12, 0
    %p32 = por %p30, %p31
    %p33 = scmp.ne.s32.totalorder %s22, %s25
    %p34 = scmp.eq.s32.totalorder %s17, 1
    %p35 = por %p33, %p34
    %p36 = scmp.ne.s32.totalorder %s25, %s26
    %p37 = scmp.eq.s32.totalorder %s17, 0
    %p38 = por %p36, %p37
    %p39 = scmp.ne.s32.totalorder %s25, %s26
    %p40 = scmp.eq.s32.totalorder %s18, 1
    %p41 = por %p39, %p40
    %p43 = scmp.ne.s32.totalorder %s26, %s42
    %p44 = scmp.eq.s32.totalorder %s18, 0
    %p45 = por %p43, %p44
    %s46 = ssub.s32 %s12, %s19
    %p47 = scmp.eq.s32.totalorder %s46, 0
    %s49 = sadd.s32 %s48, 1
    %s50 = scalar_select %p47, %s48, %s49
    %p53 = pneg %p47
    %p54 = scmp.eq.s32.totalorder %s12, 1
    %p55 = por %p53, %p54
    %p56 = scmp.ne.s32.totalorder %s48, %s51
    %p57 = scmp.eq.s32.totalorder %s12, 0
    %p58 = por %p56, %p57
    %p59 = scmp.ne.s32.totalorder %s48, %s51
    %p60 = scmp.eq.s32.totalorder %s17, 1
    %p61 = por %p59, %p60
    %p62 = scmp.ne.s32.totalorder %s51, %s52
    %p63 = scmp.eq.s32.totalorder %s17, 0
    %p64 = por %p62, %p63
    %p65 = scmp.ne.s32.totalorder %s51, %s52
    %p66 = scmp.eq.s32.totalorder %s18, 1
    %p67 = por %p65, %p66
    %p69 = scmp.ne.s32.totalorder %s52, %s68
    %p70 = scmp.eq.s32.totalorder %s18, 0
    %p71 = por %p69, %p70
    %s73 = sadd.s32 %s72, 1
    %p76 = scmp.eq.s32.totalorder %s12, 1
    %p77 = scmp.ne.s32.totalorder %s72, %s74
    %p78 = scmp.eq.s32.totalorder %s12, 0
    %p79 = por %p77, %p78
    %p80 = scmp.ne.s32.totalorder %s72, %s74
    %p81 = scmp.eq.s32.totalorder %s17, 1
    %p82 = por %p80, %p81
    %p83 = scmp.ne.s32.totalorder %s74, %s75
    %p84 = scmp.eq.s32.totalorder %s17, 0
    %p85 = por %p83, %p84
    %p86 = scmp.ne.s32.totalorder %s74, %s75
    %p87 = scmp.eq.s32.totalorder %s18, 1
    %p88 = por %p86, %p87
    %p90 = scmp.ne.s32.totalorder %s75, %s89
    %p91 = scmp.eq.s32.totalorder %s18, 0
    %p92 = por %p90, %p91
    %s94 = sadd.s32 %s93, 1
    %p97 = scmp.eq.s32.totalorder %s12, 1
    %p98 = scmp.ne.s32.totalorder %s93, %s95
    %p99 = scmp.eq.s32.totalorder %s12, 0
    %p100 = por %p98, %p99
    %p101 = scmp.ne.s32.totalorder %s93, %s95
    %p102 = scmp.eq.s32.totalorder %s17, 1
    %p103 = por %p101, %p102
    %p104 = scmp.ne.s32.totalorder %s95, %s96
    %p105 = scmp.eq.s32.totalorder %s17, 0
    %p106 = por %p104, %p105
    %p107 = scmp.ne.s32.totalorder %s95, %s96
    %p108 = scmp.eq.s32.totalorder %s18, 1
    %p109 = por %p107, %p108
    %p111 = scmp.ne.s32.totalorder %s96, %s110
    %p112 = scmp.eq.s32.totalorder %s18, 0
    %p113 = por %p111, %p112
    %s114 = ssub.s32 %s12, %s19
    %p115 = scmp.eq.s32.totalorder %s114, 0
    %s117 = sadd.s32 %s116, 1
    %s118 = scalar_select %p115, %s116, %s117
    %p121 = pneg %p115
    %p122 = scmp.eq.s32.totalorder %s12, 1
    %p123 = por %p121, %p122
    %p124 = scmp.ne.s32.totalorder %s116, %s119
    %p125 = scmp.eq.s32.totalorder %s12, 0
    %p126 = por %p124, %p125
    %p127 = scmp.ne.s32.totalorder %s116, %s119
    %p128 = scmp.eq.s32.totalorder %s17, 1
    %p129 = por %p127, %p128
    %p130 = scmp.ne.s32.totalorder %s119, %s120
    %p131 = scmp.eq.s32.totalorder %s17, 0
    %p132 = por %p130, %p131
    %p133 = scmp.ne.s32.totalorder %s119, %s120
    %p134 = scmp.eq.s32.totalorder %s18, 1
    %p135 = por %p133, %p134
    %p137 = scmp.ne.s32.totalorder %s120, %s136
    %p138 = scmp.eq.s32.totalorder %s18, 0
    %p139 = por %p137, %p138
    %s140 = ssub.s32 %s12, %s19
    %p141 = scmp.eq.s32.totalorder %s140, 0
    %s143 = sadd.s32 %s142, 1
    %s144 = scalar_select %p141, %s142, %s143
    %p147 = pneg %p141
    %p148 = scmp.eq.s32.totalorder %s12, 1
    %p149 = por %p147, %p148
    %p150 = scmp.ne.s32.totalorder %s142, %s145
    %p151 = scmp.eq.s32.totalorder %s12, 0
    %p152 = por %p150, %p151
    %p153 = scmp.ne.s32.totalorder %s142, %s145
    %p154 = scmp.eq.s32.totalorder %s17, 1
    %p155 = por %p153, %p154
    %p156 = scmp.ne.s32.totalorder %s145, %s146
    %p157 = scmp.eq.s32.totalorder %s17, 0
    %p158 = por %p156, %p157
    %p159 = scmp.ne.s32.totalorder %s145, %s146
    %p160 = scmp.eq.s32.totalorder %s18, 1
    %p161 = por %p159, %p160
    %p163 = scmp.ne.s32.totalorder %s146, %s162
    %p164 = scmp.eq.s32.totalorder %s18, 0
    %p165 = por %p163, %p164
    %p166 = scmp.le.s32.totalorder 1, %s12
    %p167 = scmp.lt.s32.totalorder %s12, 3
    %p168 = pnand %p166, %p167
    %p169 = pneg %p168
    // Predicated region
    $region9: #{super_event_forward.1} parent=5 // pred_check
      _
    $region10: #{super_event_forward.1} parent=5 // pred_check_branch
      %171 = sbr.rel (%p168) target = $region12
    $region11: #{super_event_forward.1} parent=5 // pred_region
      %s172 = ssub.s32 %s12, 1
      // Predicated region
      $region13: #{super_event_forward.1} parent=11 // pred_check
        %p173 = pneg %p85
      $region14: #{super_event_forward.1} parent=11 // pred_check_branch
        %175 = sbr.rel (%p173) target = $region16
      $region15: #{super_event_forward.1} parent=11 // pred_region
        _
      $region16: #{super_event_forward.1} parent=11 // pred_fallthru
        _
      // Predicated region
      $region17: #{super_event_forward.1} parent=11 // pred_check
        %p176 = pneg %p106
      $region18: #{super_event_forward.1} parent=11 // pred_check_branch
        %178 = sbr.rel (%p176) target = $region20
      $region19: #{super_event_forward.1} parent=11 // pred_region
        _
      $region20: #{super_event_forward.1} parent=11 // pred_fallthru
        _
    $region12: #{super_event_forward.1} parent=5 // pred_fallthru
      _
    %p179 = scmp.lt.s32.totalorder %s12, 2
    // Predicated region
    $region21: #{super_event_forward.1} parent=5 // pred_check
      %p180 = pneg %p179
    $region22: #{super_event_forward.1} parent=5 // pred_check_branch
      %182 = sbr.rel (%p180) target = $region24
    $region23: #{super_event_forward.1} parent=5 // pred_region
      // Predicated region
      $region25: #{super_event_forward.1} parent=23 // pred_check
        %p183 = pneg %p32
      $region26: #{super_event_forward.1} parent=23 // pred_check_branch
        %185 = sbr.rel (%p183) target = $region28
      $region27: #{super_event_forward.1} parent=23 // pred_region
        %p186 = scmp.lt.s32.totalorder %s12, 1
        %s187 = scalar_select %p186, %s12, 1
        %s188 = smul.addr %s187, 8
        %s189 = smul.addr %s188, 4
        %s190 = scalar_lea.vmem %s0, %s189
      $region28: #{super_event_forward.1} parent=23 // pred_fallthru
        _
      // Predicated region
      $region29: #{super_event_forward.1} parent=23 // pred_check
        %p191 = pneg %p58
      $region30: #{super_event_forward.1} parent=23 // pred_check_branch
        %193 = sbr.rel (%p191) target = $region32
      $region31: #{super_event_forward.1} parent=23 // pred_region
        %p194 = scmp.lt.s32.totalorder %s12, 1
        %s195 = scalar_select %p194, %s12, 1
        %s196 = smul.addr %s195, 392
        %s197 = smul.addr %s196, 4
        %s198 = scalar_lea.vmem %s1, %s197
      $region32: #{super_event_forward.1} parent=23 // pred_fallthru
        _
    $region24: #{super_event_forward.1} parent=5 // pred_fallthru
      _
    %p199 = scmp.le.s32.totalorder 1, %s12
    %p200 = scmp.lt.s32.totalorder %s12, 3
    %p201 = pnand %p199, %p200
    %p202 = pneg %p201
    // Predicated region
    $region33: #{super_event_forward.1} parent=5 // pred_check
      _
    $region34: #{super_event_forward.1} parent=5 // pred_check_branch
      %204 = sbr.rel (%p201) target = $region36
    $region35: #{super_event_forward.1} parent=5 // pred_region
      %s205 = ssub.s32 %s12, 1
      %p206 = scmp.lt.s32.totalorder %s17, 1
      %s207 = scalar_select %p206, %s17, 1
      %s208 = smul.addr %s207, 8
      %s209 = smul.addr %s208, 4
      %s210 = scalar_lea.vmem %s0, %s209
      %p211 = pneg %p38
      %p212 = pneg %p35
      %p213 = scmp.lt.s32.totalorder %s17, 1
      %s214 = scalar_select %p213, %s17, 1
      %s215 = smul.addr %s214, 392
      %s216 = smul.addr %s215, 4
      %s217 = scalar_lea.vmem %s1, %s216
      %p218 = pneg %p64
      %p219 = pneg %p61
      %p220 = pneg %p85
      %p221 = pneg %p82
      %p222 = pneg %p106
      %p223 = pneg %p103
      %p224 = pneg %p132
      %p225 = pneg %p129
      %p226 = scmp.lt.s32.totalorder %s17, 1
      %s227 = scalar_select %p226, %s17, 1
      %s228 = smul.addr %s227, 8
      %s229 = smul.addr %s228, 8
      %s230 = scalar_lea.vmem %s4, %s229
      %p231 = pneg %p158
      %p232 = pneg %p155
      %p233 = scmp.lt.s32.totalorder %s17, 1
      %s234 = scalar_select %p233, %s17, 1
      %s235 = smul.addr %s234, 8
      %s236 = scalar_lea.vmem %s5, %s235
      %p237 = scmp.lt.s32.totalorder %s17, 1
      %s238 = scalar_select %p237, %s17, 1
      %s239 = smul.addr %s238, 8
      %s240 = smul.addr %s239, 4
      %s241 = scalar_lea.vmem %s0, %s240
      %p242 = scmp.lt.s32.totalorder %s17, 1
      %s243 = scalar_select %p242, %s17, 1
      %s244 = smul.addr %s243, 392
      %s245 = smul.addr %s244, 4
      %s246 = scalar_lea.vmem %s1, %s245
      %p247 = scmp.lt.s32.totalorder %s17, 1
      %s248 = scalar_select %p247, %s17, 1
      %s249 = smul.addr %s248, 8
      %s250 = smul.addr %s249, 8
      %s251 = scalar_lea.vmem %s4, %s250
      %p252 = scmp.lt.s32.totalorder %s17, 1
      %s253 = scalar_select %p252, %s17, 1
      %s254 = smul.addr %s253, 8
      %s255 = scalar_lea.vmem %s5, %s254
      %v257 = vld [vmem:[%s2] sm:$0xf]
      %v258 = vld [vmem:[%s2 + $0x4] sm:$0xf]
      %v259 = vld [vmem:[%s2 + $0x8] sm:$0xf]
      %v260 = vld [vmem:[%s2 + $0xc] sm:$0xf]
      %v261 = vld [vmem:[%s2 + $0x10] sm:$0xf]
      %v262 = vld [vmem:[%s2 + $0x14] sm:$0xf]
      %v263 = vld [vmem:[%s2 + $0x18] sm:$0xf]
      %v264 = vld [vmem:[%s2 + $0x1c] sm:$0xf]
      %v265 = vld [vmem:[%s2 + $0x20] sm:$0xf]
      %v266 = vld [vmem:[%s2 + $0x24] sm:$0xf]
      %v267 = vld [vmem:[%s2 + $0x28] sm:$0xf]
      %v268 = vld [vmem:[%s2 + $0x2c] sm:$0xf]
      %v269 = vld [vmem:[%s2 + $0x30] sm:$0xf]
      %v270 = vld [vmem:[%s2 + $0x34] sm:$0xf]
      %v271 = vld [vmem:[%s2 + $0x38] sm:$0xf]
      %v272 = vld [vmem:[%s2 + $0x3c] sm:$0xf]
      %v273 = vld [vmem:[%s2 + $0x40] sm:$0xf]
      %v274 = vld [vmem:[%s2 + $0x44] sm:$0xf]
      %v275 = vld [vmem:[%s2 + $0x48] sm:$0xf]
      %v276 = vld [vmem:[%s2 + $0x4c] sm:$0xf]
      %v277 = vld [vmem:[%s2 + $0x50] sm:$0xf]
      %v278 = vld [vmem:[%s2 + $0x54] sm:$0xf]
      %v279 = vld [vmem:[%s2 + $0x58] sm:$0xf]
      %v280 = vld [vmem:[%s2 + $0x5c] sm:$0xf]
      %v281 = vld [vmem:[%s2 + $0x60] sm:$0xf]
      %v282 = vld [vmem:[%s2 + $0x64] sm:$0xf]
      %v283 = vld [vmem:[%s2 + $0x68] sm:$0xf]
      %v284 = vld [vmem:[%s2 + $0x6c] sm:$0xf]
      %v285 = vld [vmem:[%s2 + $0x70] sm:$0xf]
      %v286 = vld [vmem:[%s2 + $0x74] sm:$0xf]
      %v287 = vld [vmem:[%s2 + $0x78] sm:$0xf]
      %v288 = vld [vmem:[%s2 + $0x7c] sm:$0xf]
      %v289 = vld [vmem:[%s2 + $0x80] sm:$0xf]
      %v290 = vld [vmem:[%s2 + $0x84] sm:$0xf]
      %v291 = vld [vmem:[%s2 + $0x88] sm:$0xf]
      %v292 = vld [vmem:[%s2 + $0x8c] sm:$0xf]
      %v293 = vld [vmem:[%s2 + $0x90] sm:$0xf]
      %v294 = vld [vmem:[%s2 + $0x94] sm:$0xf]
      %v295 = vld [vmem:[%s2 + $0x98] sm:$0xf]
      %v296 = vld [vmem:[%s2 + $0x9c] sm:$0xf]
      %v297 = vld [vmem:[%s2 + $0xa0] sm:$0xf]
      %v298 = vld [vmem:[%s2 + $0xa4] sm:$0xf]
      %v299 = vld [vmem:[%s2 + $0xa8] sm:$0xf]
      %v300 = vld [vmem:[%s2 + $0xac] sm:$0xf]
      %v301 = vld [vmem:[%s2 + $0xb0] sm:$0xf]
      %v302 = vld [vmem:[%s2 + $0xb4] sm:$0xf]
      %v303 = vld [vmem:[%s2 + $0xb8] sm:$0xf]
      %v304 = vld [vmem:[%s2 + $0xbc] sm:$0xf]
      %v305 = vld [vmem:[%s2 + $0xc0] sm:$0xf]
      %v306 = vld [vmem:[%s2 + $0xc4] sm:$0xf]
      %v307 = vld [vmem:[%s2 + $0xc8] sm:$0xf]
      %v308 = vld [vmem:[%s2 + $0xcc] sm:$0xf]
      %v309 = vld [vmem:[%s2 + $0xd0] sm:$0xf]
      %v310 = vld [vmem:[%s2 + $0xd4] sm:$0xf]
      %v311 = vld [vmem:[%s2 + $0xd8] sm:$0xf]
      %v312 = vld [vmem:[%s2 + $0xdc] sm:$0xf]
      %v313 = vld [vmem:[%s2 + $0xe0] sm:$0xf]
      %v314 = vld [vmem:[%s2 + $0xe4] sm:$0xf]
      %v315 = vld [vmem:[%s2 + $0xe8] sm:$0xf]
      %v316 = vld [vmem:[%s2 + $0xec] sm:$0xf]
      %v317 = vld [vmem:[%s2 + $0xf0] sm:$0xf]
      %v318 = vld [vmem:[%s2 + $0xf4] sm:$0xf]
      %v319 = vld [vmem:[%s2 + $0xf8] sm:$0xf]
      %v320 = vld [vmem:[%s2 + $0xfc] sm:$0xf]
      %v321 = vld [vmem:[%s2 + $0x100] sm:$0xf]
      %v322 = vld [vmem:[%s2 + $0x104] sm:$0xf]
      %v323 = vld [vmem:[%s2 + $0x108] sm:$0xf]
      %v324 = vld [vmem:[%s2 + $0x10c] sm:$0xf]
      %v325 = vld [vmem:[%s2 + $0x110] sm:$0xf]
      %v326 = vld [vmem:[%s2 + $0x114] sm:$0xf]
      %v327 = vld [vmem:[%s2 + $0x118] sm:$0xf]
      %v328 = vld [vmem:[%s2 + $0x11c] sm:$0xf]
      %v329 = vld [vmem:[%s2 + $0x120] sm:$0xf]
      %v330 = vld [vmem:[%s2 + $0x124] sm:$0xf]
      %v331 = vld [vmem:[%s2 + $0x128] sm:$0xf]
      %v332 = vld [vmem:[%s2 + $0x12c] sm:$0xf]
      %v333 = vld [vmem:[%s2 + $0x130] sm:$0xf]
      %v334 = vld [vmem:[%s2 + $0x134] sm:$0xf]
      %v335 = vld [vmem:[%s2 + $0x138] sm:$0xf]
      %v336 = vld [vmem:[%s2 + $0x13c] sm:$0xf]
      %v337 = vld [vmem:[%s2 + $0x140] sm:$0xf]
      %v338 = vld [vmem:[%s2 + $0x144] sm:$0xf]
      %v339 = vld [vmem:[%s2 + $0x148] sm:$0xf]
      %v340 = vld [vmem:[%s2 + $0x14c] sm:$0xf]
      %v341 = vld [vmem:[%s2 + $0x150] sm:$0xf]
      %v342 = vld [vmem:[%s2 + $0x154] sm:$0xf]
      %v343 = vld [vmem:[%s2 + $0x158] sm:$0xf]
      %v344 = vld [vmem:[%s2 + $0x15c] sm:$0xf]
      %v345 = vld [vmem:[%s2 + $0x160] sm:$0xf]
      %v346 = vld [vmem:[%s2 + $0x164] sm:$0xf]
      %v347 = vld [vmem:[%s2 + $0x168] sm:$0xf]
      %v348 = vld [vmem:[%s2 + $0x16c] sm:$0xf]
      %v349 = vld [vmem:[%s2 + $0x170] sm:$0xf]
      %v350 = vld [vmem:[%s2 + $0x174] sm:$0xf]
      %v351 = vld [vmem:[%s2 + $0x178] sm:$0xf]
      %v352 = vld [vmem:[%s2 + $0x17c] sm:$0xf]
      %v353 = vld [vmem:[%s2 + $0x180] sm:$0xf]
      %v354 = vld [vmem:[%s2 + $0x184] sm:$0xf]
      %v355 = vld [vmem:[%s2 + $0x188] sm:$0xf]
      %v356 = vld [vmem:[%s2 + $0x18c] sm:$0xf]
      %v357 = vld [vmem:[%s2 + $0x190] sm:$0xf]
      %v358 = vld [vmem:[%s2 + $0x194] sm:$0xf]
      %v359 = vld [vmem:[%s2 + $0x198] sm:$0xf]
      %v360 = vld [vmem:[%s2 + $0x19c] sm:$0xf]
      %v361 = vld [vmem:[%s2 + $0x1a0] sm:$0xf]
      %v362 = vld [vmem:[%s2 + $0x1a4] sm:$0xf]
      %v363 = vld [vmem:[%s2 + $0x1a8] sm:$0xf]
      %v364 = vld [vmem:[%s2 + $0x1ac] sm:$0xf]
      %v365 = vld [vmem:[%s2 + $0x1b0] sm:$0xf]
      %v366 = vld [vmem:[%s2 + $0x1b4] sm:$0xf]
      %v367 = vld [vmem:[%s2 + $0x1b8] sm:$0xf]
      %v368 = vld [vmem:[%s2 + $0x1bc] sm:$0xf]
      %v369 = vld [vmem:[%s2 + $0x1c0] sm:$0xf]
      %v370 = vld [vmem:[%s2 + $0x1c4] sm:$0xf]
      %v371 = vld [vmem:[%s2 + $0x1c8] sm:$0xf]
      %v372 = vld [vmem:[%s2 + $0x1cc] sm:$0xf]
      %v373 = vld [vmem:[%s2 + $0x1d0] sm:$0xf]
      %v374 = vld [vmem:[%s2 + $0x1d4] sm:$0xf]
      %v375 = vld [vmem:[%s2 + $0x1d8] sm:$0xf]
      %v376 = vld [vmem:[%s2 + $0x1dc] sm:$0xf]
      %v377 = vld [vmem:[%s2 + $0x1e0] sm:$0xf]
      %v378 = vld [vmem:[%s2 + $0x1e4] sm:$0xf]
      %v379 = vld [vmem:[%s2 + $0x1e8] sm:$0xf]
      %v380 = vld [vmem:[%s2 + $0x1ec] sm:$0xf]
      %v381 = vld [vmem:[%s2 + $0x1f0] sm:$0xf]
      %v382 = vld [vmem:[%s2 + $0x1f4] sm:$0xf]
      %v383 = vld [vmem:[%s2 + $0x1f8] sm:$0xf]
      %v384 = vld [vmem:[%s2 + $0x1fc] sm:$0xf]
      %v385 = vld [vmem:[%s3] sm:$0x1]
      %v386 = vld [vmem:[%s241] sm:$0xff]
      %v387 = vld [vmem:[%s241 + $0x8] sm:$0xff]
      %v388 = vld [vmem:[%s241 + $0x10] sm:$0x77]
      %v389 = vld [vmem:[%s241 + $0x18] sm:$0x77]
      %v390 = vld [vmem:[%s246] sm:$0xff]
      %v391 = vld [vmem:[%s246 + $0x8] sm:$0xff]
      %v392 = vld [vmem:[%s246 + $0x10] sm:$0xff]
      %v393 = vld [vmem:[%s246 + $0x18] sm:$0xff]
      %v394 = vld [vmem:[%s246 + $0x20] sm:$0xff]
      %v395 = vld [vmem:[%s246 + $0x28] sm:$0xff]
      %v396 = vld [vmem:[%s246 + $0x30] sm:$0xff]
      %v397 = vld [vmem:[%s246 + $0x38] sm:$0xff]
      %v398 = vld [vmem:[%s246 + $0x40] sm:$0xff]
      %v399 = vld [vmem:[%s246 + $0x48] sm:$0xff]
      %v400 = vld [vmem:[%s246 + $0x50] sm:$0xff]
      %v401 = vld [vmem:[%s246 + $0x58] sm:$0xff]
      %v402 = vld [vmem:[%s246 + $0x60] sm:$0xff]
      %v403 = vld [vmem:[%s246 + $0x68] sm:$0xff]
      %v404 = vld [vmem:[%s246 + $0x70] sm:$0xff]
      %v405 = vld [vmem:[%s246 + $0x78] sm:$0xff]
      %v406 = vld [vmem:[%s246 + $0x80] sm:$0xff]
      %v407 = vld [vmem:[%s246 + $0x88] sm:$0xff]
      %v408 = vld [vmem:[%s246 + $0x90] sm:$0xff]
      %v409 = vld [vmem:[%s246 + $0x98] sm:$0xff]
      %v410 = vld [vmem:[%s246 + $0xa0] sm:$0xff]
      %v411 = vld [vmem:[%s246 + $0xa8] sm:$0xff]
      %v412 = vld [vmem:[%s246 + $0xb0] sm:$0xff]
      %v413 = vld [vmem:[%s246 + $0xb8] sm:$0xff]
      %v414 = vld [vmem:[%s246 + $0xc0] sm:$0xff]
      %v415 = vld [vmem:[%s246 + $0xc8] sm:$0xff]
      %v416 = vld [vmem:[%s246 + $0xd0] sm:$0xff]
      %v417 = vld [vmem:[%s246 + $0xd8] sm:$0xff]
      %v418 = vld [vmem:[%s246 + $0xe0] sm:$0xff]
      %v419 = vld [vmem:[%s246 + $0xe8] sm:$0xff]
      %v420 = vld [vmem:[%s246 + $0xf0] sm:$0xff]
      %v421 = vld [vmem:[%s246 + $0xf8] sm:$0xff]
      %v422 = vld [vmem:[%s246 + $0x100] sm:$0xff]
      %v423 = vld [vmem:[%s246 + $0x108] sm:$0xff]
      %v424 = vld [vmem:[%s246 + $0x110] sm:$0xff]
      %v425 = vld [vmem:[%s246 + $0x118] sm:$0xff]
      %v426 = vld [vmem:[%s246 + $0x120] sm:$0xff]
      %v427 = vld [vmem:[%s246 + $0x128] sm:$0xff]
      %v428 = vld [vmem:[%s246 + $0x130] sm:$0xff]
      %v429 = vld [vmem:[%s246 + $0x138] sm:$0xff]
      %v430 = vld [vmem:[%s246 + $0x140] sm:$0xff]
      %v431 = vld [vmem:[%s246 + $0x148] sm:$0xff]
      %v432 = vld [vmem:[%s246 + $0x150] sm:$0xff]
      %v433 = vld [vmem:[%s246 + $0x158] sm:$0xff]
      %v434 = vld [vmem:[%s246 + $0x160] sm:$0xff]
      %v435 = vld [vmem:[%s246 + $0x168] sm:$0xff]
      %v436 = vld [vmem:[%s246 + $0x170] sm:$0xff]
      %v437 = vld [vmem:[%s246 + $0x178] sm:$0xff]
      %v438 = vld [vmem:[%s246 + $0x180] sm:$0xff]
      %v439 = vld [vmem:[%s246 + $0x188] sm:$0xff]
      %v440 = vld [vmem:[%s246 + $0x190] sm:$0xff]
      %v441 = vld [vmem:[%s246 + $0x198] sm:$0xff]
      %v442 = vld [vmem:[%s246 + $0x1a0] sm:$0xff]
      %v443 = vld [vmem:[%s246 + $0x1a8] sm:$0xff]
      %v444 = vld [vmem:[%s246 + $0x1b0] sm:$0xff]
      %v445 = vld [vmem:[%s246 + $0x1b8] sm:$0xff]
      %v446 = vld [vmem:[%s246 + $0x1c0] sm:$0xff]
      %v447 = vld [vmem:[%s246 + $0x1c8] sm:$0xff]
      %v448 = vld [vmem:[%s246 + $0x1d0] sm:$0xff]
      %v449 = vld [vmem:[%s246 + $0x1d8] sm:$0xff]
      %v450 = vld [vmem:[%s246 + $0x1e0] sm:$0xff]
      %v451 = vld [vmem:[%s246 + $0x1e8] sm:$0xff]
      %v452 = vld [vmem:[%s246 + $0x1f0] sm:$0xff]
      %v453 = vld [vmem:[%s246 + $0x1f8] sm:$0xff]
      %v454 = vld [vmem:[%s246 + $0x200] sm:$0xff]
      %v455 = vld [vmem:[%s246 + $0x208] sm:$0xff]
      %v456 = vld [vmem:[%s246 + $0x210] sm:$0xff]
      %v457 = vld [vmem:[%s246 + $0x218] sm:$0xff]
      %v458 = vld [vmem:[%s246 + $0x220] sm:$0xff]
      %v459 = vld [vmem:[%s246 + $0x228] sm:$0xff]
      %v460 = vld [vmem:[%s246 + $0x230] sm:$0xff]
      %v461 = vld [vmem:[%s246 + $0x238] sm:$0xff]
      %v462 = vld [vmem:[%s246 + $0x240] sm:$0xff]
      %v463 = vld [vmem:[%s246 + $0x248] sm:$0xff]
      %v464 = vld [vmem:[%s246 + $0x250] sm:$0xff]
      %v465 = vld [vmem:[%s246 + $0x258] sm:$0xff]
      %v466 = vld [vmem:[%s246 + $0x260] sm:$0xff]
      %v467 = vld [vmem:[%s246 + $0x268] sm:$0xff]
      %v468 = vld [vmem:[%s246 + $0x270] sm:$0xff]
      %v469 = vld [vmem:[%s246 + $0x278] sm:$0xff]
      %v470 = vld [vmem:[%s246 + $0x280] sm:$0xff]
      %v471 = vld [vmem:[%s246 + $0x288] sm:$0xff]
      %v472 = vld [vmem:[%s246 + $0x290] sm:$0xff]
      %v473 = vld [vmem:[%s246 + $0x298] sm:$0xff]
      %v474 = vld [vmem:[%s246 + $0x2a0] sm:$0xff]
      %v475 = vld [vmem:[%s246 + $0x2a8] sm:$0xff]
      %v476 = vld [vmem:[%s246 + $0x2b0] sm:$0xff]
      %v477 = vld [vmem:[%s246 + $0x2b8] sm:$0xff]
      %v478 = vld [vmem:[%s246 + $0x2c0] sm:$0xff]
      %v479 = vld [vmem:[%s246 + $0x2c8] sm:$0xff]
      %v480 = vld [vmem:[%s246 + $0x2d0] sm:$0xff]
      %v481 = vld [vmem:[%s246 + $0x2d8] sm:$0xff]
      %v482 = vld [vmem:[%s246 + $0x2e0] sm:$0xff]
      %v483 = vld [vmem:[%s246 + $0x2e8] sm:$0xff]
      %v484 = vld [vmem:[%s246 + $0x2f0] sm:$0xff]
      %v485 = vld [vmem:[%s246 + $0x2f8] sm:$0xff]
      %v486 = vld [vmem:[%s246 + $0x300] sm:$0xff]
      %v487 = vld [vmem:[%s246 + $0x308] sm:$0xff]
      %v488 = vld [vmem:[%s246 + $0x310] sm:$0xff]
      %v489 = vld [vmem:[%s246 + $0x318] sm:$0xff]
      %v490 = vld [vmem:[%s246 + $0x320] sm:$0xff]
      %v491 = vld [vmem:[%s246 + $0x328] sm:$0xff]
      %v492 = vld [vmem:[%s246 + $0x330] sm:$0xff]
      %v493 = vld [vmem:[%s246 + $0x338] sm:$0xff]
      %v494 = vld [vmem:[%s246 + $0x340] sm:$0xff]
      %v495 = vld [vmem:[%s246 + $0x348] sm:$0xff]
      %v496 = vld [vmem:[%s246 + $0x350] sm:$0xff]
      %v497 = vld [vmem:[%s246 + $0x358] sm:$0xff]
      %v498 = vld [vmem:[%s246 + $0x360] sm:$0xff]
      %v499 = vld [vmem:[%s246 + $0x368] sm:$0xff]
      %v500 = vld [vmem:[%s246 + $0x370] sm:$0xff]
      %v501 = vld [vmem:[%s246 + $0x378] sm:$0xff]
      %v502 = vld [vmem:[%s246 + $0x380] sm:$0xff]
      %v503 = vld [vmem:[%s246 + $0x388] sm:$0xff]
      %v504 = vld [vmem:[%s246 + $0x390] sm:$0xff]
      %v505 = vld [vmem:[%s246 + $0x398] sm:$0xff]
      %v506 = vld [vmem:[%s246 + $0x3a0] sm:$0xff]
      %v507 = vld [vmem:[%s246 + $0x3a8] sm:$0xff]
      %v508 = vld [vmem:[%s246 + $0x3b0] sm:$0xff]
      %v509 = vld [vmem:[%s246 + $0x3b8] sm:$0xff]
      %v510 = vld [vmem:[%s246 + $0x3c0] sm:$0xff]
      %v511 = vld [vmem:[%s246 + $0x3c8] sm:$0xff]
      %v512 = vld [vmem:[%s246 + $0x3d0] sm:$0xff]
      %v513 = vld [vmem:[%s246 + $0x3d8] sm:$0xff]
      %v514 = vld [vmem:[%s246 + $0x3e0] sm:$0xff]
      %v515 = vld [vmem:[%s246 + $0x3e8] sm:$0xff]
      %v516 = vld [vmem:[%s246 + $0x3f0] sm:$0xff]
      %v517 = vld [vmem:[%s246 + $0x3f8] sm:$0xff]
      %v518 = vld [vmem:[%s246 + $0x400] sm:$0xff]
      %v519 = vld [vmem:[%s246 + $0x408] sm:$0xff]
      %v520 = vld [vmem:[%s246 + $0x410] sm:$0xff]
      %v521 = vld [vmem:[%s246 + $0x418] sm:$0xff]
      %v522 = vld [vmem:[%s246 + $0x420] sm:$0xff]
      %v523 = vld [vmem:[%s246 + $0x428] sm:$0xff]
      %v524 = vld [vmem:[%s246 + $0x430] sm:$0xff]
      %v525 = vld [vmem:[%s246 + $0x438] sm:$0xff]
      %v526 = vld [vmem:[%s246 + $0x440] sm:$0xff]
      %v527 = vld [vmem:[%s246 + $0x448] sm:$0xff]
      %v528 = vld [vmem:[%s246 + $0x450] sm:$0xff]
      %v529 = vld [vmem:[%s246 + $0x458] sm:$0xff]
      %v530 = vld [vmem:[%s246 + $0x460] sm:$0xff]
      %v531 = vld [vmem:[%s246 + $0x468] sm:$0xff]
      %v532 = vld [vmem:[%s246 + $0x470] sm:$0xff]
      %v533 = vld [vmem:[%s246 + $0x478] sm:$0xff]
      %v534 = vld [vmem:[%s246 + $0x480] sm:$0xff]
      %v535 = vld [vmem:[%s246 + $0x488] sm:$0xff]
      %v536 = vld [vmem:[%s246 + $0x490] sm:$0xff]
      %v537 = vld [vmem:[%s246 + $0x498] sm:$0xff]
      %v538 = vld [vmem:[%s246 + $0x4a0] sm:$0xff]
      %v539 = vld [vmem:[%s246 + $0x4a8] sm:$0xff]
      %v540 = vld [vmem:[%s246 + $0x4b0] sm:$0xff]
      %v541 = vld [vmem:[%s246 + $0x4b8] sm:$0xff]
      %v542 = vld [vmem:[%s246 + $0x4c0] sm:$0xff]
      %v543 = vld [vmem:[%s246 + $0x4c8] sm:$0xff]
      %v544 = vld [vmem:[%s246 + $0x4d0] sm:$0xff]
      %v545 = vld [vmem:[%s246 + $0x4d8] sm:$0xff]
      %v546 = vld [vmem:[%s246 + $0x4e0] sm:$0xff]
      %v547 = vld [vmem:[%s246 + $0x4e8] sm:$0xff]
      %v548 = vld [vmem:[%s246 + $0x4f0] sm:$0xff]
      %v549 = vld [vmem:[%s246 + $0x4f8] sm:$0xff]
      %v550 = vld [vmem:[%s246 + $0x500] sm:$0xff]
      %v551 = vld [vmem:[%s246 + $0x508] sm:$0xff]
      %v552 = vld [vmem:[%s246 + $0x510] sm:$0xff]
      %v553 = vld [vmem:[%s246 + $0x518] sm:$0xff]
      %v554 = vld [vmem:[%s246 + $0x520] sm:$0xff]
      %v555 = vld [vmem:[%s246 + $0x528] sm:$0xff]
      %v556 = vld [vmem:[%s246 + $0x530] sm:$0xff]
      %v557 = vld [vmem:[%s246 + $0x538] sm:$0xff]
      %v558 = vld [vmem:[%s246 + $0x540] sm:$0xff]
      %v559 = vld [vmem:[%s246 + $0x548] sm:$0xff]
      %v560 = vld [vmem:[%s246 + $0x550] sm:$0xff]
      %v561 = vld [vmem:[%s246 + $0x558] sm:$0xff]
      %v562 = vld [vmem:[%s246 + $0x560] sm:$0xff]
      %v563 = vld [vmem:[%s246 + $0x568] sm:$0xff]
      %v564 = vld [vmem:[%s246 + $0x570] sm:$0xff]
      %v565 = vld [vmem:[%s246 + $0x578] sm:$0xff]
      %v566 = vld [vmem:[%s246 + $0x580] sm:$0xff]
      %v567 = vld [vmem:[%s246 + $0x588] sm:$0xff]
      %v568 = vld [vmem:[%s246 + $0x590] sm:$0xff]
      %v569 = vld [vmem:[%s246 + $0x598] sm:$0xff]
      %v570 = vld [vmem:[%s246 + $0x5a0] sm:$0xff]
      %v571 = vld [vmem:[%s246 + $0x5a8] sm:$0xff]
      %v572 = vld [vmem:[%s246 + $0x5b0] sm:$0xff]
      %v573 = vld [vmem:[%s246 + $0x5b8] sm:$0xff]
      %v574 = vld [vmem:[%s246 + $0x5c0] sm:$0xff]
      %v575 = vld [vmem:[%s246 + $0x5c8] sm:$0xff]
      %v576 = vld [vmem:[%s246 + $0x5d0] sm:$0xff]
      %v577 = vld [vmem:[%s246 + $0x5d8] sm:$0xff]
      %v578 = vld [vmem:[%s246 + $0x5e0] sm:$0xff]
      %v579 = vld [vmem:[%s246 + $0x5e8] sm:$0xff]
      %v580 = vld [vmem:[%s246 + $0x5f0] sm:$0xff]
      %v581 = vld [vmem:[%s246 + $0x5f8] sm:$0xff]
      %v582 = vld [vmem:[%s246 + $0x600] sm:$0xff]
      %v583 = vld [vmem:[%s246 + $0x608] sm:$0xff]
      %v584 = vld [vmem:[%s246 + $0x610] sm:$0xff]
      %v585 = vld [vmem:[%s246 + $0x618] sm:$0xff]
      %v590 = vunpack.c.l.b16 %v386
      %v591 = vunpack.c.h.b16 %v386
      %v592 = vunpack.c.l.b16 %v387
      %v593 = vunpack.c.h.b16 %v387
      %v594 = vunpack.c.l.b16 %v388
      %v595 = vunpack.c.h.b16 %v388
      %v596 = vunpack.c.l.b16 %v389
      %v597 = vunpack.c.h.b16 %v389
      %v598 = vpack.c.b16 %v594, %v590
      %v599 = vpack.c.b16 %v595, %v591
      %v600 = vpack.c.b16 %v596, %v592
      %v601 = vpack.c.b16 %v597, %v593
      %v801 = vunpack.c.l.b16 %v390
      %v802 = vunpack.c.h.b16 %v390
      %v803 = vunpack.c.l.b16 %v391
      %v804 = vunpack.c.h.b16 %v391
      %v805 = vunpack.c.l.b16 %v392
      %v806 = vunpack.c.h.b16 %v392
      %v807 = vunpack.c.l.b16 %v393
      %v808 = vunpack.c.h.b16 %v393
      %v809 = vunpack.c.l.b16 %v394
      %v810 = vunpack.c.h.b16 %v394
      %v811 = vunpack.c.l.b16 %v395
      %v812 = vunpack.c.h.b16 %v395
      %v813 = vunpack.c.l.b16 %v396
      %v814 = vunpack.c.h.b16 %v396
      %v815 = vunpack.c.l.b16 %v397
      %v816 = vunpack.c.h.b16 %v397
      %v817 = vunpack.c.l.b16 %v398
      %v818 = vunpack.c.h.b16 %v398
      %v819 = vunpack.c.l.b16 %v399
      %v820 = vunpack.c.h.b16 %v399
      %v821 = vunpack.c.l.b16 %v400
      %v822 = vunpack.c.h.b16 %v400
      %v823 = vunpack.c.l.b16 %v401
      %v824 = vunpack.c.h.b16 %v401
      %v825 = vunpack.c.l.b16 %v402
      %v826 = vunpack.c.h.b16 %v402
      %v827 = vunpack.c.l.b16 %v403
      %v828 = vunpack.c.h.b16 %v403
      %v829 = vunpack.c.l.b16 %v404
      %v830 = vunpack.c.h.b16 %v404
      %v831 = vunpack.c.l.b16 %v405
      %v832 = vunpack.c.h.b16 %v405
      %v833 = vunpack.c.l.b16 %v406
      %v834 = vunpack.c.h.b16 %v406
      %v835 = vunpack.c.l.b16 %v407
      %v836 = vunpack.c.h.b16 %v407
      %v837 = vunpack.c.l.b16 %v408
      %v838 = vunpack.c.h.b16 %v408
      %v839 = vunpack.c.l.b16 %v409
      %v840 = vunpack.c.h.b16 %v409
      %v841 = vunpack.c.l.b16 %v410
      %v842 = vunpack.c.h.b16 %v410
      %v843 = vunpack.c.l.b16 %v411
      %v844 = vunpack.c.h.b16 %v411
      %v845 = vunpack.c.l.b16 %v412
      %v846 = vunpack.c.h.b16 %v412
      %v847 = vunpack.c.l.b16 %v413
      %v848 = vunpack.c.h.b16 %v413
      %v849 = vunpack.c.l.b16 %v414
      %v850 = vunpack.c.h.b16 %v414
      %v851 = vunpack.c.l.b16 %v415
      %v852 = vunpack.c.h.b16 %v415
      %v853 = vunpack.c.l.b16 %v416
      %v854 = vunpack.c.h.b16 %v416
      %v855 = vunpack.c.l.b16 %v417
      %v856 = vunpack.c.h.b16 %v417
      %v857 = vunpack.c.l.b16 %v418
      %v858 = vunpack.c.h.b16 %v418
      %v859 = vunpack.c.l.b16 %v419
      %v860 = vunpack.c.h.b16 %v419
      %v861 = vunpack.c.l.b16 %v420
      %v862 = vunpack.c.h.b16 %v420
      %v863 = vunpack.c.l.b16 %v421
      %v864 = vunpack.c.h.b16 %v421
      %v865 = vunpack.c.l.b16 %v422
      %v866 = vunpack.c.h.b16 %v422
      %v867 = vunpack.c.l.b16 %v423
      %v868 = vunpack.c.h.b16 %v423
      %v869 = vunpack.c.l.b16 %v424
      %v870 = vunpack.c.h.b16 %v424
      %v871 = vunpack.c.l.b16 %v425
      %v872 = vunpack.c.h.b16 %v425
      %v873 = vunpack.c.l.b16 %v426
      %v874 = vunpack.c.h.b16 %v426
      %v875 = vunpack.c.l.b16 %v427
      %v876 = vunpack.c.h.b16 %v427
      %v877 = vunpack.c.l.b16 %v428
      %v878 = vunpack.c.h.b16 %v428
      %v879 = vunpack.c.l.b16 %v429
      %v880 = vunpack.c.h.b16 %v429
      %v881 = vunpack.c.l.b16 %v430
      %v882 = vunpack.c.h.b16 %v430
      %v883 = vunpack.c.l.b16 %v431
      %v884 = vunpack.c.h.b16 %v431
      %v885 = vunpack.c.l.b16 %v432
      %v886 = vunpack.c.h.b16 %v432
      %v887 = vunpack.c.l.b16 %v433
      %v888 = vunpack.c.h.b16 %v433
      %v889 = vunpack.c.l.b16 %v434
      %v890 = vunpack.c.h.b16 %v434
      %v891 = vunpack.c.l.b16 %v435
      %v892 = vunpack.c.h.b16 %v435
      %v893 = vunpack.c.l.b16 %v436
      %v894 = vunpack.c.h.b16 %v436
      %v895 = vunpack.c.l.b16 %v437
      %v896 = vunpack.c.h.b16 %v437
      %v897 = vunpack.c.l.b16 %v438
      %v898 = vunpack.c.h.b16 %v438
      %v899 = vunpack.c.l.b16 %v439
      %v900 = vunpack.c.h.b16 %v439
      %v901 = vunpack.c.l.b16 %v440
      %v902 = vunpack.c.h.b16 %v440
      %v903 = vunpack.c.l.b16 %v441
      %v904 = vunpack.c.h.b16 %v441
      %v905 = vunpack.c.l.b16 %v442
      %v906 = vunpack.c.h.b16 %v442
      %v907 = vunpack.c.l.b16 %v443
      %v908 = vunpack.c.h.b16 %v443
      %v909 = vunpack.c.l.b16 %v444
      %v910 = vunpack.c.h.b16 %v444
      %v911 = vunpack.c.l.b16 %v445
      %v912 = vunpack.c.h.b16 %v445
      %v913 = vunpack.c.l.b16 %v446
      %v914 = vunpack.c.h.b16 %v446
      %v915 = vunpack.c.l.b16 %v447
      %v916 = vunpack.c.h.b16 %v447
      %v917 = vunpack.c.l.b16 %v448
      %v918 = vunpack.c.h.b16 %v448
      %v919 = vunpack.c.l.b16 %v449
      %v920 = vunpack.c.h.b16 %v449
      %v921 = vunpack.c.l.b16 %v450
      %v922 = vunpack.c.h.b16 %v450
      %v923 = vunpack.c.l.b16 %v451
      %v924 = vunpack.c.h.b16 %v451
      %v925 = vunpack.c.l.b16 %v452
      %v926 = vunpack.c.h.b16 %v452
      %v927 = vunpack.c.l.b16 %v453
      %v928 = vunpack.c.h.b16 %v453
      %v929 = vunpack.c.l.b16 %v454
      %v930 = vunpack.c.h.b16 %v454
      %v931 = vunpack.c.l.b16 %v455
      %v932 = vunpack.c.h.b16 %v455
      %v933 = vunpack.c.l.b16 %v456
      %v934 = vunpack.c.h.b16 %v456
      %v935 = vunpack.c.l.b16 %v457
      %v936 = vunpack.c.h.b16 %v457
      %v937 = vunpack.c.l.b16 %v458
      %v938 = vunpack.c.h.b16 %v458
      %v939 = vunpack.c.l.b16 %v459
      %v940 = vunpack.c.h.b16 %v459
      %v941 = vunpack.c.l.b16 %v460
      %v942 = vunpack.c.h.b16 %v460
      %v943 = vunpack.c.l.b16 %v461
      %v944 = vunpack.c.h.b16 %v461
      %v945 = vunpack.c.l.b16 %v462
      %v946 = vunpack.c.h.b16 %v462
      %v947 = vunpack.c.l.b16 %v463
      %v948 = vunpack.c.h.b16 %v463
      %v949 = vunpack.c.l.b16 %v464
      %v950 = vunpack.c.h.b16 %v464
      %v951 = vunpack.c.l.b16 %v465
      %v952 = vunpack.c.h.b16 %v465
      %v953 = vunpack.c.l.b16 %v466
      %v954 = vunpack.c.h.b16 %v466
      %v955 = vunpack.c.l.b16 %v467
      %v956 = vunpack.c.h.b16 %v467
      %v957 = vunpack.c.l.b16 %v468
      %v958 = vunpack.c.h.b16 %v468
      %v959 = vunpack.c.l.b16 %v469
      %v960 = vunpack.c.h.b16 %v469
      %v961 = vunpack.c.l.b16 %v470
      %v962 = vunpack.c.h.b16 %v470
      %v963 = vunpack.c.l.b16 %v471
      %v964 = vunpack.c.h.b16 %v471
      %v965 = vunpack.c.l.b16 %v472
      %v966 = vunpack.c.h.b16 %v472
      %v967 = vunpack.c.l.b16 %v473
      %v968 = vunpack.c.h.b16 %v473
      %v969 = vunpack.c.l.b16 %v474
      %v970 = vunpack.c.h.b16 %v474
      %v971 = vunpack.c.l.b16 %v475
      %v972 = vunpack.c.h.b16 %v475
      %v973 = vunpack.c.l.b16 %v476
      %v974 = vunpack.c.h.b16 %v476
      %v975 = vunpack.c.l.b16 %v477
      %v976 = vunpack.c.h.b16 %v477
      %v977 = vunpack.c.l.b16 %v478
      %v978 = vunpack.c.h.b16 %v478
      %v979 = vunpack.c.l.b16 %v479
      %v980 = vunpack.c.h.b16 %v479
      %v981 = vunpack.c.l.b16 %v480
      %v982 = vunpack.c.h.b16 %v480
      %v983 = vunpack.c.l.b16 %v481
      %v984 = vunpack.c.h.b16 %v481
      %v985 = vunpack.c.l.b16 %v482
      %v986 = vunpack.c.h.b16 %v482
      %v987 = vunpack.c.l.b16 %v483
      %v988 = vunpack.c.h.b16 %v483
      %v989 = vunpack.c.l.b16 %v484
      %v990 = vunpack.c.h.b16 %v484
      %v991 = vunpack.c.l.b16 %v485
      %v992 = vunpack.c.h.b16 %v485
      %v993 = vunpack.c.l.b16 %v486
      %v994 = vunpack.c.h.b16 %v486
      %v995 = vunpack.c.l.b16 %v487
      %v996 = vunpack.c.h.b16 %v487
      %v997 = vunpack.c.l.b16 %v488
      %v998 = vunpack.c.h.b16 %v488
      %v999 = vunpack.c.l.b16 %v489
      %v1000 = vunpack.c.h.b16 %v489
      %v1001 = vunpack.c.l.b16 %v490
      %v1002 = vunpack.c.h.b16 %v490
      %v1003 = vunpack.c.l.b16 %v491
      %v1004 = vunpack.c.h.b16 %v491
      %v1005 = vunpack.c.l.b16 %v492
      %v1006 = vunpack.c.h.b16 %v492
      %v1007 = vunpack.c.l.b16 %v493
      %v1008 = vunpack.c.h.b16 %v493
      %v1009 = vunpack.c.l.b16 %v494
      %v1010 = vunpack.c.h.b16 %v494
      %v1011 = vunpack.c.l.b16 %v495
      %v1012 = vunpack.c.h.b16 %v495
      %v1013 = vunpack.c.l.b16 %v496
      %v1014 = vunpack.c.h.b16 %v496
      %v1015 = vunpack.c.l.b16 %v497
      %v1016 = vunpack.c.h.b16 %v497
      %v1017 = vunpack.c.l.b16 %v498
      %v1018 = vunpack.c.h.b16 %v498
      %v1019 = vunpack.c.l.b16 %v499
      %v1020 = vunpack.c.h.b16 %v499
      %v1021 = vunpack.c.l.b16 %v500
      %v1022 = vunpack.c.h.b16 %v500
      %v1023 = vunpack.c.l.b16 %v501
      %v1024 = vunpack.c.h.b16 %v501
      %v1025 = vunpack.c.l.b16 %v502
      %v1026 = vunpack.c.h.b16 %v502
      %v1027 = vunpack.c.l.b16 %v503
      %v1028 = vunpack.c.h.b16 %v503
      %v1029 = vunpack.c.l.b16 %v504
      %v1030 = vunpack.c.h.b16 %v504
      %v1031 = vunpack.c.l.b16 %v505
      %v1032 = vunpack.c.h.b16 %v505
      %v1033 = vunpack.c.l.b16 %v506
      %v1034 = vunpack.c.h.b16 %v506
      %v1035 = vunpack.c.l.b16 %v507
      %v1036 = vunpack.c.h.b16 %v507
      %v1037 = vunpack.c.l.b16 %v508
      %v1038 = vunpack.c.h.b16 %v508
      %v1039 = vunpack.c.l.b16 %v509
      %v1040 = vunpack.c.h.b16 %v509
      %v1041 = vunpack.c.l.b16 %v510
      %v1042 = vunpack.c.h.b16 %v510
      %v1043 = vunpack.c.l.b16 %v511
      %v1044 = vunpack.c.h.b16 %v511
      %v1045 = vunpack.c.l.b16 %v512
      %v1046 = vunpack.c.h.b16 %v512
      %v1047 = vunpack.c.l.b16 %v513
      %v1048 = vunpack.c.h.b16 %v513
      %v1049 = vunpack.c.l.b16 %v514
      %v1050 = vunpack.c.h.b16 %v514
      %v1051 = vunpack.c.l.b16 %v515
      %v1052 = vunpack.c.h.b16 %v515
      %v1053 = vunpack.c.l.b16 %v516
      %v1054 = vunpack.c.h.b16 %v516
      %v1055 = vunpack.c.l.b16 %v517
      %v1056 = vunpack.c.h.b16 %v517
      %v1057 = vunpack.c.l.b16 %v518
      %v1058 = vunpack.c.h.b16 %v518
      %v1059 = vunpack.c.l.b16 %v519
      %v1060 = vunpack.c.h.b16 %v519
      %v1061 = vunpack.c.l.b16 %v520
      %v1062 = vunpack.c.h.b16 %v520
      %v1063 = vunpack.c.l.b16 %v521
      %v1064 = vunpack.c.h.b16 %v521
      %v1065 = vunpack.c.l.b16 %v522
      %v1066 = vunpack.c.h.b16 %v522
      %v1067 = vunpack.c.l.b16 %v523
      %v1068 = vunpack.c.h.b16 %v523
      %v1069 = vunpack.c.l.b16 %v524
      %v1070 = vunpack.c.h.b16 %v524
      %v1071 = vunpack.c.l.b16 %v525
      %v1072 = vunpack.c.h.b16 %v525
      %v1073 = vunpack.c.l.b16 %v526
      %v1074 = vunpack.c.h.b16 %v526
      %v1075 = vunpack.c.l.b16 %v527
      %v1076 = vunpack.c.h.b16 %v527
      %v1077 = vunpack.c.l.b16 %v528
      %v1078 = vunpack.c.h.b16 %v528
      %v1079 = vunpack.c.l.b16 %v529
      %v1080 = vunpack.c.h.b16 %v529
      %v1081 = vunpack.c.l.b16 %v530
      %v1082 = vunpack.c.h.b16 %v530
      %v1083 = vunpack.c.l.b16 %v531
      %v1084 = vunpack.c.h.b16 %v531
      %v1085 = vunpack.c.l.b16 %v532
      %v1086 = vunpack.c.h.b16 %v532
      %v1087 = vunpack.c.l.b16 %v533
      %v1088 = vunpack.c.h.b16 %v533
      %v1089 = vunpack.c.l.b16 %v534
      %v1090 = vunpack.c.h.b16 %v534
      %v1091 = vunpack.c.l.b16 %v535
      %v1092 = vunpack.c.h.b16 %v535
      %v1093 = vunpack.c.l.b16 %v536
      %v1094 = vunpack.c.h.b16 %v536
      %v1095 = vunpack.c.l.b16 %v537
      %v1096 = vunpack.c.h.b16 %v537
      %v1097 = vunpack.c.l.b16 %v538
      %v1098 = vunpack.c.h.b16 %v538
      %v1099 = vunpack.c.l.b16 %v539
      %v1100 = vunpack.c.h.b16 %v539
      %v1101 = vunpack.c.l.b16 %v540
      %v1102 = vunpack.c.h.b16 %v540
      %v1103 = vunpack.c.l.b16 %v541
      %v1104 = vunpack.c.h.b16 %v541
      %v1105 = vunpack.c.l.b16 %v542
      %v1106 = vunpack.c.h.b16 %v542
      %v1107 = vunpack.c.l.b16 %v543
      %v1108 = vunpack.c.h.b16 %v543
      %v1109 = vunpack.c.l.b16 %v544
      %v1110 = vunpack.c.h.b16 %v544
      %v1111 = vunpack.c.l.b16 %v545
      %v1112 = vunpack.c.h.b16 %v545
      %v1113 = vunpack.c.l.b16 %v546
      %v1114 = vunpack.c.h.b16 %v546
      %v1115 = vunpack.c.l.b16 %v547
      %v1116 = vunpack.c.h.b16 %v547
      %v1117 = vunpack.c.l.b16 %v548
      %v1118 = vunpack.c.h.b16 %v548
      %v1119 = vunpack.c.l.b16 %v549
      %v1120 = vunpack.c.h.b16 %v549
      %v1121 = vunpack.c.l.b16 %v550
      %v1122 = vunpack.c.h.b16 %v550
      %v1123 = vunpack.c.l.b16 %v551
      %v1124 = vunpack.c.h.b16 %v551
      %v1125 = vunpack.c.l.b16 %v552
      %v1126 = vunpack.c.h.b16 %v552
      %v1127 = vunpack.c.l.b16 %v553
      %v1128 = vunpack.c.h.b16 %v553
      %v1129 = vunpack.c.l.b16 %v554
      %v1130 = vunpack.c.h.b16 %v554
      %v1131 = vunpack.c.l.b16 %v555
      %v1132 = vunpack.c.h.b16 %v555
      %v1133 = vunpack.c.l.b16 %v556
      %v1134 = vunpack.c.h.b16 %v556
      %v1135 = vunpack.c.l.b16 %v557
      %v1136 = vunpack.c.h.b16 %v557
      %v1137 = vunpack.c.l.b16 %v558
      %v1138 = vunpack.c.h.b16 %v558
      %v1139 = vunpack.c.l.b16 %v559
      %v1140 = vunpack.c.h.b16 %v559
      %v1141 = vunpack.c.l.b16 %v560
      %v1142 = vunpack.c.h.b16 %v560
      %v1143 = vunpack.c.l.b16 %v561
      %v1144 = vunpack.c.h.b16 %v561
      %v1145 = vunpack.c.l.b16 %v562
      %v1146 = vunpack.c.h.b16 %v562
      %v1147 = vunpack.c.l.b16 %v563
      %v1148 = vunpack.c.h.b16 %v563
      %v1149 = vunpack.c.l.b16 %v564
      %v1150 = vunpack.c.h.b16 %v564
      %v1151 = vunpack.c.l.b16 %v565
      %v1152 = vunpack.c.h.b16 %v565
      %v1153 = vunpack.c.l.b16 %v566
      %v1154 = vunpack.c.h.b16 %v566
      %v1155 = vunpack.c.l.b16 %v567
      %v1156 = vunpack.c.h.b16 %v567
      %v1157 = vunpack.c.l.b16 %v568
      %v1158 = vunpack.c.h.b16 %v568
      %v1159 = vunpack.c.l.b16 %v569
      %v1160 = vunpack.c.h.b16 %v569
      %v1161 = vunpack.c.l.b16 %v570
      %v1162 = vunpack.c.h.b16 %v570
      %v1163 = vunpack.c.l.b16 %v571
      %v1164 = vunpack.c.h.b16 %v571
      %v1165 = vunpack.c.l.b16 %v572
      %v1166 = vunpack.c.h.b16 %v572
      %v1167 = vunpack.c.l.b16 %v573
      %v1168 = vunpack.c.h.b16 %v573
      %v1169 = vunpack.c.l.b16 %v574
      %v1170 = vunpack.c.h.b16 %v574
      %v1171 = vunpack.c.l.b16 %v575
      %v1172 = vunpack.c.h.b16 %v575
      %v1173 = vunpack.c.l.b16 %v576
      %v1174 = vunpack.c.h.b16 %v576
      %v1175 = vunpack.c.l.b16 %v577
      %v1176 = vunpack.c.h.b16 %v577
      %v1177 = vunpack.c.l.b16 %v578
      %v1178 = vunpack.c.h.b16 %v578
      %v1179 = vunpack.c.l.b16 %v579
      %v1180 = vunpack.c.h.b16 %v579
      %v1181 = vunpack.c.l.b16 %v580
      %v1182 = vunpack.c.h.b16 %v580
      %v1183 = vunpack.c.l.b16 %v581
      %v1184 = vunpack.c.h.b16 %v581
      %v1185 = vunpack.c.l.b16 %v582
      %v1186 = vunpack.c.h.b16 %v582
      %v1187 = vunpack.c.l.b16 %v583
      %v1188 = vunpack.c.h.b16 %v583
      %v1189 = vunpack.c.l.b16 %v584
      %v1190 = vunpack.c.h.b16 %v584
      %v1191 = vunpack.c.l.b16 %v585
      %v1192 = vunpack.c.h.b16 %v585
      %v1193 = vpack.c.b16 %v809, %v801
      %v1194 = vpack.c.b16 %v810, %v802
      %v1195 = vpack.c.b16 %v811, %v803
      %v1196 = vpack.c.b16 %v812, %v804
      %v1197 = vpack.c.b16 %v813, %v805
      %v1198 = vpack.c.b16 %v814, %v806
      %v1199 = vpack.c.b16 %v815, %v807
      %v1200 = vpack.c.b16 %v816, %v808
      %v1201 = vpack.c.b16 %v825, %v817
      %v1202 = vpack.c.b16 %v826, %v818
      %v1203 = vpack.c.b16 %v827, %v819
      %v1204 = vpack.c.b16 %v828, %v820
      %v1205 = vpack.c.b16 %v829, %v821
      %v1206 = vpack.c.b16 %v830, %v822
      %v1207 = vpack.c.b16 %v831, %v823
      %v1208 = vpack.c.b16 %v832, %v824
      %v1209 = vpack.c.b16 %v841, %v833
      %v1210 = vpack.c.b16 %v842, %v834
      %v1211 = vpack.c.b16 %v843, %v835
      %v1212 = vpack.c.b16 %v844, %v836
      %v1213 = vpack.c.b16 %v845, %v837
      %v1214 = vpack.c.b16 %v846, %v838
      %v1215 = vpack.c.b16 %v847, %v839
      %v1216 = vpack.c.b16 %v848, %v840
      %v1217 = vpack.c.b16 %v857, %v849
      %v1218 = vpack.c.b16 %v858, %v850
      %v1219 = vpack.c.b16 %v859, %v851
      %v1220 = vpack.c.b16 %v860, %v852
      %v1221 = vpack.c.b16 %v861, %v853
      %v1222 = vpack.c.b16 %v862, %v854
      %v1223 = vpack.c.b16 %v863, %v855
      %v1224 = vpack.c.b16 %v864, %v856
      %v1225 = vpack.c.b16 %v873, %v865
      %v1226 = vpack.c.b16 %v874, %v866
      %v1227 = vpack.c.b16 %v875, %v867
      %v1228 = vpack.c.b16 %v876, %v868
      %v1229 = vpack.c.b16 %v877, %v869
      %v1230 = vpack.c.b16 %v878, %v870
      %v1231 = vpack.c.b16 %v879, %v871
      %v1232 = vpack.c.b16 %v880, %v872
      %v1233 = vpack.c.b16 %v889, %v881
      %v1234 = vpack.c.b16 %v890, %v882
      %v1235 = vpack.c.b16 %v891, %v883
      %v1236 = vpack.c.b16 %v892, %v884
      %v1237 = vpack.c.b16 %v893, %v885
      %v1238 = vpack.c.b16 %v894, %v886
      %v1239 = vpack.c.b16 %v895, %v887
      %v1240 = vpack.c.b16 %v896, %v888
      %v1241 = vpack.c.b16 %v905, %v897
      %v1242 = vpack.c.b16 %v906, %v898
      %v1243 = vpack.c.b16 %v907, %v899
      %v1244 = vpack.c.b16 %v908, %v900
      %v1245 = vpack.c.b16 %v909, %v901
      %v1246 = vpack.c.b16 %v910, %v902
      %v1247 = vpack.c.b16 %v911, %v903
      %v1248 = vpack.c.b16 %v912, %v904
      %v1249 = vpack.c.b16 %v921, %v913
      %v1250 = vpack.c.b16 %v922, %v914
      %v1251 = vpack.c.b16 %v923, %v915
      %v1252 = vpack.c.b16 %v924, %v916
      %v1253 = vpack.c.b16 %v925, %v917
      %v1254 = vpack.c.b16 %v926, %v918
      %v1255 = vpack.c.b16 %v927, %v919
      %v1256 = vpack.c.b16 %v928, %v920
      %v1257 = vpack.c.b16 %v937, %v929
      %v1258 = vpack.c.b16 %v938, %v930
      %v1259 = vpack.c.b16 %v939, %v931
      %v1260 = vpack.c.b16 %v940, %v932
      %v1261 = vpack.c.b16 %v941, %v933
      %v1262 = vpack.c.b16 %v942, %v934
      %v1263 = vpack.c.b16 %v943, %v935
      %v1264 = vpack.c.b16 %v944, %v936
      %v1265 = vpack.c.b16 %v953, %v945
      %v1266 = vpack.c.b16 %v954, %v946
      %v1267 = vpack.c.b16 %v955, %v947
      %v1268 = vpack.c.b16 %v956, %v948
      %v1269 = vpack.c.b16 %v957, %v949
      %v1270 = vpack.c.b16 %v958, %v950
      %v1271 = vpack.c.b16 %v959, %v951
      %v1272 = vpack.c.b16 %v960, %v952
      %v1273 = vpack.c.b16 %v969, %v961
      %v1274 = vpack.c.b16 %v970, %v962
      %v1275 = vpack.c.b16 %v971, %v963
      %v1276 = vpack.c.b16 %v972, %v964
      %v1277 = vpack.c.b16 %v973, %v965
      %v1278 = vpack.c.b16 %v974, %v966
      %v1279 = vpack.c.b16 %v975, %v967
      %v1280 = vpack.c.b16 %v976, %v968
      %v1281 = vpack.c.b16 %v985, %v977
      %v1282 = vpack.c.b16 %v986, %v978
      %v1283 = vpack.c.b16 %v987, %v979
      %v1284 = vpack.c.b16 %v988, %v980
      %v1285 = vpack.c.b16 %v989, %v981
      %v1286 = vpack.c.b16 %v990, %v982
      %v1287 = vpack.c.b16 %v991, %v983
      %v1288 = vpack.c.b16 %v992, %v984
      %v1289 = vpack.c.b16 %v1001, %v993
      %v1290 = vpack.c.b16 %v1002, %v994
      %v1291 = vpack.c.b16 %v1003, %v995
      %v1292 = vpack.c.b16 %v1004, %v996
      %v1293 = vpack.c.b16 %v1005, %v997
      %v1294 = vpack.c.b16 %v1006, %v998
      %v1295 = vpack.c.b16 %v1007, %v999
      %v1296 = vpack.c.b16 %v1008, %v1000
      %v1297 = vpack.c.b16 %v1017, %v1009
      %v1298 = vpack.c.b16 %v1018, %v1010
      %v1299 = vpack.c.b16 %v1019, %v1011
      %v1300 = vpack.c.b16 %v1020, %v1012
      %v1301 = vpack.c.b16 %v1021, %v1013
      %v1302 = vpack.c.b16 %v1022, %v1014
      %v1303 = vpack.c.b16 %v1023, %v1015
      %v1304 = vpack.c.b16 %v1024, %v1016
      %v1305 = vpack.c.b16 %v1033, %v1025
      %v1306 = vpack.c.b16 %v1034, %v1026
      %v1307 = vpack.c.b16 %v1035, %v1027
      %v1308 = vpack.c.b16 %v1036, %v1028
      %v1309 = vpack.c.b16 %v1037, %v1029
      %v1310 = vpack.c.b16 %v1038, %v1030
      %v1311 = vpack.c.b16 %v1039, %v1031
      %v1312 = vpack.c.b16 %v1040, %v1032
      %v1313 = vpack.c.b16 %v1049, %v1041
      %v1314 = vpack.c.b16 %v1050, %v1042
      %v1315 = vpack.c.b16 %v1051, %v1043
      %v1316 = vpack.c.b16 %v1052, %v1044
      %v1317 = vpack.c.b16 %v1053, %v1045
      %v1318 = vpack.c.b16 %v1054, %v1046
      %v1319 = vpack.c.b16 %v1055, %v1047
      %v1320 = vpack.c.b16 %v1056, %v1048
      %v1321 = vpack.c.b16 %v1065, %v1057
      %v1322 = vpack.c.b16 %v1066, %v1058
      %v1323 = vpack.c.b16 %v1067, %v1059
      %v1324 = vpack.c.b16 %v1068, %v1060
      %v1325 = vpack.c.b16 %v1069, %v1061
      %v1326 = vpack.c.b16 %v1070, %v1062
      %v1327 = vpack.c.b16 %v1071, %v1063
      %v1328 = vpack.c.b16 %v1072, %v1064
      %v1329 = vpack.c.b16 %v1081, %v1073
      %v1330 = vpack.c.b16 %v1082, %v1074
      %v1331 = vpack.c.b16 %v1083, %v1075
      %v1332 = vpack.c.b16 %v1084, %v1076
      %v1333 = vpack.c.b16 %v1085, %v1077
      %v1334 = vpack.c.b16 %v1086, %v1078
      %v1335 = vpack.c.b16 %v1087, %v1079
      %v1336 = vpack.c.b16 %v1088, %v1080
      %v1337 = vpack.c.b16 %v1097, %v1089
      %v1338 = vpack.c.b16 %v1098, %v1090
      %v1339 = vpack.c.b16 %v1099, %v1091
      %v1340 = vpack.c.b16 %v1100, %v1092
      %v1341 = vpack.c.b16 %v1101, %v1093
      %v1342 = vpack.c.b16 %v1102, %v1094
      %v1343 = vpack.c.b16 %v1103, %v1095
      %v1344 = vpack.c.b16 %v1104, %v1096
      %v1345 = vpack.c.b16 %v1113, %v1105
      %v1346 = vpack.c.b16 %v1114, %v1106
      %v1347 = vpack.c.b16 %v1115, %v1107
      %v1348 = vpack.c.b16 %v1116, %v1108
      %v1349 = vpack.c.b16 %v1117, %v1109
      %v1350 = vpack.c.b16 %v1118, %v1110
      %v1351 = vpack.c.b16 %v1119, %v1111
      %v1352 = vpack.c.b16 %v1120, %v1112
      %v1353 = vpack.c.b16 %v1129, %v1121
      %v1354 = vpack.c.b16 %v1130, %v1122
      %v1355 = vpack.c.b16 %v1131, %v1123
      %v1356 = vpack.c.b16 %v1132, %v1124
      %v1357 = vpack.c.b16 %v1133, %v1125
      %v1358 = vpack.c.b16 %v1134, %v1126
      %v1359 = vpack.c.b16 %v1135, %v1127
      %v1360 = vpack.c.b16 %v1136, %v1128
      %v1361 = vpack.c.b16 %v1145, %v1137
      %v1362 = vpack.c.b16 %v1146, %v1138
      %v1363 = vpack.c.b16 %v1147, %v1139
      %v1364 = vpack.c.b16 %v1148, %v1140
      %v1365 = vpack.c.b16 %v1149, %v1141
      %v1366 = vpack.c.b16 %v1150, %v1142
      %v1367 = vpack.c.b16 %v1151, %v1143
      %v1368 = vpack.c.b16 %v1152, %v1144
      %v1369 = vpack.c.b16 %v1161, %v1153
      %v1370 = vpack.c.b16 %v1162, %v1154
      %v1371 = vpack.c.b16 %v1163, %v1155
      %v1372 = vpack.c.b16 %v1164, %v1156
      %v1373 = vpack.c.b16 %v1165, %v1157
      %v1374 = vpack.c.b16 %v1166, %v1158
      %v1375 = vpack.c.b16 %v1167, %v1159
      %v1376 = vpack.c.b16 %v1168, %v1160
      %v1377 = vpack.c.b16 %v1177, %v1169
      %v1378 = vpack.c.b16 %v1178, %v1170
      %v1379 = vpack.c.b16 %v1179, %v1171
      %v1380 = vpack.c.b16 %v1180, %v1172
      %v1381 = vpack.c.b16 %v1181, %v1173
      %v1382 = vpack.c.b16 %v1182, %v1174
      %v1383 = vpack.c.b16 %v1183, %v1175
      %v1384 = vpack.c.b16 %v1184, %v1176
      %v1385 = vpack.c.b16 %v1185, %v1185
      %v1386 = vpack.c.b16 %v1186, %v1186
      %v1387 = vpack.c.b16 %v1187, %v1187
      %v1388 = vpack.c.b16 %v1188, %v1188
      %v1389 = vpack.c.b16 %v1189, %v1189
      %v1390 = vpack.c.b16 %v1190, %v1190
      %v1391 = vpack.c.b16 %v1191, %v1191
      %v1392 = vpack.c.b16 %v1192, %v1192
      %vm1585 = vcmask 64512
      %v1587 = vsel %vm1585, %v601, 0
      %vm1589 = vcmask 1043456
      %v1591 = vsel %vm1589, %v1385, 0
      %v1594 = vsel %vm1589, %v1386, 0
      %v1597 = vsel %vm1589, %v1387, 0
      %v1600 = vsel %vm1589, %v1388, 0
      %v1603 = vsel %vm1589, %v1389, 0
      %v1606 = vsel %vm1589, %v1390, 0
      %v1609 = vsel %vm1589, %v1391, 0
      %v1612 = vsel %vm1589, %v1392, 0
      %1614 = vmatpush.bf16.msra.mxu0 %v1249
      %1615 = vmatpush.bf16.msra.mxu0 %v1241
      %1616 = vmatpush.bf16.msra.mxu0 %v1233
      %1617 = vmatpush.bf16.msra.mxu0 %v1225
      %1618 = vmatpush.bf16.msra.mxu0 %v1217
      %1619 = vmatpush.bf16.msra.mxu0 %v1209
      %1620 = vmatpush.bf16.msra.mxu0 %v1201
      %1621 = vmatpush.bf16.msra.mxu0 %v1193
      %1622 = vmatmul.bf16.gmra.mxu0 %v598
      %v1623 = vpop.f32.mrf.mxu0
      %v1624 = vadd.f32 0.0, %v1623
      %v1625 = vpop.f32.mrf.mxu0
      %v1626 = vadd.f32 0.0, %v1625
      %1627 = vdwg.mxu0
      %1628 = vmatpush.bf16.msra.mxu0 %v1313
      %1629 = vmatpush.bf16.msra.mxu0 %v1305
      %1630 = vmatpush.bf16.msra.mxu0 %v1297
      %1631 = vmatpush.bf16.msra.mxu0 %v1289
      %1632 = vmatpush.bf16.msra.mxu0 %v1281
      %1633 = vmatpush.bf16.msra.mxu0 %v1273
      %1634 = vmatpush.bf16.msra.mxu0 %v1265
      %1635 = vmatpush.bf16.msra.mxu0 %v1257
      %1636 = vmatmul.bf16.gmra.mxu0 %v599
      %v1637 = vpop.f32.mrf.mxu0
      %v1638 = vadd.f32 %v1624, %v1637
      %v1639 = vpop.f32.mrf.mxu0
      %v1640 = vadd.f32 %v1626, %v1639
      %1641 = vdwg.mxu0
      %1642 = vmatpush.bf16.msra.mxu0 %v1377
      %1643 = vmatpush.bf16.msra.mxu0 %v1369
      %1644 = vmatpush.bf16.msra.mxu0 %v1361
      %1645 = vmatpush.bf16.msra.mxu0 %v1353
      %1646 = vmatpush.bf16.msra.mxu0 %v1345
      %1647 = vmatpush.bf16.msra.mxu0 %v1337
      %1648 = vmatpush.bf16.msra.mxu0 %v1329
      %1649 = vmatpush.bf16.msra.mxu0 %v1321
      %1650 = vmatmul.bf16.gmra.mxu0 %v600
      %v1651 = vpop.f32.mrf.mxu0
      %v1652 = vadd.f32 %v1638, %v1651
      %v1653 = vpop.f32.mrf.mxu0
      %v1654 = vadd.f32 %v1640, %v1653
      %1655 = vdwg.mxu0
      %1656 = vmatpush.bf16.msra.mxu0 0
      %1657 = vmatpush.bf16.msra.mxu0 0
      %1658 = vmatpush.bf16.msra.mxu0 0
      %1659 = vmatpush.bf16.msra.mxu0 0
      %1660 = vmatpush.bf16.msra.mxu0 0
      %1661 = vmatpush.bf16.msra.mxu0 0
      %1662 = vmatpush.bf16.msra.mxu0 0
      %1663 = vmatpush.bf16.msra.mxu0 %v1591
      %1664 = vmatmul.bf16.gmra.mxu0 %v1587
      %v1665 = vpop.f32.mrf.mxu0
      %v1666 = vadd.f32 %v1652, %v1665
      %v1667 = vpop.f32.mrf.mxu0
      %v1668 = vadd.f32 %v1654, %v1667
      %1669 = vdwg.mxu0
      %1670 = vmatpush.bf16.msra.mxu0 %v1250
      %1671 = vmatpush.bf16.msra.mxu0 %v1242
      %1672 = vmatpush.bf16.msra.mxu0 %v1234
      %1673 = vmatpush.bf16.msra.mxu0 %v1226
      %1674 = vmatpush.bf16.msra.mxu0 %v1218
      %1675 = vmatpush.bf16.msra.mxu0 %v1210
      %1676 = vmatpush.bf16.msra.mxu0 %v1202
      %1677 = vmatpush.bf16.msra.mxu0 %v1194
      %1678 = vmatmul.bf16.gmra.mxu0 %v598
      %v1679 = vpop.f32.mrf.mxu0
      %v1680 = vadd.f32 0.0, %v1679
      %v1681 = vpop.f32.mrf.mxu0
      %v1682 = vadd.f32 0.0, %v1681
      %1683 = vdwg.mxu0
      %1684 = vmatpush.bf16.msra.mxu0 %v1314
      %1685 = vmatpush.bf16.msra.mxu0 %v1306
      %1686 = vmatpush.bf16.msra.mxu0 %v1298
      %1687 = vmatpush.bf16.msra.mxu0 %v1290
      %1688 = vmatpush.bf16.msra.mxu0 %v1282
      %1689 = vmatpush.bf16.msra.mxu0 %v1274
      %1690 = vmatpush.bf16.msra.mxu0 %v1266
      %1691 = vmatpush.bf16.msra.mxu0 %v1258
      %1692 = vmatmul.bf16.gmra.mxu0 %v599
      %v1693 = vpop.f32.mrf.mxu0
      %v1694 = vadd.f32 %v1680, %v1693
      %v1695 = vpop.f32.mrf.mxu0
      %v1696 = vadd.f32 %v1682, %v1695
      %1697 = vdwg.mxu0
      %1698 = vmatpush.bf16.msra.mxu0 %v1378
      %1699 = vmatpush.bf16.msra.mxu0 %v1370
      %1700 = vmatpush.bf16.msra.mxu0 %v1362
      %1701 = vmatpush.bf16.msra.mxu0 %v1354
      %1702 = vmatpush.bf16.msra.mxu0 %v1346
      %1703 = vmatpush.bf16.msra.mxu0 %v1338
      %1704 = vmatpush.bf16.msra.mxu0 %v1330
      %1705 = vmatpush.bf16.msra.mxu0 %v1322
      %1706 = vmatmul.bf16.gmra.mxu0 %v600
      %v1707 = vpop.f32.mrf.mxu0
      %v1708 = vadd.f32 %v1694, %v1707
      %v1709 = vpop.f32.mrf.mxu0
      %v1710 = vadd.f32 %v1696, %v1709
      %1711 = vdwg.mxu0
      %1712 = vmatpush.bf16.msra.mxu0 0
      %1713 = vmatpush.bf16.msra.mxu0 0
      %1714 = vmatpush.bf16.msra.mxu0 0
      %1715 = vmatpush.bf16.msra.mxu0 0
      %1716 = vmatpush.bf16.msra.mxu0 0
      %1717 = vmatpush.bf16.msra.mxu0 0
      %1718 = vmatpush.bf16.msra.mxu0 0
      %1719 = vmatpush.bf16.msra.mxu0 %v1594
      %1720 = vmatmul.bf16.gmra.mxu0 %v1587
      %v1721 = vpop.f32.mrf.mxu0
      %v1722 = vadd.f32 %v1708, %v1721
      %v1723 = vpop.f32.mrf.mxu0
      %v1724 = vadd.f32 %v1710, %v1723
      %1725 = vdwg.mxu0
      %1726 = vmatpush.bf16.msra.mxu0 %v1251
      %1727 = vmatpush.bf16.msra.mxu0 %v1243
      %1728 = vmatpush.bf16.msra.mxu0 %v1235
      %1729 = vmatpush.bf16.msra.mxu0 %v1227
      %1730 = vmatpush.bf16.msra.mxu0 %v1219
      %1731 = vmatpush.bf16.msra.mxu0 %v1211
      %1732 = vmatpush.bf16.msra.mxu0 %v1203
      %1733 = vmatpush.bf16.msra.mxu0 %v1195
      %1734 = vmatmul.bf16.gmra.mxu0 %v598
      %v1735 = vpop.f32.mrf.mxu0
      %v1736 = vadd.f32 0.0, %v1735
      %v1737 = vpop.f32.mrf.mxu0
      %v1738 = vadd.f32 0.0, %v1737
      %1739 = vdwg.mxu0
      %1740 = vmatpush.bf16.msra.mxu0 %v1315
      %1741 = vmatpush.bf16.msra.mxu0 %v1307
      %1742 = vmatpush.bf16.msra.mxu0 %v1299
      %1743 = vmatpush.bf16.msra.mxu0 %v1291
      %1744 = vmatpush.bf16.msra.mxu0 %v1283
      %1745 = vmatpush.bf16.msra.mxu0 %v1275
      %1746 = vmatpush.bf16.msra.mxu0 %v1267
      %1747 = vmatpush.bf16.msra.mxu0 %v1259
      %1748 = vmatmul.bf16.gmra.mxu0 %v599
      %v1749 = vpop.f32.mrf.mxu0
      %v1750 = vadd.f32 %v1736, %v1749
      %v1751 = vpop.f32.mrf.mxu0
      %v1752 = vadd.f32 %v1738, %v1751
      %1753 = vdwg.mxu0
      %1754 = vmatpush.bf16.msra.mxu0 %v1379
      %1755 = vmatpush.bf16.msra.mxu0 %v1371
      %1756 = vmatpush.bf16.msra.mxu0 %v1363
      %1757 = vmatpush.bf16.msra.mxu0 %v1355
      %1758 = vmatpush.bf16.msra.mxu0 %v1347
      %1759 = vmatpush.bf16.msra.mxu0 %v1339
      %1760 = vmatpush.bf16.msra.mxu0 %v1331
      %1761 = vmatpush.bf16.msra.mxu0 %v1323
      %1762 = vmatmul.bf16.gmra.mxu0 %v600
      %v1763 = vpop.f32.mrf.mxu0
      %v1764 = vadd.f32 %v1750, %v1763
      %v1765 = vpop.f32.mrf.mxu0
      %v1766 = vadd.f32 %v1752, %v1765
      %1767 = vdwg.mxu0
      %1768 = vmatpush.bf16.msra.mxu0 0
      %1769 = vmatpush.bf16.msra.mxu0 0
      %1770 = vmatpush.bf16.msra.mxu0 0
      %1771 = vmatpush.bf16.msra.mxu0 0
      %1772 = vmatpush.bf16.msra.mxu0 0
      %1773 = vmatpush.bf16.msra.mxu0 0
      %1774 = vmatpush.bf16.msra.mxu0 0
      %1775 = vmatpush.bf16.msra.mxu0 %v1597
      %1776 = vmatmul.bf16.gmra.mxu0 %v1587
      %v1777 = vpop.f32.mrf.mxu0
      %v1778 = vadd.f32 %v1764, %v1777
      %v1779 = vpop.f32.mrf.mxu0
      %v1780 = vadd.f32 %v1766, %v1779
      %1781 = vdwg.mxu0
      %1782 = vmatpush.bf16.msra.mxu0 %v1252
      %1783 = vmatpush.bf16.msra.mxu0 %v1244
      %1784 = vmatpush.bf16.msra.mxu0 %v1236
      %1785 = vmatpush.bf16.msra.mxu0 %v1228
      %1786 = vmatpush.bf16.msra.mxu0 %v1220
      %1787 = vmatpush.bf16.msra.mxu0 %v1212
      %1788 = vmatpush.bf16.msra.mxu0 %v1204
      %1789 = vmatpush.bf16.msra.mxu0 %v1196
      %1790 = vmatmul.bf16.gmra.mxu0 %v598
      %v1791 = vpop.f32.mrf.mxu0
      %v1792 = vadd.f32 0.0, %v1791
      %v1793 = vpop.f32.mrf.mxu0
      %v1794 = vadd.f32 0.0, %v1793
      %1795 = vdwg.mxu0
      %1796 = vmatpush.bf16.msra.mxu0 %v1316
      %1797 = vmatpush.bf16.msra.mxu0 %v1308
      %1798 = vmatpush.bf16.msra.mxu0 %v1300
      %1799 = vmatpush.bf16.msra.mxu0 %v1292
      %1800 = vmatpush.bf16.msra.mxu0 %v1284
      %1801 = vmatpush.bf16.msra.mxu0 %v1276
      %1802 = vmatpush.bf16.msra.mxu0 %v1268
      %1803 = vmatpush.bf16.msra.mxu0 %v1260
      %1804 = vmatmul.bf16.gmra.mxu0 %v599
      %v1805 = vpop.f32.mrf.mxu0
      %v1806 = vadd.f32 %v1792, %v1805
      %v1807 = vpop.f32.mrf.mxu0
      %v1808 = vadd.f32 %v1794, %v1807
      %1809 = vdwg.mxu0
      %1810 = vmatpush.bf16.msra.mxu0 %v1380
      %1811 = vmatpush.bf16.msra.mxu0 %v1372
      %1812 = vmatpush.bf16.msra.mxu0 %v1364
      %1813 = vmatpush.bf16.msra.mxu0 %v1356
      %1814 = vmatpush.bf16.msra.mxu0 %v1348
      %1815 = vmatpush.bf16.msra.mxu0 %v1340
      %1816 = vmatpush.bf16.msra.mxu0 %v1332
      %1817 = vmatpush.bf16.msra.mxu0 %v1324
      %1818 = vmatmul.bf16.gmra.mxu0 %v600
      %v1819 = vpop.f32.mrf.mxu0
      %v1820 = vadd.f32 %v1806, %v1819
      %v1821 = vpop.f32.mrf.mxu0
      %v1822 = vadd.f32 %v1808, %v1821
      %1823 = vdwg.mxu0
      %1824 = vmatpush.bf16.msra.mxu0 0
      %1825 = vmatpush.bf16.msra.mxu0 0
      %1826 = vmatpush.bf16.msra.mxu0 0
      %1827 = vmatpush.bf16.msra.mxu0 0
      %1828 = vmatpush.bf16.msra.mxu0 0
      %1829 = vmatpush.bf16.msra.mxu0 0
      %1830 = vmatpush.bf16.msra.mxu0 0
      %1831 = vmatpush.bf16.msra.mxu0 %v1600
      %1832 = vmatmul.bf16.gmra.mxu0 %v1587
      %v1833 = vpop.f32.mrf.mxu0
      %v1834 = vadd.f32 %v1820, %v1833
      %v1835 = vpop.f32.mrf.mxu0
      %v1836 = vadd.f32 %v1822, %v1835
      %1837 = vdwg.mxu0
      %1838 = vmatpush.bf16.msra.mxu0 %v1253
      %1839 = vmatpush.bf16.msra.mxu0 %v1245
      %1840 = vmatpush.bf16.msra.mxu0 %v1237
      %1841 = vmatpush.bf16.msra.mxu0 %v1229
      %1842 = vmatpush.bf16.msra.mxu0 %v1221
      %1843 = vmatpush.bf16.msra.mxu0 %v1213
      %1844 = vmatpush.bf16.msra.mxu0 %v1205
      %1845 = vmatpush.bf16.msra.mxu0 %v1197
      %1846 = vmatmul.bf16.gmra.mxu0 %v598
      %v1847 = vpop.f32.mrf.mxu0
      %v1848 = vadd.f32 0.0, %v1847
      %v1849 = vpop.f32.mrf.mxu0
      %v1850 = vadd.f32 0.0, %v1849
      %1851 = vdwg.mxu0
      %1852 = vmatpush.bf16.msra.mxu0 %v1317
      %1853 = vmatpush.bf16.msra.mxu0 %v1309
      %1854 = vmatpush.bf16.msra.mxu0 %v1301
      %1855 = vmatpush.bf16.msra.mxu0 %v1293
      %1856 = vmatpush.bf16.msra.mxu0 %v1285
      %1857 = vmatpush.bf16.msra.mxu0 %v1277
      %1858 = vmatpush.bf16.msra.mxu0 %v1269
      %1859 = vmatpush.bf16.msra.mxu0 %v1261
      %1860 = vmatmul.bf16.gmra.mxu0 %v599
      %v1861 = vpop.f32.mrf.mxu0
      %v1862 = vadd.f32 %v1848, %v1861
      %v1863 = vpop.f32.mrf.mxu0
      %v1864 = vadd.f32 %v1850, %v1863
      %1865 = vdwg.mxu0
      %1866 = vmatpush.bf16.msra.mxu0 %v1381
      %1867 = vmatpush.bf16.msra.mxu0 %v1373
      %1868 = vmatpush.bf16.msra.mxu0 %v1365
      %1869 = vmatpush.bf16.msra.mxu0 %v1357
      %1870 = vmatpush.bf16.msra.mxu0 %v1349
      %1871 = vmatpush.bf16.msra.mxu0 %v1341
      %1872 = vmatpush.bf16.msra.mxu0 %v1333
      %1873 = vmatpush.bf16.msra.mxu0 %v1325
      %1874 = vmatmul.bf16.gmra.mxu0 %v600
      %v1875 = vpop.f32.mrf.mxu0
      %v1876 = vadd.f32 %v1862, %v1875
      %v1877 = vpop.f32.mrf.mxu0
      %v1878 = vadd.f32 %v1864, %v1877
      %1879 = vdwg.mxu0
      %1880 = vmatpush.bf16.msra.mxu0 0
      %1881 = vmatpush.bf16.msra.mxu0 0
      %1882 = vmatpush.bf16.msra.mxu0 0
      %1883 = vmatpush.bf16.msra.mxu0 0
      %1884 = vmatpush.bf16.msra.mxu0 0
      %1885 = vmatpush.bf16.msra.mxu0 0
      %1886 = vmatpush.bf16.msra.mxu0 0
      %1887 = vmatpush.bf16.msra.mxu0 %v1603
      %1888 = vmatmul.bf16.gmra.mxu0 %v1587
      %v1889 = vpop.f32.mrf.mxu0
      %v1890 = vadd.f32 %v1876, %v1889
      %v1891 = vpop.f32.mrf.mxu0
      %v1892 = vadd.f32 %v1878, %v1891
      %1893 = vdwg.mxu0
      %1894 = vmatpush.bf16.msra.mxu0 %v1254
      %1895 = vmatpush.bf16.msra.mxu0 %v1246
      %1896 = vmatpush.bf16.msra.mxu0 %v1238
      %1897 = vmatpush.bf16.msra.mxu0 %v1230
      %1898 = vmatpush.bf16.msra.mxu0 %v1222
      %1899 = vmatpush.bf16.msra.mxu0 %v1214
      %1900 = vmatpush.bf16.msra.mxu0 %v1206
      %1901 = vmatpush.bf16.msra.mxu0 %v1198
      %1902 = vmatmul.bf16.gmra.mxu0 %v598
      %v1903 = vpop.f32.mrf.mxu0
      %v1904 = vadd.f32 0.0, %v1903
      %v1905 = vpop.f32.mrf.mxu0
      %v1906 = vadd.f32 0.0, %v1905
      %1907 = vdwg.mxu0
      %1908 = vmatpush.bf16.msra.mxu0 %v1318
      %1909 = vmatpush.bf16.msra.mxu0 %v1310
      %1910 = vmatpush.bf16.msra.mxu0 %v1302
      %1911 = vmatpush.bf16.msra.mxu0 %v1294
      %1912 = vmatpush.bf16.msra.mxu0 %v1286
      %1913 = vmatpush.bf16.msra.mxu0 %v1278
      %1914 = vmatpush.bf16.msra.mxu0 %v1270
      %1915 = vmatpush.bf16.msra.mxu0 %v1262
      %1916 = vmatmul.bf16.gmra.mxu0 %v599
      %v1917 = vpop.f32.mrf.mxu0
      %v1918 = vadd.f32 %v1904, %v1917
      %v1919 = vpop.f32.mrf.mxu0
      %v1920 = vadd.f32 %v1906, %v1919
      %1921 = vdwg.mxu0
      %1922 = vmatpush.bf16.msra.mxu0 %v1382
      %1923 = vmatpush.bf16.msra.mxu0 %v1374
      %1924 = vmatpush.bf16.msra.mxu0 %v1366
      %1925 = vmatpush.bf16.msra.mxu0 %v1358
      %1926 = vmatpush.bf16.msra.mxu0 %v1350
      %1927 = vmatpush.bf16.msra.mxu0 %v1342
      %1928 = vmatpush.bf16.msra.mxu0 %v1334
      %1929 = vmatpush.bf16.msra.mxu0 %v1326
      %1930 = vmatmul.bf16.gmra.mxu0 %v600
      %v1931 = vpop.f32.mrf.mxu0
      %v1932 = vadd.f32 %v1918, %v1931
      %v1933 = vpop.f32.mrf.mxu0
      %v1934 = vadd.f32 %v1920, %v1933
      %1935 = vdwg.mxu0
      %1936 = vmatpush.bf16.msra.mxu0 0
      %1937 = vmatpush.bf16.msra.mxu0 0
      %1938 = vmatpush.bf16.msra.mxu0 0
      %1939 = vmatpush.bf16.msra.mxu0 0
      %1940 = vmatpush.bf16.msra.mxu0 0
      %1941 = vmatpush.bf16.msra.mxu0 0
      %1942 = vmatpush.bf16.msra.mxu0 0
      %1943 = vmatpush.bf16.msra.mxu0 %v1606
      %1944 = vmatmul.bf16.gmra.mxu0 %v1587
      %v1945 = vpop.f32.mrf.mxu0
      %v1946 = vadd.f32 %v1932, %v1945
      %v1947 = vpop.f32.mrf.mxu0
      %v1948 = vadd.f32 %v1934, %v1947
      %1949 = vdwg.mxu0
      %1950 = vmatpush.bf16.msra.mxu0 %v1255
      %1951 = vmatpush.bf16.msra.mxu0 %v1247
      %1952 = vmatpush.bf16.msra.mxu0 %v1239
      %1953 = vmatpush.bf16.msra.mxu0 %v1231
      %1954 = vmatpush.bf16.msra.mxu0 %v1223
      %1955 = vmatpush.bf16.msra.mxu0 %v1215
      %1956 = vmatpush.bf16.msra.mxu0 %v1207
      %1957 = vmatpush.bf16.msra.mxu0 %v1199
      %1958 = vmatmul.bf16.gmra.mxu0 %v598
      %v1959 = vpop.f32.mrf.mxu0
      %v1960 = vadd.f32 0.0, %v1959
      %v1961 = vpop.f32.mrf.mxu0
      %v1962 = vadd.f32 0.0, %v1961
      %1963 = vdwg.mxu0
      %1964 = vmatpush.bf16.msra.mxu0 %v1319
      %1965 = vmatpush.bf16.msra.mxu0 %v1311
      %1966 = vmatpush.bf16.msra.mxu0 %v1303
      %1967 = vmatpush.bf16.msra.mxu0 %v1295
      %1968 = vmatpush.bf16.msra.mxu0 %v1287
      %1969 = vmatpush.bf16.msra.mxu0 %v1279
      %1970 = vmatpush.bf16.msra.mxu0 %v1271
      %1971 = vmatpush.bf16.msra.mxu0 %v1263
      %1972 = vmatmul.bf16.gmra.mxu0 %v599
      %v1973 = vpop.f32.mrf.mxu0
      %v1974 = vadd.f32 %v1960, %v1973
      %v1975 = vpop.f32.mrf.mxu0
      %v1976 = vadd.f32 %v1962, %v1975
      %1977 = vdwg.mxu0
      %1978 = vmatpush.bf16.msra.mxu0 %v1383
      %1979 = vmatpush.bf16.msra.mxu0 %v1375
      %1980 = vmatpush.bf16.msra.mxu0 %v1367
      %1981 = vmatpush.bf16.msra.mxu0 %v1359
      %1982 = vmatpush.bf16.msra.mxu0 %v1351
      %1983 = vmatpush.bf16.msra.mxu0 %v1343
      %1984 = vmatpush.bf16.msra.mxu0 %v1335
      %1985 = vmatpush.bf16.msra.mxu0 %v1327
      %1986 = vmatmul.bf16.gmra.mxu0 %v600
      %v1987 = vpop.f32.mrf.mxu0
      %v1988 = vadd.f32 %v1974, %v1987
      %v1989 = vpop.f32.mrf.mxu0
      %v1990 = vadd.f32 %v1976, %v1989
      %1991 = vdwg.mxu0
      %1992 = vmatpush.bf16.msra.mxu0 0
      %1993 = vmatpush.bf16.msra.mxu0 0
      %1994 = vmatpush.bf16.msra.mxu0 0
      %1995 = vmatpush.bf16.msra.mxu0 0
      %1996 = vmatpush.bf16.msra.mxu0 0
      %1997 = vmatpush.bf16.msra.mxu0 0
      %1998 = vmatpush.bf16.msra.mxu0 0
      %1999 = vmatpush.bf16.msra.mxu0 %v1609
      %2000 = vmatmul.bf16.gmra.mxu0 %v1587
      %v2001 = vpop.f32.mrf.mxu0
      %v2002 = vadd.f32 %v1988, %v2001
      %v2003 = vpop.f32.mrf.mxu0
      %v2004 = vadd.f32 %v1990, %v2003
      %2005 = vdwg.mxu0
      %2006 = vmatpush.bf16.msra.mxu0 %v1256
      %2007 = vmatpush.bf16.msra.mxu0 %v1248
      %2008 = vmatpush.bf16.msra.mxu0 %v1240
      %2009 = vmatpush.bf16.msra.mxu0 %v1232
      %2010 = vmatpush.bf16.msra.mxu0 %v1224
      %2011 = vmatpush.bf16.msra.mxu0 %v1216
      %2012 = vmatpush.bf16.msra.mxu0 %v1208
      %2013 = vmatpush.bf16.msra.mxu0 %v1200
      %2014 = vmatmul.bf16.gmra.mxu0 %v598
      %v2015 = vpop.f32.mrf.mxu0
      %v2016 = vadd.f32 0.0, %v2015
      %v2017 = vpop.f32.mrf.mxu0
      %v2018 = vadd.f32 0.0, %v2017
      %2019 = vdwg.mxu0
      %2020 = vmatpush.bf16.msra.mxu0 %v1320
      %2021 = vmatpush.bf16.msra.mxu0 %v1312
      %2022 = vmatpush.bf16.msra.mxu0 %v1304
      %2023 = vmatpush.bf16.msra.mxu0 %v1296
      %2024 = vmatpush.bf16.msra.mxu0 %v1288
      %2025 = vmatpush.bf16.msra.mxu0 %v1280
      %2026 = vmatpush.bf16.msra.mxu0 %v1272
      %2027 = vmatpush.bf16.msra.mxu0 %v1264
      %2028 = vmatmul.bf16.gmra.mxu0 %v599
      %v2029 = vpop.f32.mrf.mxu0
      %v2030 = vadd.f32 %v2016, %v2029
      %v2031 = vpop.f32.mrf.mxu0
      %v2032 = vadd.f32 %v2018, %v2031
      %2033 = vdwg.mxu0
      %2034 = vmatpush.bf16.msra.mxu0 %v1384
      %2035 = vmatpush.bf16.msra.mxu0 %v1376
      %2036 = vmatpush.bf16.msra.mxu0 %v1368
      %2037 = vmatpush.bf16.msra.mxu0 %v1360
      %2038 = vmatpush.bf16.msra.mxu0 %v1352
      %2039 = vmatpush.bf16.msra.mxu0 %v1344
      %2040 = vmatpush.bf16.msra.mxu0 %v1336
      %2041 = vmatpush.bf16.msra.mxu0 %v1328
      %2042 = vmatmul.bf16.gmra.mxu0 %v600
      %v2043 = vpop.f32.mrf.mxu0
      %v2044 = vadd.f32 %v2030, %v2043
      %v2045 = vpop.f32.mrf.mxu0
      %v2046 = vadd.f32 %v2032, %v2045
      %2047 = vdwg.mxu0
      %2048 = vmatpush.bf16.msra.mxu0 0
      %2049 = vmatpush.bf16.msra.mxu0 0
      %2050 = vmatpush.bf16.msra.mxu0 0
      %2051 = vmatpush.bf16.msra.mxu0 0
      %2052 = vmatpush.bf16.msra.mxu0 0
      %2053 = vmatpush.bf16.msra.mxu0 0
      %2054 = vmatpush.bf16.msra.mxu0 0
      %2055 = vmatpush.bf16.msra.mxu0 %v1612
      %2056 = vmatmul.bf16.gmra.mxu0 %v1587
      %v2057 = vpop.f32.mrf.mxu0
      %v2058 = vadd.f32 %v2044, %v2057
      %v2059 = vpop.f32.mrf.mxu0
      %v2060 = vadd.f32 %v2046, %v2059
      %2061 = vdwg.mxu0
      %v2062 = vmul.f32 %v1666, 0.020408163
      %v2063 = vmul.f32 %v1722, 0.020408163
      %v2064 = vmul.f32 %v1778, 0.020408163
      %v2065 = vmul.f32 %v1834, 0.020408163
      %v2066 = vmul.f32 %v1890, 0.020408163
      %v2067 = vmul.f32 %v1946, 0.020408163
      %v2068 = vmul.f32 %v2002, 0.020408163
      %v2069 = vmul.f32 %v2058, 0.020408163
      %v2070 = vmul.f32 %v1668, 0.020408163
      %v2071 = vmul.f32 %v1724, 0.020408163
      %v2072 = vmul.f32 %v1780, 0.020408163
      %v2073 = vmul.f32 %v1836, 0.020408163
      %v2074 = vmul.f32 %v1892, 0.020408163
      %v2075 = vmul.f32 %v1948, 0.020408163
      %v2076 = vmul.f32 %v2004, 0.020408163
      %v2077 = vmul.f32 %v2060, 0.020408163
      %2078 = vst [vmem:[%s251] sm:$0x3f] %v2070
      %2079 = vst [vmem:[%s251 + $0x8] sm:$0x3f] %v2071
      %2080 = vst [vmem:[%s251 + $0x10] sm:$0x3f] %v2072
      %2081 = vst [vmem:[%s251 + $0x18] sm:$0x3f] %v2073
      %2082 = vst [vmem:[%s251 + $0x20] sm:$0x3f] %v2074
      %2083 = vst [vmem:[%s251 + $0x28] sm:$0x3f] %v2075
      %2084 = vst [vmem:[%s251 + $0x30] sm:$0x3f] %v2076
      %2085 = vst [vmem:[%s251 + $0x38] sm:$0x3f] %v2077
      %v2086 = vpack.c.bf16 %v2062, %v2062
      %v2087 = vpack.c.bf16 %v2063, %v2063
      %v2088 = vpack.c.bf16 %v2064, %v2064
      %v2089 = vpack.c.bf16 %v2065, %v2065
      %v2090 = vpack.c.bf16 %v2066, %v2066
      %v2091 = vpack.c.bf16 %v2067, %v2067
      %v2092 = vpack.c.bf16 %v2068, %v2068
      %v2093 = vpack.c.bf16 %v2069, %v2069
      %v2095 = vperm.slane %v385, 0
      %v2225 = vunpack.c.l.b16 %v257
      %v2226 = vunpack.c.l.b16 %v258
      %v2227 = vunpack.c.l.b16 %v259
      %v2228 = vunpack.c.l.b16 %v260
      %v2229 = vunpack.c.l.b16 %v261
      %v2230 = vunpack.c.l.b16 %v262
      %v2231 = vunpack.c.l.b16 %v263
      %v2232 = vunpack.c.l.b16 %v264
      %v2233 = vunpack.c.l.b16 %v265
      %v2234 = vunpack.c.l.b16 %v266
      %v2235 = vunpack.c.l.b16 %v267
      %v2236 = vunpack.c.l.b16 %v268
      %v2237 = vunpack.c.l.b16 %v269
      %v2238 = vunpack.c.l.b16 %v270
      %v2239 = vunpack.c.l.b16 %v271
      %v2240 = vunpack.c.l.b16 %v272
      %v2241 = vunpack.c.l.b16 %v273
      %v2242 = vunpack.c.l.b16 %v274
      %v2243 = vunpack.c.l.b16 %v275
      %v2244 = vunpack.c.l.b16 %v276
      %v2245 = vunpack.c.l.b16 %v277
      %v2246 = vunpack.c.l.b16 %v278
      %v2247 = vunpack.c.l.b16 %v279
      %v2248 = vunpack.c.l.b16 %v280
      %v2249 = vunpack.c.l.b16 %v281
      %v2250 = vunpack.c.l.b16 %v282
      %v2251 = vunpack.c.l.b16 %v283
      %v2252 = vunpack.c.l.b16 %v284
      %v2253 = vunpack.c.l.b16 %v285
      %v2254 = vunpack.c.l.b16 %v286
      %v2255 = vunpack.c.l.b16 %v287
      %v2256 = vunpack.c.l.b16 %v288
      %v2257 = vunpack.c.l.b16 %v289
      %v2258 = vunpack.c.l.b16 %v290
      %v2259 = vunpack.c.l.b16 %v291
      %v2260 = vunpack.c.l.b16 %v292
      %v2261 = vunpack.c.l.b16 %v293
      %v2262 = vunpack.c.l.b16 %v294
      %v2263 = vunpack.c.l.b16 %v295
      %v2264 = vunpack.c.l.b16 %v296
      %v2265 = vunpack.c.l.b16 %v297
      %v2266 = vunpack.c.l.b16 %v298
      %v2267 = vunpack.c.l.b16 %v299
      %v2268 = vunpack.c.l.b16 %v300
      %v2269 = vunpack.c.l.b16 %v301
      %v2270 = vunpack.c.l.b16 %v302
      %v2271 = vunpack.c.l.b16 %v303
      %v2272 = vunpack.c.l.b16 %v304
      %v2273 = vunpack.c.l.b16 %v305
      %v2274 = vunpack.c.l.b16 %v306
      %v2275 = vunpack.c.l.b16 %v307
      %v2276 = vunpack.c.l.b16 %v308
      %v2277 = vunpack.c.l.b16 %v309
      %v2278 = vunpack.c.l.b16 %v310
      %v2279 = vunpack.c.l.b16 %v311
      %v2280 = vunpack.c.l.b16 %v312
      %v2281 = vunpack.c.l.b16 %v313
      %v2282 = vunpack.c.l.b16 %v314
      %v2283 = vunpack.c.l.b16 %v315
      %v2284 = vunpack.c.l.b16 %v316
      %v2285 = vunpack.c.l.b16 %v317
      %v2286 = vunpack.c.l.b16 %v318
      %v2287 = vunpack.c.l.b16 %v319
      %v2288 = vunpack.c.l.b16 %v320
      %v2289 = vunpack.c.l.b16 %v321
      %v2290 = vunpack.c.l.b16 %v322
      %v2291 = vunpack.c.l.b16 %v323
      %v2292 = vunpack.c.l.b16 %v324
      %v2293 = vunpack.c.l.b16 %v325
      %v2294 = vunpack.c.l.b16 %v326
      %v2295 = vunpack.c.l.b16 %v327
      %v2296 = vunpack.c.l.b16 %v328
      %v2297 = vunpack.c.l.b16 %v329
      %v2298 = vunpack.c.l.b16 %v330
      %v2299 = vunpack.c.l.b16 %v331
      %v2300 = vunpack.c.l.b16 %v332
      %v2301 = vunpack.c.l.b16 %v333
      %v2302 = vunpack.c.l.b16 %v334
      %v2303 = vunpack.c.l.b16 %v335
      %v2304 = vunpack.c.l.b16 %v336
      %v2305 = vunpack.c.l.b16 %v337
      %v2306 = vunpack.c.l.b16 %v338
      %v2307 = vunpack.c.l.b16 %v339
      %v2308 = vunpack.c.l.b16 %v340
      %v2309 = vunpack.c.l.b16 %v341
      %v2310 = vunpack.c.l.b16 %v342
      %v2311 = vunpack.c.l.b16 %v343
      %v2312 = vunpack.c.l.b16 %v344
      %v2313 = vunpack.c.l.b16 %v345
      %v2314 = vunpack.c.l.b16 %v346
      %v2315 = vunpack.c.l.b16 %v347
      %v2316 = vunpack.c.l.b16 %v348
      %v2317 = vunpack.c.l.b16 %v349
      %v2318 = vunpack.c.l.b16 %v350
      %v2319 = vunpack.c.l.b16 %v351
      %v2320 = vunpack.c.l.b16 %v352
      %v2321 = vunpack.c.l.b16 %v353
      %v2322 = vunpack.c.l.b16 %v354
      %v2323 = vunpack.c.l.b16 %v355
      %v2324 = vunpack.c.l.b16 %v356
      %v2325 = vunpack.c.l.b16 %v357
      %v2326 = vunpack.c.l.b16 %v358
      %v2327 = vunpack.c.l.b16 %v359
      %v2328 = vunpack.c.l.b16 %v360
      %v2329 = vunpack.c.l.b16 %v361
      %v2330 = vunpack.c.l.b16 %v362
      %v2331 = vunpack.c.l.b16 %v363
      %v2332 = vunpack.c.l.b16 %v364
      %v2333 = vunpack.c.l.b16 %v365
      %v2334 = vunpack.c.l.b16 %v366
      %v2335 = vunpack.c.l.b16 %v367
      %v2336 = vunpack.c.l.b16 %v368
      %v2337 = vunpack.c.l.b16 %v369
      %v2338 = vunpack.c.l.b16 %v370
      %v2339 = vunpack.c.l.b16 %v371
      %v2340 = vunpack.c.l.b16 %v372
      %v2341 = vunpack.c.l.b16 %v373
      %v2342 = vunpack.c.l.b16 %v374
      %v2343 = vunpack.c.l.b16 %v375
      %v2344 = vunpack.c.l.b16 %v376
      %v2345 = vunpack.c.l.b16 %v377
      %v2346 = vunpack.c.l.b16 %v378
      %v2347 = vunpack.c.l.b16 %v379
      %v2348 = vunpack.c.l.b16 %v380
      %v2349 = vunpack.c.l.b16 %v381
      %v2350 = vunpack.c.l.b16 %v382
      %v2351 = vunpack.c.l.b16 %v383
      %v2352 = vunpack.c.l.b16 %v384
      %v2353 = vpack.c.b16 %v2226, %v2225
      %v2354 = vpack.c.b16 %v2228, %v2227
      %v2355 = vpack.c.b16 %v2230, %v2229
      %v2356 = vpack.c.b16 %v2232, %v2231
      %v2357 = vpack.c.b16 %v2234, %v2233
      %v2358 = vpack.c.b16 %v2236, %v2235
      %v2359 = vpack.c.b16 %v2238, %v2237
      %v2360 = vpack.c.b16 %v2240, %v2239
      %v2361 = vpack.c.b16 %v2242, %v2241
      %v2362 = vpack.c.b16 %v2244, %v2243
      %v2363 = vpack.c.b16 %v2246, %v2245
      %v2364 = vpack.c.b16 %v2248, %v2247
      %v2365 = vpack.c.b16 %v2250, %v2249
      %v2366 = vpack.c.b16 %v2252, %v2251
      %v2367 = vpack.c.b16 %v2254, %v2253
      %v2368 = vpack.c.b16 %v2256, %v2255
      %v2369 = vpack.c.b16 %v2258, %v2257
      %v2370 = vpack.c.b16 %v2260, %v2259
      %v2371 = vpack.c.b16 %v2262, %v2261
      %v2372 = vpack.c.b16 %v2264, %v2263
      %v2373 = vpack.c.b16 %v2266, %v2265
      %v2374 = vpack.c.b16 %v2268, %v2267
      %v2375 = vpack.c.b16 %v2270, %v2269
      %v2376 = vpack.c.b16 %v2272, %v2271
      %v2377 = vpack.c.b16 %v2274, %v2273
      %v2378 = vpack.c.b16 %v2276, %v2275
      %v2379 = vpack.c.b16 %v2278, %v2277
      %v2380 = vpack.c.b16 %v2280, %v2279
      %v2381 = vpack.c.b16 %v2282, %v2281
      %v2382 = vpack.c.b16 %v2284, %v2283
      %v2383 = vpack.c.b16 %v2286, %v2285
      %v2384 = vpack.c.b16 %v2288, %v2287
      %v2385 = vpack.c.b16 %v2290, %v2289
      %v2386 = vpack.c.b16 %v2292, %v2291
      %v2387 = vpack.c.b16 %v2294, %v2293
      %v2388 = vpack.c.b16 %v2296, %v2295
      %v2389 = vpack.c.b16 %v2298, %v2297
      %v2390 = vpack.c.b16 %v2300, %v2299
      %v2391 = vpack.c.b16 %v2302, %v2301
      %v2392 = vpack.c.b16 %v2304, %v2303
      %v2393 = vpack.c.b16 %v2306, %v2305
      %v2394 = vpack.c.b16 %v2308, %v2307
      %v2395 = vpack.c.b16 %v2310, %v2309
      %v2396 = vpack.c.b16 %v2312, %v2311
      %v2397 = vpack.c.b16 %v2314, %v2313
      %v2398 = vpack.c.b16 %v2316, %v2315
      %v2399 = vpack.c.b16 %v2318, %v2317
      %v2400 = vpack.c.b16 %v2320, %v2319
      %v2401 = vpack.c.b16 %v2322, %v2321
      %v2402 = vpack.c.b16 %v2324, %v2323
      %v2403 = vpack.c.b16 %v2326, %v2325
      %v2404 = vpack.c.b16 %v2328, %v2327
      %v2405 = vpack.c.b16 %v2330, %v2329
      %v2406 = vpack.c.b16 %v2332, %v2331
      %v2407 = vpack.c.b16 %v2334, %v2333
      %v2408 = vpack.c.b16 %v2336, %v2335
      %v2409 = vpack.c.b16 %v2338, %v2337
      %v2410 = vpack.c.b16 %v2340, %v2339
      %v2411 = vpack.c.b16 %v2342, %v2341
      %v2412 = vpack.c.b16 %v2344, %v2343
      %v2413 = vpack.c.b16 %v2346, %v2345
      %v2414 = vpack.c.b16 %v2348, %v2347
      %v2415 = vpack.c.b16 %v2350, %v2349
      %v2416 = vpack.c.b16 %v2352, %v2351
      %2481 = vmatpush.bf16.msra.mxu0 %v2360
      %2482 = vmatpush.bf16.msra.mxu0 %v2359
      %2483 = vmatpush.bf16.msra.mxu0 %v2358
      %2484 = vmatpush.bf16.msra.mxu0 %v2357
      %2485 = vmatpush.bf16.msra.mxu0 %v2356
      %2486 = vmatpush.bf16.msra.mxu0 %v2355
      %2487 = vmatpush.bf16.msra.mxu0 %v2354
      %2488 = vmatpush.bf16.msra.mxu0 %v2353
      %2489 = vmatmul.bf16.gmra.mxu0 %v2086
      %v2490 = vpop.f32.mrf.mxu0
      %v2491 = vadd.f32 %v2095, %v2490
      %v2492 = vpop.f32.mrf.mxu0
      %2493 = vdwg.mxu0
      %2494 = vmatpush.bf16.msra.mxu0 %v2368
      %2495 = vmatpush.bf16.msra.mxu0 %v2367
      %2496 = vmatpush.bf16.msra.mxu0 %v2366
      %2497 = vmatpush.bf16.msra.mxu0 %v2365
      %2498 = vmatpush.bf16.msra.mxu0 %v2364
      %2499 = vmatpush.bf16.msra.mxu0 %v2363
      %2500 = vmatpush.bf16.msra.mxu0 %v2362
      %2501 = vmatpush.bf16.msra.mxu0 %v2361
      %2502 = vmatmul.bf16.gmra.mxu0 %v2087
      %v2503 = vpop.f32.mrf.mxu0
      %v2504 = vadd.f32 %v2491, %v2503
      %v2505 = vpop.f32.mrf.mxu0
      %2506 = vdwg.mxu0
      %2507 = vmatpush.bf16.msra.mxu0 %v2376
      %2508 = vmatpush.bf16.msra.mxu0 %v2375
      %2509 = vmatpush.bf16.msra.mxu0 %v2374
      %2510 = vmatpush.bf16.msra.mxu0 %v2373
      %2511 = vmatpush.bf16.msra.mxu0 %v2372
      %2512 = vmatpush.bf16.msra.mxu0 %v2371
      %2513 = vmatpush.bf16.msra.mxu0 %v2370
      %2514 = vmatpush.bf16.msra.mxu0 %v2369
      %2515 = vmatmul.bf16.gmra.mxu0 %v2088
      %v2516 = vpop.f32.mrf.mxu0
      %v2517 = vadd.f32 %v2504, %v2516
      %v2518 = vpop.f32.mrf.mxu0
      %2519 = vdwg.mxu0
      %2520 = vmatpush.bf16.msra.mxu0 %v2384
      %2521 = vmatpush.bf16.msra.mxu0 %v2383
      %2522 = vmatpush.bf16.msra.mxu0 %v2382
      %2523 = vmatpush.bf16.msra.mxu0 %v2381
      %2524 = vmatpush.bf16.msra.mxu0 %v2380
      %2525 = vmatpush.bf16.msra.mxu0 %v2379
      %2526 = vmatpush.bf16.msra.mxu0 %v2378
      %2527 = vmatpush.bf16.msra.mxu0 %v2377
      %2528 = vmatmul.bf16.gmra.mxu0 %v2089
      %v2529 = vpop.f32.mrf.mxu0
      %v2530 = vadd.f32 %v2517, %v2529
      %v2531 = vpop.f32.mrf.mxu0
      %2532 = vdwg.mxu0
      %2533 = vmatpush.bf16.msra.mxu0 %v2392
      %2534 = vmatpush.bf16.msra.mxu0 %v2391
      %2535 = vmatpush.bf16.msra.mxu0 %v2390
      %2536 = vmatpush.bf16.msra.mxu0 %v2389
      %2537 = vmatpush.bf16.msra.mxu0 %v2388
      %2538 = vmatpush.bf16.msra.mxu0 %v2387
      %2539 = vmatpush.bf16.msra.mxu0 %v2386
      %2540 = vmatpush.bf16.msra.mxu0 %v2385
      %2541 = vmatmul.bf16.gmra.mxu0 %v2090
      %v2542 = vpop.f32.mrf.mxu0
      %v2543 = vadd.f32 %v2530, %v2542
      %v2544 = vpop.f32.mrf.mxu0
      %2545 = vdwg.mxu0
      %2546 = vmatpush.bf16.msra.mxu0 %v2400
      %2547 = vmatpush.bf16.msra.mxu0 %v2399
      %2548 = vmatpush.bf16.msra.mxu0 %v2398
      %2549 = vmatpush.bf16.msra.mxu0 %v2397
      %2550 = vmatpush.bf16.msra.mxu0 %v2396
      %2551 = vmatpush.bf16.msra.mxu0 %v2395
      %2552 = vmatpush.bf16.msra.mxu0 %v2394
      %2553 = vmatpush.bf16.msra.mxu0 %v2393
      %2554 = vmatmul.bf16.gmra.mxu0 %v2091
      %v2555 = vpop.f32.mrf.mxu0
      %v2556 = vadd.f32 %v2543, %v2555
      %v2557 = vpop.f32.mrf.mxu0
      %2558 = vdwg.mxu0
      %2559 = vmatpush.bf16.msra.mxu0 %v2408
      %2560 = vmatpush.bf16.msra.mxu0 %v2407
      %2561 = vmatpush.bf16.msra.mxu0 %v2406
      %2562 = vmatpush.bf16.msra.mxu0 %v2405
      %2563 = vmatpush.bf16.msra.mxu0 %v2404
      %2564 = vmatpush.bf16.msra.mxu0 %v2403
      %2565 = vmatpush.bf16.msra.mxu0 %v2402
      %2566 = vmatpush.bf16.msra.mxu0 %v2401
      %2567 = vmatmul.bf16.gmra.mxu0 %v2092
      %v2568 = vpop.f32.mrf.mxu0
      %v2569 = vadd.f32 %v2556, %v2568
      %v2570 = vpop.f32.mrf.mxu0
      %2571 = vdwg.mxu0
      %2572 = vmatpush.bf16.msra.mxu0 %v2416
      %2573 = vmatpush.bf16.msra.mxu0 %v2415
      %2574 = vmatpush.bf16.msra.mxu0 %v2414
      %2575 = vmatpush.bf16.msra.mxu0 %v2413
      %2576 = vmatpush.bf16.msra.mxu0 %v2412
      %2577 = vmatpush.bf16.msra.mxu0 %v2411
      %2578 = vmatpush.bf16.msra.mxu0 %v2410
      %2579 = vmatpush.bf16.msra.mxu0 %v2409
      %2580 = vmatmul.bf16.gmra.mxu0 %v2093
      %v2581 = vpop.f32.mrf.mxu0
      %v2582 = vadd.f32 %v2569, %v2581
      %v2583 = vpop.f32.mrf.mxu0
      %2584 = vdwg.mxu0
      %vm2585 = vcmask 531456
      %2586 = vst.msk [vmem:[%s255] sm:$0xff] %vm2585, %v2582
      %p2587 = scmp.lt.s32.totalorder %s17, 1
      %s2588 = scalar_select %p2587, %s17, 1
      %s2589 = smul.addr %s2588, 8
      %s2590 = smul.addr %s2589, 8
      %s2591 = scalar_lea.vmem %s4, %s2590
      %p2592 = scmp.lt.s32.totalorder %s17, 1
      %s2593 = scalar_select %p2592, %s17, 1
      %s2594 = smul.addr %s2593, 8
      %s2595 = scalar_lea.vmem %s5, %s2594
      // Predicated region
      $region37: #{super_event_forward.1} parent=35 // pred_check
        %p2596 = pneg %p129
      $region38: #{super_event_forward.1} parent=35 // pred_check_branch
        %2598 = sbr.rel (%p2596) target = $region40
      $region39: #{super_event_forward.1} parent=35 // pred_region
        _
      $region40: #{super_event_forward.1} parent=35 // pred_fallthru
        _
      // Predicated region
      $region41: #{super_event_forward.1} parent=35 // pred_check
        %p2599 = pneg %p155
      $region42: #{super_event_forward.1} parent=35 // pred_check_branch
        %2601 = sbr.rel (%p2599) target = $region44
      $region43: #{super_event_forward.1} parent=35 // pred_region
        _
      $region44: #{super_event_forward.1} parent=35 // pred_fallthru
        _
    $region36: #{super_event_forward.1} parent=5 // pred_fallthru
      _
    %p2602 = scmp.le.s32.totalorder 2, %s12
    // Predicated region
    $region45: #{super_event_forward.1} parent=5 // pred_check
      %p2603 = pneg %p2602
    $region46: #{super_event_forward.1} parent=5 // pred_check_branch
      %2605 = sbr.rel (%p2603) target = $region48
    $region47: #{super_event_forward.1} parent=5 // pred_region
      %s2606 = ssub.s32 %s12, 2
      // Predicated region
      $region49: #{super_event_forward.1} parent=47 // pred_check
        %p2607 = pneg %p135
      $region50: #{super_event_forward.1} parent=47 // pred_check_branch
        %2609 = sbr.rel (%p2607) target = $region52
      $region51: #{super_event_forward.1} parent=47 // pred_region
        %p2610 = scmp.lt.s32.totalorder %s18, 1
        %s2611 = scalar_select %p2610, %s18, 1
        %s2612 = smul.addr %s2611, 8
        %s2613 = smul.addr %s2612, 8
        %s2614 = scalar_lea.vmem %s4, %s2613
      $region52: #{super_event_forward.1} parent=47 // pred_fallthru
        _
      // Predicated region
      $region53: #{super_event_forward.1} parent=47 // pred_check
        %p2615 = pneg %p161
      $region54: #{super_event_forward.1} parent=47 // pred_check_branch
        %2617 = sbr.rel (%p2615) target = $region56
      $region55: #{super_event_forward.1} parent=47 // pred_region
        %p2618 = scmp.lt.s32.totalorder %s18, 1
        %s2619 = scalar_select %p2618, %s18, 1
        %s2620 = smul.addr %s2619, 8
        %s2621 = scalar_lea.vmem %s5, %s2620
      $region56: #{super_event_forward.1} parent=47 // pred_fallthru
        _
    $region48: #{super_event_forward.1} parent=5 // pred_fallthru
      _
  $region6: #{super_event_forward.1} parent=0 // loop_footer
    %s16 = sadd.s32 1, %s12
  $region7: #{super_event_forward.1} parent=0 // loop_footer_branch
    %11 = sbr.rel target = $region3
  $region8: #{super_event_forward.1} parent=0 // loop_exit
    _

// kernel: squeeze.1
$region0: #{squeeze.1}
  %s0 = inlined_call_operand.vmem [shape: bf16[1,65,3072], index: 0, kind: input, shape index: {}]
  %s1 = inlined_call_operand.vmem [shape: bf16[65,1024,3], index: 1, kind: output, shape index: {}]
  loop: start=0, step=1, limit=4
  $region2: #{squeeze.1} parent=0 // loop_pre_header
    _
  $region3: #{squeeze.1} parent=0 // loop_header
    %s3 = sphi 0, %s7
    %p4 = scmp.ge.s32.totalorder %s3, 4
  $region4: #{squeeze.1} parent=0 // loop_header_branch
    %6 = sbr.rel (%p4) target = $region8
  $region5: #{squeeze.1} parent=0 // loop_body
    %s8 = ssub.s32 %s3, 1
    %s9 = ssub.s32 %s3, 2
    %s10 = sadd.s32 %s3, 1
    %p11 = scmp.le.s32.totalorder 1, %s3
    %p12 = scmp.lt.s32.totalorder %s3, 3
    %p13 = pnand %p11, %p12
    %p14 = pneg %p13
    // Predicated region
    $region9: #{squeeze.1} parent=5 // pred_check
      _
    $region10: #{squeeze.1} parent=5 // pred_check_branch
      %16 = sbr.rel (%p13) target = $region12
    $region11: #{squeeze.1} parent=5 // pred_region
      %s17 = ssub.s32 %s3, 1
    $region12: #{squeeze.1} parent=5 // pred_fallthru
      _
    %p18 = scmp.lt.s32.totalorder %s3, 2
    // Predicated region
    $region13: #{squeeze.1} parent=5 // pred_check
      %p19 = pneg %p18
    $region14: #{squeeze.1} parent=5 // pred_check_branch
      %21 = sbr.rel (%p19) target = $region16
    $region15: #{squeeze.1} parent=5 // pred_region
      %s22 = smul.u32 768, %s3
      %p23 = scmp.lt.s32.totalorder %s22, 1535
      %s24 = scalar_select %p23, %s22, 1535
      %s25 = scalar_lea.vmem %s0, %s24
      %s26 = smul.u32 768, %s3
    $region16: #{squeeze.1} parent=5 // pred_fallthru
      _
    %p27 = scmp.le.s32.totalorder 1, %s3
    %p28 = scmp.lt.s32.totalorder %s3, 3
    %p29 = pnand %p27, %p28
    %p30 = pneg %p29
    // Predicated region
    $region17: #{squeeze.1} parent=5 // pred_check
      _
    $region18: #{squeeze.1} parent=5 // pred_check_branch
      %32 = sbr.rel (%p29) target = $region20
    $region19: #{squeeze.1} parent=5 // pred_region
      #allocation0 [shape = 'u8[2097152]{0}', space=vmem, size = 0x200000, scoped, tag = 'scoped mem for output reshape']
      #allocation1 [shape = 'u8[786432]{0}', space=vmem, size = 0xc0000, scoped, tag = 'scoped mem for input reshape']
      %s33 = ssub.s32 %s3, 1
      %s34 = smul.u32 768, %s8
      %p35 = scmp.lt.s32.totalorder %s34, 1535
      %s36 = scalar_select %p35, %s34, 1535
      %s37 = scalar_lea.vmem %s0, %s36
      %s38 = smul.u32 1024, %s8
      %p39 = scmp.lt.s32.totalorder %s38, 2047
      %s40 = scalar_select %p39, %s38, 2047
      %s41 = scalar_lea.vmem %s1, %s40
      %s42 = smul.u32 1024, %s8
      %p43 = scmp.lt.s32.totalorder %s42, 2047
      %s44 = scalar_select %p43, %s42, 2047
      %s45 = scalar_lea.vmem %s1, %s44
      %s46 = smul.u32 1024, %s8
      %s47 = smul.u32 768, %s8
      %p48 = scmp.lt.s32.totalorder %s47, 1535
      %s49 = scalar_select %p48, %s47, 1535
      %s50 = scalar_lea.vmem %s0, %s49
      %s51 = smul.u32 768, %s8
      %s53 = ssub.s32 256, 1
      %s54 = scalar_lea.vmem %s50, 764
      %s55 = sshrl.u32 %s53, 1
      %s56 = sor.u32 %s53, %s55
      %s57 = sand.u32 %s56, 85
      %s58 = sshrl.u32 %s57, 1
      %s59 = sor.u32 %s57, %s58
      %s60 = sand.u32 51, %s59
      %s61 = sshrl.u32 %s60, 2
      %s62 = sor.u32 %s60, %s61
      %s63 = sand.u32 15, %s62
      %v64 = vld [vmem:[%s54] sm:%s63]
      %v65 = vunpack.c.l.bf16 %v64
      %v66 = vunpack.c.h.bf16 %v64
      %s67 = scalar_lea.vmem [#allocation1], 1528
      %68 = vst [vmem:[%s67] sm:%s53] %v65
      %s69 = scalar_lea.vmem %s50, 760
      %s70 = sshrl.u32 %s53, 1
      %s71 = sor.u32 %s53, %s70
      %s72 = sand.u32 %s71, 85
      %s73 = sshrl.u32 %s72, 1
      %s74 = sor.u32 %s72, %s73
      %s75 = sand.u32 51, %s74
      %s76 = sshrl.u32 %s75, 2
      %s77 = sor.u32 %s75, %s76
      %s78 = sand.u32 15, %s77
      %v79 = vld [vmem:[%s69] sm:%s78]
      %v80 = vunpack.c.l.bf16 %v79
      %v81 = vunpack.c.h.bf16 %v79
      %s82 = scalar_lea.vmem [#allocation1], 1520
      %83 = vst [vmem:[%s82] sm:%s53] %v80
      %s84 = scalar_lea.vmem %s50, 756
      %s85 = sshrl.u32 %s53, 1
      %s86 = sor.u32 %s53, %s85
      %s87 = sand.u32 %s86, 85
      %s88 = sshrl.u32 %s87, 1
      %s89 = sor.u32 %s87, %s88
      %s90 = sand.u32 51, %s89
      %s91 = sshrl.u32 %s90, 2
      %s92 = sor.u32 %s90, %s91
      %s93 = sand.u32 15, %s92
      %v94 = vld [vmem:[%s84] sm:%s93]
      %v95 = vunpack.c.l.bf16 %v94
      %v96 = vunpack.c.h.bf16 %v94
      %s97 = scalar_lea.vmem [#allocation1], 1512
      %98 = vst [vmem:[%s97] sm:%s53] %v95
      %s99 = scalar_lea.vmem %s50, 752
      %s100 = sshrl.u32 %s53, 1
      %s101 = sor.u32 %s53, %s100
      %s102 = sand.u32 %s101, 85
      %s103 = sshrl.u32 %s102, 1
      %s104 = sor.u32 %s102, %s103
      %s105 = sand.u32 51, %s104
      %s106 = sshrl.u32 %s105, 2
      %s107 = sor.u32 %s105, %s106
      %s108 = sand.u32 15, %s107
      %v109 = vld [vmem:[%s99] sm:%s108]
      %v110 = vunpack.c.l.bf16 %v109
      %v111 = vunpack.c.h.bf16 %v109
      %s112 = scalar_lea.vmem [#allocation1], 1504
      %113 = vst [vmem:[%s112] sm:%s53] %v110
      %s114 = scalar_lea.vmem %s50, 748
      %s115 = sshrl.u32 %s53, 1
      %s116 = sor.u32 %s53, %s115
      %s117 = sand.u32 %s116, 85
      %s118 = sshrl.u32 %s117, 1
      %s119 = sor.u32 %s117, %s118
      %s120 = sand.u32 51, %s119
      %s121 = sshrl.u32 %s120, 2
      %s122 = sor.u32 %s120, %s121
      %s123 = sand.u32 15, %s122
      %v124 = vld [vmem:[%s114] sm:%s123]
      %v125 = vunpack.c.l.bf16 %v124
      %v126 = vunpack.c.h.bf16 %v124
      %s127 = scalar_lea.vmem [#allocation1], 1496
      %128 = vst [vmem:[%s127] sm:%s53] %v125
      %s129 = scalar_lea.vmem %s50, 744
      %s130 = sshrl.u32 %s53, 1
      %s131 = sor.u32 %s53, %s130
      %s132 = sand.u32 %s131, 85
      %s133 = sshrl.u32 %s132, 1
      %s134 = sor.u32 %s132, %s133
      %s135 = sand.u32 51, %s134
      %s136 = sshrl.u32 %s135, 2
      %s137 = sor.u32 %s135, %s136
      %s138 = sand.u32 15, %s137
      %v139 = vld [vmem:[%s129] sm:%s138]
      %v140 = vunpack.c.l.bf16 %v139
      %v141 = vunpack.c.h.bf16 %v139
      %s142 = scalar_lea.vmem [#allocation1], 1488
      %143 = vst [vmem:[%s142] sm:%s53] %v140
      %s144 = scalar_lea.vmem %s50, 740
      %s145 = sshrl.u32 %s53, 1
      %s146 = sor.u32 %s53, %s145
      %s147 = sand.u32 %s146, 85
      %s148 = sshrl.u32 %s147, 1
      %s149 = sor.u32 %s147, %s148
      %s150 = sand.u32 51, %s149
      %s151 = sshrl.u32 %s150, 2
      %s152 = sor.u32 %s150, %s151
      %s153 = sand.u32 15, %s152
      %v154 = vld [vmem:[%s144] sm:%s153]
      %v155 = vunpack.c.l.bf16 %v154
      %v156 = vunpack.c.h.bf16 %v154
      %s157 = scalar_lea.vmem [#allocation1], 1480
      %158 = vst [vmem:[%s157] sm:%s53] %v155
      %s159 = scalar_lea.vmem %s50, 736
      %s160 = sshrl.u32 %s53, 1
      %s161 = sor.u32 %s53, %s160
      %s162 = sand.u32 %s161, 85
      %s163 = sshrl.u32 %s162, 1
      %s164 = sor.u32 %s162, %s163
      %s165 = sand.u32 51, %s164
      %s166 = sshrl.u32 %s165, 2
      %s167 = sor.u32 %s165, %s166
      %s168 = sand.u32 15, %s167
      %v169 = vld [vmem:[%s159] sm:%s168]
      %v170 = vunpack.c.l.bf16 %v169
      %v171 = vunpack.c.h.bf16 %v169
      %s172 = scalar_lea.vmem [#allocation1], 1472
      %173 = vst [vmem:[%s172] sm:%s53] %v170
      %s174 = scalar_lea.vmem %s50, 732
      %s175 = sshrl.u32 %s53, 1
      %s176 = sor.u32 %s53, %s175
      %s177 = sand.u32 %s176, 85
      %s178 = sshrl.u32 %s177, 1
      %s179 = sor.u32 %s177, %s178
      %s180 = sand.u32 51, %s179
      %s181 = sshrl.u32 %s180, 2
      %s182 = sor.u32 %s180, %s181
      %s183 = sand.u32 15, %s182
      %v184 = vld [vmem:[%s174] sm:%s183]
      %v185 = vunpack.c.l.bf16 %v184
      %v186 = vunpack.c.h.bf16 %v184
      %s187 = scalar_lea.vmem [#allocation1], 1464
      %188 = vst [vmem:[%s187] sm:%s53] %v185
      %s189 = scalar_lea.vmem %s50, 728
      %s190 = sshrl.u32 %s53, 1
      %s191 = sor.u32 %s53, %s190
      %s192 = sand.u32 %s191, 85
      %s193 = sshrl.u32 %s192, 1
      %s194 = sor.u32 %s192, %s193
      %s195 = sand.u32 51, %s194
      %s196 = sshrl.u32 %s195, 2
      %s197 = sor.u32 %s195, %s196
      %s198 = sand.u32 15, %s197
      %v199 = vld [vmem:[%s189] sm:%s198]
      %v200 = vunpack.c.l.bf16 %v199
      %v201 = vunpack.c.h.bf16 %v199
      %s202 = scalar_lea.vmem [#allocation1], 1456
      %203 = vst [vmem:[%s202] sm:%s53] %v200
      %s204 = scalar_lea.vmem %s50, 724
      %s205 = sshrl.u32 %s53, 1
      %s206 = sor.u32 %s53, %s205
      %s207 = sand.u32 %s206, 85
      %s208 = sshrl.u32 %s207, 1
      %s209 = sor.u32 %s207, %s208
      %s210 = sand.u32 51, %s209
      %s211 = sshrl.u32 %s210, 2
      %s212 = sor.u32 %s210, %s211
      %s213 = sand.u32 15, %s212
      %v214 = vld [vmem:[%s204] sm:%s213]
      %v215 = vunpack.c.l.bf16 %v214
      %v216 = vunpack.c.h.bf16 %v214
      %s217 = scalar_lea.vmem [#allocation1], 1448
      %218 = vst [vmem:[%s217] sm:%s53] %v215
      %s219 = scalar_lea.vmem %s50, 720
      %s220 = sshrl.u32 %s53, 1
      %s221 = sor.u32 %s53, %s220
      %s222 = sand.u32 %s221, 85
      %s223 = sshrl.u32 %s222, 1
      %s224 = sor.u32 %s222, %s223
      %s225 = sand.u32 51, %s224
      %s226 = sshrl.u32 %s225, 2
      %s227 = sor.u32 %s225, %s226
      %s228 = sand.u32 15, %s227
      %v229 = vld [vmem:[%s219] sm:%s228]
      %v230 = vunpack.c.l.bf16 %v229
      %v231 = vunpack.c.h.bf16 %v229
      %s232 = scalar_lea.vmem [#allocation1], 1440
      %233 = vst [vmem:[%s232] sm:%s53] %v230
      %s234 = scalar_lea.vmem %s50, 716
      %s235 = sshrl.u32 %s53, 1
      %s236 = sor.u32 %s53, %s235
      %s237 = sand.u32 %s236, 85
      %s238 = sshrl.u32 %s237, 1
      %s239 = sor.u32 %s237, %s238
      %s240 = sand.u32 51, %s239
      %s241 = sshrl.u32 %s240, 2
      %s242 = sor.u32 %s240, %s241
      %s243 = sand.u32 15, %s242
      %v244 = vld [vmem:[%s234] sm:%s243]
      %v245 = vunpack.c.l.bf16 %v244
      %v246 = vunpack.c.h.bf16 %v244
      %s247 = scalar_lea.vmem [#allocation1], 1432
      %248 = vst [vmem:[%s247] sm:%s53] %v245
      %s249 = scalar_lea.vmem %s50, 712
      %s250 = sshrl.u32 %s53, 1
      %s251 = sor.u32 %s53, %s250
      %s252 = sand.u32 %s251, 85
      %s253 = sshrl.u32 %s252, 1
      %s254 = sor.u32 %s252, %s253
      %s255 = sand.u32 51, %s254
      %s256 = sshrl.u32 %s255, 2
      %s257 = sor.u32 %s255, %s256
      %s258 = sand.u32 15, %s257
      %v259 = vld [vmem:[%s249] sm:%s258]
      %v260 = vunpack.c.l.bf16 %v259
      %v261 = vunpack.c.h.bf16 %v259
      %s262 = scalar_lea.vmem [#allocation1], 1424
      %263 = vst [vmem:[%s262] sm:%s53] %v260
      %s264 = scalar_lea.vmem %s50, 708
      %s265 = sshrl.u32 %s53, 1
      %s266 = sor.u32 %s53, %s265
      %s267 = sand.u32 %s266, 85
      %s268 = sshrl.u32 %s267, 1
      %s269 = sor.u32 %s267, %s268
      %s270 = sand.u32 51, %s269
      %s271 = sshrl.u32 %s270, 2
      %s272 = sor.u32 %s270, %s271
      %s273 = sand.u32 15, %s272
      %v274 = vld [vmem:[%s264] sm:%s273]
      %v275 = vunpack.c.l.bf16 %v274
      %v276 = vunpack.c.h.bf16 %v274
      %s277 = scalar_lea.vmem [#allocation1], 1416
      %278 = vst [vmem:[%s277] sm:%s53] %v275
      %s279 = scalar_lea.vmem %s50, 704
      %s280 = sshrl.u32 %s53, 1
      %s281 = sor.u32 %s53, %s280
      %s282 = sand.u32 %s281, 85
      %s283 = sshrl.u32 %s282, 1
      %s284 = sor.u32 %s282, %s283
      %s285 = sand.u32 51, %s284
      %s286 = sshrl.u32 %s285, 2
      %s287 = sor.u32 %s285, %s286
      %s288 = sand.u32 15, %s287
      %v289 = vld [vmem:[%s279] sm:%s288]
      %v290 = vunpack.c.l.bf16 %v289
      %v291 = vunpack.c.h.bf16 %v289
      %s292 = scalar_lea.vmem [#allocation1], 1408
      %293 = vst [vmem:[%s292] sm:%s53] %v290
      %s294 = scalar_lea.vmem %s50, 700
      %s295 = sshrl.u32 %s53, 1
      %s296 = sor.u32 %s53, %s295
      %s297 = sand.u32 %s296, 85
      %s298 = sshrl.u32 %s297, 1
      %s299 = sor.u32 %s297, %s298
      %s300 = sand.u32 51, %s299
      %s301 = sshrl.u32 %s300, 2
      %s302 = sor.u32 %s300, %s301
      %s303 = sand.u32 15, %s302
      %v304 = vld [vmem:[%s294] sm:%s303]
      %v305 = vunpack.c.l.bf16 %v304
      %v306 = vunpack.c.h.bf16 %v304
      %s307 = scalar_lea.vmem [#allocation1], 1400
      %308 = vst [vmem:[%s307] sm:%s53] %v305
      %s309 = scalar_lea.vmem %s50, 696
      %s310 = sshrl.u32 %s53, 1
      %s311 = sor.u32 %s53, %s310
      %s312 = sand.u32 %s311, 85
      %s313 = sshrl.u32 %s312, 1
      %s314 = sor.u32 %s312, %s313
      %s315 = sand.u32 51, %s314
      %s316 = sshrl.u32 %s315, 2
      %s317 = sor.u32 %s315, %s316
      %s318 = sand.u32 15, %s317
      %v319 = vld [vmem:[%s309] sm:%s318]
      %v320 = vunpack.c.l.bf16 %v319
      %v321 = vunpack.c.h.bf16 %v319
      %s322 = scalar_lea.vmem [#allocation1], 1392
      %323 = vst [vmem:[%s322] sm:%s53] %v320
      %s324 = scalar_lea.vmem %s50, 692
      %s325 = sshrl.u32 %s53, 1
      %s326 = sor.u32 %s53, %s325
      %s327 = sand.u32 %s326, 85
      %s328 = sshrl.u32 %s327, 1
      %s329 = sor.u32 %s327, %s328
      %s330 = sand.u32 51, %s329
      %s331 = sshrl.u32 %s330, 2
      %s332 = sor.u32 %s330, %s331
      %s333 = sand.u32 15, %s332
      %v334 = vld [vmem:[%s324] sm:%s333]
      %v335 = vunpack.c.l.bf16 %v334
      %v336 = vunpack.c.h.bf16 %v334
      %s337 = scalar_lea.vmem [#allocation1], 1384
      %338 = vst [vmem:[%s337] sm:%s53] %v335
      %s339 = scalar_lea.vmem %s50, 688
      %s340 = sshrl.u32 %s53, 1
      %s341 = sor.u32 %s53, %s340
      %s342 = sand.u32 %s341, 85
      %s343 = sshrl.u32 %s342, 1
      %s344 = sor.u32 %s342, %s343
      %s345 = sand.u32 51, %s344
      %s346 = sshrl.u32 %s345, 2
      %s347 = sor.u32 %s345, %s346
      %s348 = sand.u32 15, %s347
      %v349 = vld [vmem:[%s339] sm:%s348]
      %v350 = vunpack.c.l.bf16 %v349
      %v351 = vunpack.c.h.bf16 %v349
      %s352 = scalar_lea.vmem [#allocation1], 1376
      %353 = vst [vmem:[%s352] sm:%s53] %v350
      %s354 = scalar_lea.vmem %s50, 684
      %s355 = sshrl.u32 %s53, 1
      %s356 = sor.u32 %s53, %s355
      %s357 = sand.u32 %s356, 85
      %s358 = sshrl.u32 %s357, 1
      %s359 = sor.u32 %s357, %s358
      %s360 = sand.u32 51, %s359
      %s361 = sshrl.u32 %s360, 2
      %s362 = sor.u32 %s360, %s361
      %s363 = sand.u32 15, %s362
      %v364 = vld [vmem:[%s354] sm:%s363]
      %v365 = vunpack.c.l.bf16 %v364
      %v366 = vunpack.c.h.bf16 %v364
      %s367 = scalar_lea.vmem [#allocation1], 1368
      %368 = vst [vmem:[%s367] sm:%s53] %v365
      %s369 = scalar_lea.vmem %s50, 680
      %s370 = sshrl.u32 %s53, 1
      %s371 = sor.u32 %s53, %s370
      %s372 = sand.u32 %s371, 85
      %s373 = sshrl.u32 %s372, 1
      %s374 = sor.u32 %s372, %s373
      %s375 = sand.u32 51, %s374
      %s376 = sshrl.u32 %s375, 2
      %s377 = sor.u32 %s375, %s376
      %s378 = sand.u32 15, %s377
      %v379 = vld [vmem:[%s369] sm:%s378]
      %v380 = vunpack.c.l.bf16 %v379
      %v381 = vunpack.c.h.bf16 %v379
      %s382 = scalar_lea.vmem [#allocation1], 1360
      %383 = vst [vmem:[%s382] sm:%s53] %v380
      %s384 = scalar_lea.vmem %s50, 676
      %s385 = sshrl.u32 %s53, 1
      %s386 = sor.u32 %s53, %s385
      %s387 = sand.u32 %s386, 85
      %s388 = sshrl.u32 %s387, 1
      %s389 = sor.u32 %s387, %s388
      %s390 = sand.u32 51, %s389
      %s391 = sshrl.u32 %s390, 2
      %s392 = sor.u32 %s390, %s391
      %s393 = sand.u32 15, %s392
      %v394 = vld [vmem:[%s384] sm:%s393]
      %v395 = vunpack.c.l.bf16 %v394
      %v396 = vunpack.c.h.bf16 %v394
      %s397 = scalar_lea.vmem [#allocation1], 1352
      %398 = vst [vmem:[%s397] sm:%s53] %v395
      %s399 = scalar_lea.vmem %s50, 672
      %s400 = sshrl.u32 %s53, 1
      %s401 = sor.u32 %s53, %s400
      %s402 = sand.u32 %s401, 85
      %s403 = sshrl.u32 %s402, 1
      %s404 = sor.u32 %s402, %s403
      %s405 = sand.u32 51, %s404
      %s406 = sshrl.u32 %s405, 2
      %s407 = sor.u32 %s405, %s406
      %s408 = sand.u32 15, %s407
      %v409 = vld [vmem:[%s399] sm:%s408]
      %v410 = vunpack.c.l.bf16 %v409
      %v411 = vunpack.c.h.bf16 %v409
      %s412 = scalar_lea.vmem [#allocation1], 1344
      %413 = vst [vmem:[%s412] sm:%s53] %v410
      %s414 = scalar_lea.vmem %s50, 668
      %s415 = sshrl.u32 %s53, 1
      %s416 = sor.u32 %s53, %s415
      %s417 = sand.u32 %s416, 85
      %s418 = sshrl.u32 %s417, 1
      %s419 = sor.u32 %s417, %s418
      %s420 = sand.u32 51, %s419
      %s421 = sshrl.u32 %s420, 2
      %s422 = sor.u32 %s420, %s421
      %s423 = sand.u32 15, %s422
      %v424 = vld [vmem:[%s414] sm:%s423]
      %v425 = vunpack.c.l.bf16 %v424
      %v426 = vunpack.c.h.bf16 %v424
      %s427 = scalar_lea.vmem [#allocation1], 1336
      %428 = vst [vmem:[%s427] sm:%s53] %v425
      %s429 = scalar_lea.vmem %s50, 664
      %s430 = sshrl.u32 %s53, 1
      %s431 = sor.u32 %s53, %s430
      %s432 = sand.u32 %s431, 85
      %s433 = sshrl.u32 %s432, 1
      %s434 = sor.u32 %s432, %s433
      %s435 = sand.u32 51, %s434
      %s436 = sshrl.u32 %s435, 2
      %s437 = sor.u32 %s435, %s436
      %s438 = sand.u32 15, %s437
      %v439 = vld [vmem:[%s429] sm:%s438]
      %v440 = vunpack.c.l.bf16 %v439
      %v441 = vunpack.c.h.bf16 %v439
      %s442 = scalar_lea.vmem [#allocation1], 1328
      %443 = vst [vmem:[%s442] sm:%s53] %v440
      %s444 = scalar_lea.vmem %s50, 660
      %s445 = sshrl.u32 %s53, 1
      %s446 = sor.u32 %s53, %s445
      %s447 = sand.u32 %s446, 85
      %s448 = sshrl.u32 %s447, 1
      %s449 = sor.u32 %s447, %s448
      %s450 = sand.u32 51, %s449
      %s451 = sshrl.u32 %s450, 2
      %s452 = sor.u32 %s450, %s451
      %s453 = sand.u32 15, %s452
      %v454 = vld [vmem:[%s444] sm:%s453]
      %v455 = vunpack.c.l.bf16 %v454
      %v456 = vunpack.c.h.bf16 %v454
      %s457 = scalar_lea.vmem [#allocation1], 1320
      %458 = vst [vmem:[%s457] sm:%s53] %v455
      %s459 = scalar_lea.vmem %s50, 656
      %s460 = sshrl.u32 %s53, 1
      %s461 = sor.u32 %s53, %s460
      %s462 = sand.u32 %s461, 85
      %s463 = sshrl.u32 %s462, 1
      %s464 = sor.u32 %s462, %s463
      %s465 = sand.u32 51, %s464
      %s466 = sshrl.u32 %s465, 2
      %s467 = sor.u32 %s465, %s466
      %s468 = sand.u32 15, %s467
      %v469 = vld [vmem:[%s459] sm:%s468]
      %v470 = vunpack.c.l.bf16 %v469
      %v471 = vunpack.c.h.bf16 %v469
      %s472 = scalar_lea.vmem [#allocation1], 1312
      %473 = vst [vmem:[%s472] sm:%s53] %v470
      %s474 = scalar_lea.vmem %s50, 652
      %s475 = sshrl.u32 %s53, 1
      %s476 = sor.u32 %s53, %s475
      %s477 = sand.u32 %s476, 85
      %s478 = sshrl.u32 %s477, 1
      %s479 = sor.u32 %s477, %s478
      %s480 = sand.u32 51, %s479
      %s481 = sshrl.u32 %s480, 2
      %s482 = sor.u32 %s480, %s481
      %s483 = sand.u32 15, %s482
      %v484 = vld [vmem:[%s474] sm:%s483]
      %v485 = vunpack.c.l.bf16 %v484
      %v486 = vunpack.c.h.bf16 %v484
      %s487 = scalar_lea.vmem [#allocation1], 1304
      %488 = vst [vmem:[%s487] sm:%s53] %v485
      %s489 = scalar_lea.vmem %s50, 648
      %s490 = sshrl.u32 %s53, 1
      %s491 = sor.u32 %s53, %s490
      %s492 = sand.u32 %s491, 85
      %s493 = sshrl.u32 %s492, 1
      %s494 = sor.u32 %s492, %s493
      %s495 = sand.u32 51, %s494
      %s496 = sshrl.u32 %s495, 2
      %s497 = sor.u32 %s495, %s496
      %s498 = sand.u32 15, %s497
      %v499 = vld [vmem:[%s489] sm:%s498]
      %v500 = vunpack.c.l.bf16 %v499
      %v501 = vunpack.c.h.bf16 %v499
      %s502 = scalar_lea.vmem [#allocation1], 1296
      %503 = vst [vmem:[%s502] sm:%s53] %v500
      %s504 = scalar_lea.vmem %s50, 644
      %s505 = sshrl.u32 %s53, 1
      %s506 = sor.u32 %s53, %s505
      %s507 = sand.u32 %s506, 85
      %s508 = sshrl.u32 %s507, 1
      %s509 = sor.u32 %s507, %s508
      %s510 = sand.u32 51, %s509
      %s511 = sshrl.u32 %s510, 2
      %s512 = sor.u32 %s510, %s511
      %s513 = sand.u32 15, %s512
      %v514 = vld [vmem:[%s504] sm:%s513]
      %v515 = vunpack.c.l.bf16 %v514
      %v516 = vunpack.c.h.bf16 %v514
      %s517 = scalar_lea.vmem [#allocation1], 1288
      %518 = vst [vmem:[%s517] sm:%s53] %v515
      %s519 = scalar_lea.vmem %s50, 640
      %s520 = sshrl.u32 %s53, 1
      %s521 = sor.u32 %s53, %s520
      %s522 = sand.u32 %s521, 85
      %s523 = sshrl.u32 %s522, 1
      %s524 = sor.u32 %s522, %s523
      %s525 = sand.u32 51, %s524
      %s526 = sshrl.u32 %s525, 2
      %s527 = sor.u32 %s525, %s526
      %s528 = sand.u32 15, %s527
      %v529 = vld [vmem:[%s519] sm:%s528]
      %v530 = vunpack.c.l.bf16 %v529
      %v531 = vunpack.c.h.bf16 %v529
      %s532 = scalar_lea.vmem [#allocation1], 1280
      %533 = vst [vmem:[%s532] sm:%s53] %v530
      %s534 = scalar_lea.vmem %s50, 636
      %s535 = sshrl.u32 %s53, 1
      %s536 = sor.u32 %s53, %s535
      %s537 = sand.u32 %s536, 85
      %s538 = sshrl.u32 %s537, 1
      %s539 = sor.u32 %s537, %s538
      %s540 = sand.u32 51, %s539
      %s541 = sshrl.u32 %s540, 2
      %s542 = sor.u32 %s540, %s541
      %s543 = sand.u32 15, %s542
      %v544 = vld [vmem:[%s534] sm:%s543]
      %v545 = vunpack.c.l.bf16 %v544
      %v546 = vunpack.c.h.bf16 %v544
      %s547 = scalar_lea.vmem [#allocation1], 1272
      %548 = vst [vmem:[%s547] sm:%s53] %v545
      %s549 = scalar_lea.vmem %s50, 632
      %s550 = sshrl.u32 %s53, 1
      %s551 = sor.u32 %s53, %s550
      %s552 = sand.u32 %s551, 85
      %s553 = sshrl.u32 %s552, 1
      %s554 = sor.u32 %s552, %s553
      %s555 = sand.u32 51, %s554
      %s556 = sshrl.u32 %s555, 2
      %s557 = sor.u32 %s555, %s556
      %s558 = sand.u32 15, %s557
      %v559 = vld [vmem:[%s549] sm:%s558]
      %v560 = vunpack.c.l.bf16 %v559
      %v561 = vunpack.c.h.bf16 %v559
      %s562 = scalar_lea.vmem [#allocation1], 1264
      %563 = vst [vmem:[%s562] sm:%s53] %v560
      %s564 = scalar_lea.vmem %s50, 628
      %s565 = sshrl.u32 %s53, 1
      %s566 = sor.u32 %s53, %s565
      %s567 = sand.u32 %s566, 85
      %s568 = sshrl.u32 %s567, 1
      %s569 = sor.u32 %s567, %s568
      %s570 = sand.u32 51, %s569
      %s571 = sshrl.u32 %s570, 2
      %s572 = sor.u32 %s570, %s571
      %s573 = sand.u32 15, %s572
      %v574 = vld [vmem:[%s564] sm:%s573]
      %v575 = vunpack.c.l.bf16 %v574
      %v576 = vunpack.c.h.bf16 %v574
      %s577 = scalar_lea.vmem [#allocation1], 1256
      %578 = vst [vmem:[%s577] sm:%s53] %v575
      %s579 = scalar_lea.vmem %s50, 624
      %s580 = sshrl.u32 %s53, 1
      %s581 = sor.u32 %s53, %s580
      %s582 = sand.u32 %s581, 85
      %s583 = sshrl.u32 %s582, 1
      %s584 = sor.u32 %s582, %s583
      %s585 = sand.u32 51, %s584
      %s586 = sshrl.u32 %s585, 2
      %s587 = sor.u32 %s585, %s586
      %s588 = sand.u32 15, %s587
      %v589 = vld [vmem:[%s579] sm:%s588]
      %v590 = vunpack.c.l.bf16 %v589
      %v591 = vunpack.c.h.bf16 %v589
      %s592 = scalar_lea.vmem [#allocation1], 1248
      %593 = vst [vmem:[%s592] sm:%s53] %v590
      %s594 = scalar_lea.vmem %s50, 620
      %s595 = sshrl.u32 %s53, 1
      %s596 = sor.u32 %s53, %s595
      %s597 = sand.u32 %s596, 85
      %s598 = sshrl.u32 %s597, 1
      %s599 = sor.u32 %s597, %s598
      %s600 = sand.u32 51, %s599
      %s601 = sshrl.u32 %s600, 2
      %s602 = sor.u32 %s600, %s601
      %s603 = sand.u32 15, %s602
      %v604 = vld [vmem:[%s594] sm:%s603]
      %v605 = vunpack.c.l.bf16 %v604
      %v606 = vunpack.c.h.bf16 %v604
      %s607 = scalar_lea.vmem [#allocation1], 1240
      %608 = vst [vmem:[%s607] sm:%s53] %v605
      %s609 = scalar_lea.vmem %s50, 616
      %s610 = sshrl.u32 %s53, 1
      %s611 = sor.u32 %s53, %s610
      %s612 = sand.u32 %s611, 85
      %s613 = sshrl.u32 %s612, 1
      %s614 = sor.u32 %s612, %s613
      %s615 = sand.u32 51, %s614
      %s616 = sshrl.u32 %s615, 2
      %s617 = sor.u32 %s615, %s616
      %s618 = sand.u32 15, %s617
      %v619 = vld [vmem:[%s609] sm:%s618]
      %v620 = vunpack.c.l.bf16 %v619
      %v621 = vunpack.c.h.bf16 %v619
      %s622 = scalar_lea.vmem [#allocation1], 1232
      %623 = vst [vmem:[%s622] sm:%s53] %v620
      %s624 = scalar_lea.vmem %s50, 612
      %s625 = sshrl.u32 %s53, 1
      %s626 = sor.u32 %s53, %s625
      %s627 = sand.u32 %s626, 85
      %s628 = sshrl.u32 %s627, 1
      %s629 = sor.u32 %s627, %s628
      %s630 = sand.u32 51, %s629
      %s631 = sshrl.u32 %s630, 2
      %s632 = sor.u32 %s630, %s631
      %s633 = sand.u32 15, %s632
      %v634 = vld [vmem:[%s624] sm:%s633]
      %v635 = vunpack.c.l.bf16 %v634
      %v636 = vunpack.c.h.bf16 %v634
      %s637 = scalar_lea.vmem [#allocation1], 1224
      %638 = vst [vmem:[%s637] sm:%s53] %v635
      %s639 = scalar_lea.vmem %s50, 608
      %s640 = sshrl.u32 %s53, 1
      %s641 = sor.u32 %s53, %s640
      %s642 = sand.u32 %s641, 85
      %s643 = sshrl.u32 %s642, 1
      %s644 = sor.u32 %s642, %s643
      %s645 = sand.u32 51, %s644
      %s646 = sshrl.u32 %s645, 2
      %s647 = sor.u32 %s645, %s646
      %s648 = sand.u32 15, %s647
      %v649 = vld [vmem:[%s639] sm:%s648]
      %v650 = vunpack.c.l.bf16 %v649
      %v651 = vunpack.c.h.bf16 %v649
      %s652 = scalar_lea.vmem [#allocation1], 1216
      %653 = vst [vmem:[%s652] sm:%s53] %v650
      %s654 = scalar_lea.vmem %s50, 604
      %s655 = sshrl.u32 %s53, 1
      %s656 = sor.u32 %s53, %s655
      %s657 = sand.u32 %s656, 85
      %s658 = sshrl.u32 %s657, 1
      %s659 = sor.u32 %s657, %s658
      %s660 = sand.u32 51, %s659
      %s661 = sshrl.u32 %s660, 2
      %s662 = sor.u32 %s660, %s661
      %s663 = sand.u32 15, %s662
      %v664 = vld [vmem:[%s654] sm:%s663]
      %v665 = vunpack.c.l.bf16 %v664
      %v666 = vunpack.c.h.bf16 %v664
      %s667 = scalar_lea.vmem [#allocation1], 1208
      %668 = vst [vmem:[%s667] sm:%s53] %v665
      %s669 = scalar_lea.vmem %s50, 600
      %s670 = sshrl.u32 %s53, 1
      %s671 = sor.u32 %s53, %s670
      %s672 = sand.u32 %s671, 85
      %s673 = sshrl.u32 %s672, 1
      %s674 = sor.u32 %s672, %s673
      %s675 = sand.u32 51, %s674
      %s676 = sshrl.u32 %s675, 2
      %s677 = sor.u32 %s675, %s676
      %s678 = sand.u32 15, %s677
      %v679 = vld [vmem:[%s669] sm:%s678]
      %v680 = vunpack.c.l.bf16 %v679
      %v681 = vunpack.c.h.bf16 %v679
      %s682 = scalar_lea.vmem [#allocation1], 1200
      %683 = vst [vmem:[%s682] sm:%s53] %v680
      %s684 = scalar_lea.vmem %s50, 596
      %s685 = sshrl.u32 %s53, 1
      %s686 = sor.u32 %s53, %s685
      %s687 = sand.u32 %s686, 85
      %s688 = sshrl.u32 %s687, 1
      %s689 = sor.u32 %s687, %s688
      %s690 = sand.u32 51, %s689
      %s691 = sshrl.u32 %s690, 2
      %s692 = sor.u32 %s690, %s691
      %s693 = sand.u32 15, %s692
      %v694 = vld [vmem:[%s684] sm:%s693]
      %v695 = vunpack.c.l.bf16 %v694
      %v696 = vunpack.c.h.bf16 %v694
      %s697 = scalar_lea.vmem [#allocation1], 1192
      %698 = vst [vmem:[%s697] sm:%s53] %v695
      %s699 = scalar_lea.vmem %s50, 592
      %s700 = sshrl.u32 %s53, 1
      %s701 = sor.u32 %s53, %s700
      %s702 = sand.u32 %s701, 85
      %s703 = sshrl.u32 %s702, 1
      %s704 = sor.u32 %s702, %s703
      %s705 = sand.u32 51, %s704
      %s706 = sshrl.u32 %s705, 2
      %s707 = sor.u32 %s705, %s706
      %s708 = sand.u32 15, %s707
      %v709 = vld [vmem:[%s699] sm:%s708]
      %v710 = vunpack.c.l.bf16 %v709
      %v711 = vunpack.c.h.bf16 %v709
      %s712 = scalar_lea.vmem [#allocation1], 1184
      %713 = vst [vmem:[%s712] sm:%s53] %v710
      %s714 = scalar_lea.vmem %s50, 588
      %s715 = sshrl.u32 %s53, 1
      %s716 = sor.u32 %s53, %s715
      %s717 = sand.u32 %s716, 85
      %s718 = sshrl.u32 %s717, 1
      %s719 = sor.u32 %s717, %s718
      %s720 = sand.u32 51, %s719
      %s721 = sshrl.u32 %s720, 2
      %s722 = sor.u32 %s720, %s721
      %s723 = sand.u32 15, %s722
      %v724 = vld [vmem:[%s714] sm:%s723]
      %v725 = vunpack.c.l.bf16 %v724
      %v726 = vunpack.c.h.bf16 %v724
      %s727 = scalar_lea.vmem [#allocation1], 1176
      %728 = vst [vmem:[%s727] sm:%s53] %v725
      %s729 = scalar_lea.vmem %s50, 584
      %s730 = sshrl.u32 %s53, 1
      %s731 = sor.u32 %s53, %s730
      %s732 = sand.u32 %s731, 85
      %s733 = sshrl.u32 %s732, 1
      %s734 = sor.u32 %s732, %s733
      %s735 = sand.u32 51, %s734
      %s736 = sshrl.u32 %s735, 2
      %s737 = sor.u32 %s735, %s736
      %s738 = sand.u32 15, %s737
      %v739 = vld [vmem:[%s729] sm:%s738]
      %v740 = vunpack.c.l.bf16 %v739
      %v741 = vunpack.c.h.bf16 %v739
      %s742 = scalar_lea.vmem [#allocation1], 1168
      %743 = vst [vmem:[%s742] sm:%s53] %v740
      %s744 = scalar_lea.vmem %s50, 580
      %s745 = sshrl.u32 %s53, 1
      %s746 = sor.u32 %s53, %s745
      %s747 = sand.u32 %s746, 85
      %s748 = sshrl.u32 %s747, 1
      %s749 = sor.u32 %s747, %s748
      %s750 = sand.u32 51, %s749
      %s751 = sshrl.u32 %s750, 2
      %s752 = sor.u32 %s750, %s751
      %s753 = sand.u32 15, %s752
      %v754 = vld [vmem:[%s744] sm:%s753]
      %v755 = vunpack.c.l.bf16 %v754
      %v756 = vunpack.c.h.bf16 %v754
      %s757 = scalar_lea.vmem [#allocation1], 1160
      %758 = vst [vmem:[%s757] sm:%s53] %v755
      %s759 = scalar_lea.vmem %s50, 576
      %s760 = sshrl.u32 %s53, 1
      %s761 = sor.u32 %s53, %s760
      %s762 = sand.u32 %s761, 85
      %s763 = sshrl.u32 %s762, 1
      %s764 = sor.u32 %s762, %s763
      %s765 = sand.u32 51, %s764
      %s766 = sshrl.u32 %s765, 2
      %s767 = sor.u32 %s765, %s766
      %s768 = sand.u32 15, %s767
      %v769 = vld [vmem:[%s759] sm:%s768]
      %v770 = vunpack.c.l.bf16 %v769
      %v771 = vunpack.c.h.bf16 %v769
      %s772 = scalar_lea.vmem [#allocation1], 1152
      %773 = vst [vmem:[%s772] sm:%s53] %v770
      %s774 = scalar_lea.vmem %s50, 572
      %s775 = sshrl.u32 %s53, 1
      %s776 = sor.u32 %s53, %s775
      %s777 = sand.u32 %s776, 85
      %s778 = sshrl.u32 %s777, 1
      %s779 = sor.u32 %s777, %s778
      %s780 = sand.u32 51, %s779
      %s781 = sshrl.u32 %s780, 2
      %s782 = sor.u32 %s780, %s781
      %s783 = sand.u32 15, %s782
      %v784 = vld [vmem:[%s774] sm:%s783]
      %v785 = vunpack.c.l.bf16 %v784
      %v786 = vunpack.c.h.bf16 %v784
      %s787 = scalar_lea.vmem [#allocation1], 1144
      %788 = vst [vmem:[%s787] sm:%s53] %v785
      %s789 = scalar_lea.vmem %s50, 568
      %s790 = sshrl.u32 %s53, 1
      %s791 = sor.u32 %s53, %s790
      %s792 = sand.u32 %s791, 85
      %s793 = sshrl.u32 %s792, 1
      %s794 = sor.u32 %s792, %s793
      %s795 = sand.u32 51, %s794
      %s796 = sshrl.u32 %s795, 2
      %s797 = sor.u32 %s795, %s796
      %s798 = sand.u32 15, %s797
      %v799 = vld [vmem:[%s789] sm:%s798]
      %v800 = vunpack.c.l.bf16 %v799
      %v801 = vunpack.c.h.bf16 %v799
      %s802 = scalar_lea.vmem [#allocation1], 1136
      %803 = vst [vmem:[%s802] sm:%s53] %v800
      %s804 = scalar_lea.vmem %s50, 564
      %s805 = sshrl.u32 %s53, 1
      %s806 = sor.u32 %s53, %s805
      %s807 = sand.u32 %s806, 85
      %s808 = sshrl.u32 %s807, 1
      %s809 = sor.u32 %s807, %s808
      %s810 = sand.u32 51, %s809
      %s811 = sshrl.u32 %s810, 2
      %s812 = sor.u32 %s810, %s811
      %s813 = sand.u32 15, %s812
      %v814 = vld [vmem:[%s804] sm:%s813]
      %v815 = vunpack.c.l.bf16 %v814
      %v816 = vunpack.c.h.bf16 %v814
      %s817 = scalar_lea.vmem [#allocation1], 1128
      %818 = vst [vmem:[%s817] sm:%s53] %v815
      %s819 = scalar_lea.vmem %s50, 560
      %s820 = sshrl.u32 %s53, 1
      %s821 = sor.u32 %s53, %s820
      %s822 = sand.u32 %s821, 85
      %s823 = sshrl.u32 %s822, 1
      %s824 = sor.u32 %s822, %s823
      %s825 = sand.u32 51, %s824
      %s826 = sshrl.u32 %s825, 2
      %s827 = sor.u32 %s825, %s826
      %s828 = sand.u32 15, %s827
      %v829 = vld [vmem:[%s819] sm:%s828]
      %v830 = vunpack.c.l.bf16 %v829
      %v831 = vunpack.c.h.bf16 %v829
      %s832 = scalar_lea.vmem [#allocation1], 1120
      %833 = vst [vmem:[%s832] sm:%s53] %v830
      %s834 = scalar_lea.vmem %s50, 556
      %s835 = sshrl.u32 %s53, 1
      %s836 = sor.u32 %s53, %s835
      %s837 = sand.u32 %s836, 85
      %s838 = sshrl.u32 %s837, 1
      %s839 = sor.u32 %s837, %s838
      %s840 = sand.u32 51, %s839
      %s841 = sshrl.u32 %s840, 2
      %s842 = sor.u32 %s840, %s841
      %s843 = sand.u32 15, %s842
      %v844 = vld [vmem:[%s834] sm:%s843]
      %v845 = vunpack.c.l.bf16 %v844
      %v846 = vunpack.c.h.bf16 %v844
      %s847 = scalar_lea.vmem [#allocation1], 1112
      %848 = vst [vmem:[%s847] sm:%s53] %v845
      %s849 = scalar_lea.vmem %s50, 552
      %s850 = sshrl.u32 %s53, 1
      %s851 = sor.u32 %s53, %s850
      %s852 = sand.u32 %s851, 85
      %s853 = sshrl.u32 %s852, 1
      %s854 = sor.u32 %s852, %s853
      %s855 = sand.u32 51, %s854
      %s856 = sshrl.u32 %s855, 2
      %s857 = sor.u32 %s855, %s856
      %s858 = sand.u32 15, %s857
      %v859 = vld [vmem:[%s849] sm:%s858]
      %v860 = vunpack.c.l.bf16 %v859
      %v861 = vunpack.c.h.bf16 %v859
      %s862 = scalar_lea.vmem [#allocation1], 1104
      %863 = vst [vmem:[%s862] sm:%s53] %v860
      %s864 = scalar_lea.vmem %s50, 548
      %s865 = sshrl.u32 %s53, 1
      %s866 = sor.u32 %s53, %s865
      %s867 = sand.u32 %s866, 85
      %s868 = sshrl.u32 %s867, 1
      %s869 = sor.u32 %s867, %s868
      %s870 = sand.u32 51, %s869
      %s871 = sshrl.u32 %s870, 2
      %s872 = sor.u32 %s870, %s871
      %s873 = sand.u32 15, %s872
      %v874 = vld [vmem:[%s864] sm:%s873]
      %v875 = vunpack.c.l.bf16 %v874
      %v876 = vunpack.c.h.bf16 %v874
      %s877 = scalar_lea.vmem [#allocation1], 1096
      %878 = vst [vmem:[%s877] sm:%s53] %v875
      %s879 = scalar_lea.vmem %s50, 544
      %s880 = sshrl.u32 %s53, 1
      %s881 = sor.u32 %s53, %s880
      %s882 = sand.u32 %s881, 85
      %s883 = sshrl.u32 %s882, 1
      %s884 = sor.u32 %s882, %s883
      %s885 = sand.u32 51, %s884
      %s886 = sshrl.u32 %s885, 2
      %s887 = sor.u32 %s885, %s886
      %s888 = sand.u32 15, %s887
      %v889 = vld [vmem:[%s879] sm:%s888]
      %v890 = vunpack.c.l.bf16 %v889
      %v891 = vunpack.c.h.bf16 %v889
      %s892 = scalar_lea.vmem [#allocation1], 1088
      %893 = vst [vmem:[%s892] sm:%s53] %v890
      %s894 = scalar_lea.vmem %s50, 540
      %s895 = sshrl.u32 %s53, 1
      %s896 = sor.u32 %s53, %s895
      %s897 = sand.u32 %s896, 85
      %s898 = sshrl.u32 %s897, 1
      %s899 = sor.u32 %s897, %s898
      %s900 = sand.u32 51, %s899
      %s901 = sshrl.u32 %s900, 2
      %s902 = sor.u32 %s900, %s901
      %s903 = sand.u32 15, %s902
      %v904 = vld [vmem:[%s894] sm:%s903]
      %v905 = vunpack.c.l.bf16 %v904
      %v906 = vunpack.c.h.bf16 %v904
      %s907 = scalar_lea.vmem [#allocation1], 1080
      %908 = vst [vmem:[%s907] sm:%s53] %v905
      %s909 = scalar_lea.vmem %s50, 536
      %s910 = sshrl.u32 %s53, 1
      %s911 = sor.u32 %s53, %s910
      %s912 = sand.u32 %s911, 85
      %s913 = sshrl.u32 %s912, 1
      %s914 = sor.u32 %s912, %s913
      %s915 = sand.u32 51, %s914
      %s916 = sshrl.u32 %s915, 2
      %s917 = sor.u32 %s915, %s916
      %s918 = sand.u32 15, %s917
      %v919 = vld [vmem:[%s909] sm:%s918]
      %v920 = vunpack.c.l.bf16 %v919
      %v921 = vunpack.c.h.bf16 %v919
      %s922 = scalar_lea.vmem [#allocation1], 1072
      %923 = vst [vmem:[%s922] sm:%s53] %v920
      %s924 = scalar_lea.vmem %s50, 532
      %s925 = sshrl.u32 %s53, 1
      %s926 = sor.u32 %s53, %s925
      %s927 = sand.u32 %s926, 85
      %s928 = sshrl.u32 %s927, 1
      %s929 = sor.u32 %s927, %s928
      %s930 = sand.u32 51, %s929
      %s931 = sshrl.u32 %s930, 2
      %s932 = sor.u32 %s930, %s931
      %s933 = sand.u32 15, %s932
      %v934 = vld [vmem:[%s924] sm:%s933]
      %v935 = vunpack.c.l.bf16 %v934
      %v936 = vunpack.c.h.bf16 %v934
      %s937 = scalar_lea.vmem [#allocation1], 1064
      %938 = vst [vmem:[%s937] sm:%s53] %v935
      %s939 = scalar_lea.vmem %s50, 528
      %s940 = sshrl.u32 %s53, 1
      %s941 = sor.u32 %s53, %s940
      %s942 = sand.u32 %s941, 85
      %s943 = sshrl.u32 %s942, 1
      %s944 = sor.u32 %s942, %s943
      %s945 = sand.u32 51, %s944
      %s946 = sshrl.u32 %s945, 2
      %s947 = sor.u32 %s945, %s946
      %s948 = sand.u32 15, %s947
      %v949 = vld [vmem:[%s939] sm:%s948]
      %v950 = vunpack.c.l.bf16 %v949
      %v951 = vunpack.c.h.bf16 %v949
      %s952 = scalar_lea.vmem [#allocation1], 1056
      %953 = vst [vmem:[%s952] sm:%s53] %v950
      %s954 = scalar_lea.vmem %s50, 524
      %s955 = sshrl.u32 %s53, 1
      %s956 = sor.u32 %s53, %s955
      %s957 = sand.u32 %s956, 85
      %s958 = sshrl.u32 %s957, 1
      %s959 = sor.u32 %s957, %s958
      %s960 = sand.u32 51, %s959
      %s961 = sshrl.u32 %s960, 2
      %s962 = sor.u32 %s960, %s961
      %s963 = sand.u32 15, %s962
      %v964 = vld [vmem:[%s954] sm:%s963]
      %v965 = vunpack.c.l.bf16 %v964
      %v966 = vunpack.c.h.bf16 %v964
      %s967 = scalar_lea.vmem [#allocation1], 1048
      %968 = vst [vmem:[%s967] sm:%s53] %v965
      %s969 = scalar_lea.vmem %s50, 520
      %s970 = sshrl.u32 %s53, 1
      %s971 = sor.u32 %s53, %s970
      %s972 = sand.u32 %s971, 85
      %s973 = sshrl.u32 %s972, 1
      %s974 = sor.u32 %s972, %s973
      %s975 = sand.u32 51, %s974
      %s976 = sshrl.u32 %s975, 2
      %s977 = sor.u32 %s975, %s976
      %s978 = sand.u32 15, %s977
      %v979 = vld [vmem:[%s969] sm:%s978]
      %v980 = vunpack.c.l.bf16 %v979
      %v981 = vunpack.c.h.bf16 %v979
      %s982 = scalar_lea.vmem [#allocation1], 1040
      %983 = vst [vmem:[%s982] sm:%s53] %v980
      %s984 = scalar_lea.vmem %s50, 516
      %s985 = sshrl.u32 %s53, 1
      %s986 = sor.u32 %s53, %s985
      %s987 = sand.u32 %s986, 85
      %s988 = sshrl.u32 %s987, 1
      %s989 = sor.u32 %s987, %s988
      %s990 = sand.u32 51, %s989
      %s991 = sshrl.u32 %s990, 2
      %s992 = sor.u32 %s990, %s991
      %s993 = sand.u32 15, %s992
      %v994 = vld [vmem:[%s984] sm:%s993]
      %v995 = vunpack.c.l.bf16 %v994
      %v996 = vunpack.c.h.bf16 %v994
      %s997 = scalar_lea.vmem [#allocation1], 1032
      %998 = vst [vmem:[%s997] sm:%s53] %v995
      %s999 = scalar_lea.vmem %s50, 512
      %s1000 = sshrl.u32 %s53, 1
      %s1001 = sor.u32 %s53, %s1000
      %s1002 = sand.u32 %s1001, 85
      %s1003 = sshrl.u32 %s1002, 1
      %s1004 = sor.u32 %s1002, %s1003
      %s1005 = sand.u32 51, %s1004
      %s1006 = sshrl.u32 %s1005, 2
      %s1007 = sor.u32 %s1005, %s1006
      %s1008 = sand.u32 15, %s1007
      %v1009 = vld [vmem:[%s999] sm:%s1008]
      %v1010 = vunpack.c.l.bf16 %v1009
      %v1011 = vunpack.c.h.bf16 %v1009
      %s1012 = scalar_lea.vmem [#allocation1], 1024
      %1013 = vst [vmem:[%s1012] sm:%s53] %v1010
      %s1014 = scalar_lea.vmem %s50, 508
      %s1015 = sshrl.u32 %s53, 1
      %s1016 = sor.u32 %s53, %s1015
      %s1017 = sand.u32 %s1016, 85
      %s1018 = sshrl.u32 %s1017, 1
      %s1019 = sor.u32 %s1017, %s1018
      %s1020 = sand.u32 51, %s1019
      %s1021 = sshrl.u32 %s1020, 2
      %s1022 = sor.u32 %s1020, %s1021
      %s1023 = sand.u32 15, %s1022
      %v1024 = vld [vmem:[%s1014] sm:%s1023]
      %v1025 = vunpack.c.l.bf16 %v1024
      %v1026 = vunpack.c.h.bf16 %v1024
      %s1027 = scalar_lea.vmem [#allocation1], 1016
      %1028 = vst [vmem:[%s1027] sm:%s53] %v1025
      %s1029 = scalar_lea.vmem %s50, 504
      %s1030 = sshrl.u32 %s53, 1
      %s1031 = sor.u32 %s53, %s1030
      %s1032 = sand.u32 %s1031, 85
      %s1033 = sshrl.u32 %s1032, 1
      %s1034 = sor.u32 %s1032, %s1033
      %s1035 = sand.u32 51, %s1034
      %s1036 = sshrl.u32 %s1035, 2
      %s1037 = sor.u32 %s1035, %s1036
      %s1038 = sand.u32 15, %s1037
      %v1039 = vld [vmem:[%s1029] sm:%s1038]
      %v1040 = vunpack.c.l.bf16 %v1039
      %v1041 = vunpack.c.h.bf16 %v1039
      %s1042 = scalar_lea.vmem [#allocation1], 1008
      %1043 = vst [vmem:[%s1042] sm:%s53] %v1040
      %s1044 = scalar_lea.vmem %s50, 500
      %s1045 = sshrl.u32 %s53, 1
      %s1046 = sor.u32 %s53, %s1045
      %s1047 = sand.u32 %s1046, 85
      %s1048 = sshrl.u32 %s1047, 1
      %s1049 = sor.u32 %s1047, %s1048
      %s1050 = sand.u32 51, %s1049
      %s1051 = sshrl.u32 %s1050, 2
      %s1052 = sor.u32 %s1050, %s1051
      %s1053 = sand.u32 15, %s1052
      %v1054 = vld [vmem:[%s1044] sm:%s1053]
      %v1055 = vunpack.c.l.bf16 %v1054
      %v1056 = vunpack.c.h.bf16 %v1054
      %s1057 = scalar_lea.vmem [#allocation1], 1000
      %1058 = vst [vmem:[%s1057] sm:%s53] %v1055
      %s1059 = scalar_lea.vmem %s50, 496
      %s1060 = sshrl.u32 %s53, 1
      %s1061 = sor.u32 %s53, %s1060
      %s1062 = sand.u32 %s1061, 85
      %s1063 = sshrl.u32 %s1062, 1
      %s1064 = sor.u32 %s1062, %s1063
      %s1065 = sand.u32 51, %s1064
      %s1066 = sshrl.u32 %s1065, 2
      %s1067 = sor.u32 %s1065, %s1066
      %s1068 = sand.u32 15, %s1067
      %v1069 = vld [vmem:[%s1059] sm:%s1068]
      %v1070 = vunpack.c.l.bf16 %v1069
      %v1071 = vunpack.c.h.bf16 %v1069
      %s1072 = scalar_lea.vmem [#allocation1], 992
      %1073 = vst [vmem:[%s1072] sm:%s53] %v1070
      %s1074 = scalar_lea.vmem %s50, 492
      %s1075 = sshrl.u32 %s53, 1
      %s1076 = sor.u32 %s53, %s1075
      %s1077 = sand.u32 %s1076, 85
      %s1078 = sshrl.u32 %s1077, 1
      %s1079 = sor.u32 %s1077, %s1078
      %s1080 = sand.u32 51, %s1079
      %s1081 = sshrl.u32 %s1080, 2
      %s1082 = sor.u32 %s1080, %s1081
      %s1083 = sand.u32 15, %s1082
      %v1084 = vld [vmem:[%s1074] sm:%s1083]
      %v1085 = vunpack.c.l.bf16 %v1084
      %v1086 = vunpack.c.h.bf16 %v1084
      %s1087 = scalar_lea.vmem [#allocation1], 984
      %1088 = vst [vmem:[%s1087] sm:%s53] %v1085
      %s1089 = scalar_lea.vmem %s50, 488
      %s1090 = sshrl.u32 %s53, 1
      %s1091 = sor.u32 %s53, %s1090
      %s1092 = sand.u32 %s1091, 85
      %s1093 = sshrl.u32 %s1092, 1
      %s1094 = sor.u32 %s1092, %s1093
      %s1095 = sand.u32 51, %s1094
      %s1096 = sshrl.u32 %s1095, 2
      %s1097 = sor.u32 %s1095, %s1096
      %s1098 = sand.u32 15, %s1097
      %v1099 = vld [vmem:[%s1089] sm:%s1098]
      %v1100 = vunpack.c.l.bf16 %v1099
      %v1101 = vunpack.c.h.bf16 %v1099
      %s1102 = scalar_lea.vmem [#allocation1], 976
      %1103 = vst [vmem:[%s1102] sm:%s53] %v1100
      %s1104 = scalar_lea.vmem %s50, 484
      %s1105 = sshrl.u32 %s53, 1
      %s1106 = sor.u32 %s53, %s1105
      %s1107 = sand.u32 %s1106, 85
      %s1108 = sshrl.u32 %s1107, 1
      %s1109 = sor.u32 %s1107, %s1108
      %s1110 = sand.u32 51, %s1109
      %s1111 = sshrl.u32 %s1110, 2
      %s1112 = sor.u32 %s1110, %s1111
      %s1113 = sand.u32 15, %s1112
      %v1114 = vld [vmem:[%s1104] sm:%s1113]
      %v1115 = vunpack.c.l.bf16 %v1114
      %v1116 = vunpack.c.h.bf16 %v1114
      %s1117 = scalar_lea.vmem [#allocation1], 968
      %1118 = vst [vmem:[%s1117] sm:%s53] %v1115
      %s1119 = scalar_lea.vmem %s50, 480
      %s1120 = sshrl.u32 %s53, 1
      %s1121 = sor.u32 %s53, %s1120
      %s1122 = sand.u32 %s1121, 85
      %s1123 = sshrl.u32 %s1122, 1
      %s1124 = sor.u32 %s1122, %s1123
      %s1125 = sand.u32 51, %s1124
      %s1126 = sshrl.u32 %s1125, 2
      %s1127 = sor.u32 %s1125, %s1126
      %s1128 = sand.u32 15, %s1127
      %v1129 = vld [vmem:[%s1119] sm:%s1128]
      %v1130 = vunpack.c.l.bf16 %v1129
      %v1131 = vunpack.c.h.bf16 %v1129
      %s1132 = scalar_lea.vmem [#allocation1], 960
      %1133 = vst [vmem:[%s1132] sm:%s53] %v1130
      %s1134 = scalar_lea.vmem %s50, 476
      %s1135 = sshrl.u32 %s53, 1
      %s1136 = sor.u32 %s53, %s1135
      %s1137 = sand.u32 %s1136, 85
      %s1138 = sshrl.u32 %s1137, 1
      %s1139 = sor.u32 %s1137, %s1138
      %s1140 = sand.u32 51, %s1139
      %s1141 = sshrl.u32 %s1140, 2
      %s1142 = sor.u32 %s1140, %s1141
      %s1143 = sand.u32 15, %s1142
      %v1144 = vld [vmem:[%s1134] sm:%s1143]
      %v1145 = vunpack.c.l.bf16 %v1144
      %v1146 = vunpack.c.h.bf16 %v1144
      %s1147 = scalar_lea.vmem [#allocation1], 952
      %1148 = vst [vmem:[%s1147] sm:%s53] %v1145
      %s1149 = scalar_lea.vmem %s50, 472
      %s1150 = sshrl.u32 %s53, 1
      %s1151 = sor.u32 %s53, %s1150
      %s1152 = sand.u32 %s1151, 85
      %s1153 = sshrl.u32 %s1152, 1
      %s1154 = sor.u32 %s1152, %s1153
      %s1155 = sand.u32 51, %s1154
      %s1156 = sshrl.u32 %s1155, 2
      %s1157 = sor.u32 %s1155, %s1156
      %s1158 = sand.u32 15, %s1157
      %v1159 = vld [vmem:[%s1149] sm:%s1158]
      %v1160 = vunpack.c.l.bf16 %v1159
      %v1161 = vunpack.c.h.bf16 %v1159
      %s1162 = scalar_lea.vmem [#allocation1], 944
      %1163 = vst [vmem:[%s1162] sm:%s53] %v1160
      %s1164 = scalar_lea.vmem %s50, 468
      %s1165 = sshrl.u32 %s53, 1
      %s1166 = sor.u32 %s53, %s1165
      %s1167 = sand.u32 %s1166, 85
      %s1168 = sshrl.u32 %s1167, 1
      %s1169 = sor.u32 %s1167, %s1168
      %s1170 = sand.u32 51, %s1169
      %s1171 = sshrl.u32 %s1170, 2
      %s1172 = sor.u32 %s1170, %s1171
      %s1173 = sand.u32 15, %s1172
      %v1174 = vld [vmem:[%s1164] sm:%s1173]
      %v1175 = vunpack.c.l.bf16 %v1174
      %v1176 = vunpack.c.h.bf16 %v1174
      %s1177 = scalar_lea.vmem [#allocation1], 936
      %1178 = vst [vmem:[%s1177] sm:%s53] %v1175
      %s1179 = scalar_lea.vmem %s50, 464
      %s1180 = sshrl.u32 %s53, 1
      %s1181 = sor.u32 %s53, %s1180
      %s1182 = sand.u32 %s1181, 85
      %s1183 = sshrl.u32 %s1182, 1
      %s1184 = sor.u32 %s1182, %s1183
      %s1185 = sand.u32 51, %s1184
      %s1186 = sshrl.u32 %s1185, 2
      %s1187 = sor.u32 %s1185, %s1186
      %s1188 = sand.u32 15, %s1187
      %v1189 = vld [vmem:[%s1179] sm:%s1188]
      %v1190 = vunpack.c.l.bf16 %v1189
      %v1191 = vunpack.c.h.bf16 %v1189
      %s1192 = scalar_lea.vmem [#allocation1], 928
      %1193 = vst [vmem:[%s1192] sm:%s53] %v1190
      %s1194 = scalar_lea.vmem %s50, 460
      %s1195 = sshrl.u32 %s53, 1
      %s1196 = sor.u32 %s53, %s1195
      %s1197 = sand.u32 %s1196, 85
      %s1198 = sshrl.u32 %s1197, 1
      %s1199 = sor.u32 %s1197, %s1198
      %s1200 = sand.u32 51, %s1199
      %s1201 = sshrl.u32 %s1200, 2
      %s1202 = sor.u32 %s1200, %s1201
      %s1203 = sand.u32 15, %s1202
      %v1204 = vld [vmem:[%s1194] sm:%s1203]
      %v1205 = vunpack.c.l.bf16 %v1204
      %v1206 = vunpack.c.h.bf16 %v1204
      %s1207 = scalar_lea.vmem [#allocation1], 920
      %1208 = vst [vmem:[%s1207] sm:%s53] %v1205
      %s1209 = scalar_lea.vmem %s50, 456
      %s1210 = sshrl.u32 %s53, 1
      %s1211 = sor.u32 %s53, %s1210
      %s1212 = sand.u32 %s1211, 85
      %s1213 = sshrl.u32 %s1212, 1
      %s1214 = sor.u32 %s1212, %s1213
      %s1215 = sand.u32 51, %s1214
      %s1216 = sshrl.u32 %s1215, 2
      %s1217 = sor.u32 %s1215, %s1216
      %s1218 = sand.u32 15, %s1217
      %v1219 = vld [vmem:[%s1209] sm:%s1218]
      %v1220 = vunpack.c.l.bf16 %v1219
      %v1221 = vunpack.c.h.bf16 %v1219
      %s1222 = scalar_lea.vmem [#allocation1], 912
      %1223 = vst [vmem:[%s1222] sm:%s53] %v1220
      %s1224 = scalar_lea.vmem %s50, 452
      %s1225 = sshrl.u32 %s53, 1
      %s1226 = sor.u32 %s53, %s1225
      %s1227 = sand.u32 %s1226, 85
      %s1228 = sshrl.u32 %s1227, 1
      %s1229 = sor.u32 %s1227, %s1228
      %s1230 = sand.u32 51, %s1229
      %s1231 = sshrl.u32 %s1230, 2
      %s1232 = sor.u32 %s1230, %s1231
      %s1233 = sand.u32 15, %s1232
      %v1234 = vld [vmem:[%s1224] sm:%s1233]
      %v1235 = vunpack.c.l.bf16 %v1234
      %v1236 = vunpack.c.h.bf16 %v1234
      %s1237 = scalar_lea.vmem [#allocation1], 904
      %1238 = vst [vmem:[%s1237] sm:%s53] %v1235
      %s1239 = scalar_lea.vmem %s50, 448
      %s1240 = sshrl.u32 %s53, 1
      %s1241 = sor.u32 %s53, %s1240
      %s1242 = sand.u32 %s1241, 85
      %s1243 = sshrl.u32 %s1242, 1
      %s1244 = sor.u32 %s1242, %s1243
      %s1245 = sand.u32 51, %s1244
      %s1246 = sshrl.u32 %s1245, 2
      %s1247 = sor.u32 %s1245, %s1246
      %s1248 = sand.u32 15, %s1247
      %v1249 = vld [vmem:[%s1239] sm:%s1248]
      %v1250 = vunpack.c.l.bf16 %v1249
      %v1251 = vunpack.c.h.bf16 %v1249
      %s1252 = scalar_lea.vmem [#allocation1], 896
      %1253 = vst [vmem:[%s1252] sm:%s53] %v1250
      %s1254 = scalar_lea.vmem %s50, 444
      %s1255 = sshrl.u32 %s53, 1
      %s1256 = sor.u32 %s53, %s1255
      %s1257 = sand.u32 %s1256, 85
      %s1258 = sshrl.u32 %s1257, 1
      %s1259 = sor.u32 %s1257, %s1258
      %s1260 = sand.u32 51, %s1259
      %s1261 = sshrl.u32 %s1260, 2
      %s1262 = sor.u32 %s1260, %s1261
      %s1263 = sand.u32 15, %s1262
      %v1264 = vld [vmem:[%s1254] sm:%s1263]
      %v1265 = vunpack.c.l.bf16 %v1264
      %v1266 = vunpack.c.h.bf16 %v1264
      %s1267 = scalar_lea.vmem [#allocation1], 888
      %1268 = vst [vmem:[%s1267] sm:%s53] %v1265
      %s1269 = scalar_lea.vmem %s50, 440
      %s1270 = sshrl.u32 %s53, 1
      %s1271 = sor.u32 %s53, %s1270
      %s1272 = sand.u32 %s1271, 85
      %s1273 = sshrl.u32 %s1272, 1
      %s1274 = sor.u32 %s1272, %s1273
      %s1275 = sand.u32 51, %s1274
      %s1276 = sshrl.u32 %s1275, 2
      %s1277 = sor.u32 %s1275, %s1276
      %s1278 = sand.u32 15, %s1277
      %v1279 = vld [vmem:[%s1269] sm:%s1278]
      %v1280 = vunpack.c.l.bf16 %v1279
      %v1281 = vunpack.c.h.bf16 %v1279
      %s1282 = scalar_lea.vmem [#allocation1], 880
      %1283 = vst [vmem:[%s1282] sm:%s53] %v1280
      %s1284 = scalar_lea.vmem %s50, 436
      %s1285 = sshrl.u32 %s53, 1
      %s1286 = sor.u32 %s53, %s1285
      %s1287 = sand.u32 %s1286, 85
      %s1288 = sshrl.u32 %s1287, 1
      %s1289 = sor.u32 %s1287, %s1288
      %s1290 = sand.u32 51, %s1289
      %s1291 = sshrl.u32 %s1290, 2
      %s1292 = sor.u32 %s1290, %s1291
      %s1293 = sand.u32 15, %s1292
      %v1294 = vld [vmem:[%s1284] sm:%s1293]
      %v1295 = vunpack.c.l.bf16 %v1294
      %v1296 = vunpack.c.h.bf16 %v1294
      %s1297 = scalar_lea.vmem [#allocation1], 872
      %1298 = vst [vmem:[%s1297] sm:%s53] %v1295
      %s1299 = scalar_lea.vmem %s50, 432
      %s1300 = sshrl.u32 %s53, 1
      %s1301 = sor.u32 %s53, %s1300
      %s1302 = sand.u32 %s1301, 85
      %s1303 = sshrl.u32 %s1302, 1
      %s1304 = sor.u32 %s1302, %s1303
      %s1305 = sand.u32 51, %s1304
      %s1306 = sshrl.u32 %s1305, 2
      %s1307 = sor.u32 %s1305, %s1306
      %s1308 = sand.u32 15, %s1307
      %v1309 = vld [vmem:[%s1299] sm:%s1308]
      %v1310 = vunpack.c.l.bf16 %v1309
      %v1311 = vunpack.c.h.bf16 %v1309
      %s1312 = scalar_lea.vmem [#allocation1], 864
      %1313 = vst [vmem:[%s1312] sm:%s53] %v1310
      %s1314 = scalar_lea.vmem %s50, 428
      %s1315 = sshrl.u32 %s53, 1
      %s1316 = sor.u32 %s53, %s1315
      %s1317 = sand.u32 %s1316, 85
      %s1318 = sshrl.u32 %s1317, 1
      %s1319 = sor.u32 %s1317, %s1318
      %s1320 = sand.u32 51, %s1319
      %s1321 = sshrl.u32 %s1320, 2
      %s1322 = sor.u32 %s1320, %s1321
      %s1323 = sand.u32 15, %s1322
      %v1324 = vld [vmem:[%s1314] sm:%s1323]
      %v1325 = vunpack.c.l.bf16 %v1324
      %v1326 = vunpack.c.h.bf16 %v1324
      %s1327 = scalar_lea.vmem [#allocation1], 856
      %1328 = vst [vmem:[%s1327] sm:%s53] %v1325
      %s1329 = scalar_lea.vmem %s50, 424
      %s1330 = sshrl.u32 %s53, 1
      %s1331 = sor.u32 %s53, %s1330
      %s1332 = sand.u32 %s1331, 85
      %s1333 = sshrl.u32 %s1332, 1
      %s1334 = sor.u32 %s1332, %s1333
      %s1335 = sand.u32 51, %s1334
      %s1336 = sshrl.u32 %s1335, 2
      %s1337 = sor.u32 %s1335, %s1336
      %s1338 = sand.u32 15, %s1337
      %v1339 = vld [vmem:[%s1329] sm:%s1338]
      %v1340 = vunpack.c.l.bf16 %v1339
      %v1341 = vunpack.c.h.bf16 %v1339
      %s1342 = scalar_lea.vmem [#allocation1], 848
      %1343 = vst [vmem:[%s1342] sm:%s53] %v1340
      %s1344 = scalar_lea.vmem %s50, 420
      %s1345 = sshrl.u32 %s53, 1
      %s1346 = sor.u32 %s53, %s1345
      %s1347 = sand.u32 %s1346, 85
      %s1348 = sshrl.u32 %s1347, 1
      %s1349 = sor.u32 %s1347, %s1348
      %s1350 = sand.u32 51, %s1349
      %s1351 = sshrl.u32 %s1350, 2
      %s1352 = sor.u32 %s1350, %s1351
      %s1353 = sand.u32 15, %s1352
      %v1354 = vld [vmem:[%s1344] sm:%s1353]
      %v1355 = vunpack.c.l.bf16 %v1354
      %v1356 = vunpack.c.h.bf16 %v1354
      %s1357 = scalar_lea.vmem [#allocation1], 840
      %1358 = vst [vmem:[%s1357] sm:%s53] %v1355
      %s1359 = scalar_lea.vmem %s50, 416
      %s1360 = sshrl.u32 %s53, 1
      %s1361 = sor.u32 %s53, %s1360
      %s1362 = sand.u32 %s1361, 85
      %s1363 = sshrl.u32 %s1362, 1
      %s1364 = sor.u32 %s1362, %s1363
      %s1365 = sand.u32 51, %s1364
      %s1366 = sshrl.u32 %s1365, 2
      %s1367 = sor.u32 %s1365, %s1366
      %s1368 = sand.u32 15, %s1367
      %v1369 = vld [vmem:[%s1359] sm:%s1368]
      %v1370 = vunpack.c.l.bf16 %v1369
      %v1371 = vunpack.c.h.bf16 %v1369
      %s1372 = scalar_lea.vmem [#allocation1], 832
      %1373 = vst [vmem:[%s1372] sm:%s53] %v1370
      %s1374 = scalar_lea.vmem %s50, 412
      %s1375 = sshrl.u32 %s53, 1
      %s1376 = sor.u32 %s53, %s1375
      %s1377 = sand.u32 %s1376, 85
      %s1378 = sshrl.u32 %s1377, 1
      %s1379 = sor.u32 %s1377, %s1378
      %s1380 = sand.u32 51, %s1379
      %s1381 = sshrl.u32 %s1380, 2
      %s1382 = sor.u32 %s1380, %s1381
      %s1383 = sand.u32 15, %s1382
      %v1384 = vld [vmem:[%s1374] sm:%s1383]
      %v1385 = vunpack.c.l.bf16 %v1384
      %v1386 = vunpack.c.h.bf16 %v1384
      %s1387 = scalar_lea.vmem [#allocation1], 824
      %1388 = vst [vmem:[%s1387] sm:%s53] %v1385
      %s1389 = scalar_lea.vmem %s50, 408
      %s1390 = sshrl.u32 %s53, 1
      %s1391 = sor.u32 %s53, %s1390
      %s1392 = sand.u32 %s1391, 85
      %s1393 = sshrl.u32 %s1392, 1
      %s1394 = sor.u32 %s1392, %s1393
      %s1395 = sand.u32 51, %s1394
      %s1396 = sshrl.u32 %s1395, 2
      %s1397 = sor.u32 %s1395, %s1396
      %s1398 = sand.u32 15, %s1397
      %v1399 = vld [vmem:[%s1389] sm:%s1398]
      %v1400 = vunpack.c.l.bf16 %v1399
      %v1401 = vunpack.c.h.bf16 %v1399
      %s1402 = scalar_lea.vmem [#allocation1], 816
      %1403 = vst [vmem:[%s1402] sm:%s53] %v1400
      %s1404 = scalar_lea.vmem %s50, 404
      %s1405 = sshrl.u32 %s53, 1
      %s1406 = sor.u32 %s53, %s1405
      %s1407 = sand.u32 %s1406, 85
      %s1408 = sshrl.u32 %s1407, 1
      %s1409 = sor.u32 %s1407, %s1408
      %s1410 = sand.u32 51, %s1409
      %s1411 = sshrl.u32 %s1410, 2
      %s1412 = sor.u32 %s1410, %s1411
      %s1413 = sand.u32 15, %s1412
      %v1414 = vld [vmem:[%s1404] sm:%s1413]
      %v1415 = vunpack.c.l.bf16 %v1414
      %v1416 = vunpack.c.h.bf16 %v1414
      %s1417 = scalar_lea.vmem [#allocation1], 808
      %1418 = vst [vmem:[%s1417] sm:%s53] %v1415
      %s1419 = scalar_lea.vmem %s50, 400
      %s1420 = sshrl.u32 %s53, 1
      %s1421 = sor.u32 %s53, %s1420
      %s1422 = sand.u32 %s1421, 85
      %s1423 = sshrl.u32 %s1422, 1
      %s1424 = sor.u32 %s1422, %s1423
      %s1425 = sand.u32 51, %s1424
      %s1426 = sshrl.u32 %s1425, 2
      %s1427 = sor.u32 %s1425, %s1426
      %s1428 = sand.u32 15, %s1427
      %v1429 = vld [vmem:[%s1419] sm:%s1428]
      %v1430 = vunpack.c.l.bf16 %v1429
      %v1431 = vunpack.c.h.bf16 %v1429
      %s1432 = scalar_lea.vmem [#allocation1], 800
      %1433 = vst [vmem:[%s1432] sm:%s53] %v1430
      %s1434 = scalar_lea.vmem %s50, 396
      %s1435 = sshrl.u32 %s53, 1
      %s1436 = sor.u32 %s53, %s1435
      %s1437 = sand.u32 %s1436, 85
      %s1438 = sshrl.u32 %s1437, 1
      %s1439 = sor.u32 %s1437, %s1438
      %s1440 = sand.u32 51, %s1439
      %s1441 = sshrl.u32 %s1440, 2
      %s1442 = sor.u32 %s1440, %s1441
      %s1443 = sand.u32 15, %s1442
      %v1444 = vld [vmem:[%s1434] sm:%s1443]
      %v1445 = vunpack.c.l.bf16 %v1444
      %v1446 = vunpack.c.h.bf16 %v1444
      %s1447 = scalar_lea.vmem [#allocation1], 792
      %1448 = vst [vmem:[%s1447] sm:%s53] %v1445
      %s1449 = scalar_lea.vmem %s50, 392
      %s1450 = sshrl.u32 %s53, 1
      %s1451 = sor.u32 %s53, %s1450
      %s1452 = sand.u32 %s1451, 85
      %s1453 = sshrl.u32 %s1452, 1
      %s1454 = sor.u32 %s1452, %s1453
      %s1455 = sand.u32 51, %s1454
      %s1456 = sshrl.u32 %s1455, 2
      %s1457 = sor.u32 %s1455, %s1456
      %s1458 = sand.u32 15, %s1457
      %v1459 = vld [vmem:[%s1449] sm:%s1458]
      %v1460 = vunpack.c.l.bf16 %v1459
      %v1461 = vunpack.c.h.bf16 %v1459
      %s1462 = scalar_lea.vmem [#allocation1], 784
      %1463 = vst [vmem:[%s1462] sm:%s53] %v1460
      %s1464 = scalar_lea.vmem %s50, 388
      %s1465 = sshrl.u32 %s53, 1
      %s1466 = sor.u32 %s53, %s1465
      %s1467 = sand.u32 %s1466, 85
      %s1468 = sshrl.u32 %s1467, 1
      %s1469 = sor.u32 %s1467, %s1468
      %s1470 = sand.u32 51, %s1469
      %s1471 = sshrl.u32 %s1470, 2
      %s1472 = sor.u32 %s1470, %s1471
      %s1473 = sand.u32 15, %s1472
      %v1474 = vld [vmem:[%s1464] sm:%s1473]
      %v1475 = vunpack.c.l.bf16 %v1474
      %v1476 = vunpack.c.h.bf16 %v1474
      %s1477 = scalar_lea.vmem [#allocation1], 776
      %1478 = vst [vmem:[%s1477] sm:%s53] %v1475
      %s1479 = scalar_lea.vmem %s50, 384
      %s1480 = sshrl.u32 %s53, 1
      %s1481 = sor.u32 %s53, %s1480
      %s1482 = sand.u32 %s1481, 85
      %s1483 = sshrl.u32 %s1482, 1
      %s1484 = sor.u32 %s1482, %s1483
      %s1485 = sand.u32 51, %s1484
      %s1486 = sshrl.u32 %s1485, 2
      %s1487 = sor.u32 %s1485, %s1486
      %s1488 = sand.u32 15, %s1487
      %v1489 = vld [vmem:[%s1479] sm:%s1488]
      %v1490 = vunpack.c.l.bf16 %v1489
      %v1491 = vunpack.c.h.bf16 %v1489
      %s1492 = scalar_lea.vmem [#allocation1], 768
      %1493 = vst [vmem:[%s1492] sm:%s53] %v1490
      %s1494 = scalar_lea.vmem %s50, 380
      %s1495 = sshrl.u32 %s53, 1
      %s1496 = sor.u32 %s53, %s1495
      %s1497 = sand.u32 %s1496, 85
      %s1498 = sshrl.u32 %s1497, 1
      %s1499 = sor.u32 %s1497, %s1498
      %s1500 = sand.u32 51, %s1499
      %s1501 = sshrl.u32 %s1500, 2
      %s1502 = sor.u32 %s1500, %s1501
      %s1503 = sand.u32 15, %s1502
      %v1504 = vld [vmem:[%s1494] sm:%s1503]
      %v1505 = vunpack.c.l.bf16 %v1504
      %v1506 = vunpack.c.h.bf16 %v1504
      %s1507 = scalar_lea.vmem [#allocation1], 760
      %1508 = vst [vmem:[%s1507] sm:%s53] %v1505
      %s1509 = scalar_lea.vmem %s50, 376
      %s1510 = sshrl.u32 %s53, 1
      %s1511 = sor.u32 %s53, %s1510
      %s1512 = sand.u32 %s1511, 85
      %s1513 = sshrl.u32 %s1512, 1
      %s1514 = sor.u32 %s1512, %s1513
      %s1515 = sand.u32 51, %s1514
      %s1516 = sshrl.u32 %s1515, 2
      %s1517 = sor.u32 %s1515, %s1516
      %s1518 = sand.u32 15, %s1517
      %v1519 = vld [vmem:[%s1509] sm:%s1518]
      %v1520 = vunpack.c.l.bf16 %v1519
      %v1521 = vunpack.c.h.bf16 %v1519
      %s1522 = scalar_lea.vmem [#allocation1], 752
      %1523 = vst [vmem:[%s1522] sm:%s53] %v1520
      %s1524 = scalar_lea.vmem %s50, 372
      %s1525 = sshrl.u32 %s53, 1
      %s1526 = sor.u32 %s53, %s1525
      %s1527 = sand.u32 %s1526, 85
      %s1528 = sshrl.u32 %s1527, 1
      %s1529 = sor.u32 %s1527, %s1528
      %s1530 = sand.u32 51, %s1529
      %s1531 = sshrl.u32 %s1530, 2
      %s1532 = sor.u32 %s1530, %s1531
      %s1533 = sand.u32 15, %s1532
      %v1534 = vld [vmem:[%s1524] sm:%s1533]
      %v1535 = vunpack.c.l.bf16 %v1534
      %v1536 = vunpack.c.h.bf16 %v1534
      %s1537 = scalar_lea.vmem [#allocation1], 744
      %1538 = vst [vmem:[%s1537] sm:%s53] %v1535
      %s1539 = scalar_lea.vmem %s50, 368
      %s1540 = sshrl.u32 %s53, 1
      %s1541 = sor.u32 %s53, %s1540
      %s1542 = sand.u32 %s1541, 85
      %s1543 = sshrl.u32 %s1542, 1
      %s1544 = sor.u32 %s1542, %s1543
      %s1545 = sand.u32 51, %s1544
      %s1546 = sshrl.u32 %s1545, 2
      %s1547 = sor.u32 %s1545, %s1546
      %s1548 = sand.u32 15, %s1547
      %v1549 = vld [vmem:[%s1539] sm:%s1548]
      %v1550 = vunpack.c.l.bf16 %v1549
      %v1551 = vunpack.c.h.bf16 %v1549
      %s1552 = scalar_lea.vmem [#allocation1], 736
      %1553 = vst [vmem:[%s1552] sm:%s53] %v1550
      %s1554 = scalar_lea.vmem %s50, 364
      %s1555 = sshrl.u32 %s53, 1
      %s1556 = sor.u32 %s53, %s1555
      %s1557 = sand.u32 %s1556, 85
      %s1558 = sshrl.u32 %s1557, 1
      %s1559 = sor.u32 %s1557, %s1558
      %s1560 = sand.u32 51, %s1559
      %s1561 = sshrl.u32 %s1560, 2
      %s1562 = sor.u32 %s1560, %s1561
      %s1563 = sand.u32 15, %s1562
      %v1564 = vld [vmem:[%s1554] sm:%s1563]
      %v1565 = vunpack.c.l.bf16 %v1564
      %v1566 = vunpack.c.h.bf16 %v1564
      %s1567 = scalar_lea.vmem [#allocation1], 728
      %1568 = vst [vmem:[%s1567] sm:%s53] %v1565
      %s1569 = scalar_lea.vmem %s50, 360
      %s1570 = sshrl.u32 %s53, 1
      %s1571 = sor.u32 %s53, %s1570
      %s1572 = sand.u32 %s1571, 85
      %s1573 = sshrl.u32 %s1572, 1
      %s1574 = sor.u32 %s1572, %s1573
      %s1575 = sand.u32 51, %s1574
      %s1576 = sshrl.u32 %s1575, 2
      %s1577 = sor.u32 %s1575, %s1576
      %s1578 = sand.u32 15, %s1577
      %v1579 = vld [vmem:[%s1569] sm:%s1578]
      %v1580 = vunpack.c.l.bf16 %v1579
      %v1581 = vunpack.c.h.bf16 %v1579
      %s1582 = scalar_lea.vmem [#allocation1], 720
      %1583 = vst [vmem:[%s1582] sm:%s53] %v1580
      %s1584 = scalar_lea.vmem %s50, 356
      %s1585 = sshrl.u32 %s53, 1
      %s1586 = sor.u32 %s53, %s1585
      %s1587 = sand.u32 %s1586, 85
      %s1588 = sshrl.u32 %s1587, 1
      %s1589 = sor.u32 %s1587, %s1588
      %s1590 = sand.u32 51, %s1589
      %s1591 = sshrl.u32 %s1590, 2
      %s1592 = sor.u32 %s1590, %s1591
      %s1593 = sand.u32 15, %s1592
      %v1594 = vld [vmem:[%s1584] sm:%s1593]
      %v1595 = vunpack.c.l.bf16 %v1594
      %v1596 = vunpack.c.h.bf16 %v1594
      %s1597 = scalar_lea.vmem [#allocation1], 712
      %1598 = vst [vmem:[%s1597] sm:%s53] %v1595
      %s1599 = scalar_lea.vmem %s50, 352
      %s1600 = sshrl.u32 %s53, 1
      %s1601 = sor.u32 %s53, %s1600
      %s1602 = sand.u32 %s1601, 85
      %s1603 = sshrl.u32 %s1602, 1
      %s1604 = sor.u32 %s1602, %s1603
      %s1605 = sand.u32 51, %s1604
      %s1606 = sshrl.u32 %s1605, 2
      %s1607 = sor.u32 %s1605, %s1606
      %s1608 = sand.u32 15, %s1607
      %v1609 = vld [vmem:[%s1599] sm:%s1608]
      %v1610 = vunpack.c.l.bf16 %v1609
      %v1611 = vunpack.c.h.bf16 %v1609
      %s1612 = scalar_lea.vmem [#allocation1], 704
      %1613 = vst [vmem:[%s1612] sm:%s53] %v1610
      %s1614 = scalar_lea.vmem %s50, 348
      %s1615 = sshrl.u32 %s53, 1
      %s1616 = sor.u32 %s53, %s1615
      %s1617 = sand.u32 %s1616, 85
      %s1618 = sshrl.u32 %s1617, 1
      %s1619 = sor.u32 %s1617, %s1618
      %s1620 = sand.u32 51, %s1619
      %s1621 = sshrl.u32 %s1620, 2
      %s1622 = sor.u32 %s1620, %s1621
      %s1623 = sand.u32 15, %s1622
      %v1624 = vld [vmem:[%s1614] sm:%s1623]
      %v1625 = vunpack.c.l.bf16 %v1624
      %v1626 = vunpack.c.h.bf16 %v1624
      %s1627 = scalar_lea.vmem [#allocation1], 696
      %1628 = vst [vmem:[%s1627] sm:%s53] %v1625
      %s1629 = scalar_lea.vmem %s50, 344
      %s1630 = sshrl.u32 %s53, 1
      %s1631 = sor.u32 %s53, %s1630
      %s1632 = sand.u32 %s1631, 85
      %s1633 = sshrl.u32 %s1632, 1
      %s1634 = sor.u32 %s1632, %s1633
      %s1635 = sand.u32 51, %s1634
      %s1636 = sshrl.u32 %s1635, 2
      %s1637 = sor.u32 %s1635, %s1636
      %s1638 = sand.u32 15, %s1637
      %v1639 = vld [vmem:[%s1629] sm:%s1638]
      %v1640 = vunpack.c.l.bf16 %v1639
      %v1641 = vunpack.c.h.bf16 %v1639
      %s1642 = scalar_lea.vmem [#allocation1], 688
      %1643 = vst [vmem:[%s1642] sm:%s53] %v1640
      %s1644 = scalar_lea.vmem %s50, 340
      %s1645 = sshrl.u32 %s53, 1
      %s1646 = sor.u32 %s53, %s1645
      %s1647 = sand.u32 %s1646, 85
      %s1648 = sshrl.u32 %s1647, 1
      %s1649 = sor.u32 %s1647, %s1648
      %s1650 = sand.u32 51, %s1649
      %s1651 = sshrl.u32 %s1650, 2
      %s1652 = sor.u32 %s1650, %s1651
      %s1653 = sand.u32 15, %s1652
      %v1654 = vld [vmem:[%s1644] sm:%s1653]
      %v1655 = vunpack.c.l.bf16 %v1654
      %v1656 = vunpack.c.h.bf16 %v1654
      %s1657 = scalar_lea.vmem [#allocation1], 680
      %1658 = vst [vmem:[%s1657] sm:%s53] %v1655
      %s1659 = scalar_lea.vmem %s50, 336
      %s1660 = sshrl.u32 %s53, 1
      %s1661 = sor.u32 %s53, %s1660
      %s1662 = sand.u32 %s1661, 85
      %s1663 = sshrl.u32 %s1662, 1
      %s1664 = sor.u32 %s1662, %s1663
      %s1665 = sand.u32 51, %s1664
      %s1666 = sshrl.u32 %s1665, 2
      %s1667 = sor.u32 %s1665, %s1666
      %s1668 = sand.u32 15, %s1667
      %v1669 = vld [vmem:[%s1659] sm:%s1668]
      %v1670 = vunpack.c.l.bf16 %v1669
      %v1671 = vunpack.c.h.bf16 %v1669
      %s1672 = scalar_lea.vmem [#allocation1], 672
      %1673 = vst [vmem:[%s1672] sm:%s53] %v1670
      %s1674 = scalar_lea.vmem %s50, 332
      %s1675 = sshrl.u32 %s53, 1
      %s1676 = sor.u32 %s53, %s1675
      %s1677 = sand.u32 %s1676, 85
      %s1678 = sshrl.u32 %s1677, 1
      %s1679 = sor.u32 %s1677, %s1678
      %s1680 = sand.u32 51, %s1679
      %s1681 = sshrl.u32 %s1680, 2
      %s1682 = sor.u32 %s1680, %s1681
      %s1683 = sand.u32 15, %s1682
      %v1684 = vld [vmem:[%s1674] sm:%s1683]
      %v1685 = vunpack.c.l.bf16 %v1684
      %v1686 = vunpack.c.h.bf16 %v1684
      %s1687 = scalar_lea.vmem [#allocation1], 664
      %1688 = vst [vmem:[%s1687] sm:%s53] %v1685
      %s1689 = scalar_lea.vmem %s50, 328
      %s1690 = sshrl.u32 %s53, 1
      %s1691 = sor.u32 %s53, %s1690
      %s1692 = sand.u32 %s1691, 85
      %s1693 = sshrl.u32 %s1692, 1
      %s1694 = sor.u32 %s1692, %s1693
      %s1695 = sand.u32 51, %s1694
      %s1696 = sshrl.u32 %s1695, 2
      %s1697 = sor.u32 %s1695, %s1696
      %s1698 = sand.u32 15, %s1697
      %v1699 = vld [vmem:[%s1689] sm:%s1698]
      %v1700 = vunpack.c.l.bf16 %v1699
      %v1701 = vunpack.c.h.bf16 %v1699
      %s1702 = scalar_lea.vmem [#allocation1], 656
      %1703 = vst [vmem:[%s1702] sm:%s53] %v1700
      %s1704 = scalar_lea.vmem %s50, 324
      %s1705 = sshrl.u32 %s53, 1
      %s1706 = sor.u32 %s53, %s1705
      %s1707 = sand.u32 %s1706, 85
      %s1708 = sshrl.u32 %s1707, 1
      %s1709 = sor.u32 %s1707, %s1708
      %s1710 = sand.u32 51, %s1709
      %s1711 = sshrl.u32 %s1710, 2
      %s1712 = sor.u32 %s1710, %s1711
      %s1713 = sand.u32 15, %s1712
      %v1714 = vld [vmem:[%s1704] sm:%s1713]
      %v1715 = vunpack.c.l.bf16 %v1714
      %v1716 = vunpack.c.h.bf16 %v1714
      %s1717 = scalar_lea.vmem [#allocation1], 648
      %1718 = vst [vmem:[%s1717] sm:%s53] %v1715
      %s1719 = scalar_lea.vmem %s50, 320
      %s1720 = sshrl.u32 %s53, 1
      %s1721 = sor.u32 %s53, %s1720
      %s1722 = sand.u32 %s1721, 85
      %s1723 = sshrl.u32 %s1722, 1
      %s1724 = sor.u32 %s1722, %s1723
      %s1725 = sand.u32 51, %s1724
      %s1726 = sshrl.u32 %s1725, 2
      %s1727 = sor.u32 %s1725, %s1726
      %s1728 = sand.u32 15, %s1727
      %v1729 = vld [vmem:[%s1719] sm:%s1728]
      %v1730 = vunpack.c.l.bf16 %v1729
      %v1731 = vunpack.c.h.bf16 %v1729
      %s1732 = scalar_lea.vmem [#allocation1], 640
      %1733 = vst [vmem:[%s1732] sm:%s53] %v1730
      %s1734 = scalar_lea.vmem %s50, 316
      %s1735 = sshrl.u32 %s53, 1
      %s1736 = sor.u32 %s53, %s1735
      %s1737 = sand.u32 %s1736, 85
      %s1738 = sshrl.u32 %s1737, 1
      %s1739 = sor.u32 %s1737, %s1738
      %s1740 = sand.u32 51, %s1739
      %s1741 = sshrl.u32 %s1740, 2
      %s1742 = sor.u32 %s1740, %s1741
      %s1743 = sand.u32 15, %s1742
      %v1744 = vld [vmem:[%s1734] sm:%s1743]
      %v1745 = vunpack.c.l.bf16 %v1744
      %v1746 = vunpack.c.h.bf16 %v1744
      %s1747 = scalar_lea.vmem [#allocation1], 632
      %1748 = vst [vmem:[%s1747] sm:%s53] %v1745
      %s1749 = scalar_lea.vmem %s50, 312
      %s1750 = sshrl.u32 %s53, 1
      %s1751 = sor.u32 %s53, %s1750
      %s1752 = sand.u32 %s1751, 85
      %s1753 = sshrl.u32 %s1752, 1
      %s1754 = sor.u32 %s1752, %s1753
      %s1755 = sand.u32 51, %s1754
      %s1756 = sshrl.u32 %s1755, 2
      %s1757 = sor.u32 %s1755, %s1756
      %s1758 = sand.u32 15, %s1757
      %v1759 = vld [vmem:[%s1749] sm:%s1758]
      %v1760 = vunpack.c.l.bf16 %v1759
      %v1761 = vunpack.c.h.bf16 %v1759
      %s1762 = scalar_lea.vmem [#allocation1], 624
      %1763 = vst [vmem:[%s1762] sm:%s53] %v1760
      %s1764 = scalar_lea.vmem %s50, 308
      %s1765 = sshrl.u32 %s53, 1
      %s1766 = sor.u32 %s53, %s1765
      %s1767 = sand.u32 %s1766, 85
      %s1768 = sshrl.u32 %s1767, 1
      %s1769 = sor.u32 %s1767, %s1768
      %s1770 = sand.u32 51, %s1769
      %s1771 = sshrl.u32 %s1770, 2
      %s1772 = sor.u32 %s1770, %s1771
      %s1773 = sand.u32 15, %s1772
      %v1774 = vld [vmem:[%s1764] sm:%s1773]
      %v1775 = vunpack.c.l.bf16 %v1774
      %v1776 = vunpack.c.h.bf16 %v1774
      %s1777 = scalar_lea.vmem [#allocation1], 616
      %1778 = vst [vmem:[%s1777] sm:%s53] %v1775
      %s1779 = scalar_lea.vmem %s50, 304
      %s1780 = sshrl.u32 %s53, 1
      %s1781 = sor.u32 %s53, %s1780
      %s1782 = sand.u32 %s1781, 85
      %s1783 = sshrl.u32 %s1782, 1
      %s1784 = sor.u32 %s1782, %s1783
      %s1785 = sand.u32 51, %s1784
      %s1786 = sshrl.u32 %s1785, 2
      %s1787 = sor.u32 %s1785, %s1786
      %s1788 = sand.u32 15, %s1787
      %v1789 = vld [vmem:[%s1779] sm:%s1788]
      %v1790 = vunpack.c.l.bf16 %v1789
      %v1791 = vunpack.c.h.bf16 %v1789
      %s1792 = scalar_lea.vmem [#allocation1], 608
      %1793 = vst [vmem:[%s1792] sm:%s53] %v1790
      %s1794 = scalar_lea.vmem %s50, 300
      %s1795 = sshrl.u32 %s53, 1
      %s1796 = sor.u32 %s53, %s1795
      %s1797 = sand.u32 %s1796, 85
      %s1798 = sshrl.u32 %s1797, 1
      %s1799 = sor.u32 %s1797, %s1798
      %s1800 = sand.u32 51, %s1799
      %s1801 = sshrl.u32 %s1800, 2
      %s1802 = sor.u32 %s1800, %s1801
      %s1803 = sand.u32 15, %s1802
      %v1804 = vld [vmem:[%s1794] sm:%s1803]
      %v1805 = vunpack.c.l.bf16 %v1804
      %v1806 = vunpack.c.h.bf16 %v1804
      %s1807 = scalar_lea.vmem [#allocation1], 600
      %1808 = vst [vmem:[%s1807] sm:%s53] %v1805
      %s1809 = scalar_lea.vmem %s50, 296
      %s1810 = sshrl.u32 %s53, 1
      %s1811 = sor.u32 %s53, %s1810
      %s1812 = sand.u32 %s1811, 85
      %s1813 = sshrl.u32 %s1812, 1
      %s1814 = sor.u32 %s1812, %s1813
      %s1815 = sand.u32 51, %s1814
      %s1816 = sshrl.u32 %s1815, 2
      %s1817 = sor.u32 %s1815, %s1816
      %s1818 = sand.u32 15, %s1817
      %v1819 = vld [vmem:[%s1809] sm:%s1818]
      %v1820 = vunpack.c.l.bf16 %v1819
      %v1821 = vunpack.c.h.bf16 %v1819
      %s1822 = scalar_lea.vmem [#allocation1], 592
      %1823 = vst [vmem:[%s1822] sm:%s53] %v1820
      %s1824 = scalar_lea.vmem %s50, 292
      %s1825 = sshrl.u32 %s53, 1
      %s1826 = sor.u32 %s53, %s1825
      %s1827 = sand.u32 %s1826, 85
      %s1828 = sshrl.u32 %s1827, 1
      %s1829 = sor.u32 %s1827, %s1828
      %s1830 = sand.u32 51, %s1829
      %s1831 = sshrl.u32 %s1830, 2
      %s1832 = sor.u32 %s1830, %s1831
      %s1833 = sand.u32 15, %s1832
      %v1834 = vld [vmem:[%s1824] sm:%s1833]
      %v1835 = vunpack.c.l.bf16 %v1834
      %v1836 = vunpack.c.h.bf16 %v1834
      %s1837 = scalar_lea.vmem [#allocation1], 584
      %1838 = vst [vmem:[%s1837] sm:%s53] %v1835
      %s1839 = scalar_lea.vmem %s50, 288
      %s1840 = sshrl.u32 %s53, 1
      %s1841 = sor.u32 %s53, %s1840
      %s1842 = sand.u32 %s1841, 85
      %s1843 = sshrl.u32 %s1842, 1
      %s1844 = sor.u32 %s1842, %s1843
      %s1845 = sand.u32 51, %s1844
      %s1846 = sshrl.u32 %s1845, 2
      %s1847 = sor.u32 %s1845, %s1846
      %s1848 = sand.u32 15, %s1847
      %v1849 = vld [vmem:[%s1839] sm:%s1848]
      %v1850 = vunpack.c.l.bf16 %v1849
      %v1851 = vunpack.c.h.bf16 %v1849
      %s1852 = scalar_lea.vmem [#allocation1], 576
      %1853 = vst [vmem:[%s1852] sm:%s53] %v1850
      %s1854 = scalar_lea.vmem %s50, 284
      %s1855 = sshrl.u32 %s53, 1
      %s1856 = sor.u32 %s53, %s1855
      %s1857 = sand.u32 %s1856, 85
      %s1858 = sshrl.u32 %s1857, 1
      %s1859 = sor.u32 %s1857, %s1858
      %s1860 = sand.u32 51, %s1859
      %s1861 = sshrl.u32 %s1860, 2
      %s1862 = sor.u32 %s1860, %s1861
      %s1863 = sand.u32 15, %s1862
      %v1864 = vld [vmem:[%s1854] sm:%s1863]
      %v1865 = vunpack.c.l.bf16 %v1864
      %v1866 = vunpack.c.h.bf16 %v1864
      %s1867 = scalar_lea.vmem [#allocation1], 568
      %1868 = vst [vmem:[%s1867] sm:%s53] %v1865
      %s1869 = scalar_lea.vmem %s50, 280
      %s1870 = sshrl.u32 %s53, 1
      %s1871 = sor.u32 %s53, %s1870
      %s1872 = sand.u32 %s1871, 85
      %s1873 = sshrl.u32 %s1872, 1
      %s1874 = sor.u32 %s1872, %s1873
      %s1875 = sand.u32 51, %s1874
      %s1876 = sshrl.u32 %s1875, 2
      %s1877 = sor.u32 %s1875, %s1876
      %s1878 = sand.u32 15, %s1877
      %v1879 = vld [vmem:[%s1869] sm:%s1878]
      %v1880 = vunpack.c.l.bf16 %v1879
      %v1881 = vunpack.c.h.bf16 %v1879
      %s1882 = scalar_lea.vmem [#allocation1], 560
      %1883 = vst [vmem:[%s1882] sm:%s53] %v1880
      %s1884 = scalar_lea.vmem %s50, 276
      %s1885 = sshrl.u32 %s53, 1
      %s1886 = sor.u32 %s53, %s1885
      %s1887 = sand.u32 %s1886, 85
      %s1888 = sshrl.u32 %s1887, 1
      %s1889 = sor.u32 %s1887, %s1888
      %s1890 = sand.u32 51, %s1889
      %s1891 = sshrl.u32 %s1890, 2
      %s1892 = sor.u32 %s1890, %s1891
      %s1893 = sand.u32 15, %s1892
      %v1894 = vld [vmem:[%s1884] sm:%s1893]
      %v1895 = vunpack.c.l.bf16 %v1894
      %v1896 = vunpack.c.h.bf16 %v1894
      %s1897 = scalar_lea.vmem [#allocation1], 552
      %1898 = vst [vmem:[%s1897] sm:%s53] %v1895
      %s1899 = scalar_lea.vmem %s50, 272
      %s1900 = sshrl.u32 %s53, 1
      %s1901 = sor.u32 %s53, %s1900
      %s1902 = sand.u32 %s1901, 85
      %s1903 = sshrl.u32 %s1902, 1
      %s1904 = sor.u32 %s1902, %s1903
      %s1905 = sand.u32 51, %s1904
      %s1906 = sshrl.u32 %s1905, 2
      %s1907 = sor.u32 %s1905, %s1906
      %s1908 = sand.u32 15, %s1907
      %v1909 = vld [vmem:[%s1899] sm:%s1908]
      %v1910 = vunpack.c.l.bf16 %v1909
      %v1911 = vunpack.c.h.bf16 %v1909
      %s1912 = scalar_lea.vmem [#allocation1], 544
      %1913 = vst [vmem:[%s1912] sm:%s53] %v1910
      %s1914 = scalar_lea.vmem %s50, 268
      %s1915 = sshrl.u32 %s53, 1
      %s1916 = sor.u32 %s53, %s1915
      %s1917 = sand.u32 %s1916, 85
      %s1918 = sshrl.u32 %s1917, 1
      %s1919 = sor.u32 %s1917, %s1918
      %s1920 = sand.u32 51, %s1919
      %s1921 = sshrl.u32 %s1920, 2
      %s1922 = sor.u32 %s1920, %s1921
      %s1923 = sand.u32 15, %s1922
      %v1924 = vld [vmem:[%s1914] sm:%s1923]
      %v1925 = vunpack.c.l.bf16 %v1924
      %v1926 = vunpack.c.h.bf16 %v1924
      %s1927 = scalar_lea.vmem [#allocation1], 536
      %1928 = vst [vmem:[%s1927] sm:%s53] %v1925
      %s1929 = scalar_lea.vmem %s50, 264
      %s1930 = sshrl.u32 %s53, 1
      %s1931 = sor.u32 %s53, %s1930
      %s1932 = sand.u32 %s1931, 85
      %s1933 = sshrl.u32 %s1932, 1
      %s1934 = sor.u32 %s1932, %s1933
      %s1935 = sand.u32 51, %s1934
      %s1936 = sshrl.u32 %s1935, 2
      %s1937 = sor.u32 %s1935, %s1936
      %s1938 = sand.u32 15, %s1937
      %v1939 = vld [vmem:[%s1929] sm:%s1938]
      %v1940 = vunpack.c.l.bf16 %v1939
      %v1941 = vunpack.c.h.bf16 %v1939
      %s1942 = scalar_lea.vmem [#allocation1], 528
      %1943 = vst [vmem:[%s1942] sm:%s53] %v1940
      %s1944 = scalar_lea.vmem %s50, 260
      %s1945 = sshrl.u32 %s53, 1
      %s1946 = sor.u32 %s53, %s1945
      %s1947 = sand.u32 %s1946, 85
      %s1948 = sshrl.u32 %s1947, 1
      %s1949 = sor.u32 %s1947, %s1948
      %s1950 = sand.u32 51, %s1949
      %s1951 = sshrl.u32 %s1950, 2
      %s1952 = sor.u32 %s1950, %s1951
      %s1953 = sand.u32 15, %s1952
      %v1954 = vld [vmem:[%s1944] sm:%s1953]
      %v1955 = vunpack.c.l.bf16 %v1954
      %v1956 = vunpack.c.h.bf16 %v1954
      %s1957 = scalar_lea.vmem [#allocation1], 520
      %1958 = vst [vmem:[%s1957] sm:%s53] %v1955
      %s1959 = scalar_lea.vmem %s50, 256
      %s1960 = sshrl.u32 %s53, 1
      %s1961 = sor.u32 %s53, %s1960
      %s1962 = sand.u32 %s1961, 85
      %s1963 = sshrl.u32 %s1962, 1
      %s1964 = sor.u32 %s1962, %s1963
      %s1965 = sand.u32 51, %s1964
      %s1966 = sshrl.u32 %s1965, 2
      %s1967 = sor.u32 %s1965, %s1966
      %s1968 = sand.u32 15, %s1967
      %v1969 = vld [vmem:[%s1959] sm:%s1968]
      %v1970 = vunpack.c.l.bf16 %v1969
      %v1971 = vunpack.c.h.bf16 %v1969
      %s1972 = scalar_lea.vmem [#allocation1], 512
      %1973 = vst [vmem:[%s1972] sm:%s53] %v1970
      %s1974 = scalar_lea.vmem %s50, 252
      %s1975 = sshrl.u32 %s53, 1
      %s1976 = sor.u32 %s53, %s1975
      %s1977 = sand.u32 %s1976, 85
      %s1978 = sshrl.u32 %s1977, 1
      %s1979 = sor.u32 %s1977, %s1978
      %s1980 = sand.u32 51, %s1979
      %s1981 = sshrl.u32 %s1980, 2
      %s1982 = sor.u32 %s1980, %s1981
      %s1983 = sand.u32 15, %s1982
      %v1984 = vld [vmem:[%s1974] sm:%s1983]
      %v1985 = vunpack.c.l.bf16 %v1984
      %v1986 = vunpack.c.h.bf16 %v1984
      %s1987 = scalar_lea.vmem [#allocation1], 504
      %1988 = vst [vmem:[%s1987] sm:%s53] %v1985
      %s1989 = scalar_lea.vmem %s50, 248
      %s1990 = sshrl.u32 %s53, 1
      %s1991 = sor.u32 %s53, %s1990
      %s1992 = sand.u32 %s1991, 85
      %s1993 = sshrl.u32 %s1992, 1
      %s1994 = sor.u32 %s1992, %s1993
      %s1995 = sand.u32 51, %s1994
      %s1996 = sshrl.u32 %s1995, 2
      %s1997 = sor.u32 %s1995, %s1996
      %s1998 = sand.u32 15, %s1997
      %v1999 = vld [vmem:[%s1989] sm:%s1998]
      %v2000 = vunpack.c.l.bf16 %v1999
      %v2001 = vunpack.c.h.bf16 %v1999
      %s2002 = scalar_lea.vmem [#allocation1], 496
      %2003 = vst [vmem:[%s2002] sm:%s53] %v2000
      %s2004 = scalar_lea.vmem %s50, 244
      %s2005 = sshrl.u32 %s53, 1
      %s2006 = sor.u32 %s53, %s2005
      %s2007 = sand.u32 %s2006, 85
      %s2008 = sshrl.u32 %s2007, 1
      %s2009 = sor.u32 %s2007, %s2008
      %s2010 = sand.u32 51, %s2009
      %s2011 = sshrl.u32 %s2010, 2
      %s2012 = sor.u32 %s2010, %s2011
      %s2013 = sand.u32 15, %s2012
      %v2014 = vld [vmem:[%s2004] sm:%s2013]
      %v2015 = vunpack.c.l.bf16 %v2014
      %v2016 = vunpack.c.h.bf16 %v2014
      %s2017 = scalar_lea.vmem [#allocation1], 488
      %2018 = vst [vmem:[%s2017] sm:%s53] %v2015
      %s2019 = scalar_lea.vmem %s50, 240
      %s2020 = sshrl.u32 %s53, 1
      %s2021 = sor.u32 %s53, %s2020
      %s2022 = sand.u32 %s2021, 85
      %s2023 = sshrl.u32 %s2022, 1
      %s2024 = sor.u32 %s2022, %s2023
      %s2025 = sand.u32 51, %s2024
      %s2026 = sshrl.u32 %s2025, 2
      %s2027 = sor.u32 %s2025, %s2026
      %s2028 = sand.u32 15, %s2027
      %v2029 = vld [vmem:[%s2019] sm:%s2028]
      %v2030 = vunpack.c.l.bf16 %v2029
      %v2031 = vunpack.c.h.bf16 %v2029
      %s2032 = scalar_lea.vmem [#allocation1], 480
      %2033 = vst [vmem:[%s2032] sm:%s53] %v2030
      %s2034 = scalar_lea.vmem %s50, 236
      %s2035 = sshrl.u32 %s53, 1
      %s2036 = sor.u32 %s53, %s2035
      %s2037 = sand.u32 %s2036, 85
      %s2038 = sshrl.u32 %s2037, 1
      %s2039 = sor.u32 %s2037, %s2038
      %s2040 = sand.u32 51, %s2039
      %s2041 = sshrl.u32 %s2040, 2
      %s2042 = sor.u32 %s2040, %s2041
      %s2043 = sand.u32 15, %s2042
      %v2044 = vld [vmem:[%s2034] sm:%s2043]
      %v2045 = vunpack.c.l.bf16 %v2044
      %v2046 = vunpack.c.h.bf16 %v2044
      %s2047 = scalar_lea.vmem [#allocation1], 472
      %2048 = vst [vmem:[%s2047] sm:%s53] %v2045
      %s2049 = scalar_lea.vmem %s50, 232
      %s2050 = sshrl.u32 %s53, 1
      %s2051 = sor.u32 %s53, %s2050
      %s2052 = sand.u32 %s2051, 85
      %s2053 = sshrl.u32 %s2052, 1
      %s2054 = sor.u32 %s2052, %s2053
      %s2055 = sand.u32 51, %s2054
      %s2056 = sshrl.u32 %s2055, 2
      %s2057 = sor.u32 %s2055, %s2056
      %s2058 = sand.u32 15, %s2057
      %v2059 = vld [vmem:[%s2049] sm:%s2058]
      %v2060 = vunpack.c.l.bf16 %v2059
      %v2061 = vunpack.c.h.bf16 %v2059
      %s2062 = scalar_lea.vmem [#allocation1], 464
      %2063 = vst [vmem:[%s2062] sm:%s53] %v2060
      %s2064 = scalar_lea.vmem %s50, 228
      %s2065 = sshrl.u32 %s53, 1
      %s2066 = sor.u32 %s53, %s2065
      %s2067 = sand.u32 %s2066, 85
      %s2068 = sshrl.u32 %s2067, 1
      %s2069 = sor.u32 %s2067, %s2068
      %s2070 = sand.u32 51, %s2069
      %s2071 = sshrl.u32 %s2070, 2
      %s2072 = sor.u32 %s2070, %s2071
      %s2073 = sand.u32 15, %s2072
      %v2074 = vld [vmem:[%s2064] sm:%s2073]
      %v2075 = vunpack.c.l.bf16 %v2074
      %v2076 = vunpack.c.h.bf16 %v2074
      %s2077 = scalar_lea.vmem [#allocation1], 456
      %2078 = vst [vmem:[%s2077] sm:%s53] %v2075
      %s2079 = scalar_lea.vmem %s50, 224
      %s2080 = sshrl.u32 %s53, 1
      %s2081 = sor.u32 %s53, %s2080
      %s2082 = sand.u32 %s2081, 85
      %s2083 = sshrl.u32 %s2082, 1
      %s2084 = sor.u32 %s2082, %s2083
      %s2085 = sand.u32 51, %s2084
      %s2086 = sshrl.u32 %s2085, 2
      %s2087 = sor.u32 %s2085, %s2086
      %s2088 = sand.u32 15, %s2087
      %v2089 = vld [vmem:[%s2079] sm:%s2088]
      %v2090 = vunpack.c.l.bf16 %v2089
      %v2091 = vunpack.c.h.bf16 %v2089
      %s2092 = scalar_lea.vmem [#allocation1], 448
      %2093 = vst [vmem:[%s2092] sm:%s53] %v2090
      %s2094 = scalar_lea.vmem %s50, 220
      %s2095 = sshrl.u32 %s53, 1
      %s2096 = sor.u32 %s53, %s2095
      %s2097 = sand.u32 %s2096, 85
      %s2098 = sshrl.u32 %s2097, 1
      %s2099 = sor.u32 %s2097, %s2098
      %s2100 = sand.u32 51, %s2099
      %s2101 = sshrl.u32 %s2100, 2
      %s2102 = sor.u32 %s2100, %s2101
      %s2103 = sand.u32 15, %s2102
      %v2104 = vld [vmem:[%s2094] sm:%s2103]
      %v2105 = vunpack.c.l.bf16 %v2104
      %v2106 = vunpack.c.h.bf16 %v2104
      %s2107 = scalar_lea.vmem [#allocation1], 440
      %2108 = vst [vmem:[%s2107] sm:%s53] %v2105
      %s2109 = scalar_lea.vmem %s50, 216
      %s2110 = sshrl.u32 %s53, 1
      %s2111 = sor.u32 %s53, %s2110
      %s2112 = sand.u32 %s2111, 85
      %s2113 = sshrl.u32 %s2112, 1
      %s2114 = sor.u32 %s2112, %s2113
      %s2115 = sand.u32 51, %s2114
      %s2116 = sshrl.u32 %s2115, 2
      %s2117 = sor.u32 %s2115, %s2116
      %s2118 = sand.u32 15, %s2117
      %v2119 = vld [vmem:[%s2109] sm:%s2118]
      %v2120 = vunpack.c.l.bf16 %v2119
      %v2121 = vunpack.c.h.bf16 %v2119
      %s2122 = scalar_lea.vmem [#allocation1], 432
      %2123 = vst [vmem:[%s2122] sm:%s53] %v2120
      %s2124 = scalar_lea.vmem %s50, 212
      %s2125 = sshrl.u32 %s53, 1
      %s2126 = sor.u32 %s53, %s2125
      %s2127 = sand.u32 %s2126, 85
      %s2128 = sshrl.u32 %s2127, 1
      %s2129 = sor.u32 %s2127, %s2128
      %s2130 = sand.u32 51, %s2129
      %s2131 = sshrl.u32 %s2130, 2
      %s2132 = sor.u32 %s2130, %s2131
      %s2133 = sand.u32 15, %s2132
      %v2134 = vld [vmem:[%s2124] sm:%s2133]
      %v2135 = vunpack.c.l.bf16 %v2134
      %v2136 = vunpack.c.h.bf16 %v2134
      %s2137 = scalar_lea.vmem [#allocation1], 424
      %2138 = vst [vmem:[%s2137] sm:%s53] %v2135
      %s2139 = scalar_lea.vmem %s50, 208
      %s2140 = sshrl.u32 %s53, 1
      %s2141 = sor.u32 %s53, %s2140
      %s2142 = sand.u32 %s2141, 85
      %s2143 = sshrl.u32 %s2142, 1
      %s2144 = sor.u32 %s2142, %s2143
      %s2145 = sand.u32 51, %s2144
      %s2146 = sshrl.u32 %s2145, 2
      %s2147 = sor.u32 %s2145, %s2146
      %s2148 = sand.u32 15, %s2147
      %v2149 = vld [vmem:[%s2139] sm:%s2148]
      %v2150 = vunpack.c.l.bf16 %v2149
      %v2151 = vunpack.c.h.bf16 %v2149
      %s2152 = scalar_lea.vmem [#allocation1], 416
      %2153 = vst [vmem:[%s2152] sm:%s53] %v2150
      %s2154 = scalar_lea.vmem %s50, 204
      %s2155 = sshrl.u32 %s53, 1
      %s2156 = sor.u32 %s53, %s2155
      %s2157 = sand.u32 %s2156, 85
      %s2158 = sshrl.u32 %s2157, 1
      %s2159 = sor.u32 %s2157, %s2158
      %s2160 = sand.u32 51, %s2159
      %s2161 = sshrl.u32 %s2160, 2
      %s2162 = sor.u32 %s2160, %s2161
      %s2163 = sand.u32 15, %s2162
      %v2164 = vld [vmem:[%s2154] sm:%s2163]
      %v2165 = vunpack.c.l.bf16 %v2164
      %v2166 = vunpack.c.h.bf16 %v2164
      %s2167 = scalar_lea.vmem [#allocation1], 408
      %2168 = vst [vmem:[%s2167] sm:%s53] %v2165
      %s2169 = scalar_lea.vmem %s50, 200
      %s2170 = sshrl.u32 %s53, 1
      %s2171 = sor.u32 %s53, %s2170
      %s2172 = sand.u32 %s2171, 85
      %s2173 = sshrl.u32 %s2172, 1
      %s2174 = sor.u32 %s2172, %s2173
      %s2175 = sand.u32 51, %s2174
      %s2176 = sshrl.u32 %s2175, 2
      %s2177 = sor.u32 %s2175, %s2176
      %s2178 = sand.u32 15, %s2177
      %v2179 = vld [vmem:[%s2169] sm:%s2178]
      %v2180 = vunpack.c.l.bf16 %v2179
      %v2181 = vunpack.c.h.bf16 %v2179
      %s2182 = scalar_lea.vmem [#allocation1], 400
      %2183 = vst [vmem:[%s2182] sm:%s53] %v2180
      %s2184 = scalar_lea.vmem %s50, 196
      %s2185 = sshrl.u32 %s53, 1
      %s2186 = sor.u32 %s53, %s2185
      %s2187 = sand.u32 %s2186, 85
      %s2188 = sshrl.u32 %s2187, 1
      %s2189 = sor.u32 %s2187, %s2188
      %s2190 = sand.u32 51, %s2189
      %s2191 = sshrl.u32 %s2190, 2
      %s2192 = sor.u32 %s2190, %s2191
      %s2193 = sand.u32 15, %s2192
      %v2194 = vld [vmem:[%s2184] sm:%s2193]
      %v2195 = vunpack.c.l.bf16 %v2194
      %v2196 = vunpack.c.h.bf16 %v2194
      %s2197 = scalar_lea.vmem [#allocation1], 392
      %2198 = vst [vmem:[%s2197] sm:%s53] %v2195
      %s2199 = scalar_lea.vmem %s50, 192
      %s2200 = sshrl.u32 %s53, 1
      %s2201 = sor.u32 %s53, %s2200
      %s2202 = sand.u32 %s2201, 85
      %s2203 = sshrl.u32 %s2202, 1
      %s2204 = sor.u32 %s2202, %s2203
      %s2205 = sand.u32 51, %s2204
      %s2206 = sshrl.u32 %s2205, 2
      %s2207 = sor.u32 %s2205, %s2206
      %s2208 = sand.u32 15, %s2207
      %v2209 = vld [vmem:[%s2199] sm:%s2208]
      %v2210 = vunpack.c.l.bf16 %v2209
      %v2211 = vunpack.c.h.bf16 %v2209
      %s2212 = scalar_lea.vmem [#allocation1], 384
      %2213 = vst [vmem:[%s2212] sm:%s53] %v2210
      %s2214 = scalar_lea.vmem %s50, 188
      %s2215 = sshrl.u32 %s53, 1
      %s2216 = sor.u32 %s53, %s2215
      %s2217 = sand.u32 %s2216, 85
      %s2218 = sshrl.u32 %s2217, 1
      %s2219 = sor.u32 %s2217, %s2218
      %s2220 = sand.u32 51, %s2219
      %s2221 = sshrl.u32 %s2220, 2
      %s2222 = sor.u32 %s2220, %s2221
      %s2223 = sand.u32 15, %s2222
      %v2224 = vld [vmem:[%s2214] sm:%s2223]
      %v2225 = vunpack.c.l.bf16 %v2224
      %v2226 = vunpack.c.h.bf16 %v2224
      %s2227 = scalar_lea.vmem [#allocation1], 376
      %2228 = vst [vmem:[%s2227] sm:%s53] %v2225
      %s2229 = scalar_lea.vmem %s50, 184
      %s2230 = sshrl.u32 %s53, 1
      %s2231 = sor.u32 %s53, %s2230
      %s2232 = sand.u32 %s2231, 85
      %s2233 = sshrl.u32 %s2232, 1
      %s2234 = sor.u32 %s2232, %s2233
      %s2235 = sand.u32 51, %s2234
      %s2236 = sshrl.u32 %s2235, 2
      %s2237 = sor.u32 %s2235, %s2236
      %s2238 = sand.u32 15, %s2237
      %v2239 = vld [vmem:[%s2229] sm:%s2238]
      %v2240 = vunpack.c.l.bf16 %v2239
      %v2241 = vunpack.c.h.bf16 %v2239
      %s2242 = scalar_lea.vmem [#allocation1], 368
      %2243 = vst [vmem:[%s2242] sm:%s53] %v2240
      %s2244 = scalar_lea.vmem %s50, 180
      %s2245 = sshrl.u32 %s53, 1
      %s2246 = sor.u32 %s53, %s2245
      %s2247 = sand.u32 %s2246, 85
      %s2248 = sshrl.u32 %s2247, 1
      %s2249 = sor.u32 %s2247, %s2248
      %s2250 = sand.u32 51, %s2249
      %s2251 = sshrl.u32 %s2250, 2
      %s2252 = sor.u32 %s2250, %s2251
      %s2253 = sand.u32 15, %s2252
      %v2254 = vld [vmem:[%s2244] sm:%s2253]
      %v2255 = vunpack.c.l.bf16 %v2254
      %v2256 = vunpack.c.h.bf16 %v2254
      %s2257 = scalar_lea.vmem [#allocation1], 360
      %2258 = vst [vmem:[%s2257] sm:%s53] %v2255
      %s2259 = scalar_lea.vmem %s50, 176
      %s2260 = sshrl.u32 %s53, 1
      %s2261 = sor.u32 %s53, %s2260
      %s2262 = sand.u32 %s2261, 85
      %s2263 = sshrl.u32 %s2262, 1
      %s2264 = sor.u32 %s2262, %s2263
      %s2265 = sand.u32 51, %s2264
      %s2266 = sshrl.u32 %s2265, 2
      %s2267 = sor.u32 %s2265, %s2266
      %s2268 = sand.u32 15, %s2267
      %v2269 = vld [vmem:[%s2259] sm:%s2268]
      %v2270 = vunpack.c.l.bf16 %v2269
      %v2271 = vunpack.c.h.bf16 %v2269
      %s2272 = scalar_lea.vmem [#allocation1], 352
      %2273 = vst [vmem:[%s2272] sm:%s53] %v2270
      %s2274 = scalar_lea.vmem %s50, 172
      %s2275 = sshrl.u32 %s53, 1
      %s2276 = sor.u32 %s53, %s2275
      %s2277 = sand.u32 %s2276, 85
      %s2278 = sshrl.u32 %s2277, 1
      %s2279 = sor.u32 %s2277, %s2278
      %s2280 = sand.u32 51, %s2279
      %s2281 = sshrl.u32 %s2280, 2
      %s2282 = sor.u32 %s2280, %s2281
      %s2283 = sand.u32 15, %s2282
      %v2284 = vld [vmem:[%s2274] sm:%s2283]
      %v2285 = vunpack.c.l.bf16 %v2284
      %v2286 = vunpack.c.h.bf16 %v2284
      %s2287 = scalar_lea.vmem [#allocation1], 344
      %2288 = vst [vmem:[%s2287] sm:%s53] %v2285
      %s2289 = scalar_lea.vmem %s50, 168
      %s2290 = sshrl.u32 %s53, 1
      %s2291 = sor.u32 %s53, %s2290
      %s2292 = sand.u32 %s2291, 85
      %s2293 = sshrl.u32 %s2292, 1
      %s2294 = sor.u32 %s2292, %s2293
      %s2295 = sand.u32 51, %s2294
      %s2296 = sshrl.u32 %s2295, 2
      %s2297 = sor.u32 %s2295, %s2296
      %s2298 = sand.u32 15, %s2297
      %v2299 = vld [vmem:[%s2289] sm:%s2298]
      %v2300 = vunpack.c.l.bf16 %v2299
      %v2301 = vunpack.c.h.bf16 %v2299
      %s2302 = scalar_lea.vmem [#allocation1], 336
      %2303 = vst [vmem:[%s2302] sm:%s53] %v2300
      %s2304 = scalar_lea.vmem %s50, 164
      %s2305 = sshrl.u32 %s53, 1
      %s2306 = sor.u32 %s53, %s2305
      %s2307 = sand.u32 %s2306, 85
      %s2308 = sshrl.u32 %s2307, 1
      %s2309 = sor.u32 %s2307, %s2308
      %s2310 = sand.u32 51, %s2309
      %s2311 = sshrl.u32 %s2310, 2
      %s2312 = sor.u32 %s2310, %s2311
      %s2313 = sand.u32 15, %s2312
      %v2314 = vld [vmem:[%s2304] sm:%s2313]
      %v2315 = vunpack.c.l.bf16 %v2314
      %v2316 = vunpack.c.h.bf16 %v2314
      %s2317 = scalar_lea.vmem [#allocation1], 328
      %2318 = vst [vmem:[%s2317] sm:%s53] %v2315
      %s2319 = scalar_lea.vmem %s50, 160
      %s2320 = sshrl.u32 %s53, 1
      %s2321 = sor.u32 %s53, %s2320
      %s2322 = sand.u32 %s2321, 85
      %s2323 = sshrl.u32 %s2322, 1
      %s2324 = sor.u32 %s2322, %s2323
      %s2325 = sand.u32 51, %s2324
      %s2326 = sshrl.u32 %s2325, 2
      %s2327 = sor.u32 %s2325, %s2326
      %s2328 = sand.u32 15, %s2327
      %v2329 = vld [vmem:[%s2319] sm:%s2328]
      %v2330 = vunpack.c.l.bf16 %v2329
      %v2331 = vunpack.c.h.bf16 %v2329
      %s2332 = scalar_lea.vmem [#allocation1], 320
      %2333 = vst [vmem:[%s2332] sm:%s53] %v2330
      %s2334 = scalar_lea.vmem %s50, 156
      %s2335 = sshrl.u32 %s53, 1
      %s2336 = sor.u32 %s53, %s2335
      %s2337 = sand.u32 %s2336, 85
      %s2338 = sshrl.u32 %s2337, 1
      %s2339 = sor.u32 %s2337, %s2338
      %s2340 = sand.u32 51, %s2339
      %s2341 = sshrl.u32 %s2340, 2
      %s2342 = sor.u32 %s2340, %s2341
      %s2343 = sand.u32 15, %s2342
      %v2344 = vld [vmem:[%s2334] sm:%s2343]
      %v2345 = vunpack.c.l.bf16 %v2344
      %v2346 = vunpack.c.h.bf16 %v2344
      %s2347 = scalar_lea.vmem [#allocation1], 312
      %2348 = vst [vmem:[%s2347] sm:%s53] %v2345
      %s2349 = scalar_lea.vmem %s50, 152
      %s2350 = sshrl.u32 %s53, 1
      %s2351 = sor.u32 %s53, %s2350
      %s2352 = sand.u32 %s2351, 85
      %s2353 = sshrl.u32 %s2352, 1
      %s2354 = sor.u32 %s2352, %s2353
      %s2355 = sand.u32 51, %s2354
      %s2356 = sshrl.u32 %s2355, 2
      %s2357 = sor.u32 %s2355, %s2356
      %s2358 = sand.u32 15, %s2357
      %v2359 = vld [vmem:[%s2349] sm:%s2358]
      %v2360 = vunpack.c.l.bf16 %v2359
      %v2361 = vunpack.c.h.bf16 %v2359
      %s2362 = scalar_lea.vmem [#allocation1], 304
      %2363 = vst [vmem:[%s2362] sm:%s53] %v2360
      %s2364 = scalar_lea.vmem %s50, 148
      %s2365 = sshrl.u32 %s53, 1
      %s2366 = sor.u32 %s53, %s2365
      %s2367 = sand.u32 %s2366, 85
      %s2368 = sshrl.u32 %s2367, 1
      %s2369 = sor.u32 %s2367, %s2368
      %s2370 = sand.u32 51, %s2369
      %s2371 = sshrl.u32 %s2370, 2
      %s2372 = sor.u32 %s2370, %s2371
      %s2373 = sand.u32 15, %s2372
      %v2374 = vld [vmem:[%s2364] sm:%s2373]
      %v2375 = vunpack.c.l.bf16 %v2374
      %v2376 = vunpack.c.h.bf16 %v2374
      %s2377 = scalar_lea.vmem [#allocation1], 296
      %2378 = vst [vmem:[%s2377] sm:%s53] %v2375
      %s2379 = scalar_lea.vmem %s50, 144
      %s2380 = sshrl.u32 %s53, 1
      %s2381 = sor.u32 %s53, %s2380
      %s2382 = sand.u32 %s2381, 85
      %s2383 = sshrl.u32 %s2382, 1
      %s2384 = sor.u32 %s2382, %s2383
      %s2385 = sand.u32 51, %s2384
      %s2386 = sshrl.u32 %s2385, 2
      %s2387 = sor.u32 %s2385, %s2386
      %s2388 = sand.u32 15, %s2387
      %v2389 = vld [vmem:[%s2379] sm:%s2388]
      %v2390 = vunpack.c.l.bf16 %v2389
      %v2391 = vunpack.c.h.bf16 %v2389
      %s2392 = scalar_lea.vmem [#allocation1], 288
      %2393 = vst [vmem:[%s2392] sm:%s53] %v2390
      %s2394 = scalar_lea.vmem %s50, 140
      %s2395 = sshrl.u32 %s53, 1
      %s2396 = sor.u32 %s53, %s2395
      %s2397 = sand.u32 %s2396, 85
      %s2398 = sshrl.u32 %s2397, 1
      %s2399 = sor.u32 %s2397, %s2398
      %s2400 = sand.u32 51, %s2399
      %s2401 = sshrl.u32 %s2400, 2
      %s2402 = sor.u32 %s2400, %s2401
      %s2403 = sand.u32 15, %s2402
      %v2404 = vld [vmem:[%s2394] sm:%s2403]
      %v2405 = vunpack.c.l.bf16 %v2404
      %v2406 = vunpack.c.h.bf16 %v2404
      %s2407 = scalar_lea.vmem [#allocation1], 280
      %2408 = vst [vmem:[%s2407] sm:%s53] %v2405
      %s2409 = scalar_lea.vmem %s50, 136
      %s2410 = sshrl.u32 %s53, 1
      %s2411 = sor.u32 %s53, %s2410
      %s2412 = sand.u32 %s2411, 85
      %s2413 = sshrl.u32 %s2412, 1
      %s2414 = sor.u32 %s2412, %s2413
      %s2415 = sand.u32 51, %s2414
      %s2416 = sshrl.u32 %s2415, 2
      %s2417 = sor.u32 %s2415, %s2416
      %s2418 = sand.u32 15, %s2417
      %v2419 = vld [vmem:[%s2409] sm:%s2418]
      %v2420 = vunpack.c.l.bf16 %v2419
      %v2421 = vunpack.c.h.bf16 %v2419
      %s2422 = scalar_lea.vmem [#allocation1], 272
      %2423 = vst [vmem:[%s2422] sm:%s53] %v2420
      %s2424 = scalar_lea.vmem %s50, 132
      %s2425 = sshrl.u32 %s53, 1
      %s2426 = sor.u32 %s53, %s2425
      %s2427 = sand.u32 %s2426, 85
      %s2428 = sshrl.u32 %s2427, 1
      %s2429 = sor.u32 %s2427, %s2428
      %s2430 = sand.u32 51, %s2429
      %s2431 = sshrl.u32 %s2430, 2
      %s2432 = sor.u32 %s2430, %s2431
      %s2433 = sand.u32 15, %s2432
      %v2434 = vld [vmem:[%s2424] sm:%s2433]
      %v2435 = vunpack.c.l.bf16 %v2434
      %v2436 = vunpack.c.h.bf16 %v2434
      %s2437 = scalar_lea.vmem [#allocation1], 264
      %2438 = vst [vmem:[%s2437] sm:%s53] %v2435
      %s2439 = scalar_lea.vmem %s50, 128
      %s2440 = sshrl.u32 %s53, 1
      %s2441 = sor.u32 %s53, %s2440
      %s2442 = sand.u32 %s2441, 85
      %s2443 = sshrl.u32 %s2442, 1
      %s2444 = sor.u32 %s2442, %s2443
      %s2445 = sand.u32 51, %s2444
      %s2446 = sshrl.u32 %s2445, 2
      %s2447 = sor.u32 %s2445, %s2446
      %s2448 = sand.u32 15, %s2447
      %v2449 = vld [vmem:[%s2439] sm:%s2448]
      %v2450 = vunpack.c.l.bf16 %v2449
      %v2451 = vunpack.c.h.bf16 %v2449
      %s2452 = scalar_lea.vmem [#allocation1], 256
      %2453 = vst [vmem:[%s2452] sm:%s53] %v2450
      %s2454 = scalar_lea.vmem %s50, 124
      %s2455 = sshrl.u32 %s53, 1
      %s2456 = sor.u32 %s53, %s2455
      %s2457 = sand.u32 %s2456, 85
      %s2458 = sshrl.u32 %s2457, 1
      %s2459 = sor.u32 %s2457, %s2458
      %s2460 = sand.u32 51, %s2459
      %s2461 = sshrl.u32 %s2460, 2
      %s2462 = sor.u32 %s2460, %s2461
      %s2463 = sand.u32 15, %s2462
      %v2464 = vld [vmem:[%s2454] sm:%s2463]
      %v2465 = vunpack.c.l.bf16 %v2464
      %v2466 = vunpack.c.h.bf16 %v2464
      %s2467 = scalar_lea.vmem [#allocation1], 248
      %2468 = vst [vmem:[%s2467] sm:%s53] %v2465
      %s2469 = scalar_lea.vmem %s50, 120
      %s2470 = sshrl.u32 %s53, 1
      %s2471 = sor.u32 %s53, %s2470
      %s2472 = sand.u32 %s2471, 85
      %s2473 = sshrl.u32 %s2472, 1
      %s2474 = sor.u32 %s2472, %s2473
      %s2475 = sand.u32 51, %s2474
      %s2476 = sshrl.u32 %s2475, 2
      %s2477 = sor.u32 %s2475, %s2476
      %s2478 = sand.u32 15, %s2477
      %v2479 = vld [vmem:[%s2469] sm:%s2478]
      %v2480 = vunpack.c.l.bf16 %v2479
      %v2481 = vunpack.c.h.bf16 %v2479
      %s2482 = scalar_lea.vmem [#allocation1], 240
      %2483 = vst [vmem:[%s2482] sm:%s53] %v2480
      %s2484 = scalar_lea.vmem %s50, 116
      %s2485 = sshrl.u32 %s53, 1
      %s2486 = sor.u32 %s53, %s2485
      %s2487 = sand.u32 %s2486, 85
      %s2488 = sshrl.u32 %s2487, 1
      %s2489 = sor.u32 %s2487, %s2488
      %s2490 = sand.u32 51, %s2489
      %s2491 = sshrl.u32 %s2490, 2
      %s2492 = sor.u32 %s2490, %s2491
      %s2493 = sand.u32 15, %s2492
      %v2494 = vld [vmem:[%s2484] sm:%s2493]
      %v2495 = vunpack.c.l.bf16 %v2494
      %v2496 = vunpack.c.h.bf16 %v2494
      %s2497 = scalar_lea.vmem [#allocation1], 232
      %2498 = vst [vmem:[%s2497] sm:%s53] %v2495
      %s2499 = scalar_lea.vmem %s50, 112
      %s2500 = sshrl.u32 %s53, 1
      %s2501 = sor.u32 %s53, %s2500
      %s2502 = sand.u32 %s2501, 85
      %s2503 = sshrl.u32 %s2502, 1
      %s2504 = sor.u32 %s2502, %s2503
      %s2505 = sand.u32 51, %s2504
      %s2506 = sshrl.u32 %s2505, 2
      %s2507 = sor.u32 %s2505, %s2506
      %s2508 = sand.u32 15, %s2507
      %v2509 = vld [vmem:[%s2499] sm:%s2508]
      %v2510 = vunpack.c.l.bf16 %v2509
      %v2511 = vunpack.c.h.bf16 %v2509
      %s2512 = scalar_lea.vmem [#allocation1], 224
      %2513 = vst [vmem:[%s2512] sm:%s53] %v2510
      %s2514 = scalar_lea.vmem %s50, 108
      %s2515 = sshrl.u32 %s53, 1
      %s2516 = sor.u32 %s53, %s2515
      %s2517 = sand.u32 %s2516, 85
      %s2518 = sshrl.u32 %s2517, 1
      %s2519 = sor.u32 %s2517, %s2518
      %s2520 = sand.u32 51, %s2519
      %s2521 = sshrl.u32 %s2520, 2
      %s2522 = sor.u32 %s2520, %s2521
      %s2523 = sand.u32 15, %s2522
      %v2524 = vld [vmem:[%s2514] sm:%s2523]
      %v2525 = vunpack.c.l.bf16 %v2524
      %v2526 = vunpack.c.h.bf16 %v2524
      %s2527 = scalar_lea.vmem [#allocation1], 216
      %2528 = vst [vmem:[%s2527] sm:%s53] %v2525
      %s2529 = scalar_lea.vmem %s50, 104
      %s2530 = sshrl.u32 %s53, 1
      %s2531 = sor.u32 %s53, %s2530
      %s2532 = sand.u32 %s2531, 85
      %s2533 = sshrl.u32 %s2532, 1
      %s2534 = sor.u32 %s2532, %s2533
      %s2535 = sand.u32 51, %s2534
      %s2536 = sshrl.u32 %s2535, 2
      %s2537 = sor.u32 %s2535, %s2536
      %s2538 = sand.u32 15, %s2537
      %v2539 = vld [vmem:[%s2529] sm:%s2538]
      %v2540 = vunpack.c.l.bf16 %v2539
      %v2541 = vunpack.c.h.bf16 %v2539
      %s2542 = scalar_lea.vmem [#allocation1], 208
      %2543 = vst [vmem:[%s2542] sm:%s53] %v2540
      %s2544 = scalar_lea.vmem %s50, 100
      %s2545 = sshrl.u32 %s53, 1
      %s2546 = sor.u32 %s53, %s2545
      %s2547 = sand.u32 %s2546, 85
      %s2548 = sshrl.u32 %s2547, 1
      %s2549 = sor.u32 %s2547, %s2548
      %s2550 = sand.u32 51, %s2549
      %s2551 = sshrl.u32 %s2550, 2
      %s2552 = sor.u32 %s2550, %s2551
      %s2553 = sand.u32 15, %s2552
      %v2554 = vld [vmem:[%s2544] sm:%s2553]
      %v2555 = vunpack.c.l.bf16 %v2554
      %v2556 = vunpack.c.h.bf16 %v2554
      %s2557 = scalar_lea.vmem [#allocation1], 200
      %2558 = vst [vmem:[%s2557] sm:%s53] %v2555
      %s2559 = scalar_lea.vmem %s50, 96
      %s2560 = sshrl.u32 %s53, 1
      %s2561 = sor.u32 %s53, %s2560
      %s2562 = sand.u32 %s2561, 85
      %s2563 = sshrl.u32 %s2562, 1
      %s2564 = sor.u32 %s2562, %s2563
      %s2565 = sand.u32 51, %s2564
      %s2566 = sshrl.u32 %s2565, 2
      %s2567 = sor.u32 %s2565, %s2566
      %s2568 = sand.u32 15, %s2567
      %v2569 = vld [vmem:[%s2559] sm:%s2568]
      %v2570 = vunpack.c.l.bf16 %v2569
      %v2571 = vunpack.c.h.bf16 %v2569
      %s2572 = scalar_lea.vmem [#allocation1], 192
      %2573 = vst [vmem:[%s2572] sm:%s53] %v2570
      %s2574 = scalar_lea.vmem %s50, 92
      %s2575 = sshrl.u32 %s53, 1
      %s2576 = sor.u32 %s53, %s2575
      %s2577 = sand.u32 %s2576, 85
      %s2578 = sshrl.u32 %s2577, 1
      %s2579 = sor.u32 %s2577, %s2578
      %s2580 = sand.u32 51, %s2579
      %s2581 = sshrl.u32 %s2580, 2
      %s2582 = sor.u32 %s2580, %s2581
      %s2583 = sand.u32 15, %s2582
      %v2584 = vld [vmem:[%s2574] sm:%s2583]
      %v2585 = vunpack.c.l.bf16 %v2584
      %v2586 = vunpack.c.h.bf16 %v2584
      %s2587 = scalar_lea.vmem [#allocation1], 184
      %2588 = vst [vmem:[%s2587] sm:%s53] %v2585
      %s2589 = scalar_lea.vmem %s50, 88
      %s2590 = sshrl.u32 %s53, 1
      %s2591 = sor.u32 %s53, %s2590
      %s2592 = sand.u32 %s2591, 85
      %s2593 = sshrl.u32 %s2592, 1
      %s2594 = sor.u32 %s2592, %s2593
      %s2595 = sand.u32 51, %s2594
      %s2596 = sshrl.u32 %s2595, 2
      %s2597 = sor.u32 %s2595, %s2596
      %s2598 = sand.u32 15, %s2597
      %v2599 = vld [vmem:[%s2589] sm:%s2598]
      %v2600 = vunpack.c.l.bf16 %v2599
      %v2601 = vunpack.c.h.bf16 %v2599
      %s2602 = scalar_lea.vmem [#allocation1], 176
      %2603 = vst [vmem:[%s2602] sm:%s53] %v2600
      %s2604 = scalar_lea.vmem %s50, 84
      %s2605 = sshrl.u32 %s53, 1
      %s2606 = sor.u32 %s53, %s2605
      %s2607 = sand.u32 %s2606, 85
      %s2608 = sshrl.u32 %s2607, 1
      %s2609 = sor.u32 %s2607, %s2608
      %s2610 = sand.u32 51, %s2609
      %s2611 = sshrl.u32 %s2610, 2
      %s2612 = sor.u32 %s2610, %s2611
      %s2613 = sand.u32 15, %s2612
      %v2614 = vld [vmem:[%s2604] sm:%s2613]
      %v2615 = vunpack.c.l.bf16 %v2614
      %v2616 = vunpack.c.h.bf16 %v2614
      %s2617 = scalar_lea.vmem [#allocation1], 168
      %2618 = vst [vmem:[%s2617] sm:%s53] %v2615
      %s2619 = scalar_lea.vmem %s50, 80
      %s2620 = sshrl.u32 %s53, 1
      %s2621 = sor.u32 %s53, %s2620
      %s2622 = sand.u32 %s2621, 85
      %s2623 = sshrl.u32 %s2622, 1
      %s2624 = sor.u32 %s2622, %s2623
      %s2625 = sand.u32 51, %s2624
      %s2626 = sshrl.u32 %s2625, 2
      %s2627 = sor.u32 %s2625, %s2626
      %s2628 = sand.u32 15, %s2627
      %v2629 = vld [vmem:[%s2619] sm:%s2628]
      %v2630 = vunpack.c.l.bf16 %v2629
      %v2631 = vunpack.c.h.bf16 %v2629
      %s2632 = scalar_lea.vmem [#allocation1], 160
      %2633 = vst [vmem:[%s2632] sm:%s53] %v2630
      %s2634 = scalar_lea.vmem %s50, 76
      %s2635 = sshrl.u32 %s53, 1
      %s2636 = sor.u32 %s53, %s2635
      %s2637 = sand.u32 %s2636, 85
      %s2638 = sshrl.u32 %s2637, 1
      %s2639 = sor.u32 %s2637, %s2638
      %s2640 = sand.u32 51, %s2639
      %s2641 = sshrl.u32 %s2640, 2
      %s2642 = sor.u32 %s2640, %s2641
      %s2643 = sand.u32 15, %s2642
      %v2644 = vld [vmem:[%s2634] sm:%s2643]
      %v2645 = vunpack.c.l.bf16 %v2644
      %v2646 = vunpack.c.h.bf16 %v2644
      %s2647 = scalar_lea.vmem [#allocation1], 152
      %2648 = vst [vmem:[%s2647] sm:%s53] %v2645
      %s2649 = scalar_lea.vmem %s50, 72
      %s2650 = sshrl.u32 %s53, 1
      %s2651 = sor.u32 %s53, %s2650
      %s2652 = sand.u32 %s2651, 85
      %s2653 = sshrl.u32 %s2652, 1
      %s2654 = sor.u32 %s2652, %s2653
      %s2655 = sand.u32 51, %s2654
      %s2656 = sshrl.u32 %s2655, 2
      %s2657 = sor.u32 %s2655, %s2656
      %s2658 = sand.u32 15, %s2657
      %v2659 = vld [vmem:[%s2649] sm:%s2658]
      %v2660 = vunpack.c.l.bf16 %v2659
      %v2661 = vunpack.c.h.bf16 %v2659
      %s2662 = scalar_lea.vmem [#allocation1], 144
      %2663 = vst [vmem:[%s2662] sm:%s53] %v2660
      %s2664 = scalar_lea.vmem %s50, 68
      %s2665 = sshrl.u32 %s53, 1
      %s2666 = sor.u32 %s53, %s2665
      %s2667 = sand.u32 %s2666, 85
      %s2668 = sshrl.u32 %s2667, 1
      %s2669 = sor.u32 %s2667, %s2668
      %s2670 = sand.u32 51, %s2669
      %s2671 = sshrl.u32 %s2670, 2
      %s2672 = sor.u32 %s2670, %s2671
      %s2673 = sand.u32 15, %s2672
      %v2674 = vld [vmem:[%s2664] sm:%s2673]
      %v2675 = vunpack.c.l.bf16 %v2674
      %v2676 = vunpack.c.h.bf16 %v2674
      %s2677 = scalar_lea.vmem [#allocation1], 136
      %2678 = vst [vmem:[%s2677] sm:%s53] %v2675
      %s2679 = scalar_lea.vmem %s50, 64
      %s2680 = sshrl.u32 %s53, 1
      %s2681 = sor.u32 %s53, %s2680
      %s2682 = sand.u32 %s2681, 85
      %s2683 = sshrl.u32 %s2682, 1
      %s2684 = sor.u32 %s2682, %s2683
      %s2685 = sand.u32 51, %s2684
      %s2686 = sshrl.u32 %s2685, 2
      %s2687 = sor.u32 %s2685, %s2686
      %s2688 = sand.u32 15, %s2687
      %v2689 = vld [vmem:[%s2679] sm:%s2688]
      %v2690 = vunpack.c.l.bf16 %v2689
      %v2691 = vunpack.c.h.bf16 %v2689
      %s2692 = scalar_lea.vmem [#allocation1], 128
      %2693 = vst [vmem:[%s2692] sm:%s53] %v2690
      %s2694 = scalar_lea.vmem %s50, 60
      %s2695 = sshrl.u32 %s53, 1
      %s2696 = sor.u32 %s53, %s2695
      %s2697 = sand.u32 %s2696, 85
      %s2698 = sshrl.u32 %s2697, 1
      %s2699 = sor.u32 %s2697, %s2698
      %s2700 = sand.u32 51, %s2699
      %s2701 = sshrl.u32 %s2700, 2
      %s2702 = sor.u32 %s2700, %s2701
      %s2703 = sand.u32 15, %s2702
      %v2704 = vld [vmem:[%s2694] sm:%s2703]
      %v2705 = vunpack.c.l.bf16 %v2704
      %v2706 = vunpack.c.h.bf16 %v2704
      %s2707 = scalar_lea.vmem [#allocation1], 120
      %2708 = vst [vmem:[%s2707] sm:%s53] %v2705
      %s2709 = scalar_lea.vmem %s50, 56
      %s2710 = sshrl.u32 %s53, 1
      %s2711 = sor.u32 %s53, %s2710
      %s2712 = sand.u32 %s2711, 85
      %s2713 = sshrl.u32 %s2712, 1
      %s2714 = sor.u32 %s2712, %s2713
      %s2715 = sand.u32 51, %s2714
      %s2716 = sshrl.u32 %s2715, 2
      %s2717 = sor.u32 %s2715, %s2716
      %s2718 = sand.u32 15, %s2717
      %v2719 = vld [vmem:[%s2709] sm:%s2718]
      %v2720 = vunpack.c.l.bf16 %v2719
      %v2721 = vunpack.c.h.bf16 %v2719
      %s2722 = scalar_lea.vmem [#allocation1], 112
      %2723 = vst [vmem:[%s2722] sm:%s53] %v2720
      %s2724 = scalar_lea.vmem %s50, 52
      %s2725 = sshrl.u32 %s53, 1
      %s2726 = sor.u32 %s53, %s2725
      %s2727 = sand.u32 %s2726, 85
      %s2728 = sshrl.u32 %s2727, 1
      %s2729 = sor.u32 %s2727, %s2728
      %s2730 = sand.u32 51, %s2729
      %s2731 = sshrl.u32 %s2730, 2
      %s2732 = sor.u32 %s2730, %s2731
      %s2733 = sand.u32 15, %s2732
      %v2734 = vld [vmem:[%s2724] sm:%s2733]
      %v2735 = vunpack.c.l.bf16 %v2734
      %v2736 = vunpack.c.h.bf16 %v2734
      %s2737 = scalar_lea.vmem [#allocation1], 104
      %2738 = vst [vmem:[%s2737] sm:%s53] %v2735
      %s2739 = scalar_lea.vmem %s50, 48
      %s2740 = sshrl.u32 %s53, 1
      %s2741 = sor.u32 %s53, %s2740
      %s2742 = sand.u32 %s2741, 85
      %s2743 = sshrl.u32 %s2742, 1
      %s2744 = sor.u32 %s2742, %s2743
      %s2745 = sand.u32 51, %s2744
      %s2746 = sshrl.u32 %s2745, 2
      %s2747 = sor.u32 %s2745, %s2746
      %s2748 = sand.u32 15, %s2747
      %v2749 = vld [vmem:[%s2739] sm:%s2748]
      %v2750 = vunpack.c.l.bf16 %v2749
      %v2751 = vunpack.c.h.bf16 %v2749
      %s2752 = scalar_lea.vmem [#allocation1], 96
      %2753 = vst [vmem:[%s2752] sm:%s53] %v2750
      %s2754 = scalar_lea.vmem %s50, 44
      %s2755 = sshrl.u32 %s53, 1
      %s2756 = sor.u32 %s53, %s2755
      %s2757 = sand.u32 %s2756, 85
      %s2758 = sshrl.u32 %s2757, 1
      %s2759 = sor.u32 %s2757, %s2758
      %s2760 = sand.u32 51, %s2759
      %s2761 = sshrl.u32 %s2760, 2
      %s2762 = sor.u32 %s2760, %s2761
      %s2763 = sand.u32 15, %s2762
      %v2764 = vld [vmem:[%s2754] sm:%s2763]
      %v2765 = vunpack.c.l.bf16 %v2764
      %v2766 = vunpack.c.h.bf16 %v2764
      %s2767 = scalar_lea.vmem [#allocation1], 88
      %2768 = vst [vmem:[%s2767] sm:%s53] %v2765
      %s2769 = scalar_lea.vmem %s50, 40
      %s2770 = sshrl.u32 %s53, 1
      %s2771 = sor.u32 %s53, %s2770
      %s2772 = sand.u32 %s2771, 85
      %s2773 = sshrl.u32 %s2772, 1
      %s2774 = sor.u32 %s2772, %s2773
      %s2775 = sand.u32 51, %s2774
      %s2776 = sshrl.u32 %s2775, 2
      %s2777 = sor.u32 %s2775, %s2776
      %s2778 = sand.u32 15, %s2777
      %v2779 = vld [vmem:[%s2769] sm:%s2778]
      %v2780 = vunpack.c.l.bf16 %v2779
      %v2781 = vunpack.c.h.bf16 %v2779
      %s2782 = scalar_lea.vmem [#allocation1], 80
      %2783 = vst [vmem:[%s2782] sm:%s53] %v2780
      %s2784 = scalar_lea.vmem %s50, 36
      %s2785 = sshrl.u32 %s53, 1
      %s2786 = sor.u32 %s53, %s2785
      %s2787 = sand.u32 %s2786, 85
      %s2788 = sshrl.u32 %s2787, 1
      %s2789 = sor.u32 %s2787, %s2788
      %s2790 = sand.u32 51, %s2789
      %s2791 = sshrl.u32 %s2790, 2
      %s2792 = sor.u32 %s2790, %s2791
      %s2793 = sand.u32 15, %s2792
      %v2794 = vld [vmem:[%s2784] sm:%s2793]
      %v2795 = vunpack.c.l.bf16 %v2794
      %v2796 = vunpack.c.h.bf16 %v2794
      %s2797 = scalar_lea.vmem [#allocation1], 72
      %2798 = vst [vmem:[%s2797] sm:%s53] %v2795
      %s2799 = scalar_lea.vmem %s50, 32
      %s2800 = sshrl.u32 %s53, 1
      %s2801 = sor.u32 %s53, %s2800
      %s2802 = sand.u32 %s2801, 85
      %s2803 = sshrl.u32 %s2802, 1
      %s2804 = sor.u32 %s2802, %s2803
      %s2805 = sand.u32 51, %s2804
      %s2806 = sshrl.u32 %s2805, 2
      %s2807 = sor.u32 %s2805, %s2806
      %s2808 = sand.u32 15, %s2807
      %v2809 = vld [vmem:[%s2799] sm:%s2808]
      %v2810 = vunpack.c.l.bf16 %v2809
      %v2811 = vunpack.c.h.bf16 %v2809
      %s2812 = scalar_lea.vmem [#allocation1], 64
      %2813 = vst [vmem:[%s2812] sm:%s53] %v2810
      %s2814 = scalar_lea.vmem %s50, 28
      %s2815 = sshrl.u32 %s53, 1
      %s2816 = sor.u32 %s53, %s2815
      %s2817 = sand.u32 %s2816, 85
      %s2818 = sshrl.u32 %s2817, 1
      %s2819 = sor.u32 %s2817, %s2818
      %s2820 = sand.u32 51, %s2819
      %s2821 = sshrl.u32 %s2820, 2
      %s2822 = sor.u32 %s2820, %s2821
      %s2823 = sand.u32 15, %s2822
      %v2824 = vld [vmem:[%s2814] sm:%s2823]
      %v2825 = vunpack.c.l.bf16 %v2824
      %v2826 = vunpack.c.h.bf16 %v2824
      %s2827 = scalar_lea.vmem [#allocation1], 56
      %2828 = vst [vmem:[%s2827] sm:%s53] %v2825
      %s2829 = scalar_lea.vmem %s50, 24
      %s2830 = sshrl.u32 %s53, 1
      %s2831 = sor.u32 %s53, %s2830
      %s2832 = sand.u32 %s2831, 85
      %s2833 = sshrl.u32 %s2832, 1
      %s2834 = sor.u32 %s2832, %s2833
      %s2835 = sand.u32 51, %s2834
      %s2836 = sshrl.u32 %s2835, 2
      %s2837 = sor.u32 %s2835, %s2836
      %s2838 = sand.u32 15, %s2837
      %v2839 = vld [vmem:[%s2829] sm:%s2838]
      %v2840 = vunpack.c.l.bf16 %v2839
      %v2841 = vunpack.c.h.bf16 %v2839
      %s2842 = scalar_lea.vmem [#allocation1], 48
      %2843 = vst [vmem:[%s2842] sm:%s53] %v2840
      %s2844 = scalar_lea.vmem %s50, 20
      %s2845 = sshrl.u32 %s53, 1
      %s2846 = sor.u32 %s53, %s2845
      %s2847 = sand.u32 %s2846, 85
      %s2848 = sshrl.u32 %s2847, 1
      %s2849 = sor.u32 %s2847, %s2848
      %s2850 = sand.u32 51, %s2849
      %s2851 = sshrl.u32 %s2850, 2
      %s2852 = sor.u32 %s2850, %s2851
      %s2853 = sand.u32 15, %s2852
      %v2854 = vld [vmem:[%s2844] sm:%s2853]
      %v2855 = vunpack.c.l.bf16 %v2854
      %v2856 = vunpack.c.h.bf16 %v2854
      %s2857 = scalar_lea.vmem [#allocation1], 40
      %2858 = vst [vmem:[%s2857] sm:%s53] %v2855
      %s2859 = scalar_lea.vmem %s50, 16
      %s2860 = sshrl.u32 %s53, 1
      %s2861 = sor.u32 %s53, %s2860
      %s2862 = sand.u32 %s2861, 85
      %s2863 = sshrl.u32 %s2862, 1
      %s2864 = sor.u32 %s2862, %s2863
      %s2865 = sand.u32 51, %s2864
      %s2866 = sshrl.u32 %s2865, 2
      %s2867 = sor.u32 %s2865, %s2866
      %s2868 = sand.u32 15, %s2867
      %v2869 = vld [vmem:[%s2859] sm:%s2868]
      %v2870 = vunpack.c.l.bf16 %v2869
      %v2871 = vunpack.c.h.bf16 %v2869
      %s2872 = scalar_lea.vmem [#allocation1], 32
      %2873 = vst [vmem:[%s2872] sm:%s53] %v2870
      %s2874 = scalar_lea.vmem %s50, 12
      %s2875 = sshrl.u32 %s53, 1
      %s2876 = sor.u32 %s53, %s2875
      %s2877 = sand.u32 %s2876, 85
      %s2878 = sshrl.u32 %s2877, 1
      %s2879 = sor.u32 %s2877, %s2878
      %s2880 = sand.u32 51, %s2879
      %s2881 = sshrl.u32 %s2880, 2
      %s2882 = sor.u32 %s2880, %s2881
      %s2883 = sand.u32 15, %s2882
      %v2884 = vld [vmem:[%s2874] sm:%s2883]
      %v2885 = vunpack.c.l.bf16 %v2884
      %v2886 = vunpack.c.h.bf16 %v2884
      %s2887 = scalar_lea.vmem [#allocation1], 24
      %2888 = vst [vmem:[%s2887] sm:%s53] %v2885
      %s2889 = scalar_lea.vmem %s50, 8
      %s2890 = sshrl.u32 %s53, 1
      %s2891 = sor.u32 %s53, %s2890
      %s2892 = sand.u32 %s2891, 85
      %s2893 = sshrl.u32 %s2892, 1
      %s2894 = sor.u32 %s2892, %s2893
      %s2895 = sand.u32 51, %s2894
      %s2896 = sshrl.u32 %s2895, 2
      %s2897 = sor.u32 %s2895, %s2896
      %s2898 = sand.u32 15, %s2897
      %v2899 = vld [vmem:[%s2889] sm:%s2898]
      %v2900 = vunpack.c.l.bf16 %v2899
      %v2901 = vunpack.c.h.bf16 %v2899
      %s2902 = scalar_lea.vmem [#allocation1], 16
      %2903 = vst [vmem:[%s2902] sm:%s53] %v2900
      %s2904 = scalar_lea.vmem %s50, 4
      %s2905 = sshrl.u32 %s53, 1
      %s2906 = sor.u32 %s53, %s2905
      %s2907 = sand.u32 %s2906, 85
      %s2908 = sshrl.u32 %s2907, 1
      %s2909 = sor.u32 %s2907, %s2908
      %s2910 = sand.u32 51, %s2909
      %s2911 = sshrl.u32 %s2910, 2
      %s2912 = sor.u32 %s2910, %s2911
      %s2913 = sand.u32 15, %s2912
      %v2914 = vld [vmem:[%s2904] sm:%s2913]
      %v2915 = vunpack.c.l.bf16 %v2914
      %v2916 = vunpack.c.h.bf16 %v2914
      %s2917 = scalar_lea.vmem [#allocation1], 8
      %2918 = vst [vmem:[%s2917] sm:%s53] %v2915
      %s2919 = sshrl.u32 %s53, 1
      %s2920 = sor.u32 %s53, %s2919
      %s2921 = sand.u32 %s2920, 85
      %s2922 = sshrl.u32 %s2921, 1
      %s2923 = sor.u32 %s2921, %s2922
      %s2924 = sand.u32 51, %s2923
      %s2925 = sshrl.u32 %s2924, 2
      %s2926 = sor.u32 %s2924, %s2925
      %s2927 = sand.u32 15, %s2926
      %v2928 = vld [vmem:[%s50] sm:%s2927]
      %v2929 = vunpack.c.l.bf16 %v2928
      %v2930 = vunpack.c.h.bf16 %v2928
      %2931 = vst [vmem:[#allocation1] sm:%s53] %v2929
      %p2932 = scmp.lt.s32.totalorder %s8, 1
      %p2933 = scmp.eq.s32.totalorder %s8, 1
      %v2934 = vld [vmem:[#allocation1] sm:$0xff]
      %vm2935 = vcmask 531456
      %2936 = vst.msk [vmem:[#allocation0] sm:$0x7] %vm2935, %v2934
      %s2937 = scalar_lea.vmem [#allocation0], 5
      %2938 = vst.msk [vmem:[%s2937] sm:$0x38] %vm2935, %v2934
      %s2939 = scalar_lea.vmem [#allocation0], 10
      %2940 = vst.msk [vmem:[%s2939] sm:$0xc0] %vm2935, %v2934
      %s2941 = scalar_lea.vmem [#allocation1], 8
      %v2942 = vld [vmem:[%s2941] sm:$0xff]
      %vm2943 = vcmask 531456
      %s2944 = scalar_lea.vmem [#allocation0], 18
      %2945 = vst.msk [vmem:[%s2944] ss:$6 sm:$0x3] %vm2943, %v2942
      %s2946 = scalar_lea.vmem [#allocation0], 23
      %2947 = vst.msk [vmem:[%s2946] sm:$0xc] %vm2943, %v2942
      %s2948 = scalar_lea.vmem [#allocation0], 28
      %2949 = vst.msk [vmem:[%s2948] sm:$0x70] %vm2943, %v2942
      %s2950 = scalar_lea.vmem [#allocation0], 33
      %2951 = vst.msk [vmem:[%s2950] sm:$0x80] %vm2943, %v2942
      %s2952 = scalar_lea.vmem [#allocation1], 16
      %v2953 = vld [vmem:[%s2952] sm:$0xff]
      %vm2954 = vcmask 531456
      %s2955 = scalar_lea.vmem [#allocation0], 41
      %2956 = vst.msk [vmem:[%s2955] sm:$0x3] %vm2954, %v2953
      %s2957 = scalar_lea.vmem [#allocation0], 46
      %2958 = vst.msk [vmem:[%s2957] sm:$0x1c] %vm2954, %v2953
      %s2959 = scalar_lea.vmem [#allocation0], 51
      %2960 = vst.msk [vmem:[%s2959] sm:$0xe0] %vm2954, %v2953
      %s2961 = scalar_lea.vmem [#allocation1], 24
      %v2962 = vld [vmem:[%s2961] sm:$0xff]
      %vm2963 = vcmask 531456
      %s2964 = scalar_lea.vmem [#allocation0], 64
      %2965 = vst.msk [vmem:[%s2964] sm:$0x7] %vm2963, %v2962
      %s2966 = scalar_lea.vmem [#allocation0], 69
      %2967 = vst.msk [vmem:[%s2966] sm:$0x38] %vm2963, %v2962
      %s2968 = scalar_lea.vmem [#allocation0], 74
      %2969 = vst.msk [vmem:[%s2968] sm:$0xc0] %vm2963, %v2962
      %s2970 = scalar_lea.vmem [#allocation1], 32
      %v2971 = vld [vmem:[%s2970] sm:$0xff]
      %vm2972 = vcmask 531456
      %s2973 = scalar_lea.vmem [#allocation0], 82
      %2974 = vst.msk [vmem:[%s2973] ss:$6 sm:$0x3] %vm2972, %v2971
      %s2975 = scalar_lea.vmem [#allocation0], 87
      %2976 = vst.msk [vmem:[%s2975] sm:$0xc] %vm2972, %v2971
      %s2977 = scalar_lea.vmem [#allocation0], 92
      %2978 = vst.msk [vmem:[%s2977] sm:$0x70] %vm2972, %v2971
      %s2979 = scalar_lea.vmem [#allocation0], 97
      %2980 = vst.msk [vmem:[%s2979] sm:$0x80] %vm2972, %v2971
      %s2981 = scalar_lea.vmem [#allocation1], 40
      %v2982 = vld [vmem:[%s2981] sm:$0xff]
      %vm2983 = vcmask 531456
      %s2984 = scalar_lea.vmem [#allocation0], 105
      %2985 = vst.msk [vmem:[%s2984] sm:$0x3] %vm2983, %v2982
      %s2986 = scalar_lea.vmem [#allocation0], 110
      %2987 = vst.msk [vmem:[%s2986] sm:$0x1c] %vm2983, %v2982
      %s2988 = scalar_lea.vmem [#allocation0], 115
      %2989 = vst.msk [vmem:[%s2988] sm:$0xe0] %vm2983, %v2982
      %s2990 = scalar_lea.vmem [#allocation1], 48
      %v2991 = vld [vmem:[%s2990] sm:$0xff]
      %vm2992 = vcmask 531456
      %s2993 = scalar_lea.vmem [#allocation0], 128
      %2994 = vst.msk [vmem:[%s2993] sm:$0x7] %vm2992, %v2991
      %s2995 = scalar_lea.vmem [#allocation0], 133
      %2996 = vst.msk [vmem:[%s2995] sm:$0x38] %vm2992, %v2991
      %s2997 = scalar_lea.vmem [#allocation0], 138
      %2998 = vst.msk [vmem:[%s2997] sm:$0xc0] %vm2992, %v2991
      %s2999 = scalar_lea.vmem [#allocation1], 56
      %v3000 = vld [vmem:[%s2999] sm:$0xff]
      %vm3001 = vcmask 531456
      %s3002 = scalar_lea.vmem [#allocation0], 146
      %3003 = vst.msk [vmem:[%s3002] ss:$6 sm:$0x3] %vm3001, %v3000
      %s3004 = scalar_lea.vmem [#allocation0], 151
      %3005 = vst.msk [vmem:[%s3004] sm:$0xc] %vm3001, %v3000
      %s3006 = scalar_lea.vmem [#allocation0], 156
      %3007 = vst.msk [vmem:[%s3006] sm:$0x70] %vm3001, %v3000
      %s3008 = scalar_lea.vmem [#allocation0], 161
      %3009 = vst.msk [vmem:[%s3008] sm:$0x80] %vm3001, %v3000
      %s3010 = scalar_lea.vmem [#allocation1], 64
      %v3011 = vld [vmem:[%s3010] sm:$0xff]
      %vm3012 = vcmask 531456
      %s3013 = scalar_lea.vmem [#allocation0], 169
      %3014 = vst.msk [vmem:[%s3013] sm:$0x3] %vm3012, %v3011
      %s3015 = scalar_lea.vmem [#allocation0], 174
      %3016 = vst.msk [vmem:[%s3015] sm:$0x1c] %vm3012, %v3011
      %s3017 = scalar_lea.vmem [#allocation0], 179
      %3018 = vst.msk [vmem:[%s3017] sm:$0xe0] %vm3012, %v3011
      %s3019 = scalar_lea.vmem [#allocation1], 72
      %v3020 = vld [vmem:[%s3019] sm:$0xff]
      %vm3021 = vcmask 531456
      %s3022 = scalar_lea.vmem [#allocation0], 192
      %3023 = vst.msk [vmem:[%s3022] sm:$0x7] %vm3021, %v3020
      %s3024 = scalar_lea.vmem [#allocation0], 197
      %3025 = vst.msk [vmem:[%s3024] sm:$0x38] %vm3021, %v3020
      %s3026 = scalar_lea.vmem [#allocation0], 202
      %3027 = vst.msk [vmem:[%s3026] sm:$0xc0] %vm3021, %v3020
      %s3028 = scalar_lea.vmem [#allocation1], 80
      %v3029 = vld [vmem:[%s3028] sm:$0xff]
      %vm3030 = vcmask 531456
      %s3031 = scalar_lea.vmem [#allocation0], 210
      %3032 = vst.msk [vmem:[%s3031] ss:$6 sm:$0x3] %vm3030, %v3029
      %s3033 = scalar_lea.vmem [#allocation0], 215
      %3034 = vst.msk [vmem:[%s3033] sm:$0xc] %vm3030, %v3029
      %s3035 = scalar_lea.vmem [#allocation0], 220
      %3036 = vst.msk [vmem:[%s3035] sm:$0x70] %vm3030, %v3029
      %s3037 = scalar_lea.vmem [#allocation0], 225
      %3038 = vst.msk [vmem:[%s3037] sm:$0x80] %vm3030, %v3029
      %s3039 = scalar_lea.vmem [#allocation1], 88
      %v3040 = vld [vmem:[%s3039] sm:$0xff]
      %vm3041 = vcmask 531456
      %s3042 = scalar_lea.vmem [#allocation0], 233
      %3043 = vst.msk [vmem:[%s3042] sm:$0x3] %vm3041, %v3040
      %s3044 = scalar_lea.vmem [#allocation0], 238
      %3045 = vst.msk [vmem:[%s3044] sm:$0x1c] %vm3041, %v3040
      %s3046 = scalar_lea.vmem [#allocation0], 243
      %3047 = vst.msk [vmem:[%s3046] sm:$0xe0] %vm3041, %v3040
      %s3048 = scalar_lea.vmem [#allocation1], 96
      %v3049 = vld [vmem:[%s3048] sm:$0xff]
      %vm3050 = vcmask 531456
      %s3051 = scalar_lea.vmem [#allocation0], 256
      %3052 = vst.msk [vmem:[%s3051] sm:$0x7] %vm3050, %v3049
      %s3053 = scalar_lea.vmem [#allocation0], 261
      %3054 = vst.msk [vmem:[%s3053] sm:$0x38] %vm3050, %v3049
      %s3055 = scalar_lea.vmem [#allocation0], 266
      %3056 = vst.msk [vmem:[%s3055] sm:$0xc0] %vm3050, %v3049
      %s3057 = scalar_lea.vmem [#allocation1], 104
      %v3058 = vld [vmem:[%s3057] sm:$0xff]
      %vm3059 = vcmask 531456
      %s3060 = scalar_lea.vmem [#allocation0], 274
      %3061 = vst.msk [vmem:[%s3060] ss:$6 sm:$0x3] %vm3059, %v3058
      %s3062 = scalar_lea.vmem [#allocation0], 279
      %3063 = vst.msk [vmem:[%s3062] sm:$0xc] %vm3059, %v3058
      %s3064 = scalar_lea.vmem [#allocation0], 284
      %3065 = vst.msk [vmem:[%s3064] sm:$0x70] %vm3059, %v3058
      %s3066 = scalar_lea.vmem [#allocation0], 289
      %3067 = vst.msk [vmem:[%s3066] sm:$0x80] %vm3059, %v3058
      %s3068 = scalar_lea.vmem [#allocation1], 112
      %v3069 = vld [vmem:[%s3068] sm:$0xff]
      %vm3070 = vcmask 531456
      %s3071 = scalar_lea.vmem [#allocation0], 297
      %3072 = vst.msk [vmem:[%s3071] sm:$0x3] %vm3070, %v3069
      %s3073 = scalar_lea.vmem [#allocation0], 302
      %3074 = vst.msk [vmem:[%s3073] sm:$0x1c] %vm3070, %v3069
      %s3075 = scalar_lea.vmem [#allocation0], 307
      %3076 = vst.msk [vmem:[%s3075] sm:$0xe0] %vm3070, %v3069
      %s3077 = scalar_lea.vmem [#allocation1], 120
      %v3078 = vld [vmem:[%s3077] sm:$0xff]
      %vm3079 = vcmask 531456
      %s3080 = scalar_lea.vmem [#allocation0], 320
      %3081 = vst.msk [vmem:[%s3080] sm:$0x7] %vm3079, %v3078
      %s3082 = scalar_lea.vmem [#allocation0], 325
      %3083 = vst.msk [vmem:[%s3082] sm:$0x38] %vm3079, %v3078
      %s3084 = scalar_lea.vmem [#allocation0], 330
      %3085 = vst.msk [vmem:[%s3084] sm:$0xc0] %vm3079, %v3078
      %s3086 = scalar_lea.vmem [#allocation1], 128
      %v3087 = vld [vmem:[%s3086] sm:$0xff]
      %vm3088 = vcmask 531456
      %s3089 = scalar_lea.vmem [#allocation0], 338
      %3090 = vst.msk [vmem:[%s3089] ss:$6 sm:$0x3] %vm3088, %v3087
      %s3091 = scalar_lea.vmem [#allocation0], 343
      %3092 = vst.msk [vmem:[%s3091] sm:$0xc] %vm3088, %v3087
      %s3093 = scalar_lea.vmem [#allocation0], 348
      %3094 = vst.msk [vmem:[%s3093] sm:$0x70] %vm3088, %v3087
      %s3095 = scalar_lea.vmem [#allocation0], 353
      %3096 = vst.msk [vmem:[%s3095] sm:$0x80] %vm3088, %v3087
      %s3097 = scalar_lea.vmem [#allocation1], 136
      %v3098 = vld [vmem:[%s3097] sm:$0xff]
      %vm3099 = vcmask 531456
      %s3100 = scalar_lea.vmem [#allocation0], 361
      %3101 = vst.msk [vmem:[%s3100] sm:$0x3] %vm3099, %v3098
      %s3102 = scalar_lea.vmem [#allocation0], 366
      %3103 = vst.msk [vmem:[%s3102] sm:$0x1c] %vm3099, %v3098
      %s3104 = scalar_lea.vmem [#allocation0], 371
      %3105 = vst.msk [vmem:[%s3104] sm:$0xe0] %vm3099, %v3098
      %s3106 = scalar_lea.vmem [#allocation1], 144
      %v3107 = vld [vmem:[%s3106] sm:$0xff]
      %vm3108 = vcmask 531456
      %s3109 = scalar_lea.vmem [#allocation0], 384
      %3110 = vst.msk [vmem:[%s3109] sm:$0x7] %vm3108, %v3107
      %s3111 = scalar_lea.vmem [#allocation0], 389
      %3112 = vst.msk [vmem:[%s3111] sm:$0x38] %vm3108, %v3107
      %s3113 = scalar_lea.vmem [#allocation0], 394
      %3114 = vst.msk [vmem:[%s3113] sm:$0xc0] %vm3108, %v3107
      %s3115 = scalar_lea.vmem [#allocation1], 152
      %v3116 = vld [vmem:[%s3115] sm:$0xff]
      %vm3117 = vcmask 531456
      %s3118 = scalar_lea.vmem [#allocation0], 402
      %3119 = vst.msk [vmem:[%s3118] ss:$6 sm:$0x3] %vm3117, %v3116
      %s3120 = scalar_lea.vmem [#allocation0], 407
      %3121 = vst.msk [vmem:[%s3120] sm:$0xc] %vm3117, %v3116
      %s3122 = scalar_lea.vmem [#allocation0], 412
      %3123 = vst.msk [vmem:[%s3122] sm:$0x70] %vm3117, %v3116
      %s3124 = scalar_lea.vmem [#allocation0], 417
      %3125 = vst.msk [vmem:[%s3124] sm:$0x80] %vm3117, %v3116
      %s3126 = scalar_lea.vmem [#allocation1], 160
      %v3127 = vld [vmem:[%s3126] sm:$0xff]
      %vm3128 = vcmask 531456
      %s3129 = scalar_lea.vmem [#allocation0], 425
      %3130 = vst.msk [vmem:[%s3129] sm:$0x3] %vm3128, %v3127
      %s3131 = scalar_lea.vmem [#allocation0], 430
      %3132 = vst.msk [vmem:[%s3131] sm:$0x1c] %vm3128, %v3127
      %s3133 = scalar_lea.vmem [#allocation0], 435
      %3134 = vst.msk [vmem:[%s3133] sm:$0xe0] %vm3128, %v3127
      %s3135 = scalar_lea.vmem [#allocation1], 168
      %v3136 = vld [vmem:[%s3135] sm:$0xff]
      %vm3137 = vcmask 531456
      %s3138 = scalar_lea.vmem [#allocation0], 448
      %3139 = vst.msk [vmem:[%s3138] sm:$0x7] %vm3137, %v3136
      %s3140 = scalar_lea.vmem [#allocation0], 453
      %3141 = vst.msk [vmem:[%s3140] sm:$0x38] %vm3137, %v3136
      %s3142 = scalar_lea.vmem [#allocation0], 458
      %3143 = vst.msk [vmem:[%s3142] sm:$0xc0] %vm3137, %v3136
      %s3144 = scalar_lea.vmem [#allocation1], 176
      %v3145 = vld [vmem:[%s3144] sm:$0xff]
      %vm3146 = vcmask 531456
      %s3147 = scalar_lea.vmem [#allocation0], 466
      %3148 = vst.msk [vmem:[%s3147] ss:$6 sm:$0x3] %vm3146, %v3145
      %s3149 = scalar_lea.vmem [#allocation0], 471
      %3150 = vst.msk [vmem:[%s3149] sm:$0xc] %vm3146, %v3145
      %s3151 = scalar_lea.vmem [#allocation0], 476
      %3152 = vst.msk [vmem:[%s3151] sm:$0x70] %vm3146, %v3145
      %s3153 = scalar_lea.vmem [#allocation0], 481
      %3154 = vst.msk [vmem:[%s3153] sm:$0x80] %vm3146, %v3145
      %s3155 = scalar_lea.vmem [#allocation1], 184
      %v3156 = vld [vmem:[%s3155] sm:$0xff]
      %vm3157 = vcmask 531456
      %s3158 = scalar_lea.vmem [#allocation0], 489
      %3159 = vst.msk [vmem:[%s3158] sm:$0x3] %vm3157, %v3156
      %s3160 = scalar_lea.vmem [#allocation0], 494
      %3161 = vst.msk [vmem:[%s3160] sm:$0x1c] %vm3157, %v3156
      %s3162 = scalar_lea.vmem [#allocation0], 499
      %3163 = vst.msk [vmem:[%s3162] sm:$0xe0] %vm3157, %v3156
      %s3164 = scalar_lea.vmem [#allocation1], 192
      %v3165 = vld [vmem:[%s3164] sm:$0xff]
      %vm3166 = vcmask 531456
      %s3167 = scalar_lea.vmem [#allocation0], 512
      %3168 = vst.msk [vmem:[%s3167] sm:$0x7] %vm3166, %v3165
      %s3169 = scalar_lea.vmem [#allocation0], 517
      %3170 = vst.msk [vmem:[%s3169] sm:$0x38] %vm3166, %v3165
      %s3171 = scalar_lea.vmem [#allocation0], 522
      %3172 = vst.msk [vmem:[%s3171] sm:$0xc0] %vm3166, %v3165
      %s3173 = scalar_lea.vmem [#allocation1], 200
      %v3174 = vld [vmem:[%s3173] sm:$0xff]
      %vm3175 = vcmask 531456
      %s3176 = scalar_lea.vmem [#allocation0], 530
      %3177 = vst.msk [vmem:[%s3176] ss:$6 sm:$0x3] %vm3175, %v3174
      %s3178 = scalar_lea.vmem [#allocation0], 535
      %3179 = vst.msk [vmem:[%s3178] sm:$0xc] %vm3175, %v3174
      %s3180 = scalar_lea.vmem [#allocation0], 540
      %3181 = vst.msk [vmem:[%s3180] sm:$0x70] %vm3175, %v3174
      %s3182 = scalar_lea.vmem [#allocation0], 545
      %3183 = vst.msk [vmem:[%s3182] sm:$0x80] %vm3175, %v3174
      %s3184 = scalar_lea.vmem [#allocation1], 208
      %v3185 = vld [vmem:[%s3184] sm:$0xff]
      %vm3186 = vcmask 531456
      %s3187 = scalar_lea.vmem [#allocation0], 553
      %3188 = vst.msk [vmem:[%s3187] sm:$0x3] %vm3186, %v3185
      %s3189 = scalar_lea.vmem [#allocation0], 558
      %3190 = vst.msk [vmem:[%s3189] sm:$0x1c] %vm3186, %v3185
      %s3191 = scalar_lea.vmem [#allocation0], 563
      %3192 = vst.msk [vmem:[%s3191] sm:$0xe0] %vm3186, %v3185
      %s3193 = scalar_lea.vmem [#allocation1], 216
      %v3194 = vld [vmem:[%s3193] sm:$0xff]
      %vm3195 = vcmask 531456
      %s3196 = scalar_lea.vmem [#allocation0], 576
      %3197 = vst.msk [vmem:[%s3196] sm:$0x7] %vm3195, %v3194
      %s3198 = scalar_lea.vmem [#allocation0], 581
      %3199 = vst.msk [vmem:[%s3198] sm:$0x38] %vm3195, %v3194
      %s3200 = scalar_lea.vmem [#allocation0], 586
      %3201 = vst.msk [vmem:[%s3200] sm:$0xc0] %vm3195, %v3194
      %s3202 = scalar_lea.vmem [#allocation1], 224
      %v3203 = vld [vmem:[%s3202] sm:$0xff]
      %vm3204 = vcmask 531456
      %s3205 = scalar_lea.vmem [#allocation0], 594
      %3206 = vst.msk [vmem:[%s3205] ss:$6 sm:$0x3] %vm3204, %v3203
      %s3207 = scalar_lea.vmem [#allocation0], 599
      %3208 = vst.msk [vmem:[%s3207] sm:$0xc] %vm3204, %v3203
      %s3209 = scalar_lea.vmem [#allocation0], 604
      %3210 = vst.msk [vmem:[%s3209] sm:$0x70] %vm3204, %v3203
      %s3211 = scalar_lea.vmem [#allocation0], 609
      %3212 = vst.msk [vmem:[%s3211] sm:$0x80] %vm3204, %v3203
      %s3213 = scalar_lea.vmem [#allocation1], 232
      %v3214 = vld [vmem:[%s3213] sm:$0xff]
      %vm3215 = vcmask 531456
      %s3216 = scalar_lea.vmem [#allocation0], 617
      %3217 = vst.msk [vmem:[%s3216] sm:$0x3] %vm3215, %v3214
      %s3218 = scalar_lea.vmem [#allocation0], 622
      %3219 = vst.msk [vmem:[%s3218] sm:$0x1c] %vm3215, %v3214
      %s3220 = scalar_lea.vmem [#allocation0], 627
      %3221 = vst.msk [vmem:[%s3220] sm:$0xe0] %vm3215, %v3214
      %s3222 = scalar_lea.vmem [#allocation1], 240
      %v3223 = vld [vmem:[%s3222] sm:$0xff]
      %vm3224 = vcmask 531456
      %s3225 = scalar_lea.vmem [#allocation0], 640
      %3226 = vst.msk [vmem:[%s3225] sm:$0x7] %vm3224, %v3223
      %s3227 = scalar_lea.vmem [#allocation0], 645
      %3228 = vst.msk [vmem:[%s3227] sm:$0x38] %vm3224, %v3223
      %s3229 = scalar_lea.vmem [#allocation0], 650
      %3230 = vst.msk [vmem:[%s3229] sm:$0xc0] %vm3224, %v3223
      %s3231 = scalar_lea.vmem [#allocation1], 248
      %v3232 = vld [vmem:[%s3231] sm:$0xff]
      %vm3233 = vcmask 531456
      %s3234 = scalar_lea.vmem [#allocation0], 658
      %3235 = vst.msk [vmem:[%s3234] ss:$6 sm:$0x3] %vm3233, %v3232
      %s3236 = scalar_lea.vmem [#allocation0], 663
      %3237 = vst.msk [vmem:[%s3236] sm:$0xc] %vm3233, %v3232
      %s3238 = scalar_lea.vmem [#allocation0], 668
      %3239 = vst.msk [vmem:[%s3238] sm:$0x70] %vm3233, %v3232
      %s3240 = scalar_lea.vmem [#allocation0], 673
      %3241 = vst.msk [vmem:[%s3240] sm:$0x80] %vm3233, %v3232
      %s3242 = scalar_lea.vmem [#allocation1], 256
      %v3243 = vld [vmem:[%s3242] sm:$0xff]
      %vm3244 = vcmask 531456
      %s3245 = scalar_lea.vmem [#allocation0], 681
      %3246 = vst.msk [vmem:[%s3245] sm:$0x3] %vm3244, %v3243
      %s3247 = scalar_lea.vmem [#allocation0], 686
      %3248 = vst.msk [vmem:[%s3247] sm:$0x1c] %vm3244, %v3243
      %s3249 = scalar_lea.vmem [#allocation0], 691
      %3250 = vst.msk [vmem:[%s3249] sm:$0xe0] %vm3244, %v3243
      %s3251 = scalar_lea.vmem [#allocation1], 264
      %v3252 = vld [vmem:[%s3251] sm:$0xff]
      %vm3253 = vcmask 531456
      %s3254 = scalar_lea.vmem [#allocation0], 704
      %3255 = vst.msk [vmem:[%s3254] sm:$0x7] %vm3253, %v3252
      %s3256 = scalar_lea.vmem [#allocation0], 709
      %3257 = vst.msk [vmem:[%s3256] sm:$0x38] %vm3253, %v3252
      %s3258 = scalar_lea.vmem [#allocation0], 714
      %3259 = vst.msk [vmem:[%s3258] sm:$0xc0] %vm3253, %v3252
      %s3260 = scalar_lea.vmem [#allocation1], 272
      %v3261 = vld [vmem:[%s3260] sm:$0xff]
      %vm3262 = vcmask 531456
      %s3263 = scalar_lea.vmem [#allocation0], 722
      %3264 = vst.msk [vmem:[%s3263] ss:$6 sm:$0x3] %vm3262, %v3261
      %s3265 = scalar_lea.vmem [#allocation0], 727
      %3266 = vst.msk [vmem:[%s3265] sm:$0xc] %vm3262, %v3261
      %s3267 = scalar_lea.vmem [#allocation0], 732
      %3268 = vst.msk [vmem:[%s3267] sm:$0x70] %vm3262, %v3261
      %s3269 = scalar_lea.vmem [#allocation0], 737
      %3270 = vst.msk [vmem:[%s3269] sm:$0x80] %vm3262, %v3261
      %s3271 = scalar_lea.vmem [#allocation1], 280
      %v3272 = vld [vmem:[%s3271] sm:$0xff]
      %vm3273 = vcmask 531456
      %s3274 = scalar_lea.vmem [#allocation0], 745
      %3275 = vst.msk [vmem:[%s3274] sm:$0x3] %vm3273, %v3272
      %s3276 = scalar_lea.vmem [#allocation0], 750
      %3277 = vst.msk [vmem:[%s3276] sm:$0x1c] %vm3273, %v3272
      %s3278 = scalar_lea.vmem [#allocation0], 755
      %3279 = vst.msk [vmem:[%s3278] sm:$0xe0] %vm3273, %v3272
      %s3280 = scalar_lea.vmem [#allocation1], 288
      %v3281 = vld [vmem:[%s3280] sm:$0xff]
      %vm3282 = vcmask 531456
      %s3283 = scalar_lea.vmem [#allocation0], 768
      %3284 = vst.msk [vmem:[%s3283] sm:$0x7] %vm3282, %v3281
      %s3285 = scalar_lea.vmem [#allocation0], 773
      %3286 = vst.msk [vmem:[%s3285] sm:$0x38] %vm3282, %v3281
      %s3287 = scalar_lea.vmem [#allocation0], 778
      %3288 = vst.msk [vmem:[%s3287] sm:$0xc0] %vm3282, %v3281
      %s3289 = scalar_lea.vmem [#allocation1], 296
      %v3290 = vld [vmem:[%s3289] sm:$0xff]
      %vm3291 = vcmask 531456
      %s3292 = scalar_lea.vmem [#allocation0], 786
      %3293 = vst.msk [vmem:[%s3292] ss:$6 sm:$0x3] %vm3291, %v3290
      %s3294 = scalar_lea.vmem [#allocation0], 791
      %3295 = vst.msk [vmem:[%s3294] sm:$0xc] %vm3291, %v3290
      %s3296 = scalar_lea.vmem [#allocation0], 796
      %3297 = vst.msk [vmem:[%s3296] sm:$0x70] %vm3291, %v3290
      %s3298 = scalar_lea.vmem [#allocation0], 801
      %3299 = vst.msk [vmem:[%s3298] sm:$0x80] %vm3291, %v3290
      %s3300 = scalar_lea.vmem [#allocation1], 304
      %v3301 = vld [vmem:[%s3300] sm:$0xff]
      %vm3302 = vcmask 531456
      %s3303 = scalar_lea.vmem [#allocation0], 809
      %3304 = vst.msk [vmem:[%s3303] sm:$0x3] %vm3302, %v3301
      %s3305 = scalar_lea.vmem [#allocation0], 814
      %3306 = vst.msk [vmem:[%s3305] sm:$0x1c] %vm3302, %v3301
      %s3307 = scalar_lea.vmem [#allocation0], 819
      %3308 = vst.msk [vmem:[%s3307] sm:$0xe0] %vm3302, %v3301
      %s3309 = scalar_lea.vmem [#allocation1], 312
      %v3310 = vld [vmem:[%s3309] sm:$0xff]
      %vm3311 = vcmask 531456
      %s3312 = scalar_lea.vmem [#allocation0], 832
      %3313 = vst.msk [vmem:[%s3312] sm:$0x7] %vm3311, %v3310
      %s3314 = scalar_lea.vmem [#allocation0], 837
      %3315 = vst.msk [vmem:[%s3314] sm:$0x38] %vm3311, %v3310
      %s3316 = scalar_lea.vmem [#allocation0], 842
      %3317 = vst.msk [vmem:[%s3316] sm:$0xc0] %vm3311, %v3310
      %s3318 = scalar_lea.vmem [#allocation1], 320
      %v3319 = vld [vmem:[%s3318] sm:$0xff]
      %vm3320 = vcmask 531456
      %s3321 = scalar_lea.vmem [#allocation0], 850
      %3322 = vst.msk [vmem:[%s3321] ss:$6 sm:$0x3] %vm3320, %v3319
      %s3323 = scalar_lea.vmem [#allocation0], 855
      %3324 = vst.msk [vmem:[%s3323] sm:$0xc] %vm3320, %v3319
      %s3325 = scalar_lea.vmem [#allocation0], 860
      %3326 = vst.msk [vmem:[%s3325] sm:$0x70] %vm3320, %v3319
      %s3327 = scalar_lea.vmem [#allocation0], 865
      %3328 = vst.msk [vmem:[%s3327] sm:$0x80] %vm3320, %v3319
      %s3329 = scalar_lea.vmem [#allocation1], 328
      %v3330 = vld [vmem:[%s3329] sm:$0xff]
      %vm3331 = vcmask 531456
      %s3332 = scalar_lea.vmem [#allocation0], 873
      %3333 = vst.msk [vmem:[%s3332] sm:$0x3] %vm3331, %v3330
      %s3334 = scalar_lea.vmem [#allocation0], 878
      %3335 = vst.msk [vmem:[%s3334] sm:$0x1c] %vm3331, %v3330
      %s3336 = scalar_lea.vmem [#allocation0], 883
      %3337 = vst.msk [vmem:[%s3336] sm:$0xe0] %vm3331, %v3330
      %s3338 = scalar_lea.vmem [#allocation1], 336
      %v3339 = vld [vmem:[%s3338] sm:$0xff]
      %vm3340 = vcmask 531456
      %s3341 = scalar_lea.vmem [#allocation0], 896
      %3342 = vst.msk [vmem:[%s3341] sm:$0x7] %vm3340, %v3339
      %s3343 = scalar_lea.vmem [#allocation0], 901
      %3344 = vst.msk [vmem:[%s3343] sm:$0x38] %vm3340, %v3339
      %s3345 = scalar_lea.vmem [#allocation0], 906
      %3346 = vst.msk [vmem:[%s3345] sm:$0xc0] %vm3340, %v3339
      %s3347 = scalar_lea.vmem [#allocation1], 344
      %v3348 = vld [vmem:[%s3347] sm:$0xff]
      %vm3349 = vcmask 531456
      %s3350 = scalar_lea.vmem [#allocation0], 914
      %3351 = vst.msk [vmem:[%s3350] ss:$6 sm:$0x3] %vm3349, %v3348
      %s3352 = scalar_lea.vmem [#allocation0], 919
      %3353 = vst.msk [vmem:[%s3352] sm:$0xc] %vm3349, %v3348
      %s3354 = scalar_lea.vmem [#allocation0], 924
      %3355 = vst.msk [vmem:[%s3354] sm:$0x70] %vm3349, %v3348
      %s3356 = scalar_lea.vmem [#allocation0], 929
      %3357 = vst.msk [vmem:[%s3356] sm:$0x80] %vm3349, %v3348
      %s3358 = scalar_lea.vmem [#allocation1], 352
      %v3359 = vld [vmem:[%s3358] sm:$0xff]
      %vm3360 = vcmask 531456
      %s3361 = scalar_lea.vmem [#allocation0], 937
      %3362 = vst.msk [vmem:[%s3361] sm:$0x3] %vm3360, %v3359
      %s3363 = scalar_lea.vmem [#allocation0], 942
      %3364 = vst.msk [vmem:[%s3363] sm:$0x1c] %vm3360, %v3359
      %s3365 = scalar_lea.vmem [#allocation0], 947
      %3366 = vst.msk [vmem:[%s3365] sm:$0xe0] %vm3360, %v3359
      %s3367 = scalar_lea.vmem [#allocation1], 360
      %v3368 = vld [vmem:[%s3367] sm:$0xff]
      %vm3369 = vcmask 531456
      %s3370 = scalar_lea.vmem [#allocation0], 960
      %3371 = vst.msk [vmem:[%s3370] sm:$0x7] %vm3369, %v3368
      %s3372 = scalar_lea.vmem [#allocation0], 965
      %3373 = vst.msk [vmem:[%s3372] sm:$0x38] %vm3369, %v3368
      %s3374 = scalar_lea.vmem [#allocation0], 970
      %3375 = vst.msk [vmem:[%s3374] sm:$0xc0] %vm3369, %v3368
      %s3376 = scalar_lea.vmem [#allocation1], 368
      %v3377 = vld [vmem:[%s3376] sm:$0xff]
      %vm3378 = vcmask 531456
      %s3379 = scalar_lea.vmem [#allocation0], 978
      %3380 = vst.msk [vmem:[%s3379] ss:$6 sm:$0x3] %vm3378, %v3377
      %s3381 = scalar_lea.vmem [#allocation0], 983
      %3382 = vst.msk [vmem:[%s3381] sm:$0xc] %vm3378, %v3377
      %s3383 = scalar_lea.vmem [#allocation0], 988
      %3384 = vst.msk [vmem:[%s3383] sm:$0x70] %vm3378, %v3377
      %s3385 = scalar_lea.vmem [#allocation0], 993
      %3386 = vst.msk [vmem:[%s3385] sm:$0x80] %vm3378, %v3377
      %s3387 = scalar_lea.vmem [#allocation1], 376
      %v3388 = vld [vmem:[%s3387] sm:$0xff]
      %vm3389 = vcmask 531456
      %s3390 = scalar_lea.vmem [#allocation0], 1001
      %3391 = vst.msk [vmem:[%s3390] sm:$0x3] %vm3389, %v3388
      %s3392 = scalar_lea.vmem [#allocation0], 1006
      %3393 = vst.msk [vmem:[%s3392] sm:$0x1c] %vm3389, %v3388
      %s3394 = scalar_lea.vmem [#allocation0], 1011
      %3395 = vst.msk [vmem:[%s3394] sm:$0xe0] %vm3389, %v3388
      %s3396 = scalar_lea.vmem [#allocation1], 384
      %v3397 = vld [vmem:[%s3396] sm:$0xff]
      %vm3398 = vcmask 531456
      %s3399 = scalar_lea.vmem [#allocation0], 1024
      %3400 = vst.msk [vmem:[%s3399] sm:$0x7] %vm3398, %v3397
      %s3401 = scalar_lea.vmem [#allocation0], 1029
      %3402 = vst.msk [vmem:[%s3401] sm:$0x38] %vm3398, %v3397
      %s3403 = scalar_lea.vmem [#allocation0], 1034
      %3404 = vst.msk [vmem:[%s3403] sm:$0xc0] %vm3398, %v3397
      %s3405 = scalar_lea.vmem [#allocation1], 392
      %v3406 = vld [vmem:[%s3405] sm:$0xff]
      %vm3407 = vcmask 531456
      %s3408 = scalar_lea.vmem [#allocation0], 1042
      %3409 = vst.msk [vmem:[%s3408] ss:$6 sm:$0x3] %vm3407, %v3406
      %s3410 = scalar_lea.vmem [#allocation0], 1047
      %3411 = vst.msk [vmem:[%s3410] sm:$0xc] %vm3407, %v3406
      %s3412 = scalar_lea.vmem [#allocation0], 1052
      %3413 = vst.msk [vmem:[%s3412] sm:$0x70] %vm3407, %v3406
      %s3414 = scalar_lea.vmem [#allocation0], 1057
      %3415 = vst.msk [vmem:[%s3414] sm:$0x80] %vm3407, %v3406
      %s3416 = scalar_lea.vmem [#allocation1], 400
      %v3417 = vld [vmem:[%s3416] sm:$0xff]
      %vm3418 = vcmask 531456
      %s3419 = scalar_lea.vmem [#allocation0], 1065
      %3420 = vst.msk [vmem:[%s3419] sm:$0x3] %vm3418, %v3417
      %s3421 = scalar_lea.vmem [#allocation0], 1070
      %3422 = vst.msk [vmem:[%s3421] sm:$0x1c] %vm3418, %v3417
      %s3423 = scalar_lea.vmem [#allocation0], 1075
      %3424 = vst.msk [vmem:[%s3423] sm:$0xe0] %vm3418, %v3417
      %s3425 = scalar_lea.vmem [#allocation1], 408
      %v3426 = vld [vmem:[%s3425] sm:$0xff]
      %vm3427 = vcmask 531456
      %s3428 = scalar_lea.vmem [#allocation0], 1088
      %3429 = vst.msk [vmem:[%s3428] sm:$0x7] %vm3427, %v3426
      %s3430 = scalar_lea.vmem [#allocation0], 1093
      %3431 = vst.msk [vmem:[%s3430] sm:$0x38] %vm3427, %v3426
      %s3432 = scalar_lea.vmem [#allocation0], 1098
      %3433 = vst.msk [vmem:[%s3432] sm:$0xc0] %vm3427, %v3426
      %s3434 = scalar_lea.vmem [#allocation1], 416
      %v3435 = vld [vmem:[%s3434] sm:$0xff]
      %vm3436 = vcmask 531456
      %s3437 = scalar_lea.vmem [#allocation0], 1106
      %3438 = vst.msk [vmem:[%s3437] ss:$6 sm:$0x3] %vm3436, %v3435
      %s3439 = scalar_lea.vmem [#allocation0], 1111
      %3440 = vst.msk [vmem:[%s3439] sm:$0xc] %vm3436, %v3435
      %s3441 = scalar_lea.vmem [#allocation0], 1116
      %3442 = vst.msk [vmem:[%s3441] sm:$0x70] %vm3436, %v3435
      %s3443 = scalar_lea.vmem [#allocation0], 1121
      %3444 = vst.msk [vmem:[%s3443] sm:$0x80] %vm3436, %v3435
      %s3445 = scalar_lea.vmem [#allocation1], 424
      %v3446 = vld [vmem:[%s3445] sm:$0xff]
      %vm3447 = vcmask 531456
      %s3448 = scalar_lea.vmem [#allocation0], 1129
      %3449 = vst.msk [vmem:[%s3448] sm:$0x3] %vm3447, %v3446
      %s3450 = scalar_lea.vmem [#allocation0], 1134
      %3451 = vst.msk [vmem:[%s3450] sm:$0x1c] %vm3447, %v3446
      %s3452 = scalar_lea.vmem [#allocation0], 1139
      %3453 = vst.msk [vmem:[%s3452] sm:$0xe0] %vm3447, %v3446
      %s3454 = scalar_lea.vmem [#allocation1], 432
      %v3455 = vld [vmem:[%s3454] sm:$0xff]
      %vm3456 = vcmask 531456
      %s3457 = scalar_lea.vmem [#allocation0], 1152
      %3458 = vst.msk [vmem:[%s3457] sm:$0x7] %vm3456, %v3455
      %s3459 = scalar_lea.vmem [#allocation0], 1157
      %3460 = vst.msk [vmem:[%s3459] sm:$0x38] %vm3456, %v3455
      %s3461 = scalar_lea.vmem [#allocation0], 1162
      %3462 = vst.msk [vmem:[%s3461] sm:$0xc0] %vm3456, %v3455
      %s3463 = scalar_lea.vmem [#allocation1], 440
      %v3464 = vld [vmem:[%s3463] sm:$0xff]
      %vm3465 = vcmask 531456
      %s3466 = scalar_lea.vmem [#allocation0], 1170
      %3467 = vst.msk [vmem:[%s3466] ss:$6 sm:$0x3] %vm3465, %v3464
      %s3468 = scalar_lea.vmem [#allocation0], 1175
      %3469 = vst.msk [vmem:[%s3468] sm:$0xc] %vm3465, %v3464
      %s3470 = scalar_lea.vmem [#allocation0], 1180
      %3471 = vst.msk [vmem:[%s3470] sm:$0x70] %vm3465, %v3464
      %s3472 = scalar_lea.vmem [#allocation0], 1185
      %3473 = vst.msk [vmem:[%s3472] sm:$0x80] %vm3465, %v3464
      %s3474 = scalar_lea.vmem [#allocation1], 448
      %v3475 = vld [vmem:[%s3474] sm:$0xff]
      %vm3476 = vcmask 531456
      %s3477 = scalar_lea.vmem [#allocation0], 1193
      %3478 = vst.msk [vmem:[%s3477] sm:$0x3] %vm3476, %v3475
      %s3479 = scalar_lea.vmem [#allocation0], 1198
      %3480 = vst.msk [vmem:[%s3479] sm:$0x1c] %vm3476, %v3475
      %s3481 = scalar_lea.vmem [#allocation0], 1203
      %3482 = vst.msk [vmem:[%s3481] sm:$0xe0] %vm3476, %v3475
      %s3483 = scalar_lea.vmem [#allocation1], 456
      %v3484 = vld [vmem:[%s3483] sm:$0xff]
      %vm3485 = vcmask 531456
      %s3486 = scalar_lea.vmem [#allocation0], 1216
      %3487 = vst.msk [vmem:[%s3486] sm:$0x7] %vm3485, %v3484
      %s3488 = scalar_lea.vmem [#allocation0], 1221
      %3489 = vst.msk [vmem:[%s3488] sm:$0x38] %vm3485, %v3484
      %s3490 = scalar_lea.vmem [#allocation0], 1226
      %3491 = vst.msk [vmem:[%s3490] sm:$0xc0] %vm3485, %v3484
      %s3492 = scalar_lea.vmem [#allocation1], 464
      %v3493 = vld [vmem:[%s3492] sm:$0xff]
      %vm3494 = vcmask 531456
      %s3495 = scalar_lea.vmem [#allocation0], 1234
      %3496 = vst.msk [vmem:[%s3495] ss:$6 sm:$0x3] %vm3494, %v3493
      %s3497 = scalar_lea.vmem [#allocation0], 1239
      %3498 = vst.msk [vmem:[%s3497] sm:$0xc] %vm3494, %v3493
      %s3499 = scalar_lea.vmem [#allocation0], 1244
      %3500 = vst.msk [vmem:[%s3499] sm:$0x70] %vm3494, %v3493
      %s3501 = scalar_lea.vmem [#allocation0], 1249
      %3502 = vst.msk [vmem:[%s3501] sm:$0x80] %vm3494, %v3493
      %s3503 = scalar_lea.vmem [#allocation1], 472
      %v3504 = vld [vmem:[%s3503] sm:$0xff]
      %vm3505 = vcmask 531456
      %s3506 = scalar_lea.vmem [#allocation0], 1257
      %3507 = vst.msk [vmem:[%s3506] sm:$0x3] %vm3505, %v3504
      %s3508 = scalar_lea.vmem [#allocation0], 1262
      %3509 = vst.msk [vmem:[%s3508] sm:$0x1c] %vm3505, %v3504
      %s3510 = scalar_lea.vmem [#allocation0], 1267
      %3511 = vst.msk [vmem:[%s3510] sm:$0xe0] %vm3505, %v3504
      %s3512 = scalar_lea.vmem [#allocation1], 480
      %v3513 = vld [vmem:[%s3512] sm:$0xff]
      %vm3514 = vcmask 531456
      %s3515 = scalar_lea.vmem [#allocation0], 1280
      %3516 = vst.msk [vmem:[%s3515] sm:$0x7] %vm3514, %v3513
      %s3517 = scalar_lea.vmem [#allocation0], 1285
      %3518 = vst.msk [vmem:[%s3517] sm:$0x38] %vm3514, %v3513
      %s3519 = scalar_lea.vmem [#allocation0], 1290
      %3520 = vst.msk [vmem:[%s3519] sm:$0xc0] %vm3514, %v3513
      %s3521 = scalar_lea.vmem [#allocation1], 488
      %v3522 = vld [vmem:[%s3521] sm:$0xff]
      %vm3523 = vcmask 531456
      %s3524 = scalar_lea.vmem [#allocation0], 1298
      %3525 = vst.msk [vmem:[%s3524] ss:$6 sm:$0x3] %vm3523, %v3522
      %s3526 = scalar_lea.vmem [#allocation0], 1303
      %3527 = vst.msk [vmem:[%s3526] sm:$0xc] %vm3523, %v3522
      %s3528 = scalar_lea.vmem [#allocation0], 1308
      %3529 = vst.msk [vmem:[%s3528] sm:$0x70] %vm3523, %v3522
      %s3530 = scalar_lea.vmem [#allocation0], 1313
      %3531 = vst.msk [vmem:[%s3530] sm:$0x80] %vm3523, %v3522
      %s3532 = scalar_lea.vmem [#allocation1], 496
      %v3533 = vld [vmem:[%s3532] sm:$0xff]
      %vm3534 = vcmask 531456
      %s3535 = scalar_lea.vmem [#allocation0], 1321
      %3536 = vst.msk [vmem:[%s3535] sm:$0x3] %vm3534, %v3533
      %s3537 = scalar_lea.vmem [#allocation0], 1326
      %3538 = vst.msk [vmem:[%s3537] sm:$0x1c] %vm3534, %v3533
      %s3539 = scalar_lea.vmem [#allocation0], 1331
      %3540 = vst.msk [vmem:[%s3539] sm:$0xe0] %vm3534, %v3533
      %s3541 = scalar_lea.vmem [#allocation1], 504
      %v3542 = vld [vmem:[%s3541] sm:$0xff]
      %vm3543 = vcmask 531456
      %s3544 = scalar_lea.vmem [#allocation0], 1344
      %3545 = vst.msk [vmem:[%s3544] sm:$0x7] %vm3543, %v3542
      %s3546 = scalar_lea.vmem [#allocation0], 1349
      %3547 = vst.msk [vmem:[%s3546] sm:$0x38] %vm3543, %v3542
      %s3548 = scalar_lea.vmem [#allocation0], 1354
      %3549 = vst.msk [vmem:[%s3548] sm:$0xc0] %vm3543, %v3542
      %s3550 = scalar_lea.vmem [#allocation1], 512
      %v3551 = vld [vmem:[%s3550] sm:$0xff]
      %vm3552 = vcmask 531456
      %s3553 = scalar_lea.vmem [#allocation0], 1362
      %3554 = vst.msk [vmem:[%s3553] ss:$6 sm:$0x3] %vm3552, %v3551
      %s3555 = scalar_lea.vmem [#allocation0], 1367
      %3556 = vst.msk [vmem:[%s3555] sm:$0xc] %vm3552, %v3551
      %s3557 = scalar_lea.vmem [#allocation0], 1372
      %3558 = vst.msk [vmem:[%s3557] sm:$0x70] %vm3552, %v3551
      %s3559 = scalar_lea.vmem [#allocation0], 1377
      %3560 = vst.msk [vmem:[%s3559] sm:$0x80] %vm3552, %v3551
      %s3561 = scalar_lea.vmem [#allocation1], 520
      %v3562 = vld [vmem:[%s3561] sm:$0xff]
      %vm3563 = vcmask 531456
      %s3564 = scalar_lea.vmem [#allocation0], 1385
      %3565 = vst.msk [vmem:[%s3564] sm:$0x3] %vm3563, %v3562
      %s3566 = scalar_lea.vmem [#allocation0], 1390
      %3567 = vst.msk [vmem:[%s3566] sm:$0x1c] %vm3563, %v3562
      %s3568 = scalar_lea.vmem [#allocation0], 1395
      %3569 = vst.msk [vmem:[%s3568] sm:$0xe0] %vm3563, %v3562
      %s3570 = scalar_lea.vmem [#allocation1], 528
      %v3571 = vld [vmem:[%s3570] sm:$0xff]
      %vm3572 = vcmask 531456
      %s3573 = scalar_lea.vmem [#allocation0], 1408
      %3574 = vst.msk [vmem:[%s3573] sm:$0x7] %vm3572, %v3571
      %s3575 = scalar_lea.vmem [#allocation0], 1413
      %3576 = vst.msk [vmem:[%s3575] sm:$0x38] %vm3572, %v3571
      %s3577 = scalar_lea.vmem [#allocation0], 1418
      %3578 = vst.msk [vmem:[%s3577] sm:$0xc0] %vm3572, %v3571
      %s3579 = scalar_lea.vmem [#allocation1], 536
      %v3580 = vld [vmem:[%s3579] sm:$0xff]
      %vm3581 = vcmask 531456
      %s3582 = scalar_lea.vmem [#allocation0], 1426
      %3583 = vst.msk [vmem:[%s3582] ss:$6 sm:$0x3] %vm3581, %v3580
      %s3584 = scalar_lea.vmem [#allocation0], 1431
      %3585 = vst.msk [vmem:[%s3584] sm:$0xc] %vm3581, %v3580
      %s3586 = scalar_lea.vmem [#allocation0], 1436
      %3587 = vst.msk [vmem:[%s3586] sm:$0x70] %vm3581, %v3580
      %s3588 = scalar_lea.vmem [#allocation0], 1441
      %3589 = vst.msk [vmem:[%s3588] sm:$0x80] %vm3581, %v3580
      %s3590 = scalar_lea.vmem [#allocation1], 544
      %v3591 = vld [vmem:[%s3590] sm:$0xff]
      %vm3592 = vcmask 531456
      %s3593 = scalar_lea.vmem [#allocation0], 1449
      %3594 = vst.msk [vmem:[%s3593] sm:$0x3] %vm3592, %v3591
      %s3595 = scalar_lea.vmem [#allocation0], 1454
      %3596 = vst.msk [vmem:[%s3595] sm:$0x1c] %vm3592, %v3591
      %s3597 = scalar_lea.vmem [#allocation0], 1459
      %3598 = vst.msk [vmem:[%s3597] sm:$0xe0] %vm3592, %v3591
      %s3599 = scalar_lea.vmem [#allocation1], 552
      %v3600 = vld [vmem:[%s3599] sm:$0xff]
      %vm3601 = vcmask 531456
      %s3602 = scalar_lea.vmem [#allocation0], 1472
      %3603 = vst.msk [vmem:[%s3602] sm:$0x7] %vm3601, %v3600
      %s3604 = scalar_lea.vmem [#allocation0], 1477
      %3605 = vst.msk [vmem:[%s3604] sm:$0x38] %vm3601, %v3600
      %s3606 = scalar_lea.vmem [#allocation0], 1482
      %3607 = vst.msk [vmem:[%s3606] sm:$0xc0] %vm3601, %v3600
      %s3608 = scalar_lea.vmem [#allocation1], 560
      %v3609 = vld [vmem:[%s3608] sm:$0xff]
      %vm3610 = vcmask 531456
      %s3611 = scalar_lea.vmem [#allocation0], 1490
      %3612 = vst.msk [vmem:[%s3611] ss:$6 sm:$0x3] %vm3610, %v3609
      %s3613 = scalar_lea.vmem [#allocation0], 1495
      %3614 = vst.msk [vmem:[%s3613] sm:$0xc] %vm3610, %v3609
      %s3615 = scalar_lea.vmem [#allocation0], 1500
      %3616 = vst.msk [vmem:[%s3615] sm:$0x70] %vm3610, %v3609
      %s3617 = scalar_lea.vmem [#allocation0], 1505
      %3618 = vst.msk [vmem:[%s3617] sm:$0x80] %vm3610, %v3609
      %s3619 = scalar_lea.vmem [#allocation1], 568
      %v3620 = vld [vmem:[%s3619] sm:$0xff]
      %vm3621 = vcmask 531456
      %s3622 = scalar_lea.vmem [#allocation0], 1513
      %3623 = vst.msk [vmem:[%s3622] sm:$0x3] %vm3621, %v3620
      %s3624 = scalar_lea.vmem [#allocation0], 1518
      %3625 = vst.msk [vmem:[%s3624] sm:$0x1c] %vm3621, %v3620
      %s3626 = scalar_lea.vmem [#allocation0], 1523
      %3627 = vst.msk [vmem:[%s3626] sm:$0xe0] %vm3621, %v3620
      %s3628 = scalar_lea.vmem [#allocation1], 576
      %v3629 = vld [vmem:[%s3628] sm:$0xff]
      %vm3630 = vcmask 531456
      %s3631 = scalar_lea.vmem [#allocation0], 1536
      %3632 = vst.msk [vmem:[%s3631] sm:$0x7] %vm3630, %v3629
      %s3633 = scalar_lea.vmem [#allocation0], 1541
      %3634 = vst.msk [vmem:[%s3633] sm:$0x38] %vm3630, %v3629
      %s3635 = scalar_lea.vmem [#allocation0], 1546
      %3636 = vst.msk [vmem:[%s3635] sm:$0xc0] %vm3630, %v3629
      %s3637 = scalar_lea.vmem [#allocation1], 584
      %v3638 = vld [vmem:[%s3637] sm:$0xff]
      %vm3639 = vcmask 531456
      %s3640 = scalar_lea.vmem [#allocation0], 1554
      %3641 = vst.msk [vmem:[%s3640] ss:$6 sm:$0x3] %vm3639, %v3638
      %s3642 = scalar_lea.vmem [#allocation0], 1559
      %3643 = vst.msk [vmem:[%s3642] sm:$0xc] %vm3639, %v3638
      %s3644 = scalar_lea.vmem [#allocation0], 1564
      %3645 = vst.msk [vmem:[%s3644] sm:$0x70] %vm3639, %v3638
      %s3646 = scalar_lea.vmem [#allocation0], 1569
      %3647 = vst.msk [vmem:[%s3646] sm:$0x80] %vm3639, %v3638
      %s3648 = scalar_lea.vmem [#allocation1], 592
      %v3649 = vld [vmem:[%s3648] sm:$0xff]
      %vm3650 = vcmask 531456
      %s3651 = scalar_lea.vmem [#allocation0], 1577
      %3652 = vst.msk [vmem:[%s3651] sm:$0x3] %vm3650, %v3649
      %s3653 = scalar_lea.vmem [#allocation0], 1582
      %3654 = vst.msk [vmem:[%s3653] sm:$0x1c] %vm3650, %v3649
      %s3655 = scalar_lea.vmem [#allocation0], 1587
      %3656 = vst.msk [vmem:[%s3655] sm:$0xe0] %vm3650, %v3649
      %s3657 = scalar_lea.vmem [#allocation1], 600
      %v3658 = vld [vmem:[%s3657] sm:$0xff]
      %vm3659 = vcmask 531456
      %s3660 = scalar_lea.vmem [#allocation0], 1600
      %3661 = vst.msk [vmem:[%s3660] sm:$0x7] %vm3659, %v3658
      %s3662 = scalar_lea.vmem [#allocation0], 1605
      %3663 = vst.msk [vmem:[%s3662] sm:$0x38] %vm3659, %v3658
      %s3664 = scalar_lea.vmem [#allocation0], 1610
      %3665 = vst.msk [vmem:[%s3664] sm:$0xc0] %vm3659, %v3658
      %s3666 = scalar_lea.vmem [#allocation1], 608
      %v3667 = vld [vmem:[%s3666] sm:$0xff]
      %vm3668 = vcmask 531456
      %s3669 = scalar_lea.vmem [#allocation0], 1618
      %3670 = vst.msk [vmem:[%s3669] ss:$6 sm:$0x3] %vm3668, %v3667
      %s3671 = scalar_lea.vmem [#allocation0], 1623
      %3672 = vst.msk [vmem:[%s3671] sm:$0xc] %vm3668, %v3667
      %s3673 = scalar_lea.vmem [#allocation0], 1628
      %3674 = vst.msk [vmem:[%s3673] sm:$0x70] %vm3668, %v3667
      %s3675 = scalar_lea.vmem [#allocation0], 1633
      %3676 = vst.msk [vmem:[%s3675] sm:$0x80] %vm3668, %v3667
      %s3677 = scalar_lea.vmem [#allocation1], 616
      %v3678 = vld [vmem:[%s3677] sm:$0xff]
      %vm3679 = vcmask 531456
      %s3680 = scalar_lea.vmem [#allocation0], 1641
      %3681 = vst.msk [vmem:[%s3680] sm:$0x3] %vm3679, %v3678
      %s3682 = scalar_lea.vmem [#allocation0], 1646
      %3683 = vst.msk [vmem:[%s3682] sm:$0x1c] %vm3679, %v3678
      %s3684 = scalar_lea.vmem [#allocation0], 1651
      %3685 = vst.msk [vmem:[%s3684] sm:$0xe0] %vm3679, %v3678
      %s3686 = scalar_lea.vmem [#allocation1], 624
      %v3687 = vld [vmem:[%s3686] sm:$0xff]
      %vm3688 = vcmask 531456
      %s3689 = scalar_lea.vmem [#allocation0], 1664
      %3690 = vst.msk [vmem:[%s3689] sm:$0x7] %vm3688, %v3687
      %s3691 = scalar_lea.vmem [#allocation0], 1669
      %3692 = vst.msk [vmem:[%s3691] sm:$0x38] %vm3688, %v3687
      %s3693 = scalar_lea.vmem [#allocation0], 1674
      %3694 = vst.msk [vmem:[%s3693] sm:$0xc0] %vm3688, %v3687
      %s3695 = scalar_lea.vmem [#allocation1], 632
      %v3696 = vld [vmem:[%s3695] sm:$0xff]
      %vm3697 = vcmask 531456
      %s3698 = scalar_lea.vmem [#allocation0], 1682
      %3699 = vst.msk [vmem:[%s3698] ss:$6 sm:$0x3] %vm3697, %v3696
      %s3700 = scalar_lea.vmem [#allocation0], 1687
      %3701 = vst.msk [vmem:[%s3700] sm:$0xc] %vm3697, %v3696
      %s3702 = scalar_lea.vmem [#allocation0], 1692
      %3703 = vst.msk [vmem:[%s3702] sm:$0x70] %vm3697, %v3696
      %s3704 = scalar_lea.vmem [#allocation0], 1697
      %3705 = vst.msk [vmem:[%s3704] sm:$0x80] %vm3697, %v3696
      %s3706 = scalar_lea.vmem [#allocation1], 640
      %v3707 = vld [vmem:[%s3706] sm:$0xff]
      %vm3708 = vcmask 531456
      %s3709 = scalar_lea.vmem [#allocation0], 1705
      %3710 = vst.msk [vmem:[%s3709] sm:$0x3] %vm3708, %v3707
      %s3711 = scalar_lea.vmem [#allocation0], 1710
      %3712 = vst.msk [vmem:[%s3711] sm:$0x1c] %vm3708, %v3707
      %s3713 = scalar_lea.vmem [#allocation0], 1715
      %3714 = vst.msk [vmem:[%s3713] sm:$0xe0] %vm3708, %v3707
      %s3715 = scalar_lea.vmem [#allocation1], 648
      %v3716 = vld [vmem:[%s3715] sm:$0xff]
      %vm3717 = vcmask 531456
      %s3718 = scalar_lea.vmem [#allocation0], 1728
      %3719 = vst.msk [vmem:[%s3718] sm:$0x7] %vm3717, %v3716
      %s3720 = scalar_lea.vmem [#allocation0], 1733
      %3721 = vst.msk [vmem:[%s3720] sm:$0x38] %vm3717, %v3716
      %s3722 = scalar_lea.vmem [#allocation0], 1738
      %3723 = vst.msk [vmem:[%s3722] sm:$0xc0] %vm3717, %v3716
      %s3724 = scalar_lea.vmem [#allocation1], 656
      %v3725 = vld [vmem:[%s3724] sm:$0xff]
      %vm3726 = vcmask 531456
      %s3727 = scalar_lea.vmem [#allocation0], 1746
      %3728 = vst.msk [vmem:[%s3727] ss:$6 sm:$0x3] %vm3726, %v3725
      %s3729 = scalar_lea.vmem [#allocation0], 1751
      %3730 = vst.msk [vmem:[%s3729] sm:$0xc] %vm3726, %v3725
      %s3731 = scalar_lea.vmem [#allocation0], 1756
      %3732 = vst.msk [vmem:[%s3731] sm:$0x70] %vm3726, %v3725
      %s3733 = scalar_lea.vmem [#allocation0], 1761
      %3734 = vst.msk [vmem:[%s3733] sm:$0x80] %vm3726, %v3725
      %s3735 = scalar_lea.vmem [#allocation1], 664
      %v3736 = vld [vmem:[%s3735] sm:$0xff]
      %vm3737 = vcmask 531456
      %s3738 = scalar_lea.vmem [#allocation0], 1769
      %3739 = vst.msk [vmem:[%s3738] sm:$0x3] %vm3737, %v3736
      %s3740 = scalar_lea.vmem [#allocation0], 1774
      %3741 = vst.msk [vmem:[%s3740] sm:$0x1c] %vm3737, %v3736
      %s3742 = scalar_lea.vmem [#allocation0], 1779
      %3743 = vst.msk [vmem:[%s3742] sm:$0xe0] %vm3737, %v3736
      %s3744 = scalar_lea.vmem [#allocation1], 672
      %v3745 = vld [vmem:[%s3744] sm:$0xff]
      %vm3746 = vcmask 531456
      %s3747 = scalar_lea.vmem [#allocation0], 1792
      %3748 = vst.msk [vmem:[%s3747] sm:$0x7] %vm3746, %v3745
      %s3749 = scalar_lea.vmem [#allocation0], 1797
      %3750 = vst.msk [vmem:[%s3749] sm:$0x38] %vm3746, %v3745
      %s3751 = scalar_lea.vmem [#allocation0], 1802
      %3752 = vst.msk [vmem:[%s3751] sm:$0xc0] %vm3746, %v3745
      %s3753 = scalar_lea.vmem [#allocation1], 680
      %v3754 = vld [vmem:[%s3753] sm:$0xff]
      %vm3755 = vcmask 531456
      %s3756 = scalar_lea.vmem [#allocation0], 1810
      %3757 = vst.msk [vmem:[%s3756] ss:$6 sm:$0x3] %vm3755, %v3754
      %s3758 = scalar_lea.vmem [#allocation0], 1815
      %3759 = vst.msk [vmem:[%s3758] sm:$0xc] %vm3755, %v3754
      %s3760 = scalar_lea.vmem [#allocation0], 1820
      %3761 = vst.msk [vmem:[%s3760] sm:$0x70] %vm3755, %v3754
      %s3762 = scalar_lea.vmem [#allocation0], 1825
      %3763 = vst.msk [vmem:[%s3762] sm:$0x80] %vm3755, %v3754
      %s3764 = scalar_lea.vmem [#allocation1], 688
      %v3765 = vld [vmem:[%s3764] sm:$0xff]
      %vm3766 = vcmask 531456
      %s3767 = scalar_lea.vmem [#allocation0], 1833
      %3768 = vst.msk [vmem:[%s3767] sm:$0x3] %vm3766, %v3765
      %s3769 = scalar_lea.vmem [#allocation0], 1838
      %3770 = vst.msk [vmem:[%s3769] sm:$0x1c] %vm3766, %v3765
      %s3771 = scalar_lea.vmem [#allocation0], 1843
      %3772 = vst.msk [vmem:[%s3771] sm:$0xe0] %vm3766, %v3765
      %s3773 = scalar_lea.vmem [#allocation1], 696
      %v3774 = vld [vmem:[%s3773] sm:$0xff]
      %vm3775 = vcmask 531456
      %s3776 = scalar_lea.vmem [#allocation0], 1856
      %3777 = vst.msk [vmem:[%s3776] sm:$0x7] %vm3775, %v3774
      %s3778 = scalar_lea.vmem [#allocation0], 1861
      %3779 = vst.msk [vmem:[%s3778] sm:$0x38] %vm3775, %v3774
      %s3780 = scalar_lea.vmem [#allocation0], 1866
      %3781 = vst.msk [vmem:[%s3780] sm:$0xc0] %vm3775, %v3774
      %s3782 = scalar_lea.vmem [#allocation1], 704
      %v3783 = vld [vmem:[%s3782] sm:$0xff]
      %vm3784 = vcmask 531456
      %s3785 = scalar_lea.vmem [#allocation0], 1874
      %3786 = vst.msk [vmem:[%s3785] ss:$6 sm:$0x3] %vm3784, %v3783
      %s3787 = scalar_lea.vmem [#allocation0], 1879
      %3788 = vst.msk [vmem:[%s3787] sm:$0xc] %vm3784, %v3783
      %s3789 = scalar_lea.vmem [#allocation0], 1884
      %3790 = vst.msk [vmem:[%s3789] sm:$0x70] %vm3784, %v3783
      %s3791 = scalar_lea.vmem [#allocation0], 1889
      %3792 = vst.msk [vmem:[%s3791] sm:$0x80] %vm3784, %v3783
      %s3793 = scalar_lea.vmem [#allocation1], 712
      %v3794 = vld [vmem:[%s3793] sm:$0xff]
      %vm3795 = vcmask 531456
      %s3796 = scalar_lea.vmem [#allocation0], 1897
      %3797 = vst.msk [vmem:[%s3796] sm:$0x3] %vm3795, %v3794
      %s3798 = scalar_lea.vmem [#allocation0], 1902
      %3799 = vst.msk [vmem:[%s3798] sm:$0x1c] %vm3795, %v3794
      %s3800 = scalar_lea.vmem [#allocation0], 1907
      %3801 = vst.msk [vmem:[%s3800] sm:$0xe0] %vm3795, %v3794
      %s3802 = scalar_lea.vmem [#allocation1], 720
      %v3803 = vld [vmem:[%s3802] sm:$0xff]
      %vm3804 = vcmask 531456
      %s3805 = scalar_lea.vmem [#allocation0], 1920
      %3806 = vst.msk [vmem:[%s3805] sm:$0x7] %vm3804, %v3803
      %s3807 = scalar_lea.vmem [#allocation0], 1925
      %3808 = vst.msk [vmem:[%s3807] sm:$0x38] %vm3804, %v3803
      %s3809 = scalar_lea.vmem [#allocation0], 1930
      %3810 = vst.msk [vmem:[%s3809] sm:$0xc0] %vm3804, %v3803
      %s3811 = scalar_lea.vmem [#allocation1], 728
      %v3812 = vld [vmem:[%s3811] sm:$0xff]
      %vm3813 = vcmask 531456
      %s3814 = scalar_lea.vmem [#allocation0], 1938
      %3815 = vst.msk [vmem:[%s3814] ss:$6 sm:$0x3] %vm3813, %v3812
      %s3816 = scalar_lea.vmem [#allocation0], 1943
      %3817 = vst.msk [vmem:[%s3816] sm:$0xc] %vm3813, %v3812
      %s3818 = scalar_lea.vmem [#allocation0], 1948
      %3819 = vst.msk [vmem:[%s3818] sm:$0x70] %vm3813, %v3812
      %s3820 = scalar_lea.vmem [#allocation0], 1953
      %3821 = vst.msk [vmem:[%s3820] sm:$0x80] %vm3813, %v3812
      %s3822 = scalar_lea.vmem [#allocation1], 736
      %v3823 = vld [vmem:[%s3822] sm:$0xff]
      %vm3824 = vcmask 531456
      %s3825 = scalar_lea.vmem [#allocation0], 1961
      %3826 = vst.msk [vmem:[%s3825] sm:$0x3] %vm3824, %v3823
      %s3827 = scalar_lea.vmem [#allocation0], 1966
      %3828 = vst.msk [vmem:[%s3827] sm:$0x1c] %vm3824, %v3823
      %s3829 = scalar_lea.vmem [#allocation0], 1971
      %3830 = vst.msk [vmem:[%s3829] sm:$0xe0] %vm3824, %v3823
      %s3831 = scalar_lea.vmem [#allocation1], 744
      %v3832 = vld [vmem:[%s3831] sm:$0xff]
      %vm3833 = vcmask 531456
      %s3834 = scalar_lea.vmem [#allocation0], 1984
      %3835 = vst.msk [vmem:[%s3834] sm:$0x7] %vm3833, %v3832
      %s3836 = scalar_lea.vmem [#allocation0], 1989
      %3837 = vst.msk [vmem:[%s3836] sm:$0x38] %vm3833, %v3832
      %s3838 = scalar_lea.vmem [#allocation0], 1994
      %3839 = vst.msk [vmem:[%s3838] sm:$0xc0] %vm3833, %v3832
      %s3840 = scalar_lea.vmem [#allocation1], 752
      %v3841 = vld [vmem:[%s3840] sm:$0xff]
      %vm3842 = vcmask 531456
      %s3843 = scalar_lea.vmem [#allocation0], 2002
      %3844 = vst.msk [vmem:[%s3843] ss:$6 sm:$0x3] %vm3842, %v3841
      %s3845 = scalar_lea.vmem [#allocation0], 2007
      %3846 = vst.msk [vmem:[%s3845] sm:$0xc] %vm3842, %v3841
      %s3847 = scalar_lea.vmem [#allocation0], 2012
      %3848 = vst.msk [vmem:[%s3847] sm:$0x70] %vm3842, %v3841
      %s3849 = scalar_lea.vmem [#allocation0], 2017
      %3850 = vst.msk [vmem:[%s3849] sm:$0x80] %vm3842, %v3841
      %s3851 = scalar_lea.vmem [#allocation1], 760
      %v3852 = vld [vmem:[%s3851] sm:$0xff]
      %vm3853 = vcmask 531456
      %s3854 = scalar_lea.vmem [#allocation0], 2025
      %3855 = vst.msk [vmem:[%s3854] sm:$0x3] %vm3853, %v3852
      %s3856 = scalar_lea.vmem [#allocation0], 2030
      %3857 = vst.msk [vmem:[%s3856] sm:$0x1c] %vm3853, %v3852
      %s3858 = scalar_lea.vmem [#allocation0], 2035
      %3859 = vst.msk [vmem:[%s3858] sm:$0xe0] %vm3853, %v3852
      %s3860 = scalar_lea.vmem [#allocation1], 768
      %v3861 = vld [vmem:[%s3860] sm:$0xff]
      %vm3862 = vcmask 531456
      %s3863 = scalar_lea.vmem [#allocation0], 2048
      %3864 = vst.msk [vmem:[%s3863] sm:$0x7] %vm3862, %v3861
      %s3865 = scalar_lea.vmem [#allocation0], 2053
      %3866 = vst.msk [vmem:[%s3865] sm:$0x38] %vm3862, %v3861
      %s3867 = scalar_lea.vmem [#allocation0], 2058
      %3868 = vst.msk [vmem:[%s3867] sm:$0xc0] %vm3862, %v3861
      %s3869 = scalar_lea.vmem [#allocation1], 776
      %v3870 = vld [vmem:[%s3869] sm:$0xff]
      %vm3871 = vcmask 531456
      %s3872 = scalar_lea.vmem [#allocation0], 2066
      %3873 = vst.msk [vmem:[%s3872] ss:$6 sm:$0x3] %vm3871, %v3870
      %s3874 = scalar_lea.vmem [#allocation0], 2071
      %3875 = vst.msk [vmem:[%s3874] sm:$0xc] %vm3871, %v3870
      %s3876 = scalar_lea.vmem [#allocation0], 2076
      %3877 = vst.msk [vmem:[%s3876] sm:$0x70] %vm3871, %v3870
      %s3878 = scalar_lea.vmem [#allocation0], 2081
      %3879 = vst.msk [vmem:[%s3878] sm:$0x80] %vm3871, %v3870
      %s3880 = scalar_lea.vmem [#allocation1], 784
      %v3881 = vld [vmem:[%s3880] sm:$0xff]
      %vm3882 = vcmask 531456
      %s3883 = scalar_lea.vmem [#allocation0], 2089
      %3884 = vst.msk [vmem:[%s3883] sm:$0x3] %vm3882, %v3881
      %s3885 = scalar_lea.vmem [#allocation0], 2094
      %3886 = vst.msk [vmem:[%s3885] sm:$0x1c] %vm3882, %v3881
      %s3887 = scalar_lea.vmem [#allocation0], 2099
      %3888 = vst.msk [vmem:[%s3887] sm:$0xe0] %vm3882, %v3881
      %s3889 = scalar_lea.vmem [#allocation1], 792
      %v3890 = vld [vmem:[%s3889] sm:$0xff]
      %vm3891 = vcmask 531456
      %s3892 = scalar_lea.vmem [#allocation0], 2112
      %3893 = vst.msk [vmem:[%s3892] sm:$0x7] %vm3891, %v3890
      %s3894 = scalar_lea.vmem [#allocation0], 2117
      %3895 = vst.msk [vmem:[%s3894] sm:$0x38] %vm3891, %v3890
      %s3896 = scalar_lea.vmem [#allocation0], 2122
      %3897 = vst.msk [vmem:[%s3896] sm:$0xc0] %vm3891, %v3890
      %s3898 = scalar_lea.vmem [#allocation1], 800
      %v3899 = vld [vmem:[%s3898] sm:$0xff]
      %vm3900 = vcmask 531456
      %s3901 = scalar_lea.vmem [#allocation0], 2130
      %3902 = vst.msk [vmem:[%s3901] ss:$6 sm:$0x3] %vm3900, %v3899
      %s3903 = scalar_lea.vmem [#allocation0], 2135
      %3904 = vst.msk [vmem:[%s3903] sm:$0xc] %vm3900, %v3899
      %s3905 = scalar_lea.vmem [#allocation0], 2140
      %3906 = vst.msk [vmem:[%s3905] sm:$0x70] %vm3900, %v3899
      %s3907 = scalar_lea.vmem [#allocation0], 2145
      %3908 = vst.msk [vmem:[%s3907] sm:$0x80] %vm3900, %v3899
      %s3909 = scalar_lea.vmem [#allocation1], 808
      %v3910 = vld [vmem:[%s3909] sm:$0xff]
      %vm3911 = vcmask 531456
      %s3912 = scalar_lea.vmem [#allocation0], 2153
      %3913 = vst.msk [vmem:[%s3912] sm:$0x3] %vm3911, %v3910
      %s3914 = scalar_lea.vmem [#allocation0], 2158
      %3915 = vst.msk [vmem:[%s3914] sm:$0x1c] %vm3911, %v3910
      %s3916 = scalar_lea.vmem [#allocation0], 2163
      %3917 = vst.msk [vmem:[%s3916] sm:$0xe0] %vm3911, %v3910
      %s3918 = scalar_lea.vmem [#allocation1], 816
      %v3919 = vld [vmem:[%s3918] sm:$0xff]
      %vm3920 = vcmask 531456
      %s3921 = scalar_lea.vmem [#allocation0], 2176
      %3922 = vst.msk [vmem:[%s3921] sm:$0x7] %vm3920, %v3919
      %s3923 = scalar_lea.vmem [#allocation0], 2181
      %3924 = vst.msk [vmem:[%s3923] sm:$0x38] %vm3920, %v3919
      %s3925 = scalar_lea.vmem [#allocation0], 2186
      %3926 = vst.msk [vmem:[%s3925] sm:$0xc0] %vm3920, %v3919
      %s3927 = scalar_lea.vmem [#allocation1], 824
      %v3928 = vld [vmem:[%s3927] sm:$0xff]
      %vm3929 = vcmask 531456
      %s3930 = scalar_lea.vmem [#allocation0], 2194
      %3931 = vst.msk [vmem:[%s3930] ss:$6 sm:$0x3] %vm3929, %v3928
      %s3932 = scalar_lea.vmem [#allocation0], 2199
      %3933 = vst.msk [vmem:[%s3932] sm:$0xc] %vm3929, %v3928
      %s3934 = scalar_lea.vmem [#allocation0], 2204
      %3935 = vst.msk [vmem:[%s3934] sm:$0x70] %vm3929, %v3928
      %s3936 = scalar_lea.vmem [#allocation0], 2209
      %3937 = vst.msk [vmem:[%s3936] sm:$0x80] %vm3929, %v3928
      %s3938 = scalar_lea.vmem [#allocation1], 832
      %v3939 = vld [vmem:[%s3938] sm:$0xff]
      %vm3940 = vcmask 531456
      %s3941 = scalar_lea.vmem [#allocation0], 2217
      %3942 = vst.msk [vmem:[%s3941] sm:$0x3] %vm3940, %v3939
      %s3943 = scalar_lea.vmem [#allocation0], 2222
      %3944 = vst.msk [vmem:[%s3943] sm:$0x1c] %vm3940, %v3939
      %s3945 = scalar_lea.vmem [#allocation0], 2227
      %3946 = vst.msk [vmem:[%s3945] sm:$0xe0] %vm3940, %v3939
      %s3947 = scalar_lea.vmem [#allocation1], 840
      %v3948 = vld [vmem:[%s3947] sm:$0xff]
      %vm3949 = vcmask 531456
      %s3950 = scalar_lea.vmem [#allocation0], 2240
      %3951 = vst.msk [vmem:[%s3950] sm:$0x7] %vm3949, %v3948
      %s3952 = scalar_lea.vmem [#allocation0], 2245
      %3953 = vst.msk [vmem:[%s3952] sm:$0x38] %vm3949, %v3948
      %s3954 = scalar_lea.vmem [#allocation0], 2250
      %3955 = vst.msk [vmem:[%s3954] sm:$0xc0] %vm3949, %v3948
      %s3956 = scalar_lea.vmem [#allocation1], 848
      %v3957 = vld [vmem:[%s3956] sm:$0xff]
      %vm3958 = vcmask 531456
      %s3959 = scalar_lea.vmem [#allocation0], 2258
      %3960 = vst.msk [vmem:[%s3959] ss:$6 sm:$0x3] %vm3958, %v3957
      %s3961 = scalar_lea.vmem [#allocation0], 2263
      %3962 = vst.msk [vmem:[%s3961] sm:$0xc] %vm3958, %v3957
      %s3963 = scalar_lea.vmem [#allocation0], 2268
      %3964 = vst.msk [vmem:[%s3963] sm:$0x70] %vm3958, %v3957
      %s3965 = scalar_lea.vmem [#allocation0], 2273
      %3966 = vst.msk [vmem:[%s3965] sm:$0x80] %vm3958, %v3957
      %s3967 = scalar_lea.vmem [#allocation1], 856
      %v3968 = vld [vmem:[%s3967] sm:$0xff]
      %vm3969 = vcmask 531456
      %s3970 = scalar_lea.vmem [#allocation0], 2281
      %3971 = vst.msk [vmem:[%s3970] sm:$0x3] %vm3969, %v3968
      %s3972 = scalar_lea.vmem [#allocation0], 2286
      %3973 = vst.msk [vmem:[%s3972] sm:$0x1c] %vm3969, %v3968
      %s3974 = scalar_lea.vmem [#allocation0], 2291
      %3975 = vst.msk [vmem:[%s3974] sm:$0xe0] %vm3969, %v3968
      %s3976 = scalar_lea.vmem [#allocation1], 864
      %v3977 = vld [vmem:[%s3976] sm:$0xff]
      %vm3978 = vcmask 531456
      %s3979 = scalar_lea.vmem [#allocation0], 2304
      %3980 = vst.msk [vmem:[%s3979] sm:$0x7] %vm3978, %v3977
      %s3981 = scalar_lea.vmem [#allocation0], 2309
      %3982 = vst.msk [vmem:[%s3981] sm:$0x38] %vm3978, %v3977
      %s3983 = scalar_lea.vmem [#allocation0], 2314
      %3984 = vst.msk [vmem:[%s3983] sm:$0xc0] %vm3978, %v3977
      %s3985 = scalar_lea.vmem [#allocation1], 872
      %v3986 = vld [vmem:[%s3985] sm:$0xff]
      %vm3987 = vcmask 531456
      %s3988 = scalar_lea.vmem [#allocation0], 2322
      %3989 = vst.msk [vmem:[%s3988] ss:$6 sm:$0x3] %vm3987, %v3986
      %s3990 = scalar_lea.vmem [#allocation0], 2327
      %3991 = vst.msk [vmem:[%s3990] sm:$0xc] %vm3987, %v3986
      %s3992 = scalar_lea.vmem [#allocation0], 2332
      %3993 = vst.msk [vmem:[%s3992] sm:$0x70] %vm3987, %v3986
      %s3994 = scalar_lea.vmem [#allocation0], 2337
      %3995 = vst.msk [vmem:[%s3994] sm:$0x80] %vm3987, %v3986
      %s3996 = scalar_lea.vmem [#allocation1], 880
      %v3997 = vld [vmem:[%s3996] sm:$0xff]
      %vm3998 = vcmask 531456
      %s3999 = scalar_lea.vmem [#allocation0], 2345
      %4000 = vst.msk [vmem:[%s3999] sm:$0x3] %vm3998, %v3997
      %s4001 = scalar_lea.vmem [#allocation0], 2350
      %4002 = vst.msk [vmem:[%s4001] sm:$0x1c] %vm3998, %v3997
      %s4003 = scalar_lea.vmem [#allocation0], 2355
      %4004 = vst.msk [vmem:[%s4003] sm:$0xe0] %vm3998, %v3997
      %s4005 = scalar_lea.vmem [#allocation1], 888
      %v4006 = vld [vmem:[%s4005] sm:$0xff]
      %vm4007 = vcmask 531456
      %s4008 = scalar_lea.vmem [#allocation0], 2368
      %4009 = vst.msk [vmem:[%s4008] sm:$0x7] %vm4007, %v4006
      %s4010 = scalar_lea.vmem [#allocation0], 2373
      %4011 = vst.msk [vmem:[%s4010] sm:$0x38] %vm4007, %v4006
      %s4012 = scalar_lea.vmem [#allocation0], 2378
      %4013 = vst.msk [vmem:[%s4012] sm:$0xc0] %vm4007, %v4006
      %s4014 = scalar_lea.vmem [#allocation1], 896
      %v4015 = vld [vmem:[%s4014] sm:$0xff]
      %vm4016 = vcmask 531456
      %s4017 = scalar_lea.vmem [#allocation0], 2386
      %4018 = vst.msk [vmem:[%s4017] ss:$6 sm:$0x3] %vm4016, %v4015
      %s4019 = scalar_lea.vmem [#allocation0], 2391
      %4020 = vst.msk [vmem:[%s4019] sm:$0xc] %vm4016, %v4015
      %s4021 = scalar_lea.vmem [#allocation0], 2396
      %4022 = vst.msk [vmem:[%s4021] sm:$0x70] %vm4016, %v4015
      %s4023 = scalar_lea.vmem [#allocation0], 2401
      %4024 = vst.msk [vmem:[%s4023] sm:$0x80] %vm4016, %v4015
      %s4025 = scalar_lea.vmem [#allocation1], 904
      %v4026 = vld [vmem:[%s4025] sm:$0xff]
      %vm4027 = vcmask 531456
      %s4028 = scalar_lea.vmem [#allocation0], 2409
      %4029 = vst.msk [vmem:[%s4028] sm:$0x3] %vm4027, %v4026
      %s4030 = scalar_lea.vmem [#allocation0], 2414
      %4031 = vst.msk [vmem:[%s4030] sm:$0x1c] %vm4027, %v4026
      %s4032 = scalar_lea.vmem [#allocation0], 2419
      %4033 = vst.msk [vmem:[%s4032] sm:$0xe0] %vm4027, %v4026
      %s4034 = scalar_lea.vmem [#allocation1], 912
      %v4035 = vld [vmem:[%s4034] sm:$0xff]
      %vm4036 = vcmask 531456
      %s4037 = scalar_lea.vmem [#allocation0], 2432
      %4038 = vst.msk [vmem:[%s4037] sm:$0x7] %vm4036, %v4035
      %s4039 = scalar_lea.vmem [#allocation0], 2437
      %4040 = vst.msk [vmem:[%s4039] sm:$0x38] %vm4036, %v4035
      %s4041 = scalar_lea.vmem [#allocation0], 2442
      %4042 = vst.msk [vmem:[%s4041] sm:$0xc0] %vm4036, %v4035
      %s4043 = scalar_lea.vmem [#allocation1], 920
      %v4044 = vld [vmem:[%s4043] sm:$0xff]
      %vm4045 = vcmask 531456
      %s4046 = scalar_lea.vmem [#allocation0], 2450
      %4047 = vst.msk [vmem:[%s4046] ss:$6 sm:$0x3] %vm4045, %v4044
      %s4048 = scalar_lea.vmem [#allocation0], 2455
      %4049 = vst.msk [vmem:[%s4048] sm:$0xc] %vm4045, %v4044
      %s4050 = scalar_lea.vmem [#allocation0], 2460
      %4051 = vst.msk [vmem:[%s4050] sm:$0x70] %vm4045, %v4044
      %s4052 = scalar_lea.vmem [#allocation0], 2465
      %4053 = vst.msk [vmem:[%s4052] sm:$0x80] %vm4045, %v4044
      %s4054 = scalar_lea.vmem [#allocation1], 928
      %v4055 = vld [vmem:[%s4054] sm:$0xff]
      %vm4056 = vcmask 531456
      %s4057 = scalar_lea.vmem [#allocation0], 2473
      %4058 = vst.msk [vmem:[%s4057] sm:$0x3] %vm4056, %v4055
      %s4059 = scalar_lea.vmem [#allocation0], 2478
      %4060 = vst.msk [vmem:[%s4059] sm:$0x1c] %vm4056, %v4055
      %s4061 = scalar_lea.vmem [#allocation0], 2483
      %4062 = vst.msk [vmem:[%s4061] sm:$0xe0] %vm4056, %v4055
      %s4063 = scalar_lea.vmem [#allocation1], 936
      %v4064 = vld [vmem:[%s4063] sm:$0xff]
      %vm4065 = vcmask 531456
      %s4066 = scalar_lea.vmem [#allocation0], 2496
      %4067 = vst.msk [vmem:[%s4066] sm:$0x7] %vm4065, %v4064
      %s4068 = scalar_lea.vmem [#allocation0], 2501
      %4069 = vst.msk [vmem:[%s4068] sm:$0x38] %vm4065, %v4064
      %s4070 = scalar_lea.vmem [#allocation0], 2506
      %4071 = vst.msk [vmem:[%s4070] sm:$0xc0] %vm4065, %v4064
      %s4072 = scalar_lea.vmem [#allocation1], 944
      %v4073 = vld [vmem:[%s4072] sm:$0xff]
      %vm4074 = vcmask 531456
      %s4075 = scalar_lea.vmem [#allocation0], 2514
      %4076 = vst.msk [vmem:[%s4075] ss:$6 sm:$0x3] %vm4074, %v4073
      %s4077 = scalar_lea.vmem [#allocation0], 2519
      %4078 = vst.msk [vmem:[%s4077] sm:$0xc] %vm4074, %v4073
      %s4079 = scalar_lea.vmem [#allocation0], 2524
      %4080 = vst.msk [vmem:[%s4079] sm:$0x70] %vm4074, %v4073
      %s4081 = scalar_lea.vmem [#allocation0], 2529
      %4082 = vst.msk [vmem:[%s4081] sm:$0x80] %vm4074, %v4073
      %s4083 = scalar_lea.vmem [#allocation1], 952
      %v4084 = vld [vmem:[%s4083] sm:$0xff]
      %vm4085 = vcmask 531456
      %s4086 = scalar_lea.vmem [#allocation0], 2537
      %4087 = vst.msk [vmem:[%s4086] sm:$0x3] %vm4085, %v4084
      %s4088 = scalar_lea.vmem [#allocation0], 2542
      %4089 = vst.msk [vmem:[%s4088] sm:$0x1c] %vm4085, %v4084
      %s4090 = scalar_lea.vmem [#allocation0], 2547
      %4091 = vst.msk [vmem:[%s4090] sm:$0xe0] %vm4085, %v4084
      %s4092 = scalar_lea.vmem [#allocation1], 960
      %v4093 = vld [vmem:[%s4092] sm:$0xff]
      %vm4094 = vcmask 531456
      %s4095 = scalar_lea.vmem [#allocation0], 2560
      %4096 = vst.msk [vmem:[%s4095] sm:$0x7] %vm4094, %v4093
      %s4097 = scalar_lea.vmem [#allocation0], 2565
      %4098 = vst.msk [vmem:[%s4097] sm:$0x38] %vm4094, %v4093
      %s4099 = scalar_lea.vmem [#allocation0], 2570
      %4100 = vst.msk [vmem:[%s4099] sm:$0xc0] %vm4094, %v4093
      %s4101 = scalar_lea.vmem [#allocation1], 968
      %v4102 = vld [vmem:[%s4101] sm:$0xff]
      %vm4103 = vcmask 531456
      %s4104 = scalar_lea.vmem [#allocation0], 2578
      %4105 = vst.msk [vmem:[%s4104] ss:$6 sm:$0x3] %vm4103, %v4102
      %s4106 = scalar_lea.vmem [#allocation0], 2583
      %4107 = vst.msk [vmem:[%s4106] sm:$0xc] %vm4103, %v4102
      %s4108 = scalar_lea.vmem [#allocation0], 2588
      %4109 = vst.msk [vmem:[%s4108] sm:$0x70] %vm4103, %v4102
      %s4110 = scalar_lea.vmem [#allocation0], 2593
      %4111 = vst.msk [vmem:[%s4110] sm:$0x80] %vm4103, %v4102
      %s4112 = scalar_lea.vmem [#allocation1], 976
      %v4113 = vld [vmem:[%s4112] sm:$0xff]
      %vm4114 = vcmask 531456
      %s4115 = scalar_lea.vmem [#allocation0], 2601
      %4116 = vst.msk [vmem:[%s4115] sm:$0x3] %vm4114, %v4113
      %s4117 = scalar_lea.vmem [#allocation0], 2606
      %4118 = vst.msk [vmem:[%s4117] sm:$0x1c] %vm4114, %v4113
      %s4119 = scalar_lea.vmem [#allocation0], 2611
      %4120 = vst.msk [vmem:[%s4119] sm:$0xe0] %vm4114, %v4113
      %s4121 = scalar_lea.vmem [#allocation1], 984
      %v4122 = vld [vmem:[%s4121] sm:$0xff]
      %vm4123 = vcmask 531456
      %s4124 = scalar_lea.vmem [#allocation0], 2624
      %4125 = vst.msk [vmem:[%s4124] sm:$0x7] %vm4123, %v4122
      %s4126 = scalar_lea.vmem [#allocation0], 2629
      %4127 = vst.msk [vmem:[%s4126] sm:$0x38] %vm4123, %v4122
      %s4128 = scalar_lea.vmem [#allocation0], 2634
      %4129 = vst.msk [vmem:[%s4128] sm:$0xc0] %vm4123, %v4122
      %s4130 = scalar_lea.vmem [#allocation1], 992
      %v4131 = vld [vmem:[%s4130] sm:$0xff]
      %vm4132 = vcmask 531456
      %s4133 = scalar_lea.vmem [#allocation0], 2642
      %4134 = vst.msk [vmem:[%s4133] ss:$6 sm:$0x3] %vm4132, %v4131
      %s4135 = scalar_lea.vmem [#allocation0], 2647
      %4136 = vst.msk [vmem:[%s4135] sm:$0xc] %vm4132, %v4131
      %s4137 = scalar_lea.vmem [#allocation0], 2652
      %4138 = vst.msk [vmem:[%s4137] sm:$0x70] %vm4132, %v4131
      %s4139 = scalar_lea.vmem [#allocation0], 2657
      %4140 = vst.msk [vmem:[%s4139] sm:$0x80] %vm4132, %v4131
      %s4141 = scalar_lea.vmem [#allocation1], 1000
      %v4142 = vld [vmem:[%s4141] sm:$0xff]
      %vm4143 = vcmask 531456
      %s4144 = scalar_lea.vmem [#allocation0], 2665
      %4145 = vst.msk [vmem:[%s4144] sm:$0x3] %vm4143, %v4142
      %s4146 = scalar_lea.vmem [#allocation0], 2670
      %4147 = vst.msk [vmem:[%s4146] sm:$0x1c] %vm4143, %v4142
      %s4148 = scalar_lea.vmem [#allocation0], 2675
      %4149 = vst.msk [vmem:[%s4148] sm:$0xe0] %vm4143, %v4142
      %s4150 = scalar_lea.vmem [#allocation1], 1008
      %v4151 = vld [vmem:[%s4150] sm:$0xff]
      %vm4152 = vcmask 531456
      %s4153 = scalar_lea.vmem [#allocation0], 2688
      %4154 = vst.msk [vmem:[%s4153] sm:$0x7] %vm4152, %v4151
      %s4155 = scalar_lea.vmem [#allocation0], 2693
      %4156 = vst.msk [vmem:[%s4155] sm:$0x38] %vm4152, %v4151
      %s4157 = scalar_lea.vmem [#allocation0], 2698
      %4158 = vst.msk [vmem:[%s4157] sm:$0xc0] %vm4152, %v4151
      %s4159 = scalar_lea.vmem [#allocation1], 1016
      %v4160 = vld [vmem:[%s4159] sm:$0xff]
      %vm4161 = vcmask 531456
      %s4162 = scalar_lea.vmem [#allocation0], 2706
      %4163 = vst.msk [vmem:[%s4162] ss:$6 sm:$0x3] %vm4161, %v4160
      %s4164 = scalar_lea.vmem [#allocation0], 2711
      %4165 = vst.msk [vmem:[%s4164] sm:$0xc] %vm4161, %v4160
      %s4166 = scalar_lea.vmem [#allocation0], 2716
      %4167 = vst.msk [vmem:[%s4166] sm:$0x70] %vm4161, %v4160
      %s4168 = scalar_lea.vmem [#allocation0], 2721
      %4169 = vst.msk [vmem:[%s4168] sm:$0x80] %vm4161, %v4160
      %s4170 = scalar_lea.vmem [#allocation1], 1024
      %v4171 = vld [vmem:[%s4170] sm:$0xff]
      %vm4172 = vcmask 531456
      %s4173 = scalar_lea.vmem [#allocation0], 2729
      %4174 = vst.msk [vmem:[%s4173] sm:$0x3] %vm4172, %v4171
      %s4175 = scalar_lea.vmem [#allocation0], 2734
      %4176 = vst.msk [vmem:[%s4175] sm:$0x1c] %vm4172, %v4171
      %s4177 = scalar_lea.vmem [#allocation0], 2739
      %4178 = vst.msk [vmem:[%s4177] sm:$0xe0] %vm4172, %v4171
      %s4179 = scalar_lea.vmem [#allocation1], 1032
      %v4180 = vld [vmem:[%s4179] sm:$0xff]
      %vm4181 = vcmask 531456
      %s4182 = scalar_lea.vmem [#allocation0], 2752
      %4183 = vst.msk [vmem:[%s4182] sm:$0x7] %vm4181, %v4180
      %s4184 = scalar_lea.vmem [#allocation0], 2757
      %4185 = vst.msk [vmem:[%s4184] sm:$0x38] %vm4181, %v4180
      %s4186 = scalar_lea.vmem [#allocation0], 2762
      %4187 = vst.msk [vmem:[%s4186] sm:$0xc0] %vm4181, %v4180
      %s4188 = scalar_lea.vmem [#allocation1], 1040
      %v4189 = vld [vmem:[%s4188] sm:$0xff]
      %vm4190 = vcmask 531456
      %s4191 = scalar_lea.vmem [#allocation0], 2770
      %4192 = vst.msk [vmem:[%s4191] ss:$6 sm:$0x3] %vm4190, %v4189
      %s4193 = scalar_lea.vmem [#allocation0], 2775
      %4194 = vst.msk [vmem:[%s4193] sm:$0xc] %vm4190, %v4189
      %s4195 = scalar_lea.vmem [#allocation0], 2780
      %4196 = vst.msk [vmem:[%s4195] sm:$0x70] %vm4190, %v4189
      %s4197 = scalar_lea.vmem [#allocation0], 2785
      %4198 = vst.msk [vmem:[%s4197] sm:$0x80] %vm4190, %v4189
      %s4199 = scalar_lea.vmem [#allocation1], 1048
      %v4200 = vld [vmem:[%s4199] sm:$0xff]
      %vm4201 = vcmask 531456
      %s4202 = scalar_lea.vmem [#allocation0], 2793
      %4203 = vst.msk [vmem:[%s4202] sm:$0x3] %vm4201, %v4200
      %s4204 = scalar_lea.vmem [#allocation0], 2798
      %4205 = vst.msk [vmem:[%s4204] sm:$0x1c] %vm4201, %v4200
      %s4206 = scalar_lea.vmem [#allocation0], 2803
      %4207 = vst.msk [vmem:[%s4206] sm:$0xe0] %vm4201, %v4200
      %s4208 = scalar_lea.vmem [#allocation1], 1056
      %v4209 = vld [vmem:[%s4208] sm:$0xff]
      %vm4210 = vcmask 531456
      %s4211 = scalar_lea.vmem [#allocation0], 2816
      %4212 = vst.msk [vmem:[%s4211] sm:$0x7] %vm4210, %v4209
      %s4213 = scalar_lea.vmem [#allocation0], 2821
      %4214 = vst.msk [vmem:[%s4213] sm:$0x38] %vm4210, %v4209
      %s4215 = scalar_lea.vmem [#allocation0], 2826
      %4216 = vst.msk [vmem:[%s4215] sm:$0xc0] %vm4210, %v4209
      %s4217 = scalar_lea.vmem [#allocation1], 1064
      %v4218 = vld [vmem:[%s4217] sm:$0xff]
      %vm4219 = vcmask 531456
      %s4220 = scalar_lea.vmem [#allocation0], 2834
      %4221 = vst.msk [vmem:[%s4220] ss:$6 sm:$0x3] %vm4219, %v4218
      %s4222 = scalar_lea.vmem [#allocation0], 2839
      %4223 = vst.msk [vmem:[%s4222] sm:$0xc] %vm4219, %v4218
      %s4224 = scalar_lea.vmem [#allocation0], 2844
      %4225 = vst.msk [vmem:[%s4224] sm:$0x70] %vm4219, %v4218
      %s4226 = scalar_lea.vmem [#allocation0], 2849
      %4227 = vst.msk [vmem:[%s4226] sm:$0x80] %vm4219, %v4218
      %s4228 = scalar_lea.vmem [#allocation1], 1072
      %v4229 = vld [vmem:[%s4228] sm:$0xff]
      %vm4230 = vcmask 531456
      %s4231 = scalar_lea.vmem [#allocation0], 2857
      %4232 = vst.msk [vmem:[%s4231] sm:$0x3] %vm4230, %v4229
      %s4233 = scalar_lea.vmem [#allocation0], 2862
      %4234 = vst.msk [vmem:[%s4233] sm:$0x1c] %vm4230, %v4229
      %s4235 = scalar_lea.vmem [#allocation0], 2867
      %4236 = vst.msk [vmem:[%s4235] sm:$0xe0] %vm4230, %v4229
      %s4237 = scalar_lea.vmem [#allocation1], 1080
      %v4238 = vld [vmem:[%s4237] sm:$0xff]
      %vm4239 = vcmask 531456
      %s4240 = scalar_lea.vmem [#allocation0], 2880
      %4241 = vst.msk [vmem:[%s4240] sm:$0x7] %vm4239, %v4238
      %s4242 = scalar_lea.vmem [#allocation0], 2885
      %4243 = vst.msk [vmem:[%s4242] sm:$0x38] %vm4239, %v4238
      %s4244 = scalar_lea.vmem [#allocation0], 2890
      %4245 = vst.msk [vmem:[%s4244] sm:$0xc0] %vm4239, %v4238
      %s4246 = scalar_lea.vmem [#allocation1], 1088
      %v4247 = vld [vmem:[%s4246] sm:$0xff]
      %vm4248 = vcmask 531456
      %s4249 = scalar_lea.vmem [#allocation0], 2898
      %4250 = vst.msk [vmem:[%s4249] ss:$6 sm:$0x3] %vm4248, %v4247
      %s4251 = scalar_lea.vmem [#allocation0], 2903
      %4252 = vst.msk [vmem:[%s4251] sm:$0xc] %vm4248, %v4247
      %s4253 = scalar_lea.vmem [#allocation0], 2908
      %4254 = vst.msk [vmem:[%s4253] sm:$0x70] %vm4248, %v4247
      %s4255 = scalar_lea.vmem [#allocation0], 2913
      %4256 = vst.msk [vmem:[%s4255] sm:$0x80] %vm4248, %v4247
      %s4257 = scalar_lea.vmem [#allocation1], 1096
      %v4258 = vld [vmem:[%s4257] sm:$0xff]
      %vm4259 = vcmask 531456
      %s4260 = scalar_lea.vmem [#allocation0], 2921
      %4261 = vst.msk [vmem:[%s4260] sm:$0x3] %vm4259, %v4258
      %s4262 = scalar_lea.vmem [#allocation0], 2926
      %4263 = vst.msk [vmem:[%s4262] sm:$0x1c] %vm4259, %v4258
      %s4264 = scalar_lea.vmem [#allocation0], 2931
      %4265 = vst.msk [vmem:[%s4264] sm:$0xe0] %vm4259, %v4258
      %s4266 = scalar_lea.vmem [#allocation1], 1104
      %v4267 = vld [vmem:[%s4266] sm:$0xff]
      %vm4268 = vcmask 531456
      %s4269 = scalar_lea.vmem [#allocation0], 2944
      %4270 = vst.msk [vmem:[%s4269] sm:$0x7] %vm4268, %v4267
      %s4271 = scalar_lea.vmem [#allocation0], 2949
      %4272 = vst.msk [vmem:[%s4271] sm:$0x38] %vm4268, %v4267
      %s4273 = scalar_lea.vmem [#allocation0], 2954
      %4274 = vst.msk [vmem:[%s4273] sm:$0xc0] %vm4268, %v4267
      %s4275 = scalar_lea.vmem [#allocation1], 1112
      %v4276 = vld [vmem:[%s4275] sm:$0xff]
      %vm4277 = vcmask 531456
      %s4278 = scalar_lea.vmem [#allocation0], 2962
      %4279 = vst.msk [vmem:[%s4278] ss:$6 sm:$0x3] %vm4277, %v4276
      %s4280 = scalar_lea.vmem [#allocation0], 2967
      %4281 = vst.msk [vmem:[%s4280] sm:$0xc] %vm4277, %v4276
      %s4282 = scalar_lea.vmem [#allocation0], 2972
      %4283 = vst.msk [vmem:[%s4282] sm:$0x70] %vm4277, %v4276
      %s4284 = scalar_lea.vmem [#allocation0], 2977
      %4285 = vst.msk [vmem:[%s4284] sm:$0x80] %vm4277, %v4276
      %s4286 = scalar_lea.vmem [#allocation1], 1120
      %v4287 = vld [vmem:[%s4286] sm:$0xff]
      %vm4288 = vcmask 531456
      %s4289 = scalar_lea.vmem [#allocation0], 2985
      %4290 = vst.msk [vmem:[%s4289] sm:$0x3] %vm4288, %v4287
      %s4291 = scalar_lea.vmem [#allocation0], 2990
      %4292 = vst.msk [vmem:[%s4291] sm:$0x1c] %vm4288, %v4287
      %s4293 = scalar_lea.vmem [#allocation0], 2995
      %4294 = vst.msk [vmem:[%s4293] sm:$0xe0] %vm4288, %v4287
      %s4295 = scalar_lea.vmem [#allocation1], 1128
      %v4296 = vld [vmem:[%s4295] sm:$0xff]
      %vm4297 = vcmask 531456
      %s4298 = scalar_lea.vmem [#allocation0], 3008
      %4299 = vst.msk [vmem:[%s4298] sm:$0x7] %vm4297, %v4296
      %s4300 = scalar_lea.vmem [#allocation0], 3013
      %4301 = vst.msk [vmem:[%s4300] sm:$0x38] %vm4297, %v4296
      %s4302 = scalar_lea.vmem [#allocation0], 3018
      %4303 = vst.msk [vmem:[%s4302] sm:$0xc0] %vm4297, %v4296
      %s4304 = scalar_lea.vmem [#allocation1], 1136
      %v4305 = vld [vmem:[%s4304] sm:$0xff]
      %vm4306 = vcmask 531456
      %s4307 = scalar_lea.vmem [#allocation0], 3026
      %4308 = vst.msk [vmem:[%s4307] ss:$6 sm:$0x3] %vm4306, %v4305
      %s4309 = scalar_lea.vmem [#allocation0], 3031
      %4310 = vst.msk [vmem:[%s4309] sm:$0xc] %vm4306, %v4305
      %s4311 = scalar_lea.vmem [#allocation0], 3036
      %4312 = vst.msk [vmem:[%s4311] sm:$0x70] %vm4306, %v4305
      %s4313 = scalar_lea.vmem [#allocation0], 3041
      %4314 = vst.msk [vmem:[%s4313] sm:$0x80] %vm4306, %v4305
      %s4315 = scalar_lea.vmem [#allocation1], 1144
      %v4316 = vld [vmem:[%s4315] sm:$0xff]
      %vm4317 = vcmask 531456
      %s4318 = scalar_lea.vmem [#allocation0], 3049
      %4319 = vst.msk [vmem:[%s4318] sm:$0x3] %vm4317, %v4316
      %s4320 = scalar_lea.vmem [#allocation0], 3054
      %4321 = vst.msk [vmem:[%s4320] sm:$0x1c] %vm4317, %v4316
      %s4322 = scalar_lea.vmem [#allocation0], 3059
      %4323 = vst.msk [vmem:[%s4322] sm:$0xe0] %vm4317, %v4316
      %s4324 = scalar_lea.vmem [#allocation1], 1152
      %v4325 = vld [vmem:[%s4324] sm:$0xff]
      %vm4326 = vcmask 531456
      %s4327 = scalar_lea.vmem [#allocation0], 3072
      %4328 = vst.msk [vmem:[%s4327] sm:$0x7] %vm4326, %v4325
      %s4329 = scalar_lea.vmem [#allocation0], 3077
      %4330 = vst.msk [vmem:[%s4329] sm:$0x38] %vm4326, %v4325
      %s4331 = scalar_lea.vmem [#allocation0], 3082
      %4332 = vst.msk [vmem:[%s4331] sm:$0xc0] %vm4326, %v4325
      %s4333 = scalar_lea.vmem [#allocation1], 1160
      %v4334 = vld [vmem:[%s4333] sm:$0xff]
      %vm4335 = vcmask 531456
      %s4336 = scalar_lea.vmem [#allocation0], 3090
      %4337 = vst.msk [vmem:[%s4336] ss:$6 sm:$0x3] %vm4335, %v4334
      %s4338 = scalar_lea.vmem [#allocation0], 3095
      %4339 = vst.msk [vmem:[%s4338] sm:$0xc] %vm4335, %v4334
      %s4340 = scalar_lea.vmem [#allocation0], 3100
      %4341 = vst.msk [vmem:[%s4340] sm:$0x70] %vm4335, %v4334
      %s4342 = scalar_lea.vmem [#allocation0], 3105
      %4343 = vst.msk [vmem:[%s4342] sm:$0x80] %vm4335, %v4334
      %s4344 = scalar_lea.vmem [#allocation1], 1168
      %v4345 = vld [vmem:[%s4344] sm:$0xff]
      %vm4346 = vcmask 531456
      %s4347 = scalar_lea.vmem [#allocation0], 3113
      %4348 = vst.msk [vmem:[%s4347] sm:$0x3] %vm4346, %v4345
      %s4349 = scalar_lea.vmem [#allocation0], 3118
      %4350 = vst.msk [vmem:[%s4349] sm:$0x1c] %vm4346, %v4345
      %s4351 = scalar_lea.vmem [#allocation0], 3123
      %4352 = vst.msk [vmem:[%s4351] sm:$0xe0] %vm4346, %v4345
      %s4353 = scalar_lea.vmem [#allocation1], 1176
      %v4354 = vld [vmem:[%s4353] sm:$0xff]
      %vm4355 = vcmask 531456
      %s4356 = scalar_lea.vmem [#allocation0], 3136
      %4357 = vst.msk [vmem:[%s4356] sm:$0x7] %vm4355, %v4354
      %s4358 = scalar_lea.vmem [#allocation0], 3141
      %4359 = vst.msk [vmem:[%s4358] sm:$0x38] %vm4355, %v4354
      %s4360 = scalar_lea.vmem [#allocation0], 3146
      %4361 = vst.msk [vmem:[%s4360] sm:$0xc0] %vm4355, %v4354
      %s4362 = scalar_lea.vmem [#allocation1], 1184
      %v4363 = vld [vmem:[%s4362] sm:$0xff]
      %vm4364 = vcmask 531456
      %s4365 = scalar_lea.vmem [#allocation0], 3154
      %4366 = vst.msk [vmem:[%s4365] ss:$6 sm:$0x3] %vm4364, %v4363
      %s4367 = scalar_lea.vmem [#allocation0], 3159
      %4368 = vst.msk [vmem:[%s4367] sm:$0xc] %vm4364, %v4363
      %s4369 = scalar_lea.vmem [#allocation0], 3164
      %4370 = vst.msk [vmem:[%s4369] sm:$0x70] %vm4364, %v4363
      %s4371 = scalar_lea.vmem [#allocation0], 3169
      %4372 = vst.msk [vmem:[%s4371] sm:$0x80] %vm4364, %v4363
      %s4373 = scalar_lea.vmem [#allocation1], 1192
      %v4374 = vld [vmem:[%s4373] sm:$0xff]
      %vm4375 = vcmask 531456
      %s4376 = scalar_lea.vmem [#allocation0], 3177
      %4377 = vst.msk [vmem:[%s4376] sm:$0x3] %vm4375, %v4374
      %s4378 = scalar_lea.vmem [#allocation0], 3182
      %4379 = vst.msk [vmem:[%s4378] sm:$0x1c] %vm4375, %v4374
      %s4380 = scalar_lea.vmem [#allocation0], 3187
      %4381 = vst.msk [vmem:[%s4380] sm:$0xe0] %vm4375, %v4374
      %s4382 = scalar_lea.vmem [#allocation1], 1200
      %v4383 = vld [vmem:[%s4382] sm:$0xff]
      %vm4384 = vcmask 531456
      %s4385 = scalar_lea.vmem [#allocation0], 3200
      %4386 = vst.msk [vmem:[%s4385] sm:$0x7] %vm4384, %v4383
      %s4387 = scalar_lea.vmem [#allocation0], 3205
      %4388 = vst.msk [vmem:[%s4387] sm:$0x38] %vm4384, %v4383
      %s4389 = scalar_lea.vmem [#allocation0], 3210
      %4390 = vst.msk [vmem:[%s4389] sm:$0xc0] %vm4384, %v4383
      %s4391 = scalar_lea.vmem [#allocation1], 1208
      %v4392 = vld [vmem:[%s4391] sm:$0xff]
      %vm4393 = vcmask 531456
      %s4394 = scalar_lea.vmem [#allocation0], 3218
      %4395 = vst.msk [vmem:[%s4394] ss:$6 sm:$0x3] %vm4393, %v4392
      %s4396 = scalar_lea.vmem [#allocation0], 3223
      %4397 = vst.msk [vmem:[%s4396] sm:$0xc] %vm4393, %v4392
      %s4398 = scalar_lea.vmem [#allocation0], 3228
      %4399 = vst.msk [vmem:[%s4398] sm:$0x70] %vm4393, %v4392
      %s4400 = scalar_lea.vmem [#allocation0], 3233
      %4401 = vst.msk [vmem:[%s4400] sm:$0x80] %vm4393, %v4392
      %s4402 = scalar_lea.vmem [#allocation1], 1216
      %v4403 = vld [vmem:[%s4402] sm:$0xff]
      %vm4404 = vcmask 531456
      %s4405 = scalar_lea.vmem [#allocation0], 3241
      %4406 = vst.msk [vmem:[%s4405] sm:$0x3] %vm4404, %v4403
      %s4407 = scalar_lea.vmem [#allocation0], 3246
      %4408 = vst.msk [vmem:[%s4407] sm:$0x1c] %vm4404, %v4403
      %s4409 = scalar_lea.vmem [#allocation0], 3251
      %4410 = vst.msk [vmem:[%s4409] sm:$0xe0] %vm4404, %v4403
      %s4411 = scalar_lea.vmem [#allocation1], 1224
      %v4412 = vld [vmem:[%s4411] sm:$0xff]
      %vm4413 = vcmask 531456
      %s4414 = scalar_lea.vmem [#allocation0], 3264
      %4415 = vst.msk [vmem:[%s4414] sm:$0x7] %vm4413, %v4412
      %s4416 = scalar_lea.vmem [#allocation0], 3269
      %4417 = vst.msk [vmem:[%s4416] sm:$0x38] %vm4413, %v4412
      %s4418 = scalar_lea.vmem [#allocation0], 3274
      %4419 = vst.msk [vmem:[%s4418] sm:$0xc0] %vm4413, %v4412
      %s4420 = scalar_lea.vmem [#allocation1], 1232
      %v4421 = vld [vmem:[%s4420] sm:$0xff]
      %vm4422 = vcmask 531456
      %s4423 = scalar_lea.vmem [#allocation0], 3282
      %4424 = vst.msk [vmem:[%s4423] ss:$6 sm:$0x3] %vm4422, %v4421
      %s4425 = scalar_lea.vmem [#allocation0], 3287
      %4426 = vst.msk [vmem:[%s4425] sm:$0xc] %vm4422, %v4421
      %s4427 = scalar_lea.vmem [#allocation0], 3292
      %4428 = vst.msk [vmem:[%s4427] sm:$0x70] %vm4422, %v4421
      %s4429 = scalar_lea.vmem [#allocation0], 3297
      %4430 = vst.msk [vmem:[%s4429] sm:$0x80] %vm4422, %v4421
      %s4431 = scalar_lea.vmem [#allocation1], 1240
      %v4432 = vld [vmem:[%s4431] sm:$0xff]
      %vm4433 = vcmask 531456
      %s4434 = scalar_lea.vmem [#allocation0], 3305
      %4435 = vst.msk [vmem:[%s4434] sm:$0x3] %vm4433, %v4432
      %s4436 = scalar_lea.vmem [#allocation0], 3310
      %4437 = vst.msk [vmem:[%s4436] sm:$0x1c] %vm4433, %v4432
      %s4438 = scalar_lea.vmem [#allocation0], 3315
      %4439 = vst.msk [vmem:[%s4438] sm:$0xe0] %vm4433, %v4432
      %s4440 = scalar_lea.vmem [#allocation1], 1248
      %v4441 = vld [vmem:[%s4440] sm:$0xff]
      %vm4442 = vcmask 531456
      %s4443 = scalar_lea.vmem [#allocation0], 3328
      %4444 = vst.msk [vmem:[%s4443] sm:$0x7] %vm4442, %v4441
      %s4445 = scalar_lea.vmem [#allocation0], 3333
      %4446 = vst.msk [vmem:[%s4445] sm:$0x38] %vm4442, %v4441
      %s4447 = scalar_lea.vmem [#allocation0], 3338
      %4448 = vst.msk [vmem:[%s4447] sm:$0xc0] %vm4442, %v4441
      %s4449 = scalar_lea.vmem [#allocation1], 1256
      %v4450 = vld [vmem:[%s4449] sm:$0xff]
      %vm4451 = vcmask 531456
      %s4452 = scalar_lea.vmem [#allocation0], 3346
      %4453 = vst.msk [vmem:[%s4452] ss:$6 sm:$0x3] %vm4451, %v4450
      %s4454 = scalar_lea.vmem [#allocation0], 3351
      %4455 = vst.msk [vmem:[%s4454] sm:$0xc] %vm4451, %v4450
      %s4456 = scalar_lea.vmem [#allocation0], 3356
      %4457 = vst.msk [vmem:[%s4456] sm:$0x70] %vm4451, %v4450
      %s4458 = scalar_lea.vmem [#allocation0], 3361
      %4459 = vst.msk [vmem:[%s4458] sm:$0x80] %vm4451, %v4450
      %s4460 = scalar_lea.vmem [#allocation1], 1264
      %v4461 = vld [vmem:[%s4460] sm:$0xff]
      %vm4462 = vcmask 531456
      %s4463 = scalar_lea.vmem [#allocation0], 3369
      %4464 = vst.msk [vmem:[%s4463] sm:$0x3] %vm4462, %v4461
      %s4465 = scalar_lea.vmem [#allocation0], 3374
      %4466 = vst.msk [vmem:[%s4465] sm:$0x1c] %vm4462, %v4461
      %s4467 = scalar_lea.vmem [#allocation0], 3379
      %4468 = vst.msk [vmem:[%s4467] sm:$0xe0] %vm4462, %v4461
      %s4469 = scalar_lea.vmem [#allocation1], 1272
      %v4470 = vld [vmem:[%s4469] sm:$0xff]
      %vm4471 = vcmask 531456
      %s4472 = scalar_lea.vmem [#allocation0], 3392
      %4473 = vst.msk [vmem:[%s4472] sm:$0x7] %vm4471, %v4470
      %s4474 = scalar_lea.vmem [#allocation0], 3397
      %4475 = vst.msk [vmem:[%s4474] sm:$0x38] %vm4471, %v4470
      %s4476 = scalar_lea.vmem [#allocation0], 3402
      %4477 = vst.msk [vmem:[%s4476] sm:$0xc0] %vm4471, %v4470
      %s4478 = scalar_lea.vmem [#allocation1], 1280
      %v4479 = vld [vmem:[%s4478] sm:$0xff]
      %vm4480 = vcmask 531456
      %s4481 = scalar_lea.vmem [#allocation0], 3410
      %4482 = vst.msk [vmem:[%s4481] ss:$6 sm:$0x3] %vm4480, %v4479
      %s4483 = scalar_lea.vmem [#allocation0], 3415
      %4484 = vst.msk [vmem:[%s4483] sm:$0xc] %vm4480, %v4479
      %s4485 = scalar_lea.vmem [#allocation0], 3420
      %4486 = vst.msk [vmem:[%s4485] sm:$0x70] %vm4480, %v4479
      %s4487 = scalar_lea.vmem [#allocation0], 3425
      %4488 = vst.msk [vmem:[%s4487] sm:$0x80] %vm4480, %v4479
      %s4489 = scalar_lea.vmem [#allocation1], 1288
      %v4490 = vld [vmem:[%s4489] sm:$0xff]
      %vm4491 = vcmask 531456
      %s4492 = scalar_lea.vmem [#allocation0], 3433
      %4493 = vst.msk [vmem:[%s4492] sm:$0x3] %vm4491, %v4490
      %s4494 = scalar_lea.vmem [#allocation0], 3438
      %4495 = vst.msk [vmem:[%s4494] sm:$0x1c] %vm4491, %v4490
      %s4496 = scalar_lea.vmem [#allocation0], 3443
      %4497 = vst.msk [vmem:[%s4496] sm:$0xe0] %vm4491, %v4490
      %s4498 = scalar_lea.vmem [#allocation1], 1296
      %v4499 = vld [vmem:[%s4498] sm:$0xff]
      %vm4500 = vcmask 531456
      %s4501 = scalar_lea.vmem [#allocation0], 3456
      %4502 = vst.msk [vmem:[%s4501] sm:$0x7] %vm4500, %v4499
      %s4503 = scalar_lea.vmem [#allocation0], 3461
      %4504 = vst.msk [vmem:[%s4503] sm:$0x38] %vm4500, %v4499
      %s4505 = scalar_lea.vmem [#allocation0], 3466
      %4506 = vst.msk [vmem:[%s4505] sm:$0xc0] %vm4500, %v4499
      %s4507 = scalar_lea.vmem [#allocation1], 1304
      %v4508 = vld [vmem:[%s4507] sm:$0xff]
      %vm4509 = vcmask 531456
      %s4510 = scalar_lea.vmem [#allocation0], 3474
      %4511 = vst.msk [vmem:[%s4510] ss:$6 sm:$0x3] %vm4509, %v4508
      %s4512 = scalar_lea.vmem [#allocation0], 3479
      %4513 = vst.msk [vmem:[%s4512] sm:$0xc] %vm4509, %v4508
      %s4514 = scalar_lea.vmem [#allocation0], 3484
      %4515 = vst.msk [vmem:[%s4514] sm:$0x70] %vm4509, %v4508
      %s4516 = scalar_lea.vmem [#allocation0], 3489
      %4517 = vst.msk [vmem:[%s4516] sm:$0x80] %vm4509, %v4508
      %s4518 = scalar_lea.vmem [#allocation1], 1312
      %v4519 = vld [vmem:[%s4518] sm:$0xff]
      %vm4520 = vcmask 531456
      %s4521 = scalar_lea.vmem [#allocation0], 3497
      %4522 = vst.msk [vmem:[%s4521] sm:$0x3] %vm4520, %v4519
      %s4523 = scalar_lea.vmem [#allocation0], 3502
      %4524 = vst.msk [vmem:[%s4523] sm:$0x1c] %vm4520, %v4519
      %s4525 = scalar_lea.vmem [#allocation0], 3507
      %4526 = vst.msk [vmem:[%s4525] sm:$0xe0] %vm4520, %v4519
      %s4527 = scalar_lea.vmem [#allocation1], 1320
      %v4528 = vld [vmem:[%s4527] sm:$0xff]
      %vm4529 = vcmask 531456
      %s4530 = scalar_lea.vmem [#allocation0], 3520
      %4531 = vst.msk [vmem:[%s4530] sm:$0x7] %vm4529, %v4528
      %s4532 = scalar_lea.vmem [#allocation0], 3525
      %4533 = vst.msk [vmem:[%s4532] sm:$0x38] %vm4529, %v4528
      %s4534 = scalar_lea.vmem [#allocation0], 3530
      %4535 = vst.msk [vmem:[%s4534] sm:$0xc0] %vm4529, %v4528
      %s4536 = scalar_lea.vmem [#allocation1], 1328
      %v4537 = vld [vmem:[%s4536] sm:$0xff]
      %vm4538 = vcmask 531456
      %s4539 = scalar_lea.vmem [#allocation0], 3538
      %4540 = vst.msk [vmem:[%s4539] ss:$6 sm:$0x3] %vm4538, %v4537
      %s4541 = scalar_lea.vmem [#allocation0], 3543
      %4542 = vst.msk [vmem:[%s4541] sm:$0xc] %vm4538, %v4537
      %s4543 = scalar_lea.vmem [#allocation0], 3548
      %4544 = vst.msk [vmem:[%s4543] sm:$0x70] %vm4538, %v4537
      %s4545 = scalar_lea.vmem [#allocation0], 3553
      %4546 = vst.msk [vmem:[%s4545] sm:$0x80] %vm4538, %v4537
      %s4547 = scalar_lea.vmem [#allocation1], 1336
      %v4548 = vld [vmem:[%s4547] sm:$0xff]
      %vm4549 = vcmask 531456
      %s4550 = scalar_lea.vmem [#allocation0], 3561
      %4551 = vst.msk [vmem:[%s4550] sm:$0x3] %vm4549, %v4548
      %s4552 = scalar_lea.vmem [#allocation0], 3566
      %4553 = vst.msk [vmem:[%s4552] sm:$0x1c] %vm4549, %v4548
      %s4554 = scalar_lea.vmem [#allocation0], 3571
      %4555 = vst.msk [vmem:[%s4554] sm:$0xe0] %vm4549, %v4548
      %s4556 = scalar_lea.vmem [#allocation1], 1344
      %v4557 = vld [vmem:[%s4556] sm:$0xff]
      %vm4558 = vcmask 531456
      %s4559 = scalar_lea.vmem [#allocation0], 3584
      %4560 = vst.msk [vmem:[%s4559] sm:$0x7] %vm4558, %v4557
      %s4561 = scalar_lea.vmem [#allocation0], 3589
      %4562 = vst.msk [vmem:[%s4561] sm:$0x38] %vm4558, %v4557
      %s4563 = scalar_lea.vmem [#allocation0], 3594
      %4564 = vst.msk [vmem:[%s4563] sm:$0xc0] %vm4558, %v4557
      %s4565 = scalar_lea.vmem [#allocation1], 1352
      %v4566 = vld [vmem:[%s4565] sm:$0xff]
      %vm4567 = vcmask 531456
      %s4568 = scalar_lea.vmem [#allocation0], 3602
      %4569 = vst.msk [vmem:[%s4568] ss:$6 sm:$0x3] %vm4567, %v4566
      %s4570 = scalar_lea.vmem [#allocation0], 3607
      %4571 = vst.msk [vmem:[%s4570] sm:$0xc] %vm4567, %v4566
      %s4572 = scalar_lea.vmem [#allocation0], 3612
      %4573 = vst.msk [vmem:[%s4572] sm:$0x70] %vm4567, %v4566
      %s4574 = scalar_lea.vmem [#allocation0], 3617
      %4575 = vst.msk [vmem:[%s4574] sm:$0x80] %vm4567, %v4566
      %s4576 = scalar_lea.vmem [#allocation1], 1360
      %v4577 = vld [vmem:[%s4576] sm:$0xff]
      %vm4578 = vcmask 531456
      %s4579 = scalar_lea.vmem [#allocation0], 3625
      %4580 = vst.msk [vmem:[%s4579] sm:$0x3] %vm4578, %v4577
      %s4581 = scalar_lea.vmem [#allocation0], 3630
      %4582 = vst.msk [vmem:[%s4581] sm:$0x1c] %vm4578, %v4577
      %s4583 = scalar_lea.vmem [#allocation0], 3635
      %4584 = vst.msk [vmem:[%s4583] sm:$0xe0] %vm4578, %v4577
      %s4585 = scalar_lea.vmem [#allocation1], 1368
      %v4586 = vld [vmem:[%s4585] sm:$0xff]
      %vm4587 = vcmask 531456
      %s4588 = scalar_lea.vmem [#allocation0], 3648
      %4589 = vst.msk [vmem:[%s4588] sm:$0x7] %vm4587, %v4586
      %s4590 = scalar_lea.vmem [#allocation0], 3653
      %4591 = vst.msk [vmem:[%s4590] sm:$0x38] %vm4587, %v4586
      %s4592 = scalar_lea.vmem [#allocation0], 3658
      %4593 = vst.msk [vmem:[%s4592] sm:$0xc0] %vm4587, %v4586
      %s4594 = scalar_lea.vmem [#allocation1], 1376
      %v4595 = vld [vmem:[%s4594] sm:$0xff]
      %vm4596 = vcmask 531456
      %s4597 = scalar_lea.vmem [#allocation0], 3666
      %4598 = vst.msk [vmem:[%s4597] ss:$6 sm:$0x3] %vm4596, %v4595
      %s4599 = scalar_lea.vmem [#allocation0], 3671
      %4600 = vst.msk [vmem:[%s4599] sm:$0xc] %vm4596, %v4595
      %s4601 = scalar_lea.vmem [#allocation0], 3676
      %4602 = vst.msk [vmem:[%s4601] sm:$0x70] %vm4596, %v4595
      %s4603 = scalar_lea.vmem [#allocation0], 3681
      %4604 = vst.msk [vmem:[%s4603] sm:$0x80] %vm4596, %v4595
      %s4605 = scalar_lea.vmem [#allocation1], 1384
      %v4606 = vld [vmem:[%s4605] sm:$0xff]
      %vm4607 = vcmask 531456
      %s4608 = scalar_lea.vmem [#allocation0], 3689
      %4609 = vst.msk [vmem:[%s4608] sm:$0x3] %vm4607, %v4606
      %s4610 = scalar_lea.vmem [#allocation0], 3694
      %4611 = vst.msk [vmem:[%s4610] sm:$0x1c] %vm4607, %v4606
      %s4612 = scalar_lea.vmem [#allocation0], 3699
      %4613 = vst.msk [vmem:[%s4612] sm:$0xe0] %vm4607, %v4606
      %s4614 = scalar_lea.vmem [#allocation1], 1392
      %v4615 = vld [vmem:[%s4614] sm:$0xff]
      %vm4616 = vcmask 531456
      %s4617 = scalar_lea.vmem [#allocation0], 3712
      %4618 = vst.msk [vmem:[%s4617] sm:$0x7] %vm4616, %v4615
      %s4619 = scalar_lea.vmem [#allocation0], 3717
      %4620 = vst.msk [vmem:[%s4619] sm:$0x38] %vm4616, %v4615
      %s4621 = scalar_lea.vmem [#allocation0], 3722
      %4622 = vst.msk [vmem:[%s4621] sm:$0xc0] %vm4616, %v4615
      %s4623 = scalar_lea.vmem [#allocation1], 1400
      %v4624 = vld [vmem:[%s4623] sm:$0xff]
      %vm4625 = vcmask 531456
      %s4626 = scalar_lea.vmem [#allocation0], 3730
      %4627 = vst.msk [vmem:[%s4626] ss:$6 sm:$0x3] %vm4625, %v4624
      %s4628 = scalar_lea.vmem [#allocation0], 3735
      %4629 = vst.msk [vmem:[%s4628] sm:$0xc] %vm4625, %v4624
      %s4630 = scalar_lea.vmem [#allocation0], 3740
      %4631 = vst.msk [vmem:[%s4630] sm:$0x70] %vm4625, %v4624
      %s4632 = scalar_lea.vmem [#allocation0], 3745
      %4633 = vst.msk [vmem:[%s4632] sm:$0x80] %vm4625, %v4624
      %s4634 = scalar_lea.vmem [#allocation1], 1408
      %v4635 = vld [vmem:[%s4634] sm:$0xff]
      %vm4636 = vcmask 531456
      %s4637 = scalar_lea.vmem [#allocation0], 3753
      %4638 = vst.msk [vmem:[%s4637] sm:$0x3] %vm4636, %v4635
      %s4639 = scalar_lea.vmem [#allocation0], 3758
      %4640 = vst.msk [vmem:[%s4639] sm:$0x1c] %vm4636, %v4635
      %s4641 = scalar_lea.vmem [#allocation0], 3763
      %4642 = vst.msk [vmem:[%s4641] sm:$0xe0] %vm4636, %v4635
      %s4643 = scalar_lea.vmem [#allocation1], 1416
      %v4644 = vld [vmem:[%s4643] sm:$0xff]
      %vm4645 = vcmask 531456
      %s4646 = scalar_lea.vmem [#allocation0], 3776
      %4647 = vst.msk [vmem:[%s4646] sm:$0x7] %vm4645, %v4644
      %s4648 = scalar_lea.vmem [#allocation0], 3781
      %4649 = vst.msk [vmem:[%s4648] sm:$0x38] %vm4645, %v4644
      %s4650 = scalar_lea.vmem [#allocation0], 3786
      %4651 = vst.msk [vmem:[%s4650] sm:$0xc0] %vm4645, %v4644
      %s4652 = scalar_lea.vmem [#allocation1], 1424
      %v4653 = vld [vmem:[%s4652] sm:$0xff]
      %vm4654 = vcmask 531456
      %s4655 = scalar_lea.vmem [#allocation0], 3794
      %4656 = vst.msk [vmem:[%s4655] ss:$6 sm:$0x3] %vm4654, %v4653
      %s4657 = scalar_lea.vmem [#allocation0], 3799
      %4658 = vst.msk [vmem:[%s4657] sm:$0xc] %vm4654, %v4653
      %s4659 = scalar_lea.vmem [#allocation0], 3804
      %4660 = vst.msk [vmem:[%s4659] sm:$0x70] %vm4654, %v4653
      %s4661 = scalar_lea.vmem [#allocation0], 3809
      %4662 = vst.msk [vmem:[%s4661] sm:$0x80] %vm4654, %v4653
      %s4663 = scalar_lea.vmem [#allocation1], 1432
      %v4664 = vld [vmem:[%s4663] sm:$0xff]
      %vm4665 = vcmask 531456
      %s4666 = scalar_lea.vmem [#allocation0], 3817
      %4667 = vst.msk [vmem:[%s4666] sm:$0x3] %vm4665, %v4664
      %s4668 = scalar_lea.vmem [#allocation0], 3822
      %4669 = vst.msk [vmem:[%s4668] sm:$0x1c] %vm4665, %v4664
      %s4670 = scalar_lea.vmem [#allocation0], 3827
      %4671 = vst.msk [vmem:[%s4670] sm:$0xe0] %vm4665, %v4664
      %s4672 = scalar_lea.vmem [#allocation1], 1440
      %v4673 = vld [vmem:[%s4672] sm:$0xff]
      %vm4674 = vcmask 531456
      %s4675 = scalar_lea.vmem [#allocation0], 3840
      %4676 = vst.msk [vmem:[%s4675] sm:$0x7] %vm4674, %v4673
      %s4677 = scalar_lea.vmem [#allocation0], 3845
      %4678 = vst.msk [vmem:[%s4677] sm:$0x38] %vm4674, %v4673
      %s4679 = scalar_lea.vmem [#allocation0], 3850
      %4680 = vst.msk [vmem:[%s4679] sm:$0xc0] %vm4674, %v4673
      %s4681 = scalar_lea.vmem [#allocation1], 1448
      %v4682 = vld [vmem:[%s4681] sm:$0xff]
      %vm4683 = vcmask 531456
      %s4684 = scalar_lea.vmem [#allocation0], 3858
      %4685 = vst.msk [vmem:[%s4684] ss:$6 sm:$0x3] %vm4683, %v4682
      %s4686 = scalar_lea.vmem [#allocation0], 3863
      %4687 = vst.msk [vmem:[%s4686] sm:$0xc] %vm4683, %v4682
      %s4688 = scalar_lea.vmem [#allocation0], 3868
      %4689 = vst.msk [vmem:[%s4688] sm:$0x70] %vm4683, %v4682
      %s4690 = scalar_lea.vmem [#allocation0], 3873
      %4691 = vst.msk [vmem:[%s4690] sm:$0x80] %vm4683, %v4682
      %s4692 = scalar_lea.vmem [#allocation1], 1456
      %v4693 = vld [vmem:[%s4692] sm:$0xff]
      %vm4694 = vcmask 531456
      %s4695 = scalar_lea.vmem [#allocation0], 3881
      %4696 = vst.msk [vmem:[%s4695] sm:$0x3] %vm4694, %v4693
      %s4697 = scalar_lea.vmem [#allocation0], 3886
      %4698 = vst.msk [vmem:[%s4697] sm:$0x1c] %vm4694, %v4693
      %s4699 = scalar_lea.vmem [#allocation0], 3891
      %4700 = vst.msk [vmem:[%s4699] sm:$0xe0] %vm4694, %v4693
      %s4701 = scalar_lea.vmem [#allocation1], 1464
      %v4702 = vld [vmem:[%s4701] sm:$0xff]
      %vm4703 = vcmask 531456
      %s4704 = scalar_lea.vmem [#allocation0], 3904
      %4705 = vst.msk [vmem:[%s4704] sm:$0x7] %vm4703, %v4702
      %s4706 = scalar_lea.vmem [#allocation0], 3909
      %4707 = vst.msk [vmem:[%s4706] sm:$0x38] %vm4703, %v4702
      %s4708 = scalar_lea.vmem [#allocation0], 3914
      %4709 = vst.msk [vmem:[%s4708] sm:$0xc0] %vm4703, %v4702
      %s4710 = scalar_lea.vmem [#allocation1], 1472
      %v4711 = vld [vmem:[%s4710] sm:$0xff]
      %vm4712 = vcmask 531456
      %s4713 = scalar_lea.vmem [#allocation0], 3922
      %4714 = vst.msk [vmem:[%s4713] ss:$6 sm:$0x3] %vm4712, %v4711
      %s4715 = scalar_lea.vmem [#allocation0], 3927
      %4716 = vst.msk [vmem:[%s4715] sm:$0xc] %vm4712, %v4711
      %s4717 = scalar_lea.vmem [#allocation0], 3932
      %4718 = vst.msk [vmem:[%s4717] sm:$0x70] %vm4712, %v4711
      %s4719 = scalar_lea.vmem [#allocation0], 3937
      %4720 = vst.msk [vmem:[%s4719] sm:$0x80] %vm4712, %v4711
      %s4721 = scalar_lea.vmem [#allocation1], 1480
      %v4722 = vld [vmem:[%s4721] sm:$0xff]
      %vm4723 = vcmask 531456
      %s4724 = scalar_lea.vmem [#allocation0], 3945
      %4725 = vst.msk [vmem:[%s4724] sm:$0x3] %vm4723, %v4722
      %s4726 = scalar_lea.vmem [#allocation0], 3950
      %4727 = vst.msk [vmem:[%s4726] sm:$0x1c] %vm4723, %v4722
      %s4728 = scalar_lea.vmem [#allocation0], 3955
      %4729 = vst.msk [vmem:[%s4728] sm:$0xe0] %vm4723, %v4722
      %s4730 = scalar_lea.vmem [#allocation1], 1488
      %v4731 = vld [vmem:[%s4730] sm:$0xff]
      %vm4732 = vcmask 531456
      %s4733 = scalar_lea.vmem [#allocation0], 3968
      %4734 = vst.msk [vmem:[%s4733] sm:$0x7] %vm4732, %v4731
      %s4735 = scalar_lea.vmem [#allocation0], 3973
      %4736 = vst.msk [vmem:[%s4735] sm:$0x38] %vm4732, %v4731
      %s4737 = scalar_lea.vmem [#allocation0], 3978
      %4738 = vst.msk [vmem:[%s4737] sm:$0xc0] %vm4732, %v4731
      %s4739 = scalar_lea.vmem [#allocation1], 1496
      %v4740 = vld [vmem:[%s4739] sm:$0xff]
      %vm4741 = vcmask 531456
      %s4742 = scalar_lea.vmem [#allocation0], 3986
      %4743 = vst.msk [vmem:[%s4742] ss:$6 sm:$0x3] %vm4741, %v4740
      %s4744 = scalar_lea.vmem [#allocation0], 3991
      %4745 = vst.msk [vmem:[%s4744] sm:$0xc] %vm4741, %v4740
      %s4746 = scalar_lea.vmem [#allocation0], 3996
      %4747 = vst.msk [vmem:[%s4746] sm:$0x70] %vm4741, %v4740
      %s4748 = scalar_lea.vmem [#allocation0], 4001
      %4749 = vst.msk [vmem:[%s4748] sm:$0x80] %vm4741, %v4740
      %s4750 = scalar_lea.vmem [#allocation1], 1504
      %v4751 = vld [vmem:[%s4750] sm:$0xff]
      %vm4752 = vcmask 531456
      %s4753 = scalar_lea.vmem [#allocation0], 4009
      %4754 = vst.msk [vmem:[%s4753] sm:$0x3] %vm4752, %v4751
      %s4755 = scalar_lea.vmem [#allocation0], 4014
      %4756 = vst.msk [vmem:[%s4755] sm:$0x1c] %vm4752, %v4751
      %s4757 = scalar_lea.vmem [#allocation0], 4019
      %4758 = vst.msk [vmem:[%s4757] sm:$0xe0] %vm4752, %v4751
      %s4759 = scalar_lea.vmem [#allocation1], 1512
      %v4760 = vld [vmem:[%s4759] sm:$0xff]
      %vm4761 = vcmask 531456
      %s4762 = scalar_lea.vmem [#allocation0], 4032
      %4763 = vst.msk [vmem:[%s4762] sm:$0x7] %vm4761, %v4760
      %s4764 = scalar_lea.vmem [#allocation0], 4037
      %4765 = vst.msk [vmem:[%s4764] sm:$0x38] %vm4761, %v4760
      %s4766 = scalar_lea.vmem [#allocation0], 4042
      %4767 = vst.msk [vmem:[%s4766] sm:$0xc0] %vm4761, %v4760
      %s4768 = scalar_lea.vmem [#allocation1], 1520
      %v4769 = vld [vmem:[%s4768] sm:$0xff]
      %vm4770 = vcmask 531456
      %s4771 = scalar_lea.vmem [#allocation0], 4050
      %4772 = vst.msk [vmem:[%s4771] ss:$6 sm:$0x3] %vm4770, %v4769
      %s4773 = scalar_lea.vmem [#allocation0], 4055
      %4774 = vst.msk [vmem:[%s4773] sm:$0xc] %vm4770, %v4769
      %s4775 = scalar_lea.vmem [#allocation0], 4060
      %4776 = vst.msk [vmem:[%s4775] sm:$0x70] %vm4770, %v4769
      %s4777 = scalar_lea.vmem [#allocation0], 4065
      %4778 = vst.msk [vmem:[%s4777] sm:$0x80] %vm4770, %v4769
      %s4779 = scalar_lea.vmem [#allocation1], 1528
      %v4780 = vld [vmem:[%s4779] sm:$0xff]
      %vm4781 = vcmask 531456
      %s4782 = scalar_lea.vmem [#allocation0], 4073
      %4783 = vst.msk [vmem:[%s4782] sm:$0x3] %vm4781, %v4780
      %s4784 = scalar_lea.vmem [#allocation0], 4078
      %4785 = vst.msk [vmem:[%s4784] sm:$0x1c] %vm4781, %v4780
      %s4786 = scalar_lea.vmem [#allocation0], 4083
      %4787 = vst.msk [vmem:[%s4786] sm:$0xe0] %vm4781, %v4780
      %s4789 = ssub.s32 16, 1
      %v4790 = vld [vmem:[#allocation0] sm:%s4789]
      %v4791 = vpack.c.bf16 0.0, %v4790
      %s4793 = ssub.s32 4, 1
      %4794 = vst [vmem:[%s45] sm:%s4793] %v4791
      %s4795 = scalar_lea.vmem [#allocation0], 8
      %v4796 = vld [vmem:[%s4795] sm:%s4789]
      %v4797 = vpack.c.bf16 0.0, %v4796
      %s4799 = ssub.s32 4, 1
      %s4800 = scalar_lea.vmem %s45, 2
      %4801 = vst [vmem:[%s4800] sm:%s4799] %v4797
      %s4802 = scalar_lea.vmem [#allocation0], 16
      %v4803 = vld [vmem:[%s4802] sm:%s4789]
      %v4804 = vpack.c.bf16 0.0, %v4803
      %s4806 = ssub.s32 4, 1
      %s4807 = scalar_lea.vmem %s45, 4
      %4808 = vst [vmem:[%s4807] sm:%s4806] %v4804
      %s4809 = scalar_lea.vmem [#allocation0], 24
      %v4810 = vld [vmem:[%s4809] sm:%s4789]
      %v4811 = vpack.c.bf16 0.0, %v4810
      %s4813 = ssub.s32 4, 1
      %s4814 = scalar_lea.vmem %s45, 6
      %4815 = vst [vmem:[%s4814] sm:%s4813] %v4811
      %s4816 = scalar_lea.vmem [#allocation0], 32
      %v4817 = vld [vmem:[%s4816] sm:%s4789]
      %v4818 = vpack.c.bf16 0.0, %v4817
      %s4820 = ssub.s32 4, 1
      %s4821 = scalar_lea.vmem %s45, 8
      %4822 = vst [vmem:[%s4821] sm:%s4820] %v4818
      %s4823 = scalar_lea.vmem [#allocation0], 40
      %v4824 = vld [vmem:[%s4823] sm:%s4789]
      %v4825 = vpack.c.bf16 0.0, %v4824
      %s4827 = ssub.s32 4, 1
      %s4828 = scalar_lea.vmem %s45, 10
      %4829 = vst [vmem:[%s4828] sm:%s4827] %v4825
      %s4830 = scalar_lea.vmem [#allocation0], 48
      %v4831 = vld [vmem:[%s4830] sm:%s4789]
      %v4832 = vpack.c.bf16 0.0, %v4831
      %s4834 = ssub.s32 4, 1
      %s4835 = scalar_lea.vmem %s45, 12
      %4836 = vst [vmem:[%s4835] sm:%s4834] %v4832
      %s4837 = scalar_lea.vmem [#allocation0], 56
      %v4838 = vld [vmem:[%s4837] sm:%s4789]
      %v4839 = vpack.c.bf16 0.0, %v4838
      %s4841 = ssub.s32 4, 1
      %s4842 = scalar_lea.vmem %s45, 14
      %4843 = vst [vmem:[%s4842] sm:%s4841] %v4839
      %s4844 = scalar_lea.vmem [#allocation0], 64
      %v4845 = vld [vmem:[%s4844] sm:%s4789]
      %v4846 = vpack.c.bf16 0.0, %v4845
      %s4848 = ssub.s32 4, 1
      %s4849 = scalar_lea.vmem %s45, 16
      %4850 = vst [vmem:[%s4849] sm:%s4848] %v4846
      %s4851 = scalar_lea.vmem [#allocation0], 72
      %v4852 = vld [vmem:[%s4851] sm:%s4789]
      %v4853 = vpack.c.bf16 0.0, %v4852
      %s4855 = ssub.s32 4, 1
      %s4856 = scalar_lea.vmem %s45, 18
      %4857 = vst [vmem:[%s4856] sm:%s4855] %v4853
      %s4858 = scalar_lea.vmem [#allocation0], 80
      %v4859 = vld [vmem:[%s4858] sm:%s4789]
      %v4860 = vpack.c.bf16 0.0, %v4859
      %s4862 = ssub.s32 4, 1
      %s4863 = scalar_lea.vmem %s45, 20
      %4864 = vst [vmem:[%s4863] sm:%s4862] %v4860
      %s4865 = scalar_lea.vmem [#allocation0], 88
      %v4866 = vld [vmem:[%s4865] sm:%s4789]
      %v4867 = vpack.c.bf16 0.0, %v4866
      %s4869 = ssub.s32 4, 1
      %s4870 = scalar_lea.vmem %s45, 22
      %4871 = vst [vmem:[%s4870] sm:%s4869] %v4867
      %s4872 = scalar_lea.vmem [#allocation0], 96
      %v4873 = vld [vmem:[%s4872] sm:%s4789]
      %v4874 = vpack.c.bf16 0.0, %v4873
      %s4876 = ssub.s32 4, 1
      %s4877 = scalar_lea.vmem %s45, 24
      %4878 = vst [vmem:[%s4877] sm:%s4876] %v4874
      %s4879 = scalar_lea.vmem [#allocation0], 104
      %v4880 = vld [vmem:[%s4879] sm:%s4789]
      %v4881 = vpack.c.bf16 0.0, %v4880
      %s4883 = ssub.s32 4, 1
      %s4884 = scalar_lea.vmem %s45, 26
      %4885 = vst [vmem:[%s4884] sm:%s4883] %v4881
      %s4886 = scalar_lea.vmem [#allocation0], 112
      %v4887 = vld [vmem:[%s4886] sm:%s4789]
      %v4888 = vpack.c.bf16 0.0, %v4887
      %s4890 = ssub.s32 4, 1
      %s4891 = scalar_lea.vmem %s45, 28
      %4892 = vst [vmem:[%s4891] sm:%s4890] %v4888
      %s4893 = scalar_lea.vmem [#allocation0], 120
      %v4894 = vld [vmem:[%s4893] sm:%s4789]
      %v4895 = vpack.c.bf16 0.0, %v4894
      %s4897 = ssub.s32 4, 1
      %s4898 = scalar_lea.vmem %s45, 30
      %4899 = vst [vmem:[%s4898] sm:%s4897] %v4895
      %s4900 = scalar_lea.vmem [#allocation0], 128
      %v4901 = vld [vmem:[%s4900] sm:%s4789]
      %v4902 = vpack.c.bf16 0.0, %v4901
      %s4904 = ssub.s32 4, 1
      %s4905 = scalar_lea.vmem %s45, 32
      %4906 = vst [vmem:[%s4905] sm:%s4904] %v4902
      %s4907 = scalar_lea.vmem [#allocation0], 136
      %v4908 = vld [vmem:[%s4907] sm:%s4789]
      %v4909 = vpack.c.bf16 0.0, %v4908
      %s4911 = ssub.s32 4, 1
      %s4912 = scalar_lea.vmem %s45, 34
      %4913 = vst [vmem:[%s4912] sm:%s4911] %v4909
      %s4914 = scalar_lea.vmem [#allocation0], 144
      %v4915 = vld [vmem:[%s4914] sm:%s4789]
      %v4916 = vpack.c.bf16 0.0, %v4915
      %s4918 = ssub.s32 4, 1
      %s4919 = scalar_lea.vmem %s45, 36
      %4920 = vst [vmem:[%s4919] sm:%s4918] %v4916
      %s4921 = scalar_lea.vmem [#allocation0], 152
      %v4922 = vld [vmem:[%s4921] sm:%s4789]
      %v4923 = vpack.c.bf16 0.0, %v4922
      %s4925 = ssub.s32 4, 1
      %s4926 = scalar_lea.vmem %s45, 38
      %4927 = vst [vmem:[%s4926] sm:%s4925] %v4923
      %s4928 = scalar_lea.vmem [#allocation0], 160
      %v4929 = vld [vmem:[%s4928] sm:%s4789]
      %v4930 = vpack.c.bf16 0.0, %v4929
      %s4932 = ssub.s32 4, 1
      %s4933 = scalar_lea.vmem %s45, 40
      %4934 = vst [vmem:[%s4933] sm:%s4932] %v4930
      %s4935 = scalar_lea.vmem [#allocation0], 168
      %v4936 = vld [vmem:[%s4935] sm:%s4789]
      %v4937 = vpack.c.bf16 0.0, %v4936
      %s4939 = ssub.s32 4, 1
      %s4940 = scalar_lea.vmem %s45, 42
      %4941 = vst [vmem:[%s4940] sm:%s4939] %v4937
      %s4942 = scalar_lea.vmem [#allocation0], 176
      %v4943 = vld [vmem:[%s4942] sm:%s4789]
      %v4944 = vpack.c.bf16 0.0, %v4943
      %s4946 = ssub.s32 4, 1
      %s4947 = scalar_lea.vmem %s45, 44
      %4948 = vst [vmem:[%s4947] sm:%s4946] %v4944
      %s4949 = scalar_lea.vmem [#allocation0], 184
      %v4950 = vld [vmem:[%s4949] sm:%s4789]
      %v4951 = vpack.c.bf16 0.0, %v4950
      %s4953 = ssub.s32 4, 1
      %s4954 = scalar_lea.vmem %s45, 46
      %4955 = vst [vmem:[%s4954] sm:%s4953] %v4951
      %s4956 = scalar_lea.vmem [#allocation0], 192
      %v4957 = vld [vmem:[%s4956] sm:%s4789]
      %v4958 = vpack.c.bf16 0.0, %v4957
      %s4960 = ssub.s32 4, 1
      %s4961 = scalar_lea.vmem %s45, 48
      %4962 = vst [vmem:[%s4961] sm:%s4960] %v4958
      %s4963 = scalar_lea.vmem [#allocation0], 200
      %v4964 = vld [vmem:[%s4963] sm:%s4789]
      %v4965 = vpack.c.bf16 0.0, %v4964
      %s4967 = ssub.s32 4, 1
      %s4968 = scalar_lea.vmem %s45, 50
      %4969 = vst [vmem:[%s4968] sm:%s4967] %v4965
      %s4970 = scalar_lea.vmem [#allocation0], 208
      %v4971 = vld [vmem:[%s4970] sm:%s4789]
      %v4972 = vpack.c.bf16 0.0, %v4971
      %s4974 = ssub.s32 4, 1
      %s4975 = scalar_lea.vmem %s45, 52
      %4976 = vst [vmem:[%s4975] sm:%s4974] %v4972
      %s4977 = scalar_lea.vmem [#allocation0], 216
      %v4978 = vld [vmem:[%s4977] sm:%s4789]
      %v4979 = vpack.c.bf16 0.0, %v4978
      %s4981 = ssub.s32 4, 1
      %s4982 = scalar_lea.vmem %s45, 54
      %4983 = vst [vmem:[%s4982] sm:%s4981] %v4979
      %s4984 = scalar_lea.vmem [#allocation0], 224
      %v4985 = vld [vmem:[%s4984] sm:%s4789]
      %v4986 = vpack.c.bf16 0.0, %v4985
      %s4988 = ssub.s32 4, 1
      %s4989 = scalar_lea.vmem %s45, 56
      %4990 = vst [vmem:[%s4989] sm:%s4988] %v4986
      %s4991 = scalar_lea.vmem [#allocation0], 232
      %v4992 = vld [vmem:[%s4991] sm:%s4789]
      %v4993 = vpack.c.bf16 0.0, %v4992
      %s4995 = ssub.s32 4, 1
      %s4996 = scalar_lea.vmem %s45, 58
      %4997 = vst [vmem:[%s4996] sm:%s4995] %v4993
      %s4998 = scalar_lea.vmem [#allocation0], 240
      %v4999 = vld [vmem:[%s4998] sm:%s4789]
      %v5000 = vpack.c.bf16 0.0, %v4999
      %s5002 = ssub.s32 4, 1
      %s5003 = scalar_lea.vmem %s45, 60
      %5004 = vst [vmem:[%s5003] sm:%s5002] %v5000
      %s5005 = scalar_lea.vmem [#allocation0], 248
      %v5006 = vld [vmem:[%s5005] sm:%s4789]
      %v5007 = vpack.c.bf16 0.0, %v5006
      %s5009 = ssub.s32 4, 1
      %s5010 = scalar_lea.vmem %s45, 62
      %5011 = vst [vmem:[%s5010] sm:%s5009] %v5007
      %s5012 = scalar_lea.vmem [#allocation0], 256
      %v5013 = vld [vmem:[%s5012] sm:%s4789]
      %v5014 = vpack.c.bf16 0.0, %v5013
      %s5016 = ssub.s32 4, 1
      %s5017 = scalar_lea.vmem %s45, 64
      %5018 = vst [vmem:[%s5017] sm:%s5016] %v5014
      %s5019 = scalar_lea.vmem [#allocation0], 264
      %v5020 = vld [vmem:[%s5019] sm:%s4789]
      %v5021 = vpack.c.bf16 0.0, %v5020
      %s5023 = ssub.s32 4, 1
      %s5024 = scalar_lea.vmem %s45, 66
      %5025 = vst [vmem:[%s5024] sm:%s5023] %v5021
      %s5026 = scalar_lea.vmem [#allocation0], 272
      %v5027 = vld [vmem:[%s5026] sm:%s4789]
      %v5028 = vpack.c.bf16 0.0, %v5027
      %s5030 = ssub.s32 4, 1
      %s5031 = scalar_lea.vmem %s45, 68
      %5032 = vst [vmem:[%s5031] sm:%s5030] %v5028
      %s5033 = scalar_lea.vmem [#allocation0], 280
      %v5034 = vld [vmem:[%s5033] sm:%s4789]
      %v5035 = vpack.c.bf16 0.0, %v5034
      %s5037 = ssub.s32 4, 1
      %s5038 = scalar_lea.vmem %s45, 70
      %5039 = vst [vmem:[%s5038] sm:%s5037] %v5035
      %s5040 = scalar_lea.vmem [#allocation0], 288
      %v5041 = vld [vmem:[%s5040] sm:%s4789]
      %v5042 = vpack.c.bf16 0.0, %v5041
      %s5044 = ssub.s32 4, 1
      %s5045 = scalar_lea.vmem %s45, 72
      %5046 = vst [vmem:[%s5045] sm:%s5044] %v5042
      %s5047 = scalar_lea.vmem [#allocation0], 296
      %v5048 = vld [vmem:[%s5047] sm:%s4789]
      %v5049 = vpack.c.bf16 0.0, %v5048
      %s5051 = ssub.s32 4, 1
      %s5052 = scalar_lea.vmem %s45, 74
      %5053 = vst [vmem:[%s5052] sm:%s5051] %v5049
      %s5054 = scalar_lea.vmem [#allocation0], 304
      %v5055 = vld [vmem:[%s5054] sm:%s4789]
      %v5056 = vpack.c.bf16 0.0, %v5055
      %s5058 = ssub.s32 4, 1
      %s5059 = scalar_lea.vmem %s45, 76
      %5060 = vst [vmem:[%s5059] sm:%s5058] %v5056
      %s5061 = scalar_lea.vmem [#allocation0], 312
      %v5062 = vld [vmem:[%s5061] sm:%s4789]
      %v5063 = vpack.c.bf16 0.0, %v5062
      %s5065 = ssub.s32 4, 1
      %s5066 = scalar_lea.vmem %s45, 78
      %5067 = vst [vmem:[%s5066] sm:%s5065] %v5063
      %s5068 = scalar_lea.vmem [#allocation0], 320
      %v5069 = vld [vmem:[%s5068] sm:%s4789]
      %v5070 = vpack.c.bf16 0.0, %v5069
      %s5072 = ssub.s32 4, 1
      %s5073 = scalar_lea.vmem %s45, 80
      %5074 = vst [vmem:[%s5073] sm:%s5072] %v5070
      %s5075 = scalar_lea.vmem [#allocation0], 328
      %v5076 = vld [vmem:[%s5075] sm:%s4789]
      %v5077 = vpack.c.bf16 0.0, %v5076
      %s5079 = ssub.s32 4, 1
      %s5080 = scalar_lea.vmem %s45, 82
      %5081 = vst [vmem:[%s5080] sm:%s5079] %v5077
      %s5082 = scalar_lea.vmem [#allocation0], 336
      %v5083 = vld [vmem:[%s5082] sm:%s4789]
      %v5084 = vpack.c.bf16 0.0, %v5083
      %s5086 = ssub.s32 4, 1
      %s5087 = scalar_lea.vmem %s45, 84
      %5088 = vst [vmem:[%s5087] sm:%s5086] %v5084
      %s5089 = scalar_lea.vmem [#allocation0], 344
      %v5090 = vld [vmem:[%s5089] sm:%s4789]
      %v5091 = vpack.c.bf16 0.0, %v5090
      %s5093 = ssub.s32 4, 1
      %s5094 = scalar_lea.vmem %s45, 86
      %5095 = vst [vmem:[%s5094] sm:%s5093] %v5091
      %s5096 = scalar_lea.vmem [#allocation0], 352
      %v5097 = vld [vmem:[%s5096] sm:%s4789]
      %v5098 = vpack.c.bf16 0.0, %v5097
      %s5100 = ssub.s32 4, 1
      %s5101 = scalar_lea.vmem %s45, 88
      %5102 = vst [vmem:[%s5101] sm:%s5100] %v5098
      %s5103 = scalar_lea.vmem [#allocation0], 360
      %v5104 = vld [vmem:[%s5103] sm:%s4789]
      %v5105 = vpack.c.bf16 0.0, %v5104
      %s5107 = ssub.s32 4, 1
      %s5108 = scalar_lea.vmem %s45, 90
      %5109 = vst [vmem:[%s5108] sm:%s5107] %v5105
      %s5110 = scalar_lea.vmem [#allocation0], 368
      %v5111 = vld [vmem:[%s5110] sm:%s4789]
      %v5112 = vpack.c.bf16 0.0, %v5111
      %s5114 = ssub.s32 4, 1
      %s5115 = scalar_lea.vmem %s45, 92
      %5116 = vst [vmem:[%s5115] sm:%s5114] %v5112
      %s5117 = scalar_lea.vmem [#allocation0], 376
      %v5118 = vld [vmem:[%s5117] sm:%s4789]
      %v5119 = vpack.c.bf16 0.0, %v5118
      %s5121 = ssub.s32 4, 1
      %s5122 = scalar_lea.vmem %s45, 94
      %5123 = vst [vmem:[%s5122] sm:%s5121] %v5119
      %s5124 = scalar_lea.vmem [#allocation0], 384
      %v5125 = vld [vmem:[%s5124] sm:%s4789]
      %v5126 = vpack.c.bf16 0.0, %v5125
      %s5128 = ssub.s32 4, 1
      %s5129 = scalar_lea.vmem %s45, 96
      %5130 = vst [vmem:[%s5129] sm:%s5128] %v5126
      %s5131 = scalar_lea.vmem [#allocation0], 392
      %v5132 = vld [vmem:[%s5131] sm:%s4789]
      %v5133 = vpack.c.bf16 0.0, %v5132
      %s5135 = ssub.s32 4, 1
      %s5136 = scalar_lea.vmem %s45, 98
      %5137 = vst [vmem:[%s5136] sm:%s5135] %v5133
      %s5138 = scalar_lea.vmem [#allocation0], 400
      %v5139 = vld [vmem:[%s5138] sm:%s4789]
      %v5140 = vpack.c.bf16 0.0, %v5139
      %s5142 = ssub.s32 4, 1
      %s5143 = scalar_lea.vmem %s45, 100
      %5144 = vst [vmem:[%s5143] sm:%s5142] %v5140
      %s5145 = scalar_lea.vmem [#allocation0], 408
      %v5146 = vld [vmem:[%s5145] sm:%s4789]
      %v5147 = vpack.c.bf16 0.0, %v5146
      %s5149 = ssub.s32 4, 1
      %s5150 = scalar_lea.vmem %s45, 102
      %5151 = vst [vmem:[%s5150] sm:%s5149] %v5147
      %s5152 = scalar_lea.vmem [#allocation0], 416
      %v5153 = vld [vmem:[%s5152] sm:%s4789]
      %v5154 = vpack.c.bf16 0.0, %v5153
      %s5156 = ssub.s32 4, 1
      %s5157 = scalar_lea.vmem %s45, 104
      %5158 = vst [vmem:[%s5157] sm:%s5156] %v5154
      %s5159 = scalar_lea.vmem [#allocation0], 424
      %v5160 = vld [vmem:[%s5159] sm:%s4789]
      %v5161 = vpack.c.bf16 0.0, %v5160
      %s5163 = ssub.s32 4, 1
      %s5164 = scalar_lea.vmem %s45, 106
      %5165 = vst [vmem:[%s5164] sm:%s5163] %v5161
      %s5166 = scalar_lea.vmem [#allocation0], 432
      %v5167 = vld [vmem:[%s5166] sm:%s4789]
      %v5168 = vpack.c.bf16 0.0, %v5167
      %s5170 = ssub.s32 4, 1
      %s5171 = scalar_lea.vmem %s45, 108
      %5172 = vst [vmem:[%s5171] sm:%s5170] %v5168
      %s5173 = scalar_lea.vmem [#allocation0], 440
      %v5174 = vld [vmem:[%s5173] sm:%s4789]
      %v5175 = vpack.c.bf16 0.0, %v5174
      %s5177 = ssub.s32 4, 1
      %s5178 = scalar_lea.vmem %s45, 110
      %5179 = vst [vmem:[%s5178] sm:%s5177] %v5175
      %s5180 = scalar_lea.vmem [#allocation0], 448
      %v5181 = vld [vmem:[%s5180] sm:%s4789]
      %v5182 = vpack.c.bf16 0.0, %v5181
      %s5184 = ssub.s32 4, 1
      %s5185 = scalar_lea.vmem %s45, 112
      %5186 = vst [vmem:[%s5185] sm:%s5184] %v5182
      %s5187 = scalar_lea.vmem [#allocation0], 456
      %v5188 = vld [vmem:[%s5187] sm:%s4789]
      %v5189 = vpack.c.bf16 0.0, %v5188
      %s5191 = ssub.s32 4, 1
      %s5192 = scalar_lea.vmem %s45, 114
      %5193 = vst [vmem:[%s5192] sm:%s5191] %v5189
      %s5194 = scalar_lea.vmem [#allocation0], 464
      %v5195 = vld [vmem:[%s5194] sm:%s4789]
      %v5196 = vpack.c.bf16 0.0, %v5195
      %s5198 = ssub.s32 4, 1
      %s5199 = scalar_lea.vmem %s45, 116
      %5200 = vst [vmem:[%s5199] sm:%s5198] %v5196
      %s5201 = scalar_lea.vmem [#allocation0], 472
      %v5202 = vld [vmem:[%s5201] sm:%s4789]
      %v5203 = vpack.c.bf16 0.0, %v5202
      %s5205 = ssub.s32 4, 1
      %s5206 = scalar_lea.vmem %s45, 118
      %5207 = vst [vmem:[%s5206] sm:%s5205] %v5203
      %s5208 = scalar_lea.vmem [#allocation0], 480
      %v5209 = vld [vmem:[%s5208] sm:%s4789]
      %v5210 = vpack.c.bf16 0.0, %v5209
      %s5212 = ssub.s32 4, 1
      %s5213 = scalar_lea.vmem %s45, 120
      %5214 = vst [vmem:[%s5213] sm:%s5212] %v5210
      %s5215 = scalar_lea.vmem [#allocation0], 488
      %v5216 = vld [vmem:[%s5215] sm:%s4789]
      %v5217 = vpack.c.bf16 0.0, %v5216
      %s5219 = ssub.s32 4, 1
      %s5220 = scalar_lea.vmem %s45, 122
      %5221 = vst [vmem:[%s5220] sm:%s5219] %v5217
      %s5222 = scalar_lea.vmem [#allocation0], 496
      %v5223 = vld [vmem:[%s5222] sm:%s4789]
      %v5224 = vpack.c.bf16 0.0, %v5223
      %s5226 = ssub.s32 4, 1
      %s5227 = scalar_lea.vmem %s45, 124
      %5228 = vst [vmem:[%s5227] sm:%s5226] %v5224
      %s5229 = scalar_lea.vmem [#allocation0], 504
      %v5230 = vld [vmem:[%s5229] sm:%s4789]
      %v5231 = vpack.c.bf16 0.0, %v5230
      %s5233 = ssub.s32 4, 1
      %s5234 = scalar_lea.vmem %s45, 126
      %5235 = vst [vmem:[%s5234] sm:%s5233] %v5231
      %s5236 = scalar_lea.vmem [#allocation0], 512
      %v5237 = vld [vmem:[%s5236] sm:%s4789]
      %v5238 = vpack.c.bf16 0.0, %v5237
      %s5240 = ssub.s32 4, 1
      %s5241 = scalar_lea.vmem %s45, 128
      %5242 = vst [vmem:[%s5241] sm:%s5240] %v5238
      %s5243 = scalar_lea.vmem [#allocation0], 520
      %v5244 = vld [vmem:[%s5243] sm:%s4789]
      %v5245 = vpack.c.bf16 0.0, %v5244
      %s5247 = ssub.s32 4, 1
      %s5248 = scalar_lea.vmem %s45, 130
      %5249 = vst [vmem:[%s5248] sm:%s5247] %v5245
      %s5250 = scalar_lea.vmem [#allocation0], 528
      %v5251 = vld [vmem:[%s5250] sm:%s4789]
      %v5252 = vpack.c.bf16 0.0, %v5251
      %s5254 = ssub.s32 4, 1
      %s5255 = scalar_lea.vmem %s45, 132
      %5256 = vst [vmem:[%s5255] sm:%s5254] %v5252
      %s5257 = scalar_lea.vmem [#allocation0], 536
      %v5258 = vld [vmem:[%s5257] sm:%s4789]
      %v5259 = vpack.c.bf16 0.0, %v5258
      %s5261 = ssub.s32 4, 1
      %s5262 = scalar_lea.vmem %s45, 134
      %5263 = vst [vmem:[%s5262] sm:%s5261] %v5259
      %s5264 = scalar_lea.vmem [#allocation0], 544
      %v5265 = vld [vmem:[%s5264] sm:%s4789]
      %v5266 = vpack.c.bf16 0.0, %v5265
      %s5268 = ssub.s32 4, 1
      %s5269 = scalar_lea.vmem %s45, 136
      %5270 = vst [vmem:[%s5269] sm:%s5268] %v5266
      %s5271 = scalar_lea.vmem [#allocation0], 552
      %v5272 = vld [vmem:[%s5271] sm:%s4789]
      %v5273 = vpack.c.bf16 0.0, %v5272
      %s5275 = ssub.s32 4, 1
      %s5276 = scalar_lea.vmem %s45, 138
      %5277 = vst [vmem:[%s5276] sm:%s5275] %v5273
      %s5278 = scalar_lea.vmem [#allocation0], 560
      %v5279 = vld [vmem:[%s5278] sm:%s4789]
      %v5280 = vpack.c.bf16 0.0, %v5279
      %s5282 = ssub.s32 4, 1
      %s5283 = scalar_lea.vmem %s45, 140
      %5284 = vst [vmem:[%s5283] sm:%s5282] %v5280
      %s5285 = scalar_lea.vmem [#allocation0], 568
      %v5286 = vld [vmem:[%s5285] sm:%s4789]
      %v5287 = vpack.c.bf16 0.0, %v5286
      %s5289 = ssub.s32 4, 1
      %s5290 = scalar_lea.vmem %s45, 142
      %5291 = vst [vmem:[%s5290] sm:%s5289] %v5287
      %s5292 = scalar_lea.vmem [#allocation0], 576
      %v5293 = vld [vmem:[%s5292] sm:%s4789]
      %v5294 = vpack.c.bf16 0.0, %v5293
      %s5296 = ssub.s32 4, 1
      %s5297 = scalar_lea.vmem %s45, 144
      %5298 = vst [vmem:[%s5297] sm:%s5296] %v5294
      %s5299 = scalar_lea.vmem [#allocation0], 584
      %v5300 = vld [vmem:[%s5299] sm:%s4789]
      %v5301 = vpack.c.bf16 0.0, %v5300
      %s5303 = ssub.s32 4, 1
      %s5304 = scalar_lea.vmem %s45, 146
      %5305 = vst [vmem:[%s5304] sm:%s5303] %v5301
      %s5306 = scalar_lea.vmem [#allocation0], 592
      %v5307 = vld [vmem:[%s5306] sm:%s4789]
      %v5308 = vpack.c.bf16 0.0, %v5307
      %s5310 = ssub.s32 4, 1
      %s5311 = scalar_lea.vmem %s45, 148
      %5312 = vst [vmem:[%s5311] sm:%s5310] %v5308
      %s5313 = scalar_lea.vmem [#allocation0], 600
      %v5314 = vld [vmem:[%s5313] sm:%s4789]
      %v5315 = vpack.c.bf16 0.0, %v5314
      %s5317 = ssub.s32 4, 1
      %s5318 = scalar_lea.vmem %s45, 150
      %5319 = vst [vmem:[%s5318] sm:%s5317] %v5315
      %s5320 = scalar_lea.vmem [#allocation0], 608
      %v5321 = vld [vmem:[%s5320] sm:%s4789]
      %v5322 = vpack.c.bf16 0.0, %v5321
      %s5324 = ssub.s32 4, 1
      %s5325 = scalar_lea.vmem %s45, 152
      %5326 = vst [vmem:[%s5325] sm:%s5324] %v5322
      %s5327 = scalar_lea.vmem [#allocation0], 616
      %v5328 = vld [vmem:[%s5327] sm:%s4789]
      %v5329 = vpack.c.bf16 0.0, %v5328
      %s5331 = ssub.s32 4, 1
      %s5332 = scalar_lea.vmem %s45, 154
      %5333 = vst [vmem:[%s5332] sm:%s5331] %v5329
      %s5334 = scalar_lea.vmem [#allocation0], 624
      %v5335 = vld [vmem:[%s5334] sm:%s4789]
      %v5336 = vpack.c.bf16 0.0, %v5335
      %s5338 = ssub.s32 4, 1
      %s5339 = scalar_lea.vmem %s45, 156
      %5340 = vst [vmem:[%s5339] sm:%s5338] %v5336
      %s5341 = scalar_lea.vmem [#allocation0], 632
      %v5342 = vld [vmem:[%s5341] sm:%s4789]
      %v5343 = vpack.c.bf16 0.0, %v5342
      %s5345 = ssub.s32 4, 1
      %s5346 = scalar_lea.vmem %s45, 158
      %5347 = vst [vmem:[%s5346] sm:%s5345] %v5343
      %s5348 = scalar_lea.vmem [#allocation0], 640
      %v5349 = vld [vmem:[%s5348] sm:%s4789]
      %v5350 = vpack.c.bf16 0.0, %v5349
      %s5352 = ssub.s32 4, 1
      %s5353 = scalar_lea.vmem %s45, 160
      %5354 = vst [vmem:[%s5353] sm:%s5352] %v5350
      %s5355 = scalar_lea.vmem [#allocation0], 648
      %v5356 = vld [vmem:[%s5355] sm:%s4789]
      %v5357 = vpack.c.bf16 0.0, %v5356
      %s5359 = ssub.s32 4, 1
      %s5360 = scalar_lea.vmem %s45, 162
      %5361 = vst [vmem:[%s5360] sm:%s5359] %v5357
      %s5362 = scalar_lea.vmem [#allocation0], 656
      %v5363 = vld [vmem:[%s5362] sm:%s4789]
      %v5364 = vpack.c.bf16 0.0, %v5363
      %s5366 = ssub.s32 4, 1
      %s5367 = scalar_lea.vmem %s45, 164
      %5368 = vst [vmem:[%s5367] sm:%s5366] %v5364
      %s5369 = scalar_lea.vmem [#allocation0], 664
      %v5370 = vld [vmem:[%s5369] sm:%s4789]
      %v5371 = vpack.c.bf16 0.0, %v5370
      %s5373 = ssub.s32 4, 1
      %s5374 = scalar_lea.vmem %s45, 166
      %5375 = vst [vmem:[%s5374] sm:%s5373] %v5371
      %s5376 = scalar_lea.vmem [#allocation0], 672
      %v5377 = vld [vmem:[%s5376] sm:%s4789]
      %v5378 = vpack.c.bf16 0.0, %v5377
      %s5380 = ssub.s32 4, 1
      %s5381 = scalar_lea.vmem %s45, 168
      %5382 = vst [vmem:[%s5381] sm:%s5380] %v5378
      %s5383 = scalar_lea.vmem [#allocation0], 680
      %v5384 = vld [vmem:[%s5383] sm:%s4789]
      %v5385 = vpack.c.bf16 0.0, %v5384
      %s5387 = ssub.s32 4, 1
      %s5388 = scalar_lea.vmem %s45, 170
      %5389 = vst [vmem:[%s5388] sm:%s5387] %v5385
      %s5390 = scalar_lea.vmem [#allocation0], 688
      %v5391 = vld [vmem:[%s5390] sm:%s4789]
      %v5392 = vpack.c.bf16 0.0, %v5391
      %s5394 = ssub.s32 4, 1
      %s5395 = scalar_lea.vmem %s45, 172
      %5396 = vst [vmem:[%s5395] sm:%s5394] %v5392
      %s5397 = scalar_lea.vmem [#allocation0], 696
      %v5398 = vld [vmem:[%s5397] sm:%s4789]
      %v5399 = vpack.c.bf16 0.0, %v5398
      %s5401 = ssub.s32 4, 1
      %s5402 = scalar_lea.vmem %s45, 174
      %5403 = vst [vmem:[%s5402] sm:%s5401] %v5399
      %s5404 = scalar_lea.vmem [#allocation0], 704
      %v5405 = vld [vmem:[%s5404] sm:%s4789]
      %v5406 = vpack.c.bf16 0.0, %v5405
      %s5408 = ssub.s32 4, 1
      %s5409 = scalar_lea.vmem %s45, 176
      %5410 = vst [vmem:[%s5409] sm:%s5408] %v5406
      %s5411 = scalar_lea.vmem [#allocation0], 712
      %v5412 = vld [vmem:[%s5411] sm:%s4789]
      %v5413 = vpack.c.bf16 0.0, %v5412
      %s5415 = ssub.s32 4, 1
      %s5416 = scalar_lea.vmem %s45, 178
      %5417 = vst [vmem:[%s5416] sm:%s5415] %v5413
      %s5418 = scalar_lea.vmem [#allocation0], 720
      %v5419 = vld [vmem:[%s5418] sm:%s4789]
      %v5420 = vpack.c.bf16 0.0, %v5419
      %s5422 = ssub.s32 4, 1
      %s5423 = scalar_lea.vmem %s45, 180
      %5424 = vst [vmem:[%s5423] sm:%s5422] %v5420
      %s5425 = scalar_lea.vmem [#allocation0], 728
      %v5426 = vld [vmem:[%s5425] sm:%s4789]
      %v5427 = vpack.c.bf16 0.0, %v5426
      %s5429 = ssub.s32 4, 1
      %s5430 = scalar_lea.vmem %s45, 182
      %5431 = vst [vmem:[%s5430] sm:%s5429] %v5427
      %s5432 = scalar_lea.vmem [#allocation0], 736
      %v5433 = vld [vmem:[%s5432] sm:%s4789]
      %v5434 = vpack.c.bf16 0.0, %v5433
      %s5436 = ssub.s32 4, 1
      %s5437 = scalar_lea.vmem %s45, 184
      %5438 = vst [vmem:[%s5437] sm:%s5436] %v5434
      %s5439 = scalar_lea.vmem [#allocation0], 744
      %v5440 = vld [vmem:[%s5439] sm:%s4789]
      %v5441 = vpack.c.bf16 0.0, %v5440
      %s5443 = ssub.s32 4, 1
      %s5444 = scalar_lea.vmem %s45, 186
      %5445 = vst [vmem:[%s5444] sm:%s5443] %v5441
      %s5446 = scalar_lea.vmem [#allocation0], 752
      %v5447 = vld [vmem:[%s5446] sm:%s4789]
      %v5448 = vpack.c.bf16 0.0, %v5447
      %s5450 = ssub.s32 4, 1
      %s5451 = scalar_lea.vmem %s45, 188
      %5452 = vst [vmem:[%s5451] sm:%s5450] %v5448
      %s5453 = scalar_lea.vmem [#allocation0], 760
      %v5454 = vld [vmem:[%s5453] sm:%s4789]
      %v5455 = vpack.c.bf16 0.0, %v5454
      %s5457 = ssub.s32 4, 1
      %s5458 = scalar_lea.vmem %s45, 190
      %5459 = vst [vmem:[%s5458] sm:%s5457] %v5455
      %s5460 = scalar_lea.vmem [#allocation0], 768
      %v5461 = vld [vmem:[%s5460] sm:%s4789]
      %v5462 = vpack.c.bf16 0.0, %v5461
      %s5464 = ssub.s32 4, 1
      %s5465 = scalar_lea.vmem %s45, 192
      %5466 = vst [vmem:[%s5465] sm:%s5464] %v5462
      %s5467 = scalar_lea.vmem [#allocation0], 776
      %v5468 = vld [vmem:[%s5467] sm:%s4789]
      %v5469 = vpack.c.bf16 0.0, %v5468
      %s5471 = ssub.s32 4, 1
      %s5472 = scalar_lea.vmem %s45, 194
      %5473 = vst [vmem:[%s5472] sm:%s5471] %v5469
      %s5474 = scalar_lea.vmem [#allocation0], 784
      %v5475 = vld [vmem:[%s5474] sm:%s4789]
      %v5476 = vpack.c.bf16 0.0, %v5475
      %s5478 = ssub.s32 4, 1
      %s5479 = scalar_lea.vmem %s45, 196
      %5480 = vst [vmem:[%s5479] sm:%s5478] %v5476
      %s5481 = scalar_lea.vmem [#allocation0], 792
      %v5482 = vld [vmem:[%s5481] sm:%s4789]
      %v5483 = vpack.c.bf16 0.0, %v5482
      %s5485 = ssub.s32 4, 1
      %s5486 = scalar_lea.vmem %s45, 198
      %5487 = vst [vmem:[%s5486] sm:%s5485] %v5483
      %s5488 = scalar_lea.vmem [#allocation0], 800
      %v5489 = vld [vmem:[%s5488] sm:%s4789]
      %v5490 = vpack.c.bf16 0.0, %v5489
      %s5492 = ssub.s32 4, 1
      %s5493 = scalar_lea.vmem %s45, 200
      %5494 = vst [vmem:[%s5493] sm:%s5492] %v5490
      %s5495 = scalar_lea.vmem [#allocation0], 808
      %v5496 = vld [vmem:[%s5495] sm:%s4789]
      %v5497 = vpack.c.bf16 0.0, %v5496
      %s5499 = ssub.s32 4, 1
      %s5500 = scalar_lea.vmem %s45, 202
      %5501 = vst [vmem:[%s5500] sm:%s5499] %v5497
      %s5502 = scalar_lea.vmem [#allocation0], 816
      %v5503 = vld [vmem:[%s5502] sm:%s4789]
      %v5504 = vpack.c.bf16 0.0, %v5503
      %s5506 = ssub.s32 4, 1
      %s5507 = scalar_lea.vmem %s45, 204
      %5508 = vst [vmem:[%s5507] sm:%s5506] %v5504
      %s5509 = scalar_lea.vmem [#allocation0], 824
      %v5510 = vld [vmem:[%s5509] sm:%s4789]
      %v5511 = vpack.c.bf16 0.0, %v5510
      %s5513 = ssub.s32 4, 1
      %s5514 = scalar_lea.vmem %s45, 206
      %5515 = vst [vmem:[%s5514] sm:%s5513] %v5511
      %s5516 = scalar_lea.vmem [#allocation0], 832
      %v5517 = vld [vmem:[%s5516] sm:%s4789]
      %v5518 = vpack.c.bf16 0.0, %v5517
      %s5520 = ssub.s32 4, 1
      %s5521 = scalar_lea.vmem %s45, 208
      %5522 = vst [vmem:[%s5521] sm:%s5520] %v5518
      %s5523 = scalar_lea.vmem [#allocation0], 840
      %v5524 = vld [vmem:[%s5523] sm:%s4789]
      %v5525 = vpack.c.bf16 0.0, %v5524
      %s5527 = ssub.s32 4, 1
      %s5528 = scalar_lea.vmem %s45, 210
      %5529 = vst [vmem:[%s5528] sm:%s5527] %v5525
      %s5530 = scalar_lea.vmem [#allocation0], 848
      %v5531 = vld [vmem:[%s5530] sm:%s4789]
      %v5532 = vpack.c.bf16 0.0, %v5531
      %s5534 = ssub.s32 4, 1
      %s5535 = scalar_lea.vmem %s45, 212
      %5536 = vst [vmem:[%s5535] sm:%s5534] %v5532
      %s5537 = scalar_lea.vmem [#allocation0], 856
      %v5538 = vld [vmem:[%s5537] sm:%s4789]
      %v5539 = vpack.c.bf16 0.0, %v5538
      %s5541 = ssub.s32 4, 1
      %s5542 = scalar_lea.vmem %s45, 214
      %5543 = vst [vmem:[%s5542] sm:%s5541] %v5539
      %s5544 = scalar_lea.vmem [#allocation0], 864
      %v5545 = vld [vmem:[%s5544] sm:%s4789]
      %v5546 = vpack.c.bf16 0.0, %v5545
      %s5548 = ssub.s32 4, 1
      %s5549 = scalar_lea.vmem %s45, 216
      %5550 = vst [vmem:[%s5549] sm:%s5548] %v5546
      %s5551 = scalar_lea.vmem [#allocation0], 872
      %v5552 = vld [vmem:[%s5551] sm:%s4789]
      %v5553 = vpack.c.bf16 0.0, %v5552
      %s5555 = ssub.s32 4, 1
      %s5556 = scalar_lea.vmem %s45, 218
      %5557 = vst [vmem:[%s5556] sm:%s5555] %v5553
      %s5558 = scalar_lea.vmem [#allocation0], 880
      %v5559 = vld [vmem:[%s5558] sm:%s4789]
      %v5560 = vpack.c.bf16 0.0, %v5559
      %s5562 = ssub.s32 4, 1
      %s5563 = scalar_lea.vmem %s45, 220
      %5564 = vst [vmem:[%s5563] sm:%s5562] %v5560
      %s5565 = scalar_lea.vmem [#allocation0], 888
      %v5566 = vld [vmem:[%s5565] sm:%s4789]
      %v5567 = vpack.c.bf16 0.0, %v5566
      %s5569 = ssub.s32 4, 1
      %s5570 = scalar_lea.vmem %s45, 222
      %5571 = vst [vmem:[%s5570] sm:%s5569] %v5567
      %s5572 = scalar_lea.vmem [#allocation0], 896
      %v5573 = vld [vmem:[%s5572] sm:%s4789]
      %v5574 = vpack.c.bf16 0.0, %v5573
      %s5576 = ssub.s32 4, 1
      %s5577 = scalar_lea.vmem %s45, 224
      %5578 = vst [vmem:[%s5577] sm:%s5576] %v5574
      %s5579 = scalar_lea.vmem [#allocation0], 904
      %v5580 = vld [vmem:[%s5579] sm:%s4789]
      %v5581 = vpack.c.bf16 0.0, %v5580
      %s5583 = ssub.s32 4, 1
      %s5584 = scalar_lea.vmem %s45, 226
      %5585 = vst [vmem:[%s5584] sm:%s5583] %v5581
      %s5586 = scalar_lea.vmem [#allocation0], 912
      %v5587 = vld [vmem:[%s5586] sm:%s4789]
      %v5588 = vpack.c.bf16 0.0, %v5587
      %s5590 = ssub.s32 4, 1
      %s5591 = scalar_lea.vmem %s45, 228
      %5592 = vst [vmem:[%s5591] sm:%s5590] %v5588
      %s5593 = scalar_lea.vmem [#allocation0], 920
      %v5594 = vld [vmem:[%s5593] sm:%s4789]
      %v5595 = vpack.c.bf16 0.0, %v5594
      %s5597 = ssub.s32 4, 1
      %s5598 = scalar_lea.vmem %s45, 230
      %5599 = vst [vmem:[%s5598] sm:%s5597] %v5595
      %s5600 = scalar_lea.vmem [#allocation0], 928
      %v5601 = vld [vmem:[%s5600] sm:%s4789]
      %v5602 = vpack.c.bf16 0.0, %v5601
      %s5604 = ssub.s32 4, 1
      %s5605 = scalar_lea.vmem %s45, 232
      %5606 = vst [vmem:[%s5605] sm:%s5604] %v5602
      %s5607 = scalar_lea.vmem [#allocation0], 936
      %v5608 = vld [vmem:[%s5607] sm:%s4789]
      %v5609 = vpack.c.bf16 0.0, %v5608
      %s5611 = ssub.s32 4, 1
      %s5612 = scalar_lea.vmem %s45, 234
      %5613 = vst [vmem:[%s5612] sm:%s5611] %v5609
      %s5614 = scalar_lea.vmem [#allocation0], 944
      %v5615 = vld [vmem:[%s5614] sm:%s4789]
      %v5616 = vpack.c.bf16 0.0, %v5615
      %s5618 = ssub.s32 4, 1
      %s5619 = scalar_lea.vmem %s45, 236
      %5620 = vst [vmem:[%s5619] sm:%s5618] %v5616
      %s5621 = scalar_lea.vmem [#allocation0], 952
      %v5622 = vld [vmem:[%s5621] sm:%s4789]
      %v5623 = vpack.c.bf16 0.0, %v5622
      %s5625 = ssub.s32 4, 1
      %s5626 = scalar_lea.vmem %s45, 238
      %5627 = vst [vmem:[%s5626] sm:%s5625] %v5623
      %s5628 = scalar_lea.vmem [#allocation0], 960
      %v5629 = vld [vmem:[%s5628] sm:%s4789]
      %v5630 = vpack.c.bf16 0.0, %v5629
      %s5632 = ssub.s32 4, 1
      %s5633 = scalar_lea.vmem %s45, 240
      %5634 = vst [vmem:[%s5633] sm:%s5632] %v5630
      %s5635 = scalar_lea.vmem [#allocation0], 968
      %v5636 = vld [vmem:[%s5635] sm:%s4789]
      %v5637 = vpack.c.bf16 0.0, %v5636
      %s5639 = ssub.s32 4, 1
      %s5640 = scalar_lea.vmem %s45, 242
      %5641 = vst [vmem:[%s5640] sm:%s5639] %v5637
      %s5642 = scalar_lea.vmem [#allocation0], 976
      %v5643 = vld [vmem:[%s5642] sm:%s4789]
      %v5644 = vpack.c.bf16 0.0, %v5643
      %s5646 = ssub.s32 4, 1
      %s5647 = scalar_lea.vmem %s45, 244
      %5648 = vst [vmem:[%s5647] sm:%s5646] %v5644
      %s5649 = scalar_lea.vmem [#allocation0], 984
      %v5650 = vld [vmem:[%s5649] sm:%s4789]
      %v5651 = vpack.c.bf16 0.0, %v5650
      %s5653 = ssub.s32 4, 1
      %s5654 = scalar_lea.vmem %s45, 246
      %5655 = vst [vmem:[%s5654] sm:%s5653] %v5651
      %s5656 = scalar_lea.vmem [#allocation0], 992
      %v5657 = vld [vmem:[%s5656] sm:%s4789]
      %v5658 = vpack.c.bf16 0.0, %v5657
      %s5660 = ssub.s32 4, 1
      %s5661 = scalar_lea.vmem %s45, 248
      %5662 = vst [vmem:[%s5661] sm:%s5660] %v5658
      %s5663 = scalar_lea.vmem [#allocation0], 1000
      %v5664 = vld [vmem:[%s5663] sm:%s4789]
      %v5665 = vpack.c.bf16 0.0, %v5664
      %s5667 = ssub.s32 4, 1
      %s5668 = scalar_lea.vmem %s45, 250
      %5669 = vst [vmem:[%s5668] sm:%s5667] %v5665
      %s5670 = scalar_lea.vmem [#allocation0], 1008
      %v5671 = vld [vmem:[%s5670] sm:%s4789]
      %v5672 = vpack.c.bf16 0.0, %v5671
      %s5674 = ssub.s32 4, 1
      %s5675 = scalar_lea.vmem %s45, 252
      %5676 = vst [vmem:[%s5675] sm:%s5674] %v5672
      %s5677 = scalar_lea.vmem [#allocation0], 1016
      %v5678 = vld [vmem:[%s5677] sm:%s4789]
      %v5679 = vpack.c.bf16 0.0, %v5678
      %s5681 = ssub.s32 4, 1
      %s5682 = scalar_lea.vmem %s45, 254
      %5683 = vst [vmem:[%s5682] sm:%s5681] %v5679
      %s5684 = scalar_lea.vmem [#allocation0], 1024
      %v5685 = vld [vmem:[%s5684] sm:%s4789]
      %v5686 = vpack.c.bf16 0.0, %v5685
      %s5688 = ssub.s32 4, 1
      %s5689 = scalar_lea.vmem %s45, 256
      %5690 = vst [vmem:[%s5689] sm:%s5688] %v5686
      %s5691 = scalar_lea.vmem [#allocation0], 1032
      %v5692 = vld [vmem:[%s5691] sm:%s4789]
      %v5693 = vpack.c.bf16 0.0, %v5692
      %s5695 = ssub.s32 4, 1
      %s5696 = scalar_lea.vmem %s45, 258
      %5697 = vst [vmem:[%s5696] sm:%s5695] %v5693
      %s5698 = scalar_lea.vmem [#allocation0], 1040
      %v5699 = vld [vmem:[%s5698] sm:%s4789]
      %v5700 = vpack.c.bf16 0.0, %v5699
      %s5702 = ssub.s32 4, 1
      %s5703 = scalar_lea.vmem %s45, 260
      %5704 = vst [vmem:[%s5703] sm:%s5702] %v5700
      %s5705 = scalar_lea.vmem [#allocation0], 1048
      %v5706 = vld [vmem:[%s5705] sm:%s4789]
      %v5707 = vpack.c.bf16 0.0, %v5706
      %s5709 = ssub.s32 4, 1
      %s5710 = scalar_lea.vmem %s45, 262
      %5711 = vst [vmem:[%s5710] sm:%s5709] %v5707
      %s5712 = scalar_lea.vmem [#allocation0], 1056
      %v5713 = vld [vmem:[%s5712] sm:%s4789]
      %v5714 = vpack.c.bf16 0.0, %v5713
      %s5716 = ssub.s32 4, 1
      %s5717 = scalar_lea.vmem %s45, 264
      %5718 = vst [vmem:[%s5717] sm:%s5716] %v5714
      %s5719 = scalar_lea.vmem [#allocation0], 1064
      %v5720 = vld [vmem:[%s5719] sm:%s4789]
      %v5721 = vpack.c.bf16 0.0, %v5720
      %s5723 = ssub.s32 4, 1
      %s5724 = scalar_lea.vmem %s45, 266
      %5725 = vst [vmem:[%s5724] sm:%s5723] %v5721
      %s5726 = scalar_lea.vmem [#allocation0], 1072
      %v5727 = vld [vmem:[%s5726] sm:%s4789]
      %v5728 = vpack.c.bf16 0.0, %v5727
      %s5730 = ssub.s32 4, 1
      %s5731 = scalar_lea.vmem %s45, 268
      %5732 = vst [vmem:[%s5731] sm:%s5730] %v5728
      %s5733 = scalar_lea.vmem [#allocation0], 1080
      %v5734 = vld [vmem:[%s5733] sm:%s4789]
      %v5735 = vpack.c.bf16 0.0, %v5734
      %s5737 = ssub.s32 4, 1
      %s5738 = scalar_lea.vmem %s45, 270
      %5739 = vst [vmem:[%s5738] sm:%s5737] %v5735
      %s5740 = scalar_lea.vmem [#allocation0], 1088
      %v5741 = vld [vmem:[%s5740] sm:%s4789]
      %v5742 = vpack.c.bf16 0.0, %v5741
      %s5744 = ssub.s32 4, 1
      %s5745 = scalar_lea.vmem %s45, 272
      %5746 = vst [vmem:[%s5745] sm:%s5744] %v5742
      %s5747 = scalar_lea.vmem [#allocation0], 1096
      %v5748 = vld [vmem:[%s5747] sm:%s4789]
      %v5749 = vpack.c.bf16 0.0, %v5748
      %s5751 = ssub.s32 4, 1
      %s5752 = scalar_lea.vmem %s45, 274
      %5753 = vst [vmem:[%s5752] sm:%s5751] %v5749
      %s5754 = scalar_lea.vmem [#allocation0], 1104
      %v5755 = vld [vmem:[%s5754] sm:%s4789]
      %v5756 = vpack.c.bf16 0.0, %v5755
      %s5758 = ssub.s32 4, 1
      %s5759 = scalar_lea.vmem %s45, 276
      %5760 = vst [vmem:[%s5759] sm:%s5758] %v5756
      %s5761 = scalar_lea.vmem [#allocation0], 1112
      %v5762 = vld [vmem:[%s5761] sm:%s4789]
      %v5763 = vpack.c.bf16 0.0, %v5762
      %s5765 = ssub.s32 4, 1
      %s5766 = scalar_lea.vmem %s45, 278
      %5767 = vst [vmem:[%s5766] sm:%s5765] %v5763
      %s5768 = scalar_lea.vmem [#allocation0], 1120
      %v5769 = vld [vmem:[%s5768] sm:%s4789]
      %v5770 = vpack.c.bf16 0.0, %v5769
      %s5772 = ssub.s32 4, 1
      %s5773 = scalar_lea.vmem %s45, 280
      %5774 = vst [vmem:[%s5773] sm:%s5772] %v5770
      %s5775 = scalar_lea.vmem [#allocation0], 1128
      %v5776 = vld [vmem:[%s5775] sm:%s4789]
      %v5777 = vpack.c.bf16 0.0, %v5776
      %s5779 = ssub.s32 4, 1
      %s5780 = scalar_lea.vmem %s45, 282
      %5781 = vst [vmem:[%s5780] sm:%s5779] %v5777
      %s5782 = scalar_lea.vmem [#allocation0], 1136
      %v5783 = vld [vmem:[%s5782] sm:%s4789]
      %v5784 = vpack.c.bf16 0.0, %v5783
      %s5786 = ssub.s32 4, 1
      %s5787 = scalar_lea.vmem %s45, 284
      %5788 = vst [vmem:[%s5787] sm:%s5786] %v5784
      %s5789 = scalar_lea.vmem [#allocation0], 1144
      %v5790 = vld [vmem:[%s5789] sm:%s4789]
      %v5791 = vpack.c.bf16 0.0, %v5790
      %s5793 = ssub.s32 4, 1
      %s5794 = scalar_lea.vmem %s45, 286
      %5795 = vst [vmem:[%s5794] sm:%s5793] %v5791
      %s5796 = scalar_lea.vmem [#allocation0], 1152
      %v5797 = vld [vmem:[%s5796] sm:%s4789]
      %v5798 = vpack.c.bf16 0.0, %v5797
      %s5800 = ssub.s32 4, 1
      %s5801 = scalar_lea.vmem %s45, 288
      %5802 = vst [vmem:[%s5801] sm:%s5800] %v5798
      %s5803 = scalar_lea.vmem [#allocation0], 1160
      %v5804 = vld [vmem:[%s5803] sm:%s4789]
      %v5805 = vpack.c.bf16 0.0, %v5804
      %s5807 = ssub.s32 4, 1
      %s5808 = scalar_lea.vmem %s45, 290
      %5809 = vst [vmem:[%s5808] sm:%s5807] %v5805
      %s5810 = scalar_lea.vmem [#allocation0], 1168
      %v5811 = vld [vmem:[%s5810] sm:%s4789]
      %v5812 = vpack.c.bf16 0.0, %v5811
      %s5814 = ssub.s32 4, 1
      %s5815 = scalar_lea.vmem %s45, 292
      %5816 = vst [vmem:[%s5815] sm:%s5814] %v5812
      %s5817 = scalar_lea.vmem [#allocation0], 1176
      %v5818 = vld [vmem:[%s5817] sm:%s4789]
      %v5819 = vpack.c.bf16 0.0, %v5818
      %s5821 = ssub.s32 4, 1
      %s5822 = scalar_lea.vmem %s45, 294
      %5823 = vst [vmem:[%s5822] sm:%s5821] %v5819
      %s5824 = scalar_lea.vmem [#allocation0], 1184
      %v5825 = vld [vmem:[%s5824] sm:%s4789]
      %v5826 = vpack.c.bf16 0.0, %v5825
      %s5828 = ssub.s32 4, 1
      %s5829 = scalar_lea.vmem %s45, 296
      %5830 = vst [vmem:[%s5829] sm:%s5828] %v5826
      %s5831 = scalar_lea.vmem [#allocation0], 1192
      %v5832 = vld [vmem:[%s5831] sm:%s4789]
      %v5833 = vpack.c.bf16 0.0, %v5832
      %s5835 = ssub.s32 4, 1
      %s5836 = scalar_lea.vmem %s45, 298
      %5837 = vst [vmem:[%s5836] sm:%s5835] %v5833
      %s5838 = scalar_lea.vmem [#allocation0], 1200
      %v5839 = vld [vmem:[%s5838] sm:%s4789]
      %v5840 = vpack.c.bf16 0.0, %v5839
      %s5842 = ssub.s32 4, 1
      %s5843 = scalar_lea.vmem %s45, 300
      %5844 = vst [vmem:[%s5843] sm:%s5842] %v5840
      %s5845 = scalar_lea.vmem [#allocation0], 1208
      %v5846 = vld [vmem:[%s5845] sm:%s4789]
      %v5847 = vpack.c.bf16 0.0, %v5846
      %s5849 = ssub.s32 4, 1
      %s5850 = scalar_lea.vmem %s45, 302
      %5851 = vst [vmem:[%s5850] sm:%s5849] %v5847
      %s5852 = scalar_lea.vmem [#allocation0], 1216
      %v5853 = vld [vmem:[%s5852] sm:%s4789]
      %v5854 = vpack.c.bf16 0.0, %v5853
      %s5856 = ssub.s32 4, 1
      %s5857 = scalar_lea.vmem %s45, 304
      %5858 = vst [vmem:[%s5857] sm:%s5856] %v5854
      %s5859 = scalar_lea.vmem [#allocation0], 1224
      %v5860 = vld [vmem:[%s5859] sm:%s4789]
      %v5861 = vpack.c.bf16 0.0, %v5860
      %s5863 = ssub.s32 4, 1
      %s5864 = scalar_lea.vmem %s45, 306
      %5865 = vst [vmem:[%s5864] sm:%s5863] %v5861
      %s5866 = scalar_lea.vmem [#allocation0], 1232
      %v5867 = vld [vmem:[%s5866] sm:%s4789]
      %v5868 = vpack.c.bf16 0.0, %v5867
      %s5870 = ssub.s32 4, 1
      %s5871 = scalar_lea.vmem %s45, 308
      %5872 = vst [vmem:[%s5871] sm:%s5870] %v5868
      %s5873 = scalar_lea.vmem [#allocation0], 1240
      %v5874 = vld [vmem:[%s5873] sm:%s4789]
      %v5875 = vpack.c.bf16 0.0, %v5874
      %s5877 = ssub.s32 4, 1
      %s5878 = scalar_lea.vmem %s45, 310
      %5879 = vst [vmem:[%s5878] sm:%s5877] %v5875
      %s5880 = scalar_lea.vmem [#allocation0], 1248
      %v5881 = vld [vmem:[%s5880] sm:%s4789]
      %v5882 = vpack.c.bf16 0.0, %v5881
      %s5884 = ssub.s32 4, 1
      %s5885 = scalar_lea.vmem %s45, 312
      %5886 = vst [vmem:[%s5885] sm:%s5884] %v5882
      %s5887 = scalar_lea.vmem [#allocation0], 1256
      %v5888 = vld [vmem:[%s5887] sm:%s4789]
      %v5889 = vpack.c.bf16 0.0, %v5888
      %s5891 = ssub.s32 4, 1
      %s5892 = scalar_lea.vmem %s45, 314
      %5893 = vst [vmem:[%s5892] sm:%s5891] %v5889
      %s5894 = scalar_lea.vmem [#allocation0], 1264
      %v5895 = vld [vmem:[%s5894] sm:%s4789]
      %v5896 = vpack.c.bf16 0.0, %v5895
      %s5898 = ssub.s32 4, 1
      %s5899 = scalar_lea.vmem %s45, 316
      %5900 = vst [vmem:[%s5899] sm:%s5898] %v5896
      %s5901 = scalar_lea.vmem [#allocation0], 1272
      %v5902 = vld [vmem:[%s5901] sm:%s4789]
      %v5903 = vpack.c.bf16 0.0, %v5902
      %s5905 = ssub.s32 4, 1
      %s5906 = scalar_lea.vmem %s45, 318
      %5907 = vst [vmem:[%s5906] sm:%s5905] %v5903
      %s5908 = scalar_lea.vmem [#allocation0], 1280
      %v5909 = vld [vmem:[%s5908] sm:%s4789]
      %v5910 = vpack.c.bf16 0.0, %v5909
      %s5912 = ssub.s32 4, 1
      %s5913 = scalar_lea.vmem %s45, 320
      %5914 = vst [vmem:[%s5913] sm:%s5912] %v5910
      %s5915 = scalar_lea.vmem [#allocation0], 1288
      %v5916 = vld [vmem:[%s5915] sm:%s4789]
      %v5917 = vpack.c.bf16 0.0, %v5916
      %s5919 = ssub.s32 4, 1
      %s5920 = scalar_lea.vmem %s45, 322
      %5921 = vst [vmem:[%s5920] sm:%s5919] %v5917
      %s5922 = scalar_lea.vmem [#allocation0], 1296
      %v5923 = vld [vmem:[%s5922] sm:%s4789]
      %v5924 = vpack.c.bf16 0.0, %v5923
      %s5926 = ssub.s32 4, 1
      %s5927 = scalar_lea.vmem %s45, 324
      %5928 = vst [vmem:[%s5927] sm:%s5926] %v5924
      %s5929 = scalar_lea.vmem [#allocation0], 1304
      %v5930 = vld [vmem:[%s5929] sm:%s4789]
      %v5931 = vpack.c.bf16 0.0, %v5930
      %s5933 = ssub.s32 4, 1
      %s5934 = scalar_lea.vmem %s45, 326
      %5935 = vst [vmem:[%s5934] sm:%s5933] %v5931
      %s5936 = scalar_lea.vmem [#allocation0], 1312
      %v5937 = vld [vmem:[%s5936] sm:%s4789]
      %v5938 = vpack.c.bf16 0.0, %v5937
      %s5940 = ssub.s32 4, 1
      %s5941 = scalar_lea.vmem %s45, 328
      %5942 = vst [vmem:[%s5941] sm:%s5940] %v5938
      %s5943 = scalar_lea.vmem [#allocation0], 1320
      %v5944 = vld [vmem:[%s5943] sm:%s4789]
      %v5945 = vpack.c.bf16 0.0, %v5944
      %s5947 = ssub.s32 4, 1
      %s5948 = scalar_lea.vmem %s45, 330
      %5949 = vst [vmem:[%s5948] sm:%s5947] %v5945
      %s5950 = scalar_lea.vmem [#allocation0], 1328
      %v5951 = vld [vmem:[%s5950] sm:%s4789]
      %v5952 = vpack.c.bf16 0.0, %v5951
      %s5954 = ssub.s32 4, 1
      %s5955 = scalar_lea.vmem %s45, 332
      %5956 = vst [vmem:[%s5955] sm:%s5954] %v5952
      %s5957 = scalar_lea.vmem [#allocation0], 1336
      %v5958 = vld [vmem:[%s5957] sm:%s4789]
      %v5959 = vpack.c.bf16 0.0, %v5958
      %s5961 = ssub.s32 4, 1
      %s5962 = scalar_lea.vmem %s45, 334
      %5963 = vst [vmem:[%s5962] sm:%s5961] %v5959
      %s5964 = scalar_lea.vmem [#allocation0], 1344
      %v5965 = vld [vmem:[%s5964] sm:%s4789]
      %v5966 = vpack.c.bf16 0.0, %v5965
      %s5968 = ssub.s32 4, 1
      %s5969 = scalar_lea.vmem %s45, 336
      %5970 = vst [vmem:[%s5969] sm:%s5968] %v5966
      %s5971 = scalar_lea.vmem [#allocation0], 1352
      %v5972 = vld [vmem:[%s5971] sm:%s4789]
      %v5973 = vpack.c.bf16 0.0, %v5972
      %s5975 = ssub.s32 4, 1
      %s5976 = scalar_lea.vmem %s45, 338
      %5977 = vst [vmem:[%s5976] sm:%s5975] %v5973
      %s5978 = scalar_lea.vmem [#allocation0], 1360
      %v5979 = vld [vmem:[%s5978] sm:%s4789]
      %v5980 = vpack.c.bf16 0.0, %v5979
      %s5982 = ssub.s32 4, 1
      %s5983 = scalar_lea.vmem %s45, 340
      %5984 = vst [vmem:[%s5983] sm:%s5982] %v5980
      %s5985 = scalar_lea.vmem [#allocation0], 1368
      %v5986 = vld [vmem:[%s5985] sm:%s4789]
      %v5987 = vpack.c.bf16 0.0, %v5986
      %s5989 = ssub.s32 4, 1
      %s5990 = scalar_lea.vmem %s45, 342
      %5991 = vst [vmem:[%s5990] sm:%s5989] %v5987
      %s5992 = scalar_lea.vmem [#allocation0], 1376
      %v5993 = vld [vmem:[%s5992] sm:%s4789]
      %v5994 = vpack.c.bf16 0.0, %v5993
      %s5996 = ssub.s32 4, 1
      %s5997 = scalar_lea.vmem %s45, 344
      %5998 = vst [vmem:[%s5997] sm:%s5996] %v5994
      %s5999 = scalar_lea.vmem [#allocation0], 1384
      %v6000 = vld [vmem:[%s5999] sm:%s4789]
      %v6001 = vpack.c.bf16 0.0, %v6000
      %s6003 = ssub.s32 4, 1
      %s6004 = scalar_lea.vmem %s45, 346
      %6005 = vst [vmem:[%s6004] sm:%s6003] %v6001
      %s6006 = scalar_lea.vmem [#allocation0], 1392
      %v6007 = vld [vmem:[%s6006] sm:%s4789]
      %v6008 = vpack.c.bf16 0.0, %v6007
      %s6010 = ssub.s32 4, 1
      %s6011 = scalar_lea.vmem %s45, 348
      %6012 = vst [vmem:[%s6011] sm:%s6010] %v6008
      %s6013 = scalar_lea.vmem [#allocation0], 1400
      %v6014 = vld [vmem:[%s6013] sm:%s4789]
      %v6015 = vpack.c.bf16 0.0, %v6014
      %s6017 = ssub.s32 4, 1
      %s6018 = scalar_lea.vmem %s45, 350
      %6019 = vst [vmem:[%s6018] sm:%s6017] %v6015
      %s6020 = scalar_lea.vmem [#allocation0], 1408
      %v6021 = vld [vmem:[%s6020] sm:%s4789]
      %v6022 = vpack.c.bf16 0.0, %v6021
      %s6024 = ssub.s32 4, 1
      %s6025 = scalar_lea.vmem %s45, 352
      %6026 = vst [vmem:[%s6025] sm:%s6024] %v6022
      %s6027 = scalar_lea.vmem [#allocation0], 1416
      %v6028 = vld [vmem:[%s6027] sm:%s4789]
      %v6029 = vpack.c.bf16 0.0, %v6028
      %s6031 = ssub.s32 4, 1
      %s6032 = scalar_lea.vmem %s45, 354
      %6033 = vst [vmem:[%s6032] sm:%s6031] %v6029
      %s6034 = scalar_lea.vmem [#allocation0], 1424
      %v6035 = vld [vmem:[%s6034] sm:%s4789]
      %v6036 = vpack.c.bf16 0.0, %v6035
      %s6038 = ssub.s32 4, 1
      %s6039 = scalar_lea.vmem %s45, 356
      %6040 = vst [vmem:[%s6039] sm:%s6038] %v6036
      %s6041 = scalar_lea.vmem [#allocation0], 1432
      %v6042 = vld [vmem:[%s6041] sm:%s4789]
      %v6043 = vpack.c.bf16 0.0, %v6042
      %s6045 = ssub.s32 4, 1
      %s6046 = scalar_lea.vmem %s45, 358
      %6047 = vst [vmem:[%s6046] sm:%s6045] %v6043
      %s6048 = scalar_lea.vmem [#allocation0], 1440
      %v6049 = vld [vmem:[%s6048] sm:%s4789]
      %v6050 = vpack.c.bf16 0.0, %v6049
      %s6052 = ssub.s32 4, 1
      %s6053 = scalar_lea.vmem %s45, 360
      %6054 = vst [vmem:[%s6053] sm:%s6052] %v6050
      %s6055 = scalar_lea.vmem [#allocation0], 1448
      %v6056 = vld [vmem:[%s6055] sm:%s4789]
      %v6057 = vpack.c.bf16 0.0, %v6056
      %s6059 = ssub.s32 4, 1
      %s6060 = scalar_lea.vmem %s45, 362
      %6061 = vst [vmem:[%s6060] sm:%s6059] %v6057
      %s6062 = scalar_lea.vmem [#allocation0], 1456
      %v6063 = vld [vmem:[%s6062] sm:%s4789]
      %v6064 = vpack.c.bf16 0.0, %v6063
      %s6066 = ssub.s32 4, 1
      %s6067 = scalar_lea.vmem %s45, 364
      %6068 = vst [vmem:[%s6067] sm:%s6066] %v6064
      %s6069 = scalar_lea.vmem [#allocation0], 1464
      %v6070 = vld [vmem:[%s6069] sm:%s4789]
      %v6071 = vpack.c.bf16 0.0, %v6070
      %s6073 = ssub.s32 4, 1
      %s6074 = scalar_lea.vmem %s45, 366
      %6075 = vst [vmem:[%s6074] sm:%s6073] %v6071
      %s6076 = scalar_lea.vmem [#allocation0], 1472
      %v6077 = vld [vmem:[%s6076] sm:%s4789]
      %v6078 = vpack.c.bf16 0.0, %v6077
      %s6080 = ssub.s32 4, 1
      %s6081 = scalar_lea.vmem %s45, 368
      %6082 = vst [vmem:[%s6081] sm:%s6080] %v6078
      %s6083 = scalar_lea.vmem [#allocation0], 1480
      %v6084 = vld [vmem:[%s6083] sm:%s4789]
      %v6085 = vpack.c.bf16 0.0, %v6084
      %s6087 = ssub.s32 4, 1
      %s6088 = scalar_lea.vmem %s45, 370
      %6089 = vst [vmem:[%s6088] sm:%s6087] %v6085
      %s6090 = scalar_lea.vmem [#allocation0], 1488
      %v6091 = vld [vmem:[%s6090] sm:%s4789]
      %v6092 = vpack.c.bf16 0.0, %v6091
      %s6094 = ssub.s32 4, 1
      %s6095 = scalar_lea.vmem %s45, 372
      %6096 = vst [vmem:[%s6095] sm:%s6094] %v6092
      %s6097 = scalar_lea.vmem [#allocation0], 1496
      %v6098 = vld [vmem:[%s6097] sm:%s4789]
      %v6099 = vpack.c.bf16 0.0, %v6098
      %s6101 = ssub.s32 4, 1
      %s6102 = scalar_lea.vmem %s45, 374
      %6103 = vst [vmem:[%s6102] sm:%s6101] %v6099
      %s6104 = scalar_lea.vmem [#allocation0], 1504
      %v6105 = vld [vmem:[%s6104] sm:%s4789]
      %v6106 = vpack.c.bf16 0.0, %v6105
      %s6108 = ssub.s32 4, 1
      %s6109 = scalar_lea.vmem %s45, 376
      %6110 = vst [vmem:[%s6109] sm:%s6108] %v6106
      %s6111 = scalar_lea.vmem [#allocation0], 1512
      %v6112 = vld [vmem:[%s6111] sm:%s4789]
      %v6113 = vpack.c.bf16 0.0, %v6112
      %s6115 = ssub.s32 4, 1
      %s6116 = scalar_lea.vmem %s45, 378
      %6117 = vst [vmem:[%s6116] sm:%s6115] %v6113
      %s6118 = scalar_lea.vmem [#allocation0], 1520
      %v6119 = vld [vmem:[%s6118] sm:%s4789]
      %v6120 = vpack.c.bf16 0.0, %v6119
      %s6122 = ssub.s32 4, 1
      %s6123 = scalar_lea.vmem %s45, 380
      %6124 = vst [vmem:[%s6123] sm:%s6122] %v6120
      %s6125 = scalar_lea.vmem [#allocation0], 1528
      %v6126 = vld [vmem:[%s6125] sm:%s4789]
      %v6127 = vpack.c.bf16 0.0, %v6126
      %s6129 = ssub.s32 4, 1
      %s6130 = scalar_lea.vmem %s45, 382
      %6131 = vst [vmem:[%s6130] sm:%s6129] %v6127
      %s6132 = scalar_lea.vmem [#allocation0], 1536
      %v6133 = vld [vmem:[%s6132] sm:%s4789]
      %v6134 = vpack.c.bf16 0.0, %v6133
      %s6136 = ssub.s32 4, 1
      %s6137 = scalar_lea.vmem %s45, 384
      %6138 = vst [vmem:[%s6137] sm:%s6136] %v6134
      %s6139 = scalar_lea.vmem [#allocation0], 1544
      %v6140 = vld [vmem:[%s6139] sm:%s4789]
      %v6141 = vpack.c.bf16 0.0, %v6140
      %s6143 = ssub.s32 4, 1
      %s6144 = scalar_lea.vmem %s45, 386
      %6145 = vst [vmem:[%s6144] sm:%s6143] %v6141
      %s6146 = scalar_lea.vmem [#allocation0], 1552
      %v6147 = vld [vmem:[%s6146] sm:%s4789]
      %v6148 = vpack.c.bf16 0.0, %v6147
      %s6150 = ssub.s32 4, 1
      %s6151 = scalar_lea.vmem %s45, 388
      %6152 = vst [vmem:[%s6151] sm:%s6150] %v6148
      %s6153 = scalar_lea.vmem [#allocation0], 1560
      %v6154 = vld [vmem:[%s6153] sm:%s4789]
      %v6155 = vpack.c.bf16 0.0, %v6154
      %s6157 = ssub.s32 4, 1
      %s6158 = scalar_lea.vmem %s45, 390
      %6159 = vst [vmem:[%s6158] sm:%s6157] %v6155
      %s6160 = scalar_lea.vmem [#allocation0], 1568
      %v6161 = vld [vmem:[%s6160] sm:%s4789]
      %v6162 = vpack.c.bf16 0.0, %v6161
      %s6164 = ssub.s32 4, 1
      %s6165 = scalar_lea.vmem %s45, 392
      %6166 = vst [vmem:[%s6165] sm:%s6164] %v6162
      %s6167 = scalar_lea.vmem [#allocation0], 1576
      %v6168 = vld [vmem:[%s6167] sm:%s4789]
      %v6169 = vpack.c.bf16 0.0, %v6168
      %s6171 = ssub.s32 4, 1
      %s6172 = scalar_lea.vmem %s45, 394
      %6173 = vst [vmem:[%s6172] sm:%s6171] %v6169
      %s6174 = scalar_lea.vmem [#allocation0], 1584
      %v6175 = vld [vmem:[%s6174] sm:%s4789]
      %v6176 = vpack.c.bf16 0.0, %v6175
      %s6178 = ssub.s32 4, 1
      %s6179 = scalar_lea.vmem %s45, 396
      %6180 = vst [vmem:[%s6179] sm:%s6178] %v6176
      %s6181 = scalar_lea.vmem [#allocation0], 1592
      %v6182 = vld [vmem:[%s6181] sm:%s4789]
      %v6183 = vpack.c.bf16 0.0, %v6182
      %s6185 = ssub.s32 4, 1
      %s6186 = scalar_lea.vmem %s45, 398
      %6187 = vst [vmem:[%s6186] sm:%s6185] %v6183
      %s6188 = scalar_lea.vmem [#allocation0], 1600
      %v6189 = vld [vmem:[%s6188] sm:%s4789]
      %v6190 = vpack.c.bf16 0.0, %v6189
      %s6192 = ssub.s32 4, 1
      %s6193 = scalar_lea.vmem %s45, 400
      %6194 = vst [vmem:[%s6193] sm:%s6192] %v6190
      %s6195 = scalar_lea.vmem [#allocation0], 1608
      %v6196 = vld [vmem:[%s6195] sm:%s4789]
      %v6197 = vpack.c.bf16 0.0, %v6196
      %s6199 = ssub.s32 4, 1
      %s6200 = scalar_lea.vmem %s45, 402
      %6201 = vst [vmem:[%s6200] sm:%s6199] %v6197
      %s6202 = scalar_lea.vmem [#allocation0], 1616
      %v6203 = vld [vmem:[%s6202] sm:%s4789]
      %v6204 = vpack.c.bf16 0.0, %v6203
      %s6206 = ssub.s32 4, 1
      %s6207 = scalar_lea.vmem %s45, 404
      %6208 = vst [vmem:[%s6207] sm:%s6206] %v6204
      %s6209 = scalar_lea.vmem [#allocation0], 1624
      %v6210 = vld [vmem:[%s6209] sm:%s4789]
      %v6211 = vpack.c.bf16 0.0, %v6210
      %s6213 = ssub.s32 4, 1
      %s6214 = scalar_lea.vmem %s45, 406
      %6215 = vst [vmem:[%s6214] sm:%s6213] %v6211
      %s6216 = scalar_lea.vmem [#allocation0], 1632
      %v6217 = vld [vmem:[%s6216] sm:%s4789]
      %v6218 = vpack.c.bf16 0.0, %v6217
      %s6220 = ssub.s32 4, 1
      %s6221 = scalar_lea.vmem %s45, 408
      %6222 = vst [vmem:[%s6221] sm:%s6220] %v6218
      %s6223 = scalar_lea.vmem [#allocation0], 1640
      %v6224 = vld [vmem:[%s6223] sm:%s4789]
      %v6225 = vpack.c.bf16 0.0, %v6224
      %s6227 = ssub.s32 4, 1
      %s6228 = scalar_lea.vmem %s45, 410
      %6229 = vst [vmem:[%s6228] sm:%s6227] %v6225
      %s6230 = scalar_lea.vmem [#allocation0], 1648
      %v6231 = vld [vmem:[%s6230] sm:%s4789]
      %v6232 = vpack.c.bf16 0.0, %v6231
      %s6234 = ssub.s32 4, 1
      %s6235 = scalar_lea.vmem %s45, 412
      %6236 = vst [vmem:[%s6235] sm:%s6234] %v6232
      %s6237 = scalar_lea.vmem [#allocation0], 1656
      %v6238 = vld [vmem:[%s6237] sm:%s4789]
      %v6239 = vpack.c.bf16 0.0, %v6238
      %s6241 = ssub.s32 4, 1
      %s6242 = scalar_lea.vmem %s45, 414
      %6243 = vst [vmem:[%s6242] sm:%s6241] %v6239
      %s6244 = scalar_lea.vmem [#allocation0], 1664
      %v6245 = vld [vmem:[%s6244] sm:%s4789]
      %v6246 = vpack.c.bf16 0.0, %v6245
      %s6248 = ssub.s32 4, 1
      %s6249 = scalar_lea.vmem %s45, 416
      %6250 = vst [vmem:[%s6249] sm:%s6248] %v6246
      %s6251 = scalar_lea.vmem [#allocation0], 1672
      %v6252 = vld [vmem:[%s6251] sm:%s4789]
      %v6253 = vpack.c.bf16 0.0, %v6252
      %s6255 = ssub.s32 4, 1
      %s6256 = scalar_lea.vmem %s45, 418
      %6257 = vst [vmem:[%s6256] sm:%s6255] %v6253
      %s6258 = scalar_lea.vmem [#allocation0], 1680
      %v6259 = vld [vmem:[%s6258] sm:%s4789]
      %v6260 = vpack.c.bf16 0.0, %v6259
      %s6262 = ssub.s32 4, 1
      %s6263 = scalar_lea.vmem %s45, 420
      %6264 = vst [vmem:[%s6263] sm:%s6262] %v6260
      %s6265 = scalar_lea.vmem [#allocation0], 1688
      %v6266 = vld [vmem:[%s6265] sm:%s4789]
      %v6267 = vpack.c.bf16 0.0, %v6266
      %s6269 = ssub.s32 4, 1
      %s6270 = scalar_lea.vmem %s45, 422
      %6271 = vst [vmem:[%s6270] sm:%s6269] %v6267
      %s6272 = scalar_lea.vmem [#allocation0], 1696
      %v6273 = vld [vmem:[%s6272] sm:%s4789]
      %v6274 = vpack.c.bf16 0.0, %v6273
      %s6276 = ssub.s32 4, 1
      %s6277 = scalar_lea.vmem %s45, 424
      %6278 = vst [vmem:[%s6277] sm:%s6276] %v6274
      %s6279 = scalar_lea.vmem [#allocation0], 1704
      %v6280 = vld [vmem:[%s6279] sm:%s4789]
      %v6281 = vpack.c.bf16 0.0, %v6280
      %s6283 = ssub.s32 4, 1
      %s6284 = scalar_lea.vmem %s45, 426
      %6285 = vst [vmem:[%s6284] sm:%s6283] %v6281
      %s6286 = scalar_lea.vmem [#allocation0], 1712
      %v6287 = vld [vmem:[%s6286] sm:%s4789]
      %v6288 = vpack.c.bf16 0.0, %v6287
      %s6290 = ssub.s32 4, 1
      %s6291 = scalar_lea.vmem %s45, 428
      %6292 = vst [vmem:[%s6291] sm:%s6290] %v6288
      %s6293 = scalar_lea.vmem [#allocation0], 1720
      %v6294 = vld [vmem:[%s6293] sm:%s4789]
      %v6295 = vpack.c.bf16 0.0, %v6294
      %s6297 = ssub.s32 4, 1
      %s6298 = scalar_lea.vmem %s45, 430
      %6299 = vst [vmem:[%s6298] sm:%s6297] %v6295
      %s6300 = scalar_lea.vmem [#allocation0], 1728
      %v6301 = vld [vmem:[%s6300] sm:%s4789]
      %v6302 = vpack.c.bf16 0.0, %v6301
      %s6304 = ssub.s32 4, 1
      %s6305 = scalar_lea.vmem %s45, 432
      %6306 = vst [vmem:[%s6305] sm:%s6304] %v6302
      %s6307 = scalar_lea.vmem [#allocation0], 1736
      %v6308 = vld [vmem:[%s6307] sm:%s4789]
      %v6309 = vpack.c.bf16 0.0, %v6308
      %s6311 = ssub.s32 4, 1
      %s6312 = scalar_lea.vmem %s45, 434
      %6313 = vst [vmem:[%s6312] sm:%s6311] %v6309
      %s6314 = scalar_lea.vmem [#allocation0], 1744
      %v6315 = vld [vmem:[%s6314] sm:%s4789]
      %v6316 = vpack.c.bf16 0.0, %v6315
      %s6318 = ssub.s32 4, 1
      %s6319 = scalar_lea.vmem %s45, 436
      %6320 = vst [vmem:[%s6319] sm:%s6318] %v6316
      %s6321 = scalar_lea.vmem [#allocation0], 1752
      %v6322 = vld [vmem:[%s6321] sm:%s4789]
      %v6323 = vpack.c.bf16 0.0, %v6322
      %s6325 = ssub.s32 4, 1
      %s6326 = scalar_lea.vmem %s45, 438
      %6327 = vst [vmem:[%s6326] sm:%s6325] %v6323
      %s6328 = scalar_lea.vmem [#allocation0], 1760
      %v6329 = vld [vmem:[%s6328] sm:%s4789]
      %v6330 = vpack.c.bf16 0.0, %v6329
      %s6332 = ssub.s32 4, 1
      %s6333 = scalar_lea.vmem %s45, 440
      %6334 = vst [vmem:[%s6333] sm:%s6332] %v6330
      %s6335 = scalar_lea.vmem [#allocation0], 1768
      %v6336 = vld [vmem:[%s6335] sm:%s4789]
      %v6337 = vpack.c.bf16 0.0, %v6336
      %s6339 = ssub.s32 4, 1
      %s6340 = scalar_lea.vmem %s45, 442
      %6341 = vst [vmem:[%s6340] sm:%s6339] %v6337
      %s6342 = scalar_lea.vmem [#allocation0], 1776
      %v6343 = vld [vmem:[%s6342] sm:%s4789]
      %v6344 = vpack.c.bf16 0.0, %v6343
      %s6346 = ssub.s32 4, 1
      %s6347 = scalar_lea.vmem %s45, 444
      %6348 = vst [vmem:[%s6347] sm:%s6346] %v6344
      %s6349 = scalar_lea.vmem [#allocation0], 1784
      %v6350 = vld [vmem:[%s6349] sm:%s4789]
      %v6351 = vpack.c.bf16 0.0, %v6350
      %s6353 = ssub.s32 4, 1
      %s6354 = scalar_lea.vmem %s45, 446
      %6355 = vst [vmem:[%s6354] sm:%s6353] %v6351
      %s6356 = scalar_lea.vmem [#allocation0], 1792
      %v6357 = vld [vmem:[%s6356] sm:%s4789]
      %v6358 = vpack.c.bf16 0.0, %v6357
      %s6360 = ssub.s32 4, 1
      %s6361 = scalar_lea.vmem %s45, 448
      %6362 = vst [vmem:[%s6361] sm:%s6360] %v6358
      %s6363 = scalar_lea.vmem [#allocation0], 1800
      %v6364 = vld [vmem:[%s6363] sm:%s4789]
      %v6365 = vpack.c.bf16 0.0, %v6364
      %s6367 = ssub.s32 4, 1
      %s6368 = scalar_lea.vmem %s45, 450
      %6369 = vst [vmem:[%s6368] sm:%s6367] %v6365
      %s6370 = scalar_lea.vmem [#allocation0], 1808
      %v6371 = vld [vmem:[%s6370] sm:%s4789]
      %v6372 = vpack.c.bf16 0.0, %v6371
      %s6374 = ssub.s32 4, 1
      %s6375 = scalar_lea.vmem %s45, 452
      %6376 = vst [vmem:[%s6375] sm:%s6374] %v6372
      %s6377 = scalar_lea.vmem [#allocation0], 1816
      %v6378 = vld [vmem:[%s6377] sm:%s4789]
      %v6379 = vpack.c.bf16 0.0, %v6378
      %s6381 = ssub.s32 4, 1
      %s6382 = scalar_lea.vmem %s45, 454
      %6383 = vst [vmem:[%s6382] sm:%s6381] %v6379
      %s6384 = scalar_lea.vmem [#allocation0], 1824
      %v6385 = vld [vmem:[%s6384] sm:%s4789]
      %v6386 = vpack.c.bf16 0.0, %v6385
      %s6388 = ssub.s32 4, 1
      %s6389 = scalar_lea.vmem %s45, 456
      %6390 = vst [vmem:[%s6389] sm:%s6388] %v6386
      %s6391 = scalar_lea.vmem [#allocation0], 1832
      %v6392 = vld [vmem:[%s6391] sm:%s4789]
      %v6393 = vpack.c.bf16 0.0, %v6392
      %s6395 = ssub.s32 4, 1
      %s6396 = scalar_lea.vmem %s45, 458
      %6397 = vst [vmem:[%s6396] sm:%s6395] %v6393
      %s6398 = scalar_lea.vmem [#allocation0], 1840
      %v6399 = vld [vmem:[%s6398] sm:%s4789]
      %v6400 = vpack.c.bf16 0.0, %v6399
      %s6402 = ssub.s32 4, 1
      %s6403 = scalar_lea.vmem %s45, 460
      %6404 = vst [vmem:[%s6403] sm:%s6402] %v6400
      %s6405 = scalar_lea.vmem [#allocation0], 1848
      %v6406 = vld [vmem:[%s6405] sm:%s4789]
      %v6407 = vpack.c.bf16 0.0, %v6406
      %s6409 = ssub.s32 4, 1
      %s6410 = scalar_lea.vmem %s45, 462
      %6411 = vst [vmem:[%s6410] sm:%s6409] %v6407
      %s6412 = scalar_lea.vmem [#allocation0], 1856
      %v6413 = vld [vmem:[%s6412] sm:%s4789]
      %v6414 = vpack.c.bf16 0.0, %v6413
      %s6416 = ssub.s32 4, 1
      %s6417 = scalar_lea.vmem %s45, 464
      %6418 = vst [vmem:[%s6417] sm:%s6416] %v6414
      %s6419 = scalar_lea.vmem [#allocation0], 1864
      %v6420 = vld [vmem:[%s6419] sm:%s4789]
      %v6421 = vpack.c.bf16 0.0, %v6420
      %s6423 = ssub.s32 4, 1
      %s6424 = scalar_lea.vmem %s45, 466
      %6425 = vst [vmem:[%s6424] sm:%s6423] %v6421
      %s6426 = scalar_lea.vmem [#allocation0], 1872
      %v6427 = vld [vmem:[%s6426] sm:%s4789]
      %v6428 = vpack.c.bf16 0.0, %v6427
      %s6430 = ssub.s32 4, 1
      %s6431 = scalar_lea.vmem %s45, 468
      %6432 = vst [vmem:[%s6431] sm:%s6430] %v6428
      %s6433 = scalar_lea.vmem [#allocation0], 1880
      %v6434 = vld [vmem:[%s6433] sm:%s4789]
      %v6435 = vpack.c.bf16 0.0, %v6434
      %s6437 = ssub.s32 4, 1
      %s6438 = scalar_lea.vmem %s45, 470
      %6439 = vst [vmem:[%s6438] sm:%s6437] %v6435
      %s6440 = scalar_lea.vmem [#allocation0], 1888
      %v6441 = vld [vmem:[%s6440] sm:%s4789]
      %v6442 = vpack.c.bf16 0.0, %v6441
      %s6444 = ssub.s32 4, 1
      %s6445 = scalar_lea.vmem %s45, 472
      %6446 = vst [vmem:[%s6445] sm:%s6444] %v6442
      %s6447 = scalar_lea.vmem [#allocation0], 1896
      %v6448 = vld [vmem:[%s6447] sm:%s4789]
      %v6449 = vpack.c.bf16 0.0, %v6448
      %s6451 = ssub.s32 4, 1
      %s6452 = scalar_lea.vmem %s45, 474
      %6453 = vst [vmem:[%s6452] sm:%s6451] %v6449
      %s6454 = scalar_lea.vmem [#allocation0], 1904
      %v6455 = vld [vmem:[%s6454] sm:%s4789]
      %v6456 = vpack.c.bf16 0.0, %v6455
      %s6458 = ssub.s32 4, 1
      %s6459 = scalar_lea.vmem %s45, 476
      %6460 = vst [vmem:[%s6459] sm:%s6458] %v6456
      %s6461 = scalar_lea.vmem [#allocation0], 1912
      %v6462 = vld [vmem:[%s6461] sm:%s4789]
      %v6463 = vpack.c.bf16 0.0, %v6462
      %s6465 = ssub.s32 4, 1
      %s6466 = scalar_lea.vmem %s45, 478
      %6467 = vst [vmem:[%s6466] sm:%s6465] %v6463
      %s6468 = scalar_lea.vmem [#allocation0], 1920
      %v6469 = vld [vmem:[%s6468] sm:%s4789]
      %v6470 = vpack.c.bf16 0.0, %v6469
      %s6472 = ssub.s32 4, 1
      %s6473 = scalar_lea.vmem %s45, 480
      %6474 = vst [vmem:[%s6473] sm:%s6472] %v6470
      %s6475 = scalar_lea.vmem [#allocation0], 1928
      %v6476 = vld [vmem:[%s6475] sm:%s4789]
      %v6477 = vpack.c.bf16 0.0, %v6476
      %s6479 = ssub.s32 4, 1
      %s6480 = scalar_lea.vmem %s45, 482
      %6481 = vst [vmem:[%s6480] sm:%s6479] %v6477
      %s6482 = scalar_lea.vmem [#allocation0], 1936
      %v6483 = vld [vmem:[%s6482] sm:%s4789]
      %v6484 = vpack.c.bf16 0.0, %v6483
      %s6486 = ssub.s32 4, 1
      %s6487 = scalar_lea.vmem %s45, 484
      %6488 = vst [vmem:[%s6487] sm:%s6486] %v6484
      %s6489 = scalar_lea.vmem [#allocation0], 1944
      %v6490 = vld [vmem:[%s6489] sm:%s4789]
      %v6491 = vpack.c.bf16 0.0, %v6490
      %s6493 = ssub.s32 4, 1
      %s6494 = scalar_lea.vmem %s45, 486
      %6495 = vst [vmem:[%s6494] sm:%s6493] %v6491
      %s6496 = scalar_lea.vmem [#allocation0], 1952
      %v6497 = vld [vmem:[%s6496] sm:%s4789]
      %v6498 = vpack.c.bf16 0.0, %v6497
      %s6500 = ssub.s32 4, 1
      %s6501 = scalar_lea.vmem %s45, 488
      %6502 = vst [vmem:[%s6501] sm:%s6500] %v6498
      %s6503 = scalar_lea.vmem [#allocation0], 1960
      %v6504 = vld [vmem:[%s6503] sm:%s4789]
      %v6505 = vpack.c.bf16 0.0, %v6504
      %s6507 = ssub.s32 4, 1
      %s6508 = scalar_lea.vmem %s45, 490
      %6509 = vst [vmem:[%s6508] sm:%s6507] %v6505
      %s6510 = scalar_lea.vmem [#allocation0], 1968
      %v6511 = vld [vmem:[%s6510] sm:%s4789]
      %v6512 = vpack.c.bf16 0.0, %v6511
      %s6514 = ssub.s32 4, 1
      %s6515 = scalar_lea.vmem %s45, 492
      %6516 = vst [vmem:[%s6515] sm:%s6514] %v6512
      %s6517 = scalar_lea.vmem [#allocation0], 1976
      %v6518 = vld [vmem:[%s6517] sm:%s4789]
      %v6519 = vpack.c.bf16 0.0, %v6518
      %s6521 = ssub.s32 4, 1
      %s6522 = scalar_lea.vmem %s45, 494
      %6523 = vst [vmem:[%s6522] sm:%s6521] %v6519
      %s6524 = scalar_lea.vmem [#allocation0], 1984
      %v6525 = vld [vmem:[%s6524] sm:%s4789]
      %v6526 = vpack.c.bf16 0.0, %v6525
      %s6528 = ssub.s32 4, 1
      %s6529 = scalar_lea.vmem %s45, 496
      %6530 = vst [vmem:[%s6529] sm:%s6528] %v6526
      %s6531 = scalar_lea.vmem [#allocation0], 1992
      %v6532 = vld [vmem:[%s6531] sm:%s4789]
      %v6533 = vpack.c.bf16 0.0, %v6532
      %s6535 = ssub.s32 4, 1
      %s6536 = scalar_lea.vmem %s45, 498
      %6537 = vst [vmem:[%s6536] sm:%s6535] %v6533
      %s6538 = scalar_lea.vmem [#allocation0], 2000
      %v6539 = vld [vmem:[%s6538] sm:%s4789]
      %v6540 = vpack.c.bf16 0.0, %v6539
      %s6542 = ssub.s32 4, 1
      %s6543 = scalar_lea.vmem %s45, 500
      %6544 = vst [vmem:[%s6543] sm:%s6542] %v6540
      %s6545 = scalar_lea.vmem [#allocation0], 2008
      %v6546 = vld [vmem:[%s6545] sm:%s4789]
      %v6547 = vpack.c.bf16 0.0, %v6546
      %s6549 = ssub.s32 4, 1
      %s6550 = scalar_lea.vmem %s45, 502
      %6551 = vst [vmem:[%s6550] sm:%s6549] %v6547
      %s6552 = scalar_lea.vmem [#allocation0], 2016
      %v6553 = vld [vmem:[%s6552] sm:%s4789]
      %v6554 = vpack.c.bf16 0.0, %v6553
      %s6556 = ssub.s32 4, 1
      %s6557 = scalar_lea.vmem %s45, 504
      %6558 = vst [vmem:[%s6557] sm:%s6556] %v6554
      %s6559 = scalar_lea.vmem [#allocation0], 2024
      %v6560 = vld [vmem:[%s6559] sm:%s4789]
      %v6561 = vpack.c.bf16 0.0, %v6560
      %s6563 = ssub.s32 4, 1
      %s6564 = scalar_lea.vmem %s45, 506
      %6565 = vst [vmem:[%s6564] sm:%s6563] %v6561
      %s6566 = scalar_lea.vmem [#allocation0], 2032
      %v6567 = vld [vmem:[%s6566] sm:%s4789]
      %v6568 = vpack.c.bf16 0.0, %v6567
      %s6570 = ssub.s32 4, 1
      %s6571 = scalar_lea.vmem %s45, 508
      %6572 = vst [vmem:[%s6571] sm:%s6570] %v6568
      %s6573 = scalar_lea.vmem [#allocation0], 2040
      %v6574 = vld [vmem:[%s6573] sm:%s4789]
      %v6575 = vpack.c.bf16 0.0, %v6574
      %s6577 = ssub.s32 4, 1
      %s6578 = scalar_lea.vmem %s45, 510
      %6579 = vst [vmem:[%s6578] sm:%s6577] %v6575
      %s6580 = scalar_lea.vmem [#allocation0], 2048
      %v6581 = vld [vmem:[%s6580] sm:%s4789]
      %v6582 = vpack.c.bf16 0.0, %v6581
      %s6584 = ssub.s32 4, 1
      %s6585 = scalar_lea.vmem %s45, 512
      %6586 = vst [vmem:[%s6585] sm:%s6584] %v6582
      %s6587 = scalar_lea.vmem [#allocation0], 2056
      %v6588 = vld [vmem:[%s6587] sm:%s4789]
      %v6589 = vpack.c.bf16 0.0, %v6588
      %s6591 = ssub.s32 4, 1
      %s6592 = scalar_lea.vmem %s45, 514
      %6593 = vst [vmem:[%s6592] sm:%s6591] %v6589
      %s6594 = scalar_lea.vmem [#allocation0], 2064
      %v6595 = vld [vmem:[%s6594] sm:%s4789]
      %v6596 = vpack.c.bf16 0.0, %v6595
      %s6598 = ssub.s32 4, 1
      %s6599 = scalar_lea.vmem %s45, 516
      %6600 = vst [vmem:[%s6599] sm:%s6598] %v6596
      %s6601 = scalar_lea.vmem [#allocation0], 2072
      %v6602 = vld [vmem:[%s6601] sm:%s4789]
      %v6603 = vpack.c.bf16 0.0, %v6602
      %s6605 = ssub.s32 4, 1
      %s6606 = scalar_lea.vmem %s45, 518
      %6607 = vst [vmem:[%s6606] sm:%s6605] %v6603
      %s6608 = scalar_lea.vmem [#allocation0], 2080
      %v6609 = vld [vmem:[%s6608] sm:%s4789]
      %v6610 = vpack.c.bf16 0.0, %v6609
      %s6612 = ssub.s32 4, 1
      %s6613 = scalar_lea.vmem %s45, 520
      %6614 = vst [vmem:[%s6613] sm:%s6612] %v6610
      %s6615 = scalar_lea.vmem [#allocation0], 2088
      %v6616 = vld [vmem:[%s6615] sm:%s4789]
      %v6617 = vpack.c.bf16 0.0, %v6616
      %s6619 = ssub.s32 4, 1
      %s6620 = scalar_lea.vmem %s45, 522
      %6621 = vst [vmem:[%s6620] sm:%s6619] %v6617
      %s6622 = scalar_lea.vmem [#allocation0], 2096
      %v6623 = vld [vmem:[%s6622] sm:%s4789]
      %v6624 = vpack.c.bf16 0.0, %v6623
      %s6626 = ssub.s32 4, 1
      %s6627 = scalar_lea.vmem %s45, 524
      %6628 = vst [vmem:[%s6627] sm:%s6626] %v6624
      %s6629 = scalar_lea.vmem [#allocation0], 2104
      %v6630 = vld [vmem:[%s6629] sm:%s4789]
      %v6631 = vpack.c.bf16 0.0, %v6630
      %s6633 = ssub.s32 4, 1
      %s6634 = scalar_lea.vmem %s45, 526
      %6635 = vst [vmem:[%s6634] sm:%s6633] %v6631
      %s6636 = scalar_lea.vmem [#allocation0], 2112
      %v6637 = vld [vmem:[%s6636] sm:%s4789]
      %v6638 = vpack.c.bf16 0.0, %v6637
      %s6640 = ssub.s32 4, 1
      %s6641 = scalar_lea.vmem %s45, 528
      %6642 = vst [vmem:[%s6641] sm:%s6640] %v6638
      %s6643 = scalar_lea.vmem [#allocation0], 2120
      %v6644 = vld [vmem:[%s6643] sm:%s4789]
      %v6645 = vpack.c.bf16 0.0, %v6644
      %s6647 = ssub.s32 4, 1
      %s6648 = scalar_lea.vmem %s45, 530
      %6649 = vst [vmem:[%s6648] sm:%s6647] %v6645
      %s6650 = scalar_lea.vmem [#allocation0], 2128
      %v6651 = vld [vmem:[%s6650] sm:%s4789]
      %v6652 = vpack.c.bf16 0.0, %v6651
      %s6654 = ssub.s32 4, 1
      %s6655 = scalar_lea.vmem %s45, 532
      %6656 = vst [vmem:[%s6655] sm:%s6654] %v6652
      %s6657 = scalar_lea.vmem [#allocation0], 2136
      %v6658 = vld [vmem:[%s6657] sm:%s4789]
      %v6659 = vpack.c.bf16 0.0, %v6658
      %s6661 = ssub.s32 4, 1
      %s6662 = scalar_lea.vmem %s45, 534
      %6663 = vst [vmem:[%s6662] sm:%s6661] %v6659
      %s6664 = scalar_lea.vmem [#allocation0], 2144
      %v6665 = vld [vmem:[%s6664] sm:%s4789]
      %v6666 = vpack.c.bf16 0.0, %v6665
      %s6668 = ssub.s32 4, 1
      %s6669 = scalar_lea.vmem %s45, 536
      %6670 = vst [vmem:[%s6669] sm:%s6668] %v6666
      %s6671 = scalar_lea.vmem [#allocation0], 2152
      %v6672 = vld [vmem:[%s6671] sm:%s4789]
      %v6673 = vpack.c.bf16 0.0, %v6672
      %s6675 = ssub.s32 4, 1
      %s6676 = scalar_lea.vmem %s45, 538
      %6677 = vst [vmem:[%s6676] sm:%s6675] %v6673
      %s6678 = scalar_lea.vmem [#allocation0], 2160
      %v6679 = vld [vmem:[%s6678] sm:%s4789]
      %v6680 = vpack.c.bf16 0.0, %v6679
      %s6682 = ssub.s32 4, 1
      %s6683 = scalar_lea.vmem %s45, 540
      %6684 = vst [vmem:[%s6683] sm:%s6682] %v6680
      %s6685 = scalar_lea.vmem [#allocation0], 2168
      %v6686 = vld [vmem:[%s6685] sm:%s4789]
      %v6687 = vpack.c.bf16 0.0, %v6686
      %s6689 = ssub.s32 4, 1
      %s6690 = scalar_lea.vmem %s45, 542
      %6691 = vst [vmem:[%s6690] sm:%s6689] %v6687
      %s6692 = scalar_lea.vmem [#allocation0], 2176
      %v6693 = vld [vmem:[%s6692] sm:%s4789]
      %v6694 = vpack.c.bf16 0.0, %v6693
      %s6696 = ssub.s32 4, 1
      %s6697 = scalar_lea.vmem %s45, 544
      %6698 = vst [vmem:[%s6697] sm:%s6696] %v6694
      %s6699 = scalar_lea.vmem [#allocation0], 2184
      %v6700 = vld [vmem:[%s6699] sm:%s4789]
      %v6701 = vpack.c.bf16 0.0, %v6700
      %s6703 = ssub.s32 4, 1
      %s6704 = scalar_lea.vmem %s45, 546
      %6705 = vst [vmem:[%s6704] sm:%s6703] %v6701
      %s6706 = scalar_lea.vmem [#allocation0], 2192
      %v6707 = vld [vmem:[%s6706] sm:%s4789]
      %v6708 = vpack.c.bf16 0.0, %v6707
      %s6710 = ssub.s32 4, 1
      %s6711 = scalar_lea.vmem %s45, 548
      %6712 = vst [vmem:[%s6711] sm:%s6710] %v6708
      %s6713 = scalar_lea.vmem [#allocation0], 2200
      %v6714 = vld [vmem:[%s6713] sm:%s4789]
      %v6715 = vpack.c.bf16 0.0, %v6714
      %s6717 = ssub.s32 4, 1
      %s6718 = scalar_lea.vmem %s45, 550
      %6719 = vst [vmem:[%s6718] sm:%s6717] %v6715
      %s6720 = scalar_lea.vmem [#allocation0], 2208
      %v6721 = vld [vmem:[%s6720] sm:%s4789]
      %v6722 = vpack.c.bf16 0.0, %v6721
      %s6724 = ssub.s32 4, 1
      %s6725 = scalar_lea.vmem %s45, 552
      %6726 = vst [vmem:[%s6725] sm:%s6724] %v6722
      %s6727 = scalar_lea.vmem [#allocation0], 2216
      %v6728 = vld [vmem:[%s6727] sm:%s4789]
      %v6729 = vpack.c.bf16 0.0, %v6728
      %s6731 = ssub.s32 4, 1
      %s6732 = scalar_lea.vmem %s45, 554
      %6733 = vst [vmem:[%s6732] sm:%s6731] %v6729
      %s6734 = scalar_lea.vmem [#allocation0], 2224
      %v6735 = vld [vmem:[%s6734] sm:%s4789]
      %v6736 = vpack.c.bf16 0.0, %v6735
      %s6738 = ssub.s32 4, 1
      %s6739 = scalar_lea.vmem %s45, 556
      %6740 = vst [vmem:[%s6739] sm:%s6738] %v6736
      %s6741 = scalar_lea.vmem [#allocation0], 2232
      %v6742 = vld [vmem:[%s6741] sm:%s4789]
      %v6743 = vpack.c.bf16 0.0, %v6742
      %s6745 = ssub.s32 4, 1
      %s6746 = scalar_lea.vmem %s45, 558
      %6747 = vst [vmem:[%s6746] sm:%s6745] %v6743
      %s6748 = scalar_lea.vmem [#allocation0], 2240
      %v6749 = vld [vmem:[%s6748] sm:%s4789]
      %v6750 = vpack.c.bf16 0.0, %v6749
      %s6752 = ssub.s32 4, 1
      %s6753 = scalar_lea.vmem %s45, 560
      %6754 = vst [vmem:[%s6753] sm:%s6752] %v6750
      %s6755 = scalar_lea.vmem [#allocation0], 2248
      %v6756 = vld [vmem:[%s6755] sm:%s4789]
      %v6757 = vpack.c.bf16 0.0, %v6756
      %s6759 = ssub.s32 4, 1
      %s6760 = scalar_lea.vmem %s45, 562
      %6761 = vst [vmem:[%s6760] sm:%s6759] %v6757
      %s6762 = scalar_lea.vmem [#allocation0], 2256
      %v6763 = vld [vmem:[%s6762] sm:%s4789]
      %v6764 = vpack.c.bf16 0.0, %v6763
      %s6766 = ssub.s32 4, 1
      %s6767 = scalar_lea.vmem %s45, 564
      %6768 = vst [vmem:[%s6767] sm:%s6766] %v6764
      %s6769 = scalar_lea.vmem [#allocation0], 2264
      %v6770 = vld [vmem:[%s6769] sm:%s4789]
      %v6771 = vpack.c.bf16 0.0, %v6770
      %s6773 = ssub.s32 4, 1
      %s6774 = scalar_lea.vmem %s45, 566
      %6775 = vst [vmem:[%s6774] sm:%s6773] %v6771
      %s6776 = scalar_lea.vmem [#allocation0], 2272
      %v6777 = vld [vmem:[%s6776] sm:%s4789]
      %v6778 = vpack.c.bf16 0.0, %v6777
      %s6780 = ssub.s32 4, 1
      %s6781 = scalar_lea.vmem %s45, 568
      %6782 = vst [vmem:[%s6781] sm:%s6780] %v6778
      %s6783 = scalar_lea.vmem [#allocation0], 2280
      %v6784 = vld [vmem:[%s6783] sm:%s4789]
      %v6785 = vpack.c.bf16 0.0, %v6784
      %s6787 = ssub.s32 4, 1
      %s6788 = scalar_lea.vmem %s45, 570
      %6789 = vst [vmem:[%s6788] sm:%s6787] %v6785
      %s6790 = scalar_lea.vmem [#allocation0], 2288
      %v6791 = vld [vmem:[%s6790] sm:%s4789]
      %v6792 = vpack.c.bf16 0.0, %v6791
      %s6794 = ssub.s32 4, 1
      %s6795 = scalar_lea.vmem %s45, 572
      %6796 = vst [vmem:[%s6795] sm:%s6794] %v6792
      %s6797 = scalar_lea.vmem [#allocation0], 2296
      %v6798 = vld [vmem:[%s6797] sm:%s4789]
      %v6799 = vpack.c.bf16 0.0, %v6798
      %s6801 = ssub.s32 4, 1
      %s6802 = scalar_lea.vmem %s45, 574
      %6803 = vst [vmem:[%s6802] sm:%s6801] %v6799
      %s6804 = scalar_lea.vmem [#allocation0], 2304
      %v6805 = vld [vmem:[%s6804] sm:%s4789]
      %v6806 = vpack.c.bf16 0.0, %v6805
      %s6808 = ssub.s32 4, 1
      %s6809 = scalar_lea.vmem %s45, 576
      %6810 = vst [vmem:[%s6809] sm:%s6808] %v6806
      %s6811 = scalar_lea.vmem [#allocation0], 2312
      %v6812 = vld [vmem:[%s6811] sm:%s4789]
      %v6813 = vpack.c.bf16 0.0, %v6812
      %s6815 = ssub.s32 4, 1
      %s6816 = scalar_lea.vmem %s45, 578
      %6817 = vst [vmem:[%s6816] sm:%s6815] %v6813
      %s6818 = scalar_lea.vmem [#allocation0], 2320
      %v6819 = vld [vmem:[%s6818] sm:%s4789]
      %v6820 = vpack.c.bf16 0.0, %v6819
      %s6822 = ssub.s32 4, 1
      %s6823 = scalar_lea.vmem %s45, 580
      %6824 = vst [vmem:[%s6823] sm:%s6822] %v6820
      %s6825 = scalar_lea.vmem [#allocation0], 2328
      %v6826 = vld [vmem:[%s6825] sm:%s4789]
      %v6827 = vpack.c.bf16 0.0, %v6826
      %s6829 = ssub.s32 4, 1
      %s6830 = scalar_lea.vmem %s45, 582
      %6831 = vst [vmem:[%s6830] sm:%s6829] %v6827
      %s6832 = scalar_lea.vmem [#allocation0], 2336
      %v6833 = vld [vmem:[%s6832] sm:%s4789]
      %v6834 = vpack.c.bf16 0.0, %v6833
      %s6836 = ssub.s32 4, 1
      %s6837 = scalar_lea.vmem %s45, 584
      %6838 = vst [vmem:[%s6837] sm:%s6836] %v6834
      %s6839 = scalar_lea.vmem [#allocation0], 2344
      %v6840 = vld [vmem:[%s6839] sm:%s4789]
      %v6841 = vpack.c.bf16 0.0, %v6840
      %s6843 = ssub.s32 4, 1
      %s6844 = scalar_lea.vmem %s45, 586
      %6845 = vst [vmem:[%s6844] sm:%s6843] %v6841
      %s6846 = scalar_lea.vmem [#allocation0], 2352
      %v6847 = vld [vmem:[%s6846] sm:%s4789]
      %v6848 = vpack.c.bf16 0.0, %v6847
      %s6850 = ssub.s32 4, 1
      %s6851 = scalar_lea.vmem %s45, 588
      %6852 = vst [vmem:[%s6851] sm:%s6850] %v6848
      %s6853 = scalar_lea.vmem [#allocation0], 2360
      %v6854 = vld [vmem:[%s6853] sm:%s4789]
      %v6855 = vpack.c.bf16 0.0, %v6854
      %s6857 = ssub.s32 4, 1
      %s6858 = scalar_lea.vmem %s45, 590
      %6859 = vst [vmem:[%s6858] sm:%s6857] %v6855
      %s6860 = scalar_lea.vmem [#allocation0], 2368
      %v6861 = vld [vmem:[%s6860] sm:%s4789]
      %v6862 = vpack.c.bf16 0.0, %v6861
      %s6864 = ssub.s32 4, 1
      %s6865 = scalar_lea.vmem %s45, 592
      %6866 = vst [vmem:[%s6865] sm:%s6864] %v6862
      %s6867 = scalar_lea.vmem [#allocation0], 2376
      %v6868 = vld [vmem:[%s6867] sm:%s4789]
      %v6869 = vpack.c.bf16 0.0, %v6868
      %s6871 = ssub.s32 4, 1
      %s6872 = scalar_lea.vmem %s45, 594
      %6873 = vst [vmem:[%s6872] sm:%s6871] %v6869
      %s6874 = scalar_lea.vmem [#allocation0], 2384
      %v6875 = vld [vmem:[%s6874] sm:%s4789]
      %v6876 = vpack.c.bf16 0.0, %v6875
      %s6878 = ssub.s32 4, 1
      %s6879 = scalar_lea.vmem %s45, 596
      %6880 = vst [vmem:[%s6879] sm:%s6878] %v6876
      %s6881 = scalar_lea.vmem [#allocation0], 2392
      %v6882 = vld [vmem:[%s6881] sm:%s4789]
      %v6883 = vpack.c.bf16 0.0, %v6882
      %s6885 = ssub.s32 4, 1
      %s6886 = scalar_lea.vmem %s45, 598
      %6887 = vst [vmem:[%s6886] sm:%s6885] %v6883
      %s6888 = scalar_lea.vmem [#allocation0], 2400
      %v6889 = vld [vmem:[%s6888] sm:%s4789]
      %v6890 = vpack.c.bf16 0.0, %v6889
      %s6892 = ssub.s32 4, 1
      %s6893 = scalar_lea.vmem %s45, 600
      %6894 = vst [vmem:[%s6893] sm:%s6892] %v6890
      %s6895 = scalar_lea.vmem [#allocation0], 2408
      %v6896 = vld [vmem:[%s6895] sm:%s4789]
      %v6897 = vpack.c.bf16 0.0, %v6896
      %s6899 = ssub.s32 4, 1
      %s6900 = scalar_lea.vmem %s45, 602
      %6901 = vst [vmem:[%s6900] sm:%s6899] %v6897
      %s6902 = scalar_lea.vmem [#allocation0], 2416
      %v6903 = vld [vmem:[%s6902] sm:%s4789]
      %v6904 = vpack.c.bf16 0.0, %v6903
      %s6906 = ssub.s32 4, 1
      %s6907 = scalar_lea.vmem %s45, 604
      %6908 = vst [vmem:[%s6907] sm:%s6906] %v6904
      %s6909 = scalar_lea.vmem [#allocation0], 2424
      %v6910 = vld [vmem:[%s6909] sm:%s4789]
      %v6911 = vpack.c.bf16 0.0, %v6910
      %s6913 = ssub.s32 4, 1
      %s6914 = scalar_lea.vmem %s45, 606
      %6915 = vst [vmem:[%s6914] sm:%s6913] %v6911
      %s6916 = scalar_lea.vmem [#allocation0], 2432
      %v6917 = vld [vmem:[%s6916] sm:%s4789]
      %v6918 = vpack.c.bf16 0.0, %v6917
      %s6920 = ssub.s32 4, 1
      %s6921 = scalar_lea.vmem %s45, 608
      %6922 = vst [vmem:[%s6921] sm:%s6920] %v6918
      %s6923 = scalar_lea.vmem [#allocation0], 2440
      %v6924 = vld [vmem:[%s6923] sm:%s4789]
      %v6925 = vpack.c.bf16 0.0, %v6924
      %s6927 = ssub.s32 4, 1
      %s6928 = scalar_lea.vmem %s45, 610
      %6929 = vst [vmem:[%s6928] sm:%s6927] %v6925
      %s6930 = scalar_lea.vmem [#allocation0], 2448
      %v6931 = vld [vmem:[%s6930] sm:%s4789]
      %v6932 = vpack.c.bf16 0.0, %v6931
      %s6934 = ssub.s32 4, 1
      %s6935 = scalar_lea.vmem %s45, 612
      %6936 = vst [vmem:[%s6935] sm:%s6934] %v6932
      %s6937 = scalar_lea.vmem [#allocation0], 2456
      %v6938 = vld [vmem:[%s6937] sm:%s4789]
      %v6939 = vpack.c.bf16 0.0, %v6938
      %s6941 = ssub.s32 4, 1
      %s6942 = scalar_lea.vmem %s45, 614
      %6943 = vst [vmem:[%s6942] sm:%s6941] %v6939
      %s6944 = scalar_lea.vmem [#allocation0], 2464
      %v6945 = vld [vmem:[%s6944] sm:%s4789]
      %v6946 = vpack.c.bf16 0.0, %v6945
      %s6948 = ssub.s32 4, 1
      %s6949 = scalar_lea.vmem %s45, 616
      %6950 = vst [vmem:[%s6949] sm:%s6948] %v6946
      %s6951 = scalar_lea.vmem [#allocation0], 2472
      %v6952 = vld [vmem:[%s6951] sm:%s4789]
      %v6953 = vpack.c.bf16 0.0, %v6952
      %s6955 = ssub.s32 4, 1
      %s6956 = scalar_lea.vmem %s45, 618
      %6957 = vst [vmem:[%s6956] sm:%s6955] %v6953
      %s6958 = scalar_lea.vmem [#allocation0], 2480
      %v6959 = vld [vmem:[%s6958] sm:%s4789]
      %v6960 = vpack.c.bf16 0.0, %v6959
      %s6962 = ssub.s32 4, 1
      %s6963 = scalar_lea.vmem %s45, 620
      %6964 = vst [vmem:[%s6963] sm:%s6962] %v6960
      %s6965 = scalar_lea.vmem [#allocation0], 2488
      %v6966 = vld [vmem:[%s6965] sm:%s4789]
      %v6967 = vpack.c.bf16 0.0, %v6966
      %s6969 = ssub.s32 4, 1
      %s6970 = scalar_lea.vmem %s45, 622
      %6971 = vst [vmem:[%s6970] sm:%s6969] %v6967
      %s6972 = scalar_lea.vmem [#allocation0], 2496
      %v6973 = vld [vmem:[%s6972] sm:%s4789]
      %v6974 = vpack.c.bf16 0.0, %v6973
      %s6976 = ssub.s32 4, 1
      %s6977 = scalar_lea.vmem %s45, 624
      %6978 = vst [vmem:[%s6977] sm:%s6976] %v6974
      %s6979 = scalar_lea.vmem [#allocation0], 2504
      %v6980 = vld [vmem:[%s6979] sm:%s4789]
      %v6981 = vpack.c.bf16 0.0, %v6980
      %s6983 = ssub.s32 4, 1
      %s6984 = scalar_lea.vmem %s45, 626
      %6985 = vst [vmem:[%s6984] sm:%s6983] %v6981
      %s6986 = scalar_lea.vmem [#allocation0], 2512
      %v6987 = vld [vmem:[%s6986] sm:%s4789]
      %v6988 = vpack.c.bf16 0.0, %v6987
      %s6990 = ssub.s32 4, 1
      %s6991 = scalar_lea.vmem %s45, 628
      %6992 = vst [vmem:[%s6991] sm:%s6990] %v6988
      %s6993 = scalar_lea.vmem [#allocation0], 2520
      %v6994 = vld [vmem:[%s6993] sm:%s4789]
      %v6995 = vpack.c.bf16 0.0, %v6994
      %s6997 = ssub.s32 4, 1
      %s6998 = scalar_lea.vmem %s45, 630
      %6999 = vst [vmem:[%s6998] sm:%s6997] %v6995
      %s7000 = scalar_lea.vmem [#allocation0], 2528
      %v7001 = vld [vmem:[%s7000] sm:%s4789]
      %v7002 = vpack.c.bf16 0.0, %v7001
      %s7004 = ssub.s32 4, 1
      %s7005 = scalar_lea.vmem %s45, 632
      %7006 = vst [vmem:[%s7005] sm:%s7004] %v7002
      %s7007 = scalar_lea.vmem [#allocation0], 2536
      %v7008 = vld [vmem:[%s7007] sm:%s4789]
      %v7009 = vpack.c.bf16 0.0, %v7008
      %s7011 = ssub.s32 4, 1
      %s7012 = scalar_lea.vmem %s45, 634
      %7013 = vst [vmem:[%s7012] sm:%s7011] %v7009
      %s7014 = scalar_lea.vmem [#allocation0], 2544
      %v7015 = vld [vmem:[%s7014] sm:%s4789]
      %v7016 = vpack.c.bf16 0.0, %v7015
      %s7018 = ssub.s32 4, 1
      %s7019 = scalar_lea.vmem %s45, 636
      %7020 = vst [vmem:[%s7019] sm:%s7018] %v7016
      %s7021 = scalar_lea.vmem [#allocation0], 2552
      %v7022 = vld [vmem:[%s7021] sm:%s4789]
      %v7023 = vpack.c.bf16 0.0, %v7022
      %s7025 = ssub.s32 4, 1
      %s7026 = scalar_lea.vmem %s45, 638
      %7027 = vst [vmem:[%s7026] sm:%s7025] %v7023
      %s7028 = scalar_lea.vmem [#allocation0], 2560
      %v7029 = vld [vmem:[%s7028] sm:%s4789]
      %v7030 = vpack.c.bf16 0.0, %v7029
      %s7032 = ssub.s32 4, 1
      %s7033 = scalar_lea.vmem %s45, 640
      %7034 = vst [vmem:[%s7033] sm:%s7032] %v7030
      %s7035 = scalar_lea.vmem [#allocation0], 2568
      %v7036 = vld [vmem:[%s7035] sm:%s4789]
      %v7037 = vpack.c.bf16 0.0, %v7036
      %s7039 = ssub.s32 4, 1
      %s7040 = scalar_lea.vmem %s45, 642
      %7041 = vst [vmem:[%s7040] sm:%s7039] %v7037
      %s7042 = scalar_lea.vmem [#allocation0], 2576
      %v7043 = vld [vmem:[%s7042] sm:%s4789]
      %v7044 = vpack.c.bf16 0.0, %v7043
      %s7046 = ssub.s32 4, 1
      %s7047 = scalar_lea.vmem %s45, 644
      %7048 = vst [vmem:[%s7047] sm:%s7046] %v7044
      %s7049 = scalar_lea.vmem [#allocation0], 2584
      %v7050 = vld [vmem:[%s7049] sm:%s4789]
      %v7051 = vpack.c.bf16 0.0, %v7050
      %s7053 = ssub.s32 4, 1
      %s7054 = scalar_lea.vmem %s45, 646
      %7055 = vst [vmem:[%s7054] sm:%s7053] %v7051
      %s7056 = scalar_lea.vmem [#allocation0], 2592
      %v7057 = vld [vmem:[%s7056] sm:%s4789]
      %v7058 = vpack.c.bf16 0.0, %v7057
      %s7060 = ssub.s32 4, 1
      %s7061 = scalar_lea.vmem %s45, 648
      %7062 = vst [vmem:[%s7061] sm:%s7060] %v7058
      %s7063 = scalar_lea.vmem [#allocation0], 2600
      %v7064 = vld [vmem:[%s7063] sm:%s4789]
      %v7065 = vpack.c.bf16 0.0, %v7064
      %s7067 = ssub.s32 4, 1
      %s7068 = scalar_lea.vmem %s45, 650
      %7069 = vst [vmem:[%s7068] sm:%s7067] %v7065
      %s7070 = scalar_lea.vmem [#allocation0], 2608
      %v7071 = vld [vmem:[%s7070] sm:%s4789]
      %v7072 = vpack.c.bf16 0.0, %v7071
      %s7074 = ssub.s32 4, 1
      %s7075 = scalar_lea.vmem %s45, 652
      %7076 = vst [vmem:[%s7075] sm:%s7074] %v7072
      %s7077 = scalar_lea.vmem [#allocation0], 2616
      %v7078 = vld [vmem:[%s7077] sm:%s4789]
      %v7079 = vpack.c.bf16 0.0, %v7078
      %s7081 = ssub.s32 4, 1
      %s7082 = scalar_lea.vmem %s45, 654
      %7083 = vst [vmem:[%s7082] sm:%s7081] %v7079
      %s7084 = scalar_lea.vmem [#allocation0], 2624
      %v7085 = vld [vmem:[%s7084] sm:%s4789]
      %v7086 = vpack.c.bf16 0.0, %v7085
      %s7088 = ssub.s32 4, 1
      %s7089 = scalar_lea.vmem %s45, 656
      %7090 = vst [vmem:[%s7089] sm:%s7088] %v7086
      %s7091 = scalar_lea.vmem [#allocation0], 2632
      %v7092 = vld [vmem:[%s7091] sm:%s4789]
      %v7093 = vpack.c.bf16 0.0, %v7092
      %s7095 = ssub.s32 4, 1
      %s7096 = scalar_lea.vmem %s45, 658
      %7097 = vst [vmem:[%s7096] sm:%s7095] %v7093
      %s7098 = scalar_lea.vmem [#allocation0], 2640
      %v7099 = vld [vmem:[%s7098] sm:%s4789]
      %v7100 = vpack.c.bf16 0.0, %v7099
      %s7102 = ssub.s32 4, 1
      %s7103 = scalar_lea.vmem %s45, 660
      %7104 = vst [vmem:[%s7103] sm:%s7102] %v7100
      %s7105 = scalar_lea.vmem [#allocation0], 2648
      %v7106 = vld [vmem:[%s7105] sm:%s4789]
      %v7107 = vpack.c.bf16 0.0, %v7106
      %s7109 = ssub.s32 4, 1
      %s7110 = scalar_lea.vmem %s45, 662
      %7111 = vst [vmem:[%s7110] sm:%s7109] %v7107
      %s7112 = scalar_lea.vmem [#allocation0], 2656
      %v7113 = vld [vmem:[%s7112] sm:%s4789]
      %v7114 = vpack.c.bf16 0.0, %v7113
      %s7116 = ssub.s32 4, 1
      %s7117 = scalar_lea.vmem %s45, 664
      %7118 = vst [vmem:[%s7117] sm:%s7116] %v7114
      %s7119 = scalar_lea.vmem [#allocation0], 2664
      %v7120 = vld [vmem:[%s7119] sm:%s4789]
      %v7121 = vpack.c.bf16 0.0, %v7120
      %s7123 = ssub.s32 4, 1
      %s7124 = scalar_lea.vmem %s45, 666
      %7125 = vst [vmem:[%s7124] sm:%s7123] %v7121
      %s7126 = scalar_lea.vmem [#allocation0], 2672
      %v7127 = vld [vmem:[%s7126] sm:%s4789]
      %v7128 = vpack.c.bf16 0.0, %v7127
      %s7130 = ssub.s32 4, 1
      %s7131 = scalar_lea.vmem %s45, 668
      %7132 = vst [vmem:[%s7131] sm:%s7130] %v7128
      %s7133 = scalar_lea.vmem [#allocation0], 2680
      %v7134 = vld [vmem:[%s7133] sm:%s4789]
      %v7135 = vpack.c.bf16 0.0, %v7134
      %s7137 = ssub.s32 4, 1
      %s7138 = scalar_lea.vmem %s45, 670
      %7139 = vst [vmem:[%s7138] sm:%s7137] %v7135
      %s7140 = scalar_lea.vmem [#allocation0], 2688
      %v7141 = vld [vmem:[%s7140] sm:%s4789]
      %v7142 = vpack.c.bf16 0.0, %v7141
      %s7144 = ssub.s32 4, 1
      %s7145 = scalar_lea.vmem %s45, 672
      %7146 = vst [vmem:[%s7145] sm:%s7144] %v7142
      %s7147 = scalar_lea.vmem [#allocation0], 2696
      %v7148 = vld [vmem:[%s7147] sm:%s4789]
      %v7149 = vpack.c.bf16 0.0, %v7148
      %s7151 = ssub.s32 4, 1
      %s7152 = scalar_lea.vmem %s45, 674
      %7153 = vst [vmem:[%s7152] sm:%s7151] %v7149
      %s7154 = scalar_lea.vmem [#allocation0], 2704
      %v7155 = vld [vmem:[%s7154] sm:%s4789]
      %v7156 = vpack.c.bf16 0.0, %v7155
      %s7158 = ssub.s32 4, 1
      %s7159 = scalar_lea.vmem %s45, 676
      %7160 = vst [vmem:[%s7159] sm:%s7158] %v7156
      %s7161 = scalar_lea.vmem [#allocation0], 2712
      %v7162 = vld [vmem:[%s7161] sm:%s4789]
      %v7163 = vpack.c.bf16 0.0, %v7162
      %s7165 = ssub.s32 4, 1
      %s7166 = scalar_lea.vmem %s45, 678
      %7167 = vst [vmem:[%s7166] sm:%s7165] %v7163
      %s7168 = scalar_lea.vmem [#allocation0], 2720
      %v7169 = vld [vmem:[%s7168] sm:%s4789]
      %v7170 = vpack.c.bf16 0.0, %v7169
      %s7172 = ssub.s32 4, 1
      %s7173 = scalar_lea.vmem %s45, 680
      %7174 = vst [vmem:[%s7173] sm:%s7172] %v7170
      %s7175 = scalar_lea.vmem [#allocation0], 2728
      %v7176 = vld [vmem:[%s7175] sm:%s4789]
      %v7177 = vpack.c.bf16 0.0, %v7176
      %s7179 = ssub.s32 4, 1
      %s7180 = scalar_lea.vmem %s45, 682
      %7181 = vst [vmem:[%s7180] sm:%s7179] %v7177
      %s7182 = scalar_lea.vmem [#allocation0], 2736
      %v7183 = vld [vmem:[%s7182] sm:%s4789]
      %v7184 = vpack.c.bf16 0.0, %v7183
      %s7186 = ssub.s32 4, 1
      %s7187 = scalar_lea.vmem %s45, 684
      %7188 = vst [vmem:[%s7187] sm:%s7186] %v7184
      %s7189 = scalar_lea.vmem [#allocation0], 2744
      %v7190 = vld [vmem:[%s7189] sm:%s4789]
      %v7191 = vpack.c.bf16 0.0, %v7190
      %s7193 = ssub.s32 4, 1
      %s7194 = scalar_lea.vmem %s45, 686
      %7195 = vst [vmem:[%s7194] sm:%s7193] %v7191
      %s7196 = scalar_lea.vmem [#allocation0], 2752
      %v7197 = vld [vmem:[%s7196] sm:%s4789]
      %v7198 = vpack.c.bf16 0.0, %v7197
      %s7200 = ssub.s32 4, 1
      %s7201 = scalar_lea.vmem %s45, 688
      %7202 = vst [vmem:[%s7201] sm:%s7200] %v7198
      %s7203 = scalar_lea.vmem [#allocation0], 2760
      %v7204 = vld [vmem:[%s7203] sm:%s4789]
      %v7205 = vpack.c.bf16 0.0, %v7204
      %s7207 = ssub.s32 4, 1
      %s7208 = scalar_lea.vmem %s45, 690
      %7209 = vst [vmem:[%s7208] sm:%s7207] %v7205
      %s7210 = scalar_lea.vmem [#allocation0], 2768
      %v7211 = vld [vmem:[%s7210] sm:%s4789]
      %v7212 = vpack.c.bf16 0.0, %v7211
      %s7214 = ssub.s32 4, 1
      %s7215 = scalar_lea.vmem %s45, 692
      %7216 = vst [vmem:[%s7215] sm:%s7214] %v7212
      %s7217 = scalar_lea.vmem [#allocation0], 2776
      %v7218 = vld [vmem:[%s7217] sm:%s4789]
      %v7219 = vpack.c.bf16 0.0, %v7218
      %s7221 = ssub.s32 4, 1
      %s7222 = scalar_lea.vmem %s45, 694
      %7223 = vst [vmem:[%s7222] sm:%s7221] %v7219
      %s7224 = scalar_lea.vmem [#allocation0], 2784
      %v7225 = vld [vmem:[%s7224] sm:%s4789]
      %v7226 = vpack.c.bf16 0.0, %v7225
      %s7228 = ssub.s32 4, 1
      %s7229 = scalar_lea.vmem %s45, 696
      %7230 = vst [vmem:[%s7229] sm:%s7228] %v7226
      %s7231 = scalar_lea.vmem [#allocation0], 2792
      %v7232 = vld [vmem:[%s7231] sm:%s4789]
      %v7233 = vpack.c.bf16 0.0, %v7232
      %s7235 = ssub.s32 4, 1
      %s7236 = scalar_lea.vmem %s45, 698
      %7237 = vst [vmem:[%s7236] sm:%s7235] %v7233
      %s7238 = scalar_lea.vmem [#allocation0], 2800
      %v7239 = vld [vmem:[%s7238] sm:%s4789]
      %v7240 = vpack.c.bf16 0.0, %v7239
      %s7242 = ssub.s32 4, 1
      %s7243 = scalar_lea.vmem %s45, 700
      %7244 = vst [vmem:[%s7243] sm:%s7242] %v7240
      %s7245 = scalar_lea.vmem [#allocation0], 2808
      %v7246 = vld [vmem:[%s7245] sm:%s4789]
      %v7247 = vpack.c.bf16 0.0, %v7246
      %s7249 = ssub.s32 4, 1
      %s7250 = scalar_lea.vmem %s45, 702
      %7251 = vst [vmem:[%s7250] sm:%s7249] %v7247
      %s7252 = scalar_lea.vmem [#allocation0], 2816
      %v7253 = vld [vmem:[%s7252] sm:%s4789]
      %v7254 = vpack.c.bf16 0.0, %v7253
      %s7256 = ssub.s32 4, 1
      %s7257 = scalar_lea.vmem %s45, 704
      %7258 = vst [vmem:[%s7257] sm:%s7256] %v7254
      %s7259 = scalar_lea.vmem [#allocation0], 2824
      %v7260 = vld [vmem:[%s7259] sm:%s4789]
      %v7261 = vpack.c.bf16 0.0, %v7260
      %s7263 = ssub.s32 4, 1
      %s7264 = scalar_lea.vmem %s45, 706
      %7265 = vst [vmem:[%s7264] sm:%s7263] %v7261
      %s7266 = scalar_lea.vmem [#allocation0], 2832
      %v7267 = vld [vmem:[%s7266] sm:%s4789]
      %v7268 = vpack.c.bf16 0.0, %v7267
      %s7270 = ssub.s32 4, 1
      %s7271 = scalar_lea.vmem %s45, 708
      %7272 = vst [vmem:[%s7271] sm:%s7270] %v7268
      %s7273 = scalar_lea.vmem [#allocation0], 2840
      %v7274 = vld [vmem:[%s7273] sm:%s4789]
      %v7275 = vpack.c.bf16 0.0, %v7274
      %s7277 = ssub.s32 4, 1
      %s7278 = scalar_lea.vmem %s45, 710
      %7279 = vst [vmem:[%s7278] sm:%s7277] %v7275
      %s7280 = scalar_lea.vmem [#allocation0], 2848
      %v7281 = vld [vmem:[%s7280] sm:%s4789]
      %v7282 = vpack.c.bf16 0.0, %v7281
      %s7284 = ssub.s32 4, 1
      %s7285 = scalar_lea.vmem %s45, 712
      %7286 = vst [vmem:[%s7285] sm:%s7284] %v7282
      %s7287 = scalar_lea.vmem [#allocation0], 2856
      %v7288 = vld [vmem:[%s7287] sm:%s4789]
      %v7289 = vpack.c.bf16 0.0, %v7288
      %s7291 = ssub.s32 4, 1
      %s7292 = scalar_lea.vmem %s45, 714
      %7293 = vst [vmem:[%s7292] sm:%s7291] %v7289
      %s7294 = scalar_lea.vmem [#allocation0], 2864
      %v7295 = vld [vmem:[%s7294] sm:%s4789]
      %v7296 = vpack.c.bf16 0.0, %v7295
      %s7298 = ssub.s32 4, 1
      %s7299 = scalar_lea.vmem %s45, 716
      %7300 = vst [vmem:[%s7299] sm:%s7298] %v7296
      %s7301 = scalar_lea.vmem [#allocation0], 2872
      %v7302 = vld [vmem:[%s7301] sm:%s4789]
      %v7303 = vpack.c.bf16 0.0, %v7302
      %s7305 = ssub.s32 4, 1
      %s7306 = scalar_lea.vmem %s45, 718
      %7307 = vst [vmem:[%s7306] sm:%s7305] %v7303
      %s7308 = scalar_lea.vmem [#allocation0], 2880
      %v7309 = vld [vmem:[%s7308] sm:%s4789]
      %v7310 = vpack.c.bf16 0.0, %v7309
      %s7312 = ssub.s32 4, 1
      %s7313 = scalar_lea.vmem %s45, 720
      %7314 = vst [vmem:[%s7313] sm:%s7312] %v7310
      %s7315 = scalar_lea.vmem [#allocation0], 2888
      %v7316 = vld [vmem:[%s7315] sm:%s4789]
      %v7317 = vpack.c.bf16 0.0, %v7316
      %s7319 = ssub.s32 4, 1
      %s7320 = scalar_lea.vmem %s45, 722
      %7321 = vst [vmem:[%s7320] sm:%s7319] %v7317
      %s7322 = scalar_lea.vmem [#allocation0], 2896
      %v7323 = vld [vmem:[%s7322] sm:%s4789]
      %v7324 = vpack.c.bf16 0.0, %v7323
      %s7326 = ssub.s32 4, 1
      %s7327 = scalar_lea.vmem %s45, 724
      %7328 = vst [vmem:[%s7327] sm:%s7326] %v7324
      %s7329 = scalar_lea.vmem [#allocation0], 2904
      %v7330 = vld [vmem:[%s7329] sm:%s4789]
      %v7331 = vpack.c.bf16 0.0, %v7330
      %s7333 = ssub.s32 4, 1
      %s7334 = scalar_lea.vmem %s45, 726
      %7335 = vst [vmem:[%s7334] sm:%s7333] %v7331
      %s7336 = scalar_lea.vmem [#allocation0], 2912
      %v7337 = vld [vmem:[%s7336] sm:%s4789]
      %v7338 = vpack.c.bf16 0.0, %v7337
      %s7340 = ssub.s32 4, 1
      %s7341 = scalar_lea.vmem %s45, 728
      %7342 = vst [vmem:[%s7341] sm:%s7340] %v7338
      %s7343 = scalar_lea.vmem [#allocation0], 2920
      %v7344 = vld [vmem:[%s7343] sm:%s4789]
      %v7345 = vpack.c.bf16 0.0, %v7344
      %s7347 = ssub.s32 4, 1
      %s7348 = scalar_lea.vmem %s45, 730
      %7349 = vst [vmem:[%s7348] sm:%s7347] %v7345
      %s7350 = scalar_lea.vmem [#allocation0], 2928
      %v7351 = vld [vmem:[%s7350] sm:%s4789]
      %v7352 = vpack.c.bf16 0.0, %v7351
      %s7354 = ssub.s32 4, 1
      %s7355 = scalar_lea.vmem %s45, 732
      %7356 = vst [vmem:[%s7355] sm:%s7354] %v7352
      %s7357 = scalar_lea.vmem [#allocation0], 2936
      %v7358 = vld [vmem:[%s7357] sm:%s4789]
      %v7359 = vpack.c.bf16 0.0, %v7358
      %s7361 = ssub.s32 4, 1
      %s7362 = scalar_lea.vmem %s45, 734
      %7363 = vst [vmem:[%s7362] sm:%s7361] %v7359
      %s7364 = scalar_lea.vmem [#allocation0], 2944
      %v7365 = vld [vmem:[%s7364] sm:%s4789]
      %v7366 = vpack.c.bf16 0.0, %v7365
      %s7368 = ssub.s32 4, 1
      %s7369 = scalar_lea.vmem %s45, 736
      %7370 = vst [vmem:[%s7369] sm:%s7368] %v7366
      %s7371 = scalar_lea.vmem [#allocation0], 2952
      %v7372 = vld [vmem:[%s7371] sm:%s4789]
      %v7373 = vpack.c.bf16 0.0, %v7372
      %s7375 = ssub.s32 4, 1
      %s7376 = scalar_lea.vmem %s45, 738
      %7377 = vst [vmem:[%s7376] sm:%s7375] %v7373
      %s7378 = scalar_lea.vmem [#allocation0], 2960
      %v7379 = vld [vmem:[%s7378] sm:%s4789]
      %v7380 = vpack.c.bf16 0.0, %v7379
      %s7382 = ssub.s32 4, 1
      %s7383 = scalar_lea.vmem %s45, 740
      %7384 = vst [vmem:[%s7383] sm:%s7382] %v7380
      %s7385 = scalar_lea.vmem [#allocation0], 2968
      %v7386 = vld [vmem:[%s7385] sm:%s4789]
      %v7387 = vpack.c.bf16 0.0, %v7386
      %s7389 = ssub.s32 4, 1
      %s7390 = scalar_lea.vmem %s45, 742
      %7391 = vst [vmem:[%s7390] sm:%s7389] %v7387
      %s7392 = scalar_lea.vmem [#allocation0], 2976
      %v7393 = vld [vmem:[%s7392] sm:%s4789]
      %v7394 = vpack.c.bf16 0.0, %v7393
      %s7396 = ssub.s32 4, 1
      %s7397 = scalar_lea.vmem %s45, 744
      %7398 = vst [vmem:[%s7397] sm:%s7396] %v7394
      %s7399 = scalar_lea.vmem [#allocation0], 2984
      %v7400 = vld [vmem:[%s7399] sm:%s4789]
      %v7401 = vpack.c.bf16 0.0, %v7400
      %s7403 = ssub.s32 4, 1
      %s7404 = scalar_lea.vmem %s45, 746
      %7405 = vst [vmem:[%s7404] sm:%s7403] %v7401
      %s7406 = scalar_lea.vmem [#allocation0], 2992
      %v7407 = vld [vmem:[%s7406] sm:%s4789]
      %v7408 = vpack.c.bf16 0.0, %v7407
      %s7410 = ssub.s32 4, 1
      %s7411 = scalar_lea.vmem %s45, 748
      %7412 = vst [vmem:[%s7411] sm:%s7410] %v7408
      %s7413 = scalar_lea.vmem [#allocation0], 3000
      %v7414 = vld [vmem:[%s7413] sm:%s4789]
      %v7415 = vpack.c.bf16 0.0, %v7414
      %s7417 = ssub.s32 4, 1
      %s7418 = scalar_lea.vmem %s45, 750
      %7419 = vst [vmem:[%s7418] sm:%s7417] %v7415
      %s7420 = scalar_lea.vmem [#allocation0], 3008
      %v7421 = vld [vmem:[%s7420] sm:%s4789]
      %v7422 = vpack.c.bf16 0.0, %v7421
      %s7424 = ssub.s32 4, 1
      %s7425 = scalar_lea.vmem %s45, 752
      %7426 = vst [vmem:[%s7425] sm:%s7424] %v7422
      %s7427 = scalar_lea.vmem [#allocation0], 3016
      %v7428 = vld [vmem:[%s7427] sm:%s4789]
      %v7429 = vpack.c.bf16 0.0, %v7428
      %s7431 = ssub.s32 4, 1
      %s7432 = scalar_lea.vmem %s45, 754
      %7433 = vst [vmem:[%s7432] sm:%s7431] %v7429
      %s7434 = scalar_lea.vmem [#allocation0], 3024
      %v7435 = vld [vmem:[%s7434] sm:%s4789]
      %v7436 = vpack.c.bf16 0.0, %v7435
      %s7438 = ssub.s32 4, 1
      %s7439 = scalar_lea.vmem %s45, 756
      %7440 = vst [vmem:[%s7439] sm:%s7438] %v7436
      %s7441 = scalar_lea.vmem [#allocation0], 3032
      %v7442 = vld [vmem:[%s7441] sm:%s4789]
      %v7443 = vpack.c.bf16 0.0, %v7442
      %s7445 = ssub.s32 4, 1
      %s7446 = scalar_lea.vmem %s45, 758
      %7447 = vst [vmem:[%s7446] sm:%s7445] %v7443
      %s7448 = scalar_lea.vmem [#allocation0], 3040
      %v7449 = vld [vmem:[%s7448] sm:%s4789]
      %v7450 = vpack.c.bf16 0.0, %v7449
      %s7452 = ssub.s32 4, 1
      %s7453 = scalar_lea.vmem %s45, 760
      %7454 = vst [vmem:[%s7453] sm:%s7452] %v7450
      %s7455 = scalar_lea.vmem [#allocation0], 3048
      %v7456 = vld [vmem:[%s7455] sm:%s4789]
      %v7457 = vpack.c.bf16 0.0, %v7456
      %s7459 = ssub.s32 4, 1
      %s7460 = scalar_lea.vmem %s45, 762
      %7461 = vst [vmem:[%s7460] sm:%s7459] %v7457
      %s7462 = scalar_lea.vmem [#allocation0], 3056
      %v7463 = vld [vmem:[%s7462] sm:%s4789]
      %v7464 = vpack.c.bf16 0.0, %v7463
      %s7466 = ssub.s32 4, 1
      %s7467 = scalar_lea.vmem %s45, 764
      %7468 = vst [vmem:[%s7467] sm:%s7466] %v7464
      %s7469 = scalar_lea.vmem [#allocation0], 3064
      %v7470 = vld [vmem:[%s7469] sm:%s4789]
      %v7471 = vpack.c.bf16 0.0, %v7470
      %s7473 = ssub.s32 4, 1
      %s7474 = scalar_lea.vmem %s45, 766
      %7475 = vst [vmem:[%s7474] sm:%s7473] %v7471
      %s7476 = scalar_lea.vmem [#allocation0], 3072
      %v7477 = vld [vmem:[%s7476] sm:%s4789]
      %v7478 = vpack.c.bf16 0.0, %v7477
      %s7480 = ssub.s32 4, 1
      %s7481 = scalar_lea.vmem %s45, 768
      %7482 = vst [vmem:[%s7481] sm:%s7480] %v7478
      %s7483 = scalar_lea.vmem [#allocation0], 3080
      %v7484 = vld [vmem:[%s7483] sm:%s4789]
      %v7485 = vpack.c.bf16 0.0, %v7484
      %s7487 = ssub.s32 4, 1
      %s7488 = scalar_lea.vmem %s45, 770
      %7489 = vst [vmem:[%s7488] sm:%s7487] %v7485
      %s7490 = scalar_lea.vmem [#allocation0], 3088
      %v7491 = vld [vmem:[%s7490] sm:%s4789]
      %v7492 = vpack.c.bf16 0.0, %v7491
      %s7494 = ssub.s32 4, 1
      %s7495 = scalar_lea.vmem %s45, 772
      %7496 = vst [vmem:[%s7495] sm:%s7494] %v7492
      %s7497 = scalar_lea.vmem [#allocation0], 3096
      %v7498 = vld [vmem:[%s7497] sm:%s4789]
      %v7499 = vpack.c.bf16 0.0, %v7498
      %s7501 = ssub.s32 4, 1
      %s7502 = scalar_lea.vmem %s45, 774
      %7503 = vst [vmem:[%s7502] sm:%s7501] %v7499
      %s7504 = scalar_lea.vmem [#allocation0], 3104
      %v7505 = vld [vmem:[%s7504] sm:%s4789]
      %v7506 = vpack.c.bf16 0.0, %v7505
      %s7508 = ssub.s32 4, 1
      %s7509 = scalar_lea.vmem %s45, 776
      %7510 = vst [vmem:[%s7509] sm:%s7508] %v7506
      %s7511 = scalar_lea.vmem [#allocation0], 3112
      %v7512 = vld [vmem:[%s7511] sm:%s4789]
      %v7513 = vpack.c.bf16 0.0, %v7512
      %s7515 = ssub.s32 4, 1
      %s7516 = scalar_lea.vmem %s45, 778
      %7517 = vst [vmem:[%s7516] sm:%s7515] %v7513
      %s7518 = scalar_lea.vmem [#allocation0], 3120
      %v7519 = vld [vmem:[%s7518] sm:%s4789]
      %v7520 = vpack.c.bf16 0.0, %v7519
      %s7522 = ssub.s32 4, 1
      %s7523 = scalar_lea.vmem %s45, 780
      %7524 = vst [vmem:[%s7523] sm:%s7522] %v7520
      %s7525 = scalar_lea.vmem [#allocation0], 3128
      %v7526 = vld [vmem:[%s7525] sm:%s4789]
      %v7527 = vpack.c.bf16 0.0, %v7526
      %s7529 = ssub.s32 4, 1
      %s7530 = scalar_lea.vmem %s45, 782
      %7531 = vst [vmem:[%s7530] sm:%s7529] %v7527
      %s7532 = scalar_lea.vmem [#allocation0], 3136
      %v7533 = vld [vmem:[%s7532] sm:%s4789]
      %v7534 = vpack.c.bf16 0.0, %v7533
      %s7536 = ssub.s32 4, 1
      %s7537 = scalar_lea.vmem %s45, 784
      %7538 = vst [vmem:[%s7537] sm:%s7536] %v7534
      %s7539 = scalar_lea.vmem [#allocation0], 3144
      %v7540 = vld [vmem:[%s7539] sm:%s4789]
      %v7541 = vpack.c.bf16 0.0, %v7540
      %s7543 = ssub.s32 4, 1
      %s7544 = scalar_lea.vmem %s45, 786
      %7545 = vst [vmem:[%s7544] sm:%s7543] %v7541
      %s7546 = scalar_lea.vmem [#allocation0], 3152
      %v7547 = vld [vmem:[%s7546] sm:%s4789]
      %v7548 = vpack.c.bf16 0.0, %v7547
      %s7550 = ssub.s32 4, 1
      %s7551 = scalar_lea.vmem %s45, 788
      %7552 = vst [vmem:[%s7551] sm:%s7550] %v7548
      %s7553 = scalar_lea.vmem [#allocation0], 3160
      %v7554 = vld [vmem:[%s7553] sm:%s4789]
      %v7555 = vpack.c.bf16 0.0, %v7554
      %s7557 = ssub.s32 4, 1
      %s7558 = scalar_lea.vmem %s45, 790
      %7559 = vst [vmem:[%s7558] sm:%s7557] %v7555
      %s7560 = scalar_lea.vmem [#allocation0], 3168
      %v7561 = vld [vmem:[%s7560] sm:%s4789]
      %v7562 = vpack.c.bf16 0.0, %v7561
      %s7564 = ssub.s32 4, 1
      %s7565 = scalar_lea.vmem %s45, 792
      %7566 = vst [vmem:[%s7565] sm:%s7564] %v7562
      %s7567 = scalar_lea.vmem [#allocation0], 3176
      %v7568 = vld [vmem:[%s7567] sm:%s4789]
      %v7569 = vpack.c.bf16 0.0, %v7568
      %s7571 = ssub.s32 4, 1
      %s7572 = scalar_lea.vmem %s45, 794
      %7573 = vst [vmem:[%s7572] sm:%s7571] %v7569
      %s7574 = scalar_lea.vmem [#allocation0], 3184
      %v7575 = vld [vmem:[%s7574] sm:%s4789]
      %v7576 = vpack.c.bf16 0.0, %v7575
      %s7578 = ssub.s32 4, 1
      %s7579 = scalar_lea.vmem %s45, 796
      %7580 = vst [vmem:[%s7579] sm:%s7578] %v7576
      %s7581 = scalar_lea.vmem [#allocation0], 3192
      %v7582 = vld [vmem:[%s7581] sm:%s4789]
      %v7583 = vpack.c.bf16 0.0, %v7582
      %s7585 = ssub.s32 4, 1
      %s7586 = scalar_lea.vmem %s45, 798
      %7587 = vst [vmem:[%s7586] sm:%s7585] %v7583
      %s7588 = scalar_lea.vmem [#allocation0], 3200
      %v7589 = vld [vmem:[%s7588] sm:%s4789]
      %v7590 = vpack.c.bf16 0.0, %v7589
      %s7592 = ssub.s32 4, 1
      %s7593 = scalar_lea.vmem %s45, 800
      %7594 = vst [vmem:[%s7593] sm:%s7592] %v7590
      %s7595 = scalar_lea.vmem [#allocation0], 3208
      %v7596 = vld [vmem:[%s7595] sm:%s4789]
      %v7597 = vpack.c.bf16 0.0, %v7596
      %s7599 = ssub.s32 4, 1
      %s7600 = scalar_lea.vmem %s45, 802
      %7601 = vst [vmem:[%s7600] sm:%s7599] %v7597
      %s7602 = scalar_lea.vmem [#allocation0], 3216
      %v7603 = vld [vmem:[%s7602] sm:%s4789]
      %v7604 = vpack.c.bf16 0.0, %v7603
      %s7606 = ssub.s32 4, 1
      %s7607 = scalar_lea.vmem %s45, 804
      %7608 = vst [vmem:[%s7607] sm:%s7606] %v7604
      %s7609 = scalar_lea.vmem [#allocation0], 3224
      %v7610 = vld [vmem:[%s7609] sm:%s4789]
      %v7611 = vpack.c.bf16 0.0, %v7610
      %s7613 = ssub.s32 4, 1
      %s7614 = scalar_lea.vmem %s45, 806
      %7615 = vst [vmem:[%s7614] sm:%s7613] %v7611
      %s7616 = scalar_lea.vmem [#allocation0], 3232
      %v7617 = vld [vmem:[%s7616] sm:%s4789]
      %v7618 = vpack.c.bf16 0.0, %v7617
      %s7620 = ssub.s32 4, 1
      %s7621 = scalar_lea.vmem %s45, 808
      %7622 = vst [vmem:[%s7621] sm:%s7620] %v7618
      %s7623 = scalar_lea.vmem [#allocation0], 3240
      %v7624 = vld [vmem:[%s7623] sm:%s4789]
      %v7625 = vpack.c.bf16 0.0, %v7624
      %s7627 = ssub.s32 4, 1
      %s7628 = scalar_lea.vmem %s45, 810
      %7629 = vst [vmem:[%s7628] sm:%s7627] %v7625
      %s7630 = scalar_lea.vmem [#allocation0], 3248
      %v7631 = vld [vmem:[%s7630] sm:%s4789]
      %v7632 = vpack.c.bf16 0.0, %v7631
      %s7634 = ssub.s32 4, 1
      %s7635 = scalar_lea.vmem %s45, 812
      %7636 = vst [vmem:[%s7635] sm:%s7634] %v7632
      %s7637 = scalar_lea.vmem [#allocation0], 3256
      %v7638 = vld [vmem:[%s7637] sm:%s4789]
      %v7639 = vpack.c.bf16 0.0, %v7638
      %s7641 = ssub.s32 4, 1
      %s7642 = scalar_lea.vmem %s45, 814
      %7643 = vst [vmem:[%s7642] sm:%s7641] %v7639
      %s7644 = scalar_lea.vmem [#allocation0], 3264
      %v7645 = vld [vmem:[%s7644] sm:%s4789]
      %v7646 = vpack.c.bf16 0.0, %v7645
      %s7648 = ssub.s32 4, 1
      %s7649 = scalar_lea.vmem %s45, 816
      %7650 = vst [vmem:[%s7649] sm:%s7648] %v7646
      %s7651 = scalar_lea.vmem [#allocation0], 3272
      %v7652 = vld [vmem:[%s7651] sm:%s4789]
      %v7653 = vpack.c.bf16 0.0, %v7652
      %s7655 = ssub.s32 4, 1
      %s7656 = scalar_lea.vmem %s45, 818
      %7657 = vst [vmem:[%s7656] sm:%s7655] %v7653
      %s7658 = scalar_lea.vmem [#allocation0], 3280
      %v7659 = vld [vmem:[%s7658] sm:%s4789]
      %v7660 = vpack.c.bf16 0.0, %v7659
      %s7662 = ssub.s32 4, 1
      %s7663 = scalar_lea.vmem %s45, 820
      %7664 = vst [vmem:[%s7663] sm:%s7662] %v7660
      %s7665 = scalar_lea.vmem [#allocation0], 3288
      %v7666 = vld [vmem:[%s7665] sm:%s4789]
      %v7667 = vpack.c.bf16 0.0, %v7666
      %s7669 = ssub.s32 4, 1
      %s7670 = scalar_lea.vmem %s45, 822
      %7671 = vst [vmem:[%s7670] sm:%s7669] %v7667
      %s7672 = scalar_lea.vmem [#allocation0], 3296
      %v7673 = vld [vmem:[%s7672] sm:%s4789]
      %v7674 = vpack.c.bf16 0.0, %v7673
      %s7676 = ssub.s32 4, 1
      %s7677 = scalar_lea.vmem %s45, 824
      %7678 = vst [vmem:[%s7677] sm:%s7676] %v7674
      %s7679 = scalar_lea.vmem [#allocation0], 3304
      %v7680 = vld [vmem:[%s7679] sm:%s4789]
      %v7681 = vpack.c.bf16 0.0, %v7680
      %s7683 = ssub.s32 4, 1
      %s7684 = scalar_lea.vmem %s45, 826
      %7685 = vst [vmem:[%s7684] sm:%s7683] %v7681
      %s7686 = scalar_lea.vmem [#allocation0], 3312
      %v7687 = vld [vmem:[%s7686] sm:%s4789]
      %v7688 = vpack.c.bf16 0.0, %v7687
      %s7690 = ssub.s32 4, 1
      %s7691 = scalar_lea.vmem %s45, 828
      %7692 = vst [vmem:[%s7691] sm:%s7690] %v7688
      %s7693 = scalar_lea.vmem [#allocation0], 3320
      %v7694 = vld [vmem:[%s7693] sm:%s4789]
      %v7695 = vpack.c.bf16 0.0, %v7694
      %s7697 = ssub.s32 4, 1
      %s7698 = scalar_lea.vmem %s45, 830
      %7699 = vst [vmem:[%s7698] sm:%s7697] %v7695
      %s7700 = scalar_lea.vmem [#allocation0], 3328
      %v7701 = vld [vmem:[%s7700] sm:%s4789]
      %v7702 = vpack.c.bf16 0.0, %v7701
      %s7704 = ssub.s32 4, 1
      %s7705 = scalar_lea.vmem %s45, 832
      %7706 = vst [vmem:[%s7705] sm:%s7704] %v7702
      %s7707 = scalar_lea.vmem [#allocation0], 3336
      %v7708 = vld [vmem:[%s7707] sm:%s4789]
      %v7709 = vpack.c.bf16 0.0, %v7708
      %s7711 = ssub.s32 4, 1
      %s7712 = scalar_lea.vmem %s45, 834
      %7713 = vst [vmem:[%s7712] sm:%s7711] %v7709
      %s7714 = scalar_lea.vmem [#allocation0], 3344
      %v7715 = vld [vmem:[%s7714] sm:%s4789]
      %v7716 = vpack.c.bf16 0.0, %v7715
      %s7718 = ssub.s32 4, 1
      %s7719 = scalar_lea.vmem %s45, 836
      %7720 = vst [vmem:[%s7719] sm:%s7718] %v7716
      %s7721 = scalar_lea.vmem [#allocation0], 3352
      %v7722 = vld [vmem:[%s7721] sm:%s4789]
      %v7723 = vpack.c.bf16 0.0, %v7722
      %s7725 = ssub.s32 4, 1
      %s7726 = scalar_lea.vmem %s45, 838
      %7727 = vst [vmem:[%s7726] sm:%s7725] %v7723
      %s7728 = scalar_lea.vmem [#allocation0], 3360
      %v7729 = vld [vmem:[%s7728] sm:%s4789]
      %v7730 = vpack.c.bf16 0.0, %v7729
      %s7732 = ssub.s32 4, 1
      %s7733 = scalar_lea.vmem %s45, 840
      %7734 = vst [vmem:[%s7733] sm:%s7732] %v7730
      %s7735 = scalar_lea.vmem [#allocation0], 3368
      %v7736 = vld [vmem:[%s7735] sm:%s4789]
      %v7737 = vpack.c.bf16 0.0, %v7736
      %s7739 = ssub.s32 4, 1
      %s7740 = scalar_lea.vmem %s45, 842
      %7741 = vst [vmem:[%s7740] sm:%s7739] %v7737
      %s7742 = scalar_lea.vmem [#allocation0], 3376
      %v7743 = vld [vmem:[%s7742] sm:%s4789]
      %v7744 = vpack.c.bf16 0.0, %v7743
      %s7746 = ssub.s32 4, 1
      %s7747 = scalar_lea.vmem %s45, 844
      %7748 = vst [vmem:[%s7747] sm:%s7746] %v7744
      %s7749 = scalar_lea.vmem [#allocation0], 3384
      %v7750 = vld [vmem:[%s7749] sm:%s4789]
      %v7751 = vpack.c.bf16 0.0, %v7750
      %s7753 = ssub.s32 4, 1
      %s7754 = scalar_lea.vmem %s45, 846
      %7755 = vst [vmem:[%s7754] sm:%s7753] %v7751
      %s7756 = scalar_lea.vmem [#allocation0], 3392
      %v7757 = vld [vmem:[%s7756] sm:%s4789]
      %v7758 = vpack.c.bf16 0.0, %v7757
      %s7760 = ssub.s32 4, 1
      %s7761 = scalar_lea.vmem %s45, 848
      %7762 = vst [vmem:[%s7761] sm:%s7760] %v7758
      %s7763 = scalar_lea.vmem [#allocation0], 3400
      %v7764 = vld [vmem:[%s7763] sm:%s4789]
      %v7765 = vpack.c.bf16 0.0, %v7764
      %s7767 = ssub.s32 4, 1
      %s7768 = scalar_lea.vmem %s45, 850
      %7769 = vst [vmem:[%s7768] sm:%s7767] %v7765
      %s7770 = scalar_lea.vmem [#allocation0], 3408
      %v7771 = vld [vmem:[%s7770] sm:%s4789]
      %v7772 = vpack.c.bf16 0.0, %v7771
      %s7774 = ssub.s32 4, 1
      %s7775 = scalar_lea.vmem %s45, 852
      %7776 = vst [vmem:[%s7775] sm:%s7774] %v7772
      %s7777 = scalar_lea.vmem [#allocation0], 3416
      %v7778 = vld [vmem:[%s7777] sm:%s4789]
      %v7779 = vpack.c.bf16 0.0, %v7778
      %s7781 = ssub.s32 4, 1
      %s7782 = scalar_lea.vmem %s45, 854
      %7783 = vst [vmem:[%s7782] sm:%s7781] %v7779
      %s7784 = scalar_lea.vmem [#allocation0], 3424
      %v7785 = vld [vmem:[%s7784] sm:%s4789]
      %v7786 = vpack.c.bf16 0.0, %v7785
      %s7788 = ssub.s32 4, 1
      %s7789 = scalar_lea.vmem %s45, 856
      %7790 = vst [vmem:[%s7789] sm:%s7788] %v7786
      %s7791 = scalar_lea.vmem [#allocation0], 3432
      %v7792 = vld [vmem:[%s7791] sm:%s4789]
      %v7793 = vpack.c.bf16 0.0, %v7792
      %s7795 = ssub.s32 4, 1
      %s7796 = scalar_lea.vmem %s45, 858
      %7797 = vst [vmem:[%s7796] sm:%s7795] %v7793
      %s7798 = scalar_lea.vmem [#allocation0], 3440
      %v7799 = vld [vmem:[%s7798] sm:%s4789]
      %v7800 = vpack.c.bf16 0.0, %v7799
      %s7802 = ssub.s32 4, 1
      %s7803 = scalar_lea.vmem %s45, 860
      %7804 = vst [vmem:[%s7803] sm:%s7802] %v7800
      %s7805 = scalar_lea.vmem [#allocation0], 3448
      %v7806 = vld [vmem:[%s7805] sm:%s4789]
      %v7807 = vpack.c.bf16 0.0, %v7806
      %s7809 = ssub.s32 4, 1
      %s7810 = scalar_lea.vmem %s45, 862
      %7811 = vst [vmem:[%s7810] sm:%s7809] %v7807
      %s7812 = scalar_lea.vmem [#allocation0], 3456
      %v7813 = vld [vmem:[%s7812] sm:%s4789]
      %v7814 = vpack.c.bf16 0.0, %v7813
      %s7816 = ssub.s32 4, 1
      %s7817 = scalar_lea.vmem %s45, 864
      %7818 = vst [vmem:[%s7817] sm:%s7816] %v7814
      %s7819 = scalar_lea.vmem [#allocation0], 3464
      %v7820 = vld [vmem:[%s7819] sm:%s4789]
      %v7821 = vpack.c.bf16 0.0, %v7820
      %s7823 = ssub.s32 4, 1
      %s7824 = scalar_lea.vmem %s45, 866
      %7825 = vst [vmem:[%s7824] sm:%s7823] %v7821
      %s7826 = scalar_lea.vmem [#allocation0], 3472
      %v7827 = vld [vmem:[%s7826] sm:%s4789]
      %v7828 = vpack.c.bf16 0.0, %v7827
      %s7830 = ssub.s32 4, 1
      %s7831 = scalar_lea.vmem %s45, 868
      %7832 = vst [vmem:[%s7831] sm:%s7830] %v7828
      %s7833 = scalar_lea.vmem [#allocation0], 3480
      %v7834 = vld [vmem:[%s7833] sm:%s4789]
      %v7835 = vpack.c.bf16 0.0, %v7834
      %s7837 = ssub.s32 4, 1
      %s7838 = scalar_lea.vmem %s45, 870
      %7839 = vst [vmem:[%s7838] sm:%s7837] %v7835
      %s7840 = scalar_lea.vmem [#allocation0], 3488
      %v7841 = vld [vmem:[%s7840] sm:%s4789]
      %v7842 = vpack.c.bf16 0.0, %v7841
      %s7844 = ssub.s32 4, 1
      %s7845 = scalar_lea.vmem %s45, 872
      %7846 = vst [vmem:[%s7845] sm:%s7844] %v7842
      %s7847 = scalar_lea.vmem [#allocation0], 3496
      %v7848 = vld [vmem:[%s7847] sm:%s4789]
      %v7849 = vpack.c.bf16 0.0, %v7848
      %s7851 = ssub.s32 4, 1
      %s7852 = scalar_lea.vmem %s45, 874
      %7853 = vst [vmem:[%s7852] sm:%s7851] %v7849
      %s7854 = scalar_lea.vmem [#allocation0], 3504
      %v7855 = vld [vmem:[%s7854] sm:%s4789]
      %v7856 = vpack.c.bf16 0.0, %v7855
      %s7858 = ssub.s32 4, 1
      %s7859 = scalar_lea.vmem %s45, 876
      %7860 = vst [vmem:[%s7859] sm:%s7858] %v7856
      %s7861 = scalar_lea.vmem [#allocation0], 3512
      %v7862 = vld [vmem:[%s7861] sm:%s4789]
      %v7863 = vpack.c.bf16 0.0, %v7862
      %s7865 = ssub.s32 4, 1
      %s7866 = scalar_lea.vmem %s45, 878
      %7867 = vst [vmem:[%s7866] sm:%s7865] %v7863
      %s7868 = scalar_lea.vmem [#allocation0], 3520
      %v7869 = vld [vmem:[%s7868] sm:%s4789]
      %v7870 = vpack.c.bf16 0.0, %v7869
      %s7872 = ssub.s32 4, 1
      %s7873 = scalar_lea.vmem %s45, 880
      %7874 = vst [vmem:[%s7873] sm:%s7872] %v7870
      %s7875 = scalar_lea.vmem [#allocation0], 3528
      %v7876 = vld [vmem:[%s7875] sm:%s4789]
      %v7877 = vpack.c.bf16 0.0, %v7876
      %s7879 = ssub.s32 4, 1
      %s7880 = scalar_lea.vmem %s45, 882
      %7881 = vst [vmem:[%s7880] sm:%s7879] %v7877
      %s7882 = scalar_lea.vmem [#allocation0], 3536
      %v7883 = vld [vmem:[%s7882] sm:%s4789]
      %v7884 = vpack.c.bf16 0.0, %v7883
      %s7886 = ssub.s32 4, 1
      %s7887 = scalar_lea.vmem %s45, 884
      %7888 = vst [vmem:[%s7887] sm:%s7886] %v7884
      %s7889 = scalar_lea.vmem [#allocation0], 3544
      %v7890 = vld [vmem:[%s7889] sm:%s4789]
      %v7891 = vpack.c.bf16 0.0, %v7890
      %s7893 = ssub.s32 4, 1
      %s7894 = scalar_lea.vmem %s45, 886
      %7895 = vst [vmem:[%s7894] sm:%s7893] %v7891
      %s7896 = scalar_lea.vmem [#allocation0], 3552
      %v7897 = vld [vmem:[%s7896] sm:%s4789]
      %v7898 = vpack.c.bf16 0.0, %v7897
      %s7900 = ssub.s32 4, 1
      %s7901 = scalar_lea.vmem %s45, 888
      %7902 = vst [vmem:[%s7901] sm:%s7900] %v7898
      %s7903 = scalar_lea.vmem [#allocation0], 3560
      %v7904 = vld [vmem:[%s7903] sm:%s4789]
      %v7905 = vpack.c.bf16 0.0, %v7904
      %s7907 = ssub.s32 4, 1
      %s7908 = scalar_lea.vmem %s45, 890
      %7909 = vst [vmem:[%s7908] sm:%s7907] %v7905
      %s7910 = scalar_lea.vmem [#allocation0], 3568
      %v7911 = vld [vmem:[%s7910] sm:%s4789]
      %v7912 = vpack.c.bf16 0.0, %v7911
      %s7914 = ssub.s32 4, 1
      %s7915 = scalar_lea.vmem %s45, 892
      %7916 = vst [vmem:[%s7915] sm:%s7914] %v7912
      %s7917 = scalar_lea.vmem [#allocation0], 3576
      %v7918 = vld [vmem:[%s7917] sm:%s4789]
      %v7919 = vpack.c.bf16 0.0, %v7918
      %s7921 = ssub.s32 4, 1
      %s7922 = scalar_lea.vmem %s45, 894
      %7923 = vst [vmem:[%s7922] sm:%s7921] %v7919
      %s7924 = scalar_lea.vmem [#allocation0], 3584
      %v7925 = vld [vmem:[%s7924] sm:%s4789]
      %v7926 = vpack.c.bf16 0.0, %v7925
      %s7928 = ssub.s32 4, 1
      %s7929 = scalar_lea.vmem %s45, 896
      %7930 = vst [vmem:[%s7929] sm:%s7928] %v7926
      %s7931 = scalar_lea.vmem [#allocation0], 3592
      %v7932 = vld [vmem:[%s7931] sm:%s4789]
      %v7933 = vpack.c.bf16 0.0, %v7932
      %s7935 = ssub.s32 4, 1
      %s7936 = scalar_lea.vmem %s45, 898
      %7937 = vst [vmem:[%s7936] sm:%s7935] %v7933
      %s7938 = scalar_lea.vmem [#allocation0], 3600
      %v7939 = vld [vmem:[%s7938] sm:%s4789]
      %v7940 = vpack.c.bf16 0.0, %v7939
      %s7942 = ssub.s32 4, 1
      %s7943 = scalar_lea.vmem %s45, 900
      %7944 = vst [vmem:[%s7943] sm:%s7942] %v7940
      %s7945 = scalar_lea.vmem [#allocation0], 3608
      %v7946 = vld [vmem:[%s7945] sm:%s4789]
      %v7947 = vpack.c.bf16 0.0, %v7946
      %s7949 = ssub.s32 4, 1
      %s7950 = scalar_lea.vmem %s45, 902
      %7951 = vst [vmem:[%s7950] sm:%s7949] %v7947
      %s7952 = scalar_lea.vmem [#allocation0], 3616
      %v7953 = vld [vmem:[%s7952] sm:%s4789]
      %v7954 = vpack.c.bf16 0.0, %v7953
      %s7956 = ssub.s32 4, 1
      %s7957 = scalar_lea.vmem %s45, 904
      %7958 = vst [vmem:[%s7957] sm:%s7956] %v7954
      %s7959 = scalar_lea.vmem [#allocation0], 3624
      %v7960 = vld [vmem:[%s7959] sm:%s4789]
      %v7961 = vpack.c.bf16 0.0, %v7960
      %s7963 = ssub.s32 4, 1
      %s7964 = scalar_lea.vmem %s45, 906
      %7965 = vst [vmem:[%s7964] sm:%s7963] %v7961
      %s7966 = scalar_lea.vmem [#allocation0], 3632
      %v7967 = vld [vmem:[%s7966] sm:%s4789]
      %v7968 = vpack.c.bf16 0.0, %v7967
      %s7970 = ssub.s32 4, 1
      %s7971 = scalar_lea.vmem %s45, 908
      %7972 = vst [vmem:[%s7971] sm:%s7970] %v7968
      %s7973 = scalar_lea.vmem [#allocation0], 3640
      %v7974 = vld [vmem:[%s7973] sm:%s4789]
      %v7975 = vpack.c.bf16 0.0, %v7974
      %s7977 = ssub.s32 4, 1
      %s7978 = scalar_lea.vmem %s45, 910
      %7979 = vst [vmem:[%s7978] sm:%s7977] %v7975
      %s7980 = scalar_lea.vmem [#allocation0], 3648
      %v7981 = vld [vmem:[%s7980] sm:%s4789]
      %v7982 = vpack.c.bf16 0.0, %v7981
      %s7984 = ssub.s32 4, 1
      %s7985 = scalar_lea.vmem %s45, 912
      %7986 = vst [vmem:[%s7985] sm:%s7984] %v7982
      %s7987 = scalar_lea.vmem [#allocation0], 3656
      %v7988 = vld [vmem:[%s7987] sm:%s4789]
      %v7989 = vpack.c.bf16 0.0, %v7988
      %s7991 = ssub.s32 4, 1
      %s7992 = scalar_lea.vmem %s45, 914
      %7993 = vst [vmem:[%s7992] sm:%s7991] %v7989
      %s7994 = scalar_lea.vmem [#allocation0], 3664
      %v7995 = vld [vmem:[%s7994] sm:%s4789]
      %v7996 = vpack.c.bf16 0.0, %v7995
      %s7998 = ssub.s32 4, 1
      %s7999 = scalar_lea.vmem %s45, 916
      %8000 = vst [vmem:[%s7999] sm:%s7998] %v7996
      %s8001 = scalar_lea.vmem [#allocation0], 3672
      %v8002 = vld [vmem:[%s8001] sm:%s4789]
      %v8003 = vpack.c.bf16 0.0, %v8002
      %s8005 = ssub.s32 4, 1
      %s8006 = scalar_lea.vmem %s45, 918
      %8007 = vst [vmem:[%s8006] sm:%s8005] %v8003
      %s8008 = scalar_lea.vmem [#allocation0], 3680
      %v8009 = vld [vmem:[%s8008] sm:%s4789]
      %v8010 = vpack.c.bf16 0.0, %v8009
      %s8012 = ssub.s32 4, 1
      %s8013 = scalar_lea.vmem %s45, 920
      %8014 = vst [vmem:[%s8013] sm:%s8012] %v8010
      %s8015 = scalar_lea.vmem [#allocation0], 3688
      %v8016 = vld [vmem:[%s8015] sm:%s4789]
      %v8017 = vpack.c.bf16 0.0, %v8016
      %s8019 = ssub.s32 4, 1
      %s8020 = scalar_lea.vmem %s45, 922
      %8021 = vst [vmem:[%s8020] sm:%s8019] %v8017
      %s8022 = scalar_lea.vmem [#allocation0], 3696
      %v8023 = vld [vmem:[%s8022] sm:%s4789]
      %v8024 = vpack.c.bf16 0.0, %v8023
      %s8026 = ssub.s32 4, 1
      %s8027 = scalar_lea.vmem %s45, 924
      %8028 = vst [vmem:[%s8027] sm:%s8026] %v8024
      %s8029 = scalar_lea.vmem [#allocation0], 3704
      %v8030 = vld [vmem:[%s8029] sm:%s4789]
      %v8031 = vpack.c.bf16 0.0, %v8030
      %s8033 = ssub.s32 4, 1
      %s8034 = scalar_lea.vmem %s45, 926
      %8035 = vst [vmem:[%s8034] sm:%s8033] %v8031
      %s8036 = scalar_lea.vmem [#allocation0], 3712
      %v8037 = vld [vmem:[%s8036] sm:%s4789]
      %v8038 = vpack.c.bf16 0.0, %v8037
      %s8040 = ssub.s32 4, 1
      %s8041 = scalar_lea.vmem %s45, 928
      %8042 = vst [vmem:[%s8041] sm:%s8040] %v8038
      %s8043 = scalar_lea.vmem [#allocation0], 3720
      %v8044 = vld [vmem:[%s8043] sm:%s4789]
      %v8045 = vpack.c.bf16 0.0, %v8044
      %s8047 = ssub.s32 4, 1
      %s8048 = scalar_lea.vmem %s45, 930
      %8049 = vst [vmem:[%s8048] sm:%s8047] %v8045
      %s8050 = scalar_lea.vmem [#allocation0], 3728
      %v8051 = vld [vmem:[%s8050] sm:%s4789]
      %v8052 = vpack.c.bf16 0.0, %v8051
      %s8054 = ssub.s32 4, 1
      %s8055 = scalar_lea.vmem %s45, 932
      %8056 = vst [vmem:[%s8055] sm:%s8054] %v8052
      %s8057 = scalar_lea.vmem [#allocation0], 3736
      %v8058 = vld [vmem:[%s8057] sm:%s4789]
      %v8059 = vpack.c.bf16 0.0, %v8058
      %s8061 = ssub.s32 4, 1
      %s8062 = scalar_lea.vmem %s45, 934
      %8063 = vst [vmem:[%s8062] sm:%s8061] %v8059
      %s8064 = scalar_lea.vmem [#allocation0], 3744
      %v8065 = vld [vmem:[%s8064] sm:%s4789]
      %v8066 = vpack.c.bf16 0.0, %v8065
      %s8068 = ssub.s32 4, 1
      %s8069 = scalar_lea.vmem %s45, 936
      %8070 = vst [vmem:[%s8069] sm:%s8068] %v8066
      %s8071 = scalar_lea.vmem [#allocation0], 3752
      %v8072 = vld [vmem:[%s8071] sm:%s4789]
      %v8073 = vpack.c.bf16 0.0, %v8072
      %s8075 = ssub.s32 4, 1
      %s8076 = scalar_lea.vmem %s45, 938
      %8077 = vst [vmem:[%s8076] sm:%s8075] %v8073
      %s8078 = scalar_lea.vmem [#allocation0], 3760
      %v8079 = vld [vmem:[%s8078] sm:%s4789]
      %v8080 = vpack.c.bf16 0.0, %v8079
      %s8082 = ssub.s32 4, 1
      %s8083 = scalar_lea.vmem %s45, 940
      %8084 = vst [vmem:[%s8083] sm:%s8082] %v8080
      %s8085 = scalar_lea.vmem [#allocation0], 3768
      %v8086 = vld [vmem:[%s8085] sm:%s4789]
      %v8087 = vpack.c.bf16 0.0, %v8086
      %s8089 = ssub.s32 4, 1
      %s8090 = scalar_lea.vmem %s45, 942
      %8091 = vst [vmem:[%s8090] sm:%s8089] %v8087
      %s8092 = scalar_lea.vmem [#allocation0], 3776
      %v8093 = vld [vmem:[%s8092] sm:%s4789]
      %v8094 = vpack.c.bf16 0.0, %v8093
      %s8096 = ssub.s32 4, 1
      %s8097 = scalar_lea.vmem %s45, 944
      %8098 = vst [vmem:[%s8097] sm:%s8096] %v8094
      %s8099 = scalar_lea.vmem [#allocation0], 3784
      %v8100 = vld [vmem:[%s8099] sm:%s4789]
      %v8101 = vpack.c.bf16 0.0, %v8100
      %s8103 = ssub.s32 4, 1
      %s8104 = scalar_lea.vmem %s45, 946
      %8105 = vst [vmem:[%s8104] sm:%s8103] %v8101
      %s8106 = scalar_lea.vmem [#allocation0], 3792
      %v8107 = vld [vmem:[%s8106] sm:%s4789]
      %v8108 = vpack.c.bf16 0.0, %v8107
      %s8110 = ssub.s32 4, 1
      %s8111 = scalar_lea.vmem %s45, 948
      %8112 = vst [vmem:[%s8111] sm:%s8110] %v8108
      %s8113 = scalar_lea.vmem [#allocation0], 3800
      %v8114 = vld [vmem:[%s8113] sm:%s4789]
      %v8115 = vpack.c.bf16 0.0, %v8114
      %s8117 = ssub.s32 4, 1
      %s8118 = scalar_lea.vmem %s45, 950
      %8119 = vst [vmem:[%s8118] sm:%s8117] %v8115
      %s8120 = scalar_lea.vmem [#allocation0], 3808
      %v8121 = vld [vmem:[%s8120] sm:%s4789]
      %v8122 = vpack.c.bf16 0.0, %v8121
      %s8124 = ssub.s32 4, 1
      %s8125 = scalar_lea.vmem %s45, 952
      %8126 = vst [vmem:[%s8125] sm:%s8124] %v8122
      %s8127 = scalar_lea.vmem [#allocation0], 3816
      %v8128 = vld [vmem:[%s8127] sm:%s4789]
      %v8129 = vpack.c.bf16 0.0, %v8128
      %s8131 = ssub.s32 4, 1
      %s8132 = scalar_lea.vmem %s45, 954
      %8133 = vst [vmem:[%s8132] sm:%s8131] %v8129
      %s8134 = scalar_lea.vmem [#allocation0], 3824
      %v8135 = vld [vmem:[%s8134] sm:%s4789]
      %v8136 = vpack.c.bf16 0.0, %v8135
      %s8138 = ssub.s32 4, 1
      %s8139 = scalar_lea.vmem %s45, 956
      %8140 = vst [vmem:[%s8139] sm:%s8138] %v8136
      %s8141 = scalar_lea.vmem [#allocation0], 3832
      %v8142 = vld [vmem:[%s8141] sm:%s4789]
      %v8143 = vpack.c.bf16 0.0, %v8142
      %s8145 = ssub.s32 4, 1
      %s8146 = scalar_lea.vmem %s45, 958
      %8147 = vst [vmem:[%s8146] sm:%s8145] %v8143
      %s8148 = scalar_lea.vmem [#allocation0], 3840
      %v8149 = vld [vmem:[%s8148] sm:%s4789]
      %v8150 = vpack.c.bf16 0.0, %v8149
      %s8152 = ssub.s32 4, 1
      %s8153 = scalar_lea.vmem %s45, 960
      %8154 = vst [vmem:[%s8153] sm:%s8152] %v8150
      %s8155 = scalar_lea.vmem [#allocation0], 3848
      %v8156 = vld [vmem:[%s8155] sm:%s4789]
      %v8157 = vpack.c.bf16 0.0, %v8156
      %s8159 = ssub.s32 4, 1
      %s8160 = scalar_lea.vmem %s45, 962
      %8161 = vst [vmem:[%s8160] sm:%s8159] %v8157
      %s8162 = scalar_lea.vmem [#allocation0], 3856
      %v8163 = vld [vmem:[%s8162] sm:%s4789]
      %v8164 = vpack.c.bf16 0.0, %v8163
      %s8166 = ssub.s32 4, 1
      %s8167 = scalar_lea.vmem %s45, 964
      %8168 = vst [vmem:[%s8167] sm:%s8166] %v8164
      %s8169 = scalar_lea.vmem [#allocation0], 3864
      %v8170 = vld [vmem:[%s8169] sm:%s4789]
      %v8171 = vpack.c.bf16 0.0, %v8170
      %s8173 = ssub.s32 4, 1
      %s8174 = scalar_lea.vmem %s45, 966
      %8175 = vst [vmem:[%s8174] sm:%s8173] %v8171
      %s8176 = scalar_lea.vmem [#allocation0], 3872
      %v8177 = vld [vmem:[%s8176] sm:%s4789]
      %v8178 = vpack.c.bf16 0.0, %v8177
      %s8180 = ssub.s32 4, 1
      %s8181 = scalar_lea.vmem %s45, 968
      %8182 = vst [vmem:[%s8181] sm:%s8180] %v8178
      %s8183 = scalar_lea.vmem [#allocation0], 3880
      %v8184 = vld [vmem:[%s8183] sm:%s4789]
      %v8185 = vpack.c.bf16 0.0, %v8184
      %s8187 = ssub.s32 4, 1
      %s8188 = scalar_lea.vmem %s45, 970
      %8189 = vst [vmem:[%s8188] sm:%s8187] %v8185
      %s8190 = scalar_lea.vmem [#allocation0], 3888
      %v8191 = vld [vmem:[%s8190] sm:%s4789]
      %v8192 = vpack.c.bf16 0.0, %v8191
      %s8194 = ssub.s32 4, 1
      %s8195 = scalar_lea.vmem %s45, 972
      %8196 = vst [vmem:[%s8195] sm:%s8194] %v8192
      %s8197 = scalar_lea.vmem [#allocation0], 3896
      %v8198 = vld [vmem:[%s8197] sm:%s4789]
      %v8199 = vpack.c.bf16 0.0, %v8198
      %s8201 = ssub.s32 4, 1
      %s8202 = scalar_lea.vmem %s45, 974
      %8203 = vst [vmem:[%s8202] sm:%s8201] %v8199
      %s8204 = scalar_lea.vmem [#allocation0], 3904
      %v8205 = vld [vmem:[%s8204] sm:%s4789]
      %v8206 = vpack.c.bf16 0.0, %v8205
      %s8208 = ssub.s32 4, 1
      %s8209 = scalar_lea.vmem %s45, 976
      %8210 = vst [vmem:[%s8209] sm:%s8208] %v8206
      %s8211 = scalar_lea.vmem [#allocation0], 3912
      %v8212 = vld [vmem:[%s8211] sm:%s4789]
      %v8213 = vpack.c.bf16 0.0, %v8212
      %s8215 = ssub.s32 4, 1
      %s8216 = scalar_lea.vmem %s45, 978
      %8217 = vst [vmem:[%s8216] sm:%s8215] %v8213
      %s8218 = scalar_lea.vmem [#allocation0], 3920
      %v8219 = vld [vmem:[%s8218] sm:%s4789]
      %v8220 = vpack.c.bf16 0.0, %v8219
      %s8222 = ssub.s32 4, 1
      %s8223 = scalar_lea.vmem %s45, 980
      %8224 = vst [vmem:[%s8223] sm:%s8222] %v8220
      %s8225 = scalar_lea.vmem [#allocation0], 3928
      %v8226 = vld [vmem:[%s8225] sm:%s4789]
      %v8227 = vpack.c.bf16 0.0, %v8226
      %s8229 = ssub.s32 4, 1
      %s8230 = scalar_lea.vmem %s45, 982
      %8231 = vst [vmem:[%s8230] sm:%s8229] %v8227
      %s8232 = scalar_lea.vmem [#allocation0], 3936
      %v8233 = vld [vmem:[%s8232] sm:%s4789]
      %v8234 = vpack.c.bf16 0.0, %v8233
      %s8236 = ssub.s32 4, 1
      %s8237 = scalar_lea.vmem %s45, 984
      %8238 = vst [vmem:[%s8237] sm:%s8236] %v8234
      %s8239 = scalar_lea.vmem [#allocation0], 3944
      %v8240 = vld [vmem:[%s8239] sm:%s4789]
      %v8241 = vpack.c.bf16 0.0, %v8240
      %s8243 = ssub.s32 4, 1
      %s8244 = scalar_lea.vmem %s45, 986
      %8245 = vst [vmem:[%s8244] sm:%s8243] %v8241
      %s8246 = scalar_lea.vmem [#allocation0], 3952
      %v8247 = vld [vmem:[%s8246] sm:%s4789]
      %v8248 = vpack.c.bf16 0.0, %v8247
      %s8250 = ssub.s32 4, 1
      %s8251 = scalar_lea.vmem %s45, 988
      %8252 = vst [vmem:[%s8251] sm:%s8250] %v8248
      %s8253 = scalar_lea.vmem [#allocation0], 3960
      %v8254 = vld [vmem:[%s8253] sm:%s4789]
      %v8255 = vpack.c.bf16 0.0, %v8254
      %s8257 = ssub.s32 4, 1
      %s8258 = scalar_lea.vmem %s45, 990
      %8259 = vst [vmem:[%s8258] sm:%s8257] %v8255
      %s8260 = scalar_lea.vmem [#allocation0], 3968
      %v8261 = vld [vmem:[%s8260] sm:%s4789]
      %v8262 = vpack.c.bf16 0.0, %v8261
      %s8264 = ssub.s32 4, 1
      %s8265 = scalar_lea.vmem %s45, 992
      %8266 = vst [vmem:[%s8265] sm:%s8264] %v8262
      %s8267 = scalar_lea.vmem [#allocation0], 3976
      %v8268 = vld [vmem:[%s8267] sm:%s4789]
      %v8269 = vpack.c.bf16 0.0, %v8268
      %s8271 = ssub.s32 4, 1
      %s8272 = scalar_lea.vmem %s45, 994
      %8273 = vst [vmem:[%s8272] sm:%s8271] %v8269
      %s8274 = scalar_lea.vmem [#allocation0], 3984
      %v8275 = vld [vmem:[%s8274] sm:%s4789]
      %v8276 = vpack.c.bf16 0.0, %v8275
      %s8278 = ssub.s32 4, 1
      %s8279 = scalar_lea.vmem %s45, 996
      %8280 = vst [vmem:[%s8279] sm:%s8278] %v8276
      %s8281 = scalar_lea.vmem [#allocation0], 3992
      %v8282 = vld [vmem:[%s8281] sm:%s4789]
      %v8283 = vpack.c.bf16 0.0, %v8282
      %s8285 = ssub.s32 4, 1
      %s8286 = scalar_lea.vmem %s45, 998
      %8287 = vst [vmem:[%s8286] sm:%s8285] %v8283
      %s8288 = scalar_lea.vmem [#allocation0], 4000
      %v8289 = vld [vmem:[%s8288] sm:%s4789]
      %v8290 = vpack.c.bf16 0.0, %v8289
      %s8292 = ssub.s32 4, 1
      %s8293 = scalar_lea.vmem %s45, 1000
      %8294 = vst [vmem:[%s8293] sm:%s8292] %v8290
      %s8295 = scalar_lea.vmem [#allocation0], 4008
      %v8296 = vld [vmem:[%s8295] sm:%s4789]
      %v8297 = vpack.c.bf16 0.0, %v8296
      %s8299 = ssub.s32 4, 1
      %s8300 = scalar_lea.vmem %s45, 1002
      %8301 = vst [vmem:[%s8300] sm:%s8299] %v8297
      %s8302 = scalar_lea.vmem [#allocation0], 4016
      %v8303 = vld [vmem:[%s8302] sm:%s4789]
      %v8304 = vpack.c.bf16 0.0, %v8303
      %s8306 = ssub.s32 4, 1
      %s8307 = scalar_lea.vmem %s45, 1004
      %8308 = vst [vmem:[%s8307] sm:%s8306] %v8304
      %s8309 = scalar_lea.vmem [#allocation0], 4024
      %v8310 = vld [vmem:[%s8309] sm:%s4789]
      %v8311 = vpack.c.bf16 0.0, %v8310
      %s8313 = ssub.s32 4, 1
      %s8314 = scalar_lea.vmem %s45, 1006
      %8315 = vst [vmem:[%s8314] sm:%s8313] %v8311
      %s8316 = scalar_lea.vmem [#allocation0], 4032
      %v8317 = vld [vmem:[%s8316] sm:%s4789]
      %v8318 = vpack.c.bf16 0.0, %v8317
      %s8320 = ssub.s32 4, 1
      %s8321 = scalar_lea.vmem %s45, 1008
      %8322 = vst [vmem:[%s8321] sm:%s8320] %v8318
      %s8323 = scalar_lea.vmem [#allocation0], 4040
      %v8324 = vld [vmem:[%s8323] sm:%s4789]
      %v8325 = vpack.c.bf16 0.0, %v8324
      %s8327 = ssub.s32 4, 1
      %s8328 = scalar_lea.vmem %s45, 1010
      %8329 = vst [vmem:[%s8328] sm:%s8327] %v8325
      %s8330 = scalar_lea.vmem [#allocation0], 4048
      %v8331 = vld [vmem:[%s8330] sm:%s4789]
      %v8332 = vpack.c.bf16 0.0, %v8331
      %s8334 = ssub.s32 4, 1
      %s8335 = scalar_lea.vmem %s45, 1012
      %8336 = vst [vmem:[%s8335] sm:%s8334] %v8332
      %s8337 = scalar_lea.vmem [#allocation0], 4056
      %v8338 = vld [vmem:[%s8337] sm:%s4789]
      %v8339 = vpack.c.bf16 0.0, %v8338
      %s8341 = ssub.s32 4, 1
      %s8342 = scalar_lea.vmem %s45, 1014
      %8343 = vst [vmem:[%s8342] sm:%s8341] %v8339
      %s8344 = scalar_lea.vmem [#allocation0], 4064
      %v8345 = vld [vmem:[%s8344] sm:%s4789]
      %v8346 = vpack.c.bf16 0.0, %v8345
      %s8348 = ssub.s32 4, 1
      %s8349 = scalar_lea.vmem %s45, 1016
      %8350 = vst [vmem:[%s8349] sm:%s8348] %v8346
      %s8351 = scalar_lea.vmem [#allocation0], 4072
      %v8352 = vld [vmem:[%s8351] sm:%s4789]
      %v8353 = vpack.c.bf16 0.0, %v8352
      %s8355 = ssub.s32 4, 1
      %s8356 = scalar_lea.vmem %s45, 1018
      %8357 = vst [vmem:[%s8356] sm:%s8355] %v8353
      %s8358 = scalar_lea.vmem [#allocation0], 4080
      %v8359 = vld [vmem:[%s8358] sm:%s4789]
      %v8360 = vpack.c.bf16 0.0, %v8359
      %s8362 = ssub.s32 4, 1
      %s8363 = scalar_lea.vmem %s45, 1020
      %8364 = vst [vmem:[%s8363] sm:%s8362] %v8360
      %s8365 = scalar_lea.vmem [#allocation0], 4088
      %v8366 = vld [vmem:[%s8365] sm:%s4789]
      %v8367 = vpack.c.bf16 0.0, %v8366
      %s8369 = ssub.s32 4, 1
      %s8370 = scalar_lea.vmem %s45, 1022
      %8371 = vst [vmem:[%s8370] sm:%s8369] %v8367
      %s8372 = smul.u32 1024, %s8
      %p8373 = scmp.lt.s32.totalorder %s8372, 2047
      %s8374 = scalar_select %p8373, %s8372, 2047
      %s8375 = scalar_lea.vmem %s1, %s8374
      %s8376 = smul.u32 1024, %s8
    $region20: #{squeeze.1} parent=5 // pred_fallthru
      _
    %p8377 = scmp.le.s32.totalorder 2, %s3
    // Predicated region
    $region21: #{squeeze.1} parent=5 // pred_check
      %p8378 = pneg %p8377
    $region22: #{squeeze.1} parent=5 // pred_check_branch
      %8380 = sbr.rel (%p8378) target = $region24
    $region23: #{squeeze.1} parent=5 // pred_region
      %s8381 = ssub.s32 %s3, 2
      %s8382 = smul.u32 1024, %s9
      %p8383 = scmp.lt.s32.totalorder %s8382, 2047
      %s8384 = scalar_select %p8383, %s8382, 2047
      %s8385 = scalar_lea.vmem %s1, %s8384
    $region24: #{squeeze.1} parent=5 // pred_fallthru
      _
  $region6: #{squeeze.1} parent=0 // loop_footer
    %s7 = sadd.s32 1, %s3
  $region7: #{squeeze.1} parent=0 // loop_footer_branch
    %2 = sbr.rel target = $region3
  $region8: #{squeeze.1} parent=0 // loop_exit
    _

// kernel: tile.14
$region0: #{tile.14}
  %s0 = inlined_call_operand.vmem [shape: bf16[2,3,6], index: 0, kind: input, shape index: {}]
  %s1 = inlined_call_operand.vmem [shape: bf16[6,6], index: 1, kind: output, shape index: {}]
  $region1: #{tile.14} parent=0
    #allocation0 [shape = 'u8[4096]{0}', space=vmem, size = 0x1000, scoped, tag = 'scoped mem for output reshape']
    #allocation1 [shape = 'u8[8192]{0}', space=vmem, size = 0x2000, scoped, tag = 'scoped mem for input reshape']
    %s3 = ssub.s32 16, 1
    %s4 = scalar_lea.vmem %s0, 2
    %s5 = sshrl.u32 %s3, 1
    %s6 = sor.u32 %s3, %s5
    %s7 = sand.u32 %s6, 85
    %s8 = sshrl.u32 %s7, 1
    %s9 = sor.u32 %s7, %s8
    %s10 = sand.u32 51, %s9
    %s11 = sshrl.u32 %s10, 2
    %s12 = sor.u32 %s10, %s11
    %s13 = sand.u32 15, %s12
    %v14 = vld [vmem:[%s4] sm:%s13]
    %v15 = vunpack.c.l.bf16 %v14
    %v16 = vunpack.c.h.bf16 %v14
    %s17 = scalar_lea.vmem [#allocation1], 8
    %18 = vst [vmem:[%s17] sm:%s3] %v15
    %s19 = sshrl.u32 %s3, 1
    %s20 = sor.u32 %s3, %s19
    %s21 = sand.u32 %s20, 85
    %s22 = sshrl.u32 %s21, 1
    %s23 = sor.u32 %s21, %s22
    %s24 = sand.u32 51, %s23
    %s25 = sshrl.u32 %s24, 2
    %s26 = sor.u32 %s24, %s25
    %s27 = sand.u32 15, %s26
    %v28 = vld [vmem:[%s0] sm:%s27]
    %v29 = vunpack.c.l.bf16 %v28
    %v30 = vunpack.c.h.bf16 %v28
    %31 = vst [vmem:[#allocation1] sm:%s3] %v29
    %v32 = vld [vmem:[#allocation1] sm:$0x7]
    %vm33 = vcmask 48128
    %34 = vst.msk [vmem:[#allocation0] sm:$0x7] %vm33, %v32
    %s35 = scalar_lea.vmem [#allocation1], 8
    %v36 = vld [vmem:[%s35] sm:$0x7]
    %vm37 = vcmask 48128
    %s38 = scalar_lea.vmem [#allocation0], 3
    %39 = vst.msk [vmem:[%s38] sm:$0x7] %vm37, %v36
    %s41 = ssub.s32 256, 1
    %v42 = vld [vmem:[#allocation0] sm:%s41]
    %v43 = vpack.c.bf16 0.0, %v42
    %s45 = ssub.s32 16, 1
    %46 = vst [vmem:[%s1] sm:%s45] %v43

</llo_original>
